<compile_context>
chip_gen: v7x
topology: tpu7x:2x2x1
jax: 0.10.0
libtpu: 0.0.40
codegen_flags: <defaults>
</compile_context>

<pallas_src>
import functools

import jax
import jax.numpy as jnp
from jax import lax
from jax.experimental import pallas as pl
from jax.experimental.pallas import tpu as pltpu


# ----------------------------------------------------------------------------
# Kernel
# ----------------------------------------------------------------------------
def _dual_attention_kernel(x_ref, slab_ref, out_ref, enc_scr, *,
                           offsets, seq_len, cell, enc_cell, bb):
    S, C, E = seq_len, cell, enc_cell
    B = bb
    D = x_ref.shape[-1]
    f32 = jnp.float32

    def get(name):
        r0, nr, nc = offsets[name]
        return slab_ref[r0:r0 + nr, 0:nc]

    def mm(a, w):
        return jnp.dot(a, w, preferred_element_type=f32)

    def bc(v, n):
        return jnp.broadcast_to(v, (B, n))

    # ---- load packed weights once; hoist every per-step bias broadcast -----
    e_hcat   = get("e_hcat")                    # (C, D+4C)  [Wh | w_hh]
    e_Wc     = get("e_Wc")                      # (C, D)
    e_U      = get("e_U")                       # (D, D)
    e_att_b  = bc(get("e_att_b"), D)            # U_b + W_b
    e_V      = get("e_V")                       # (D, D)
    e_V_b    = bc(get("e_V_b"), D)
    e_wx     = get("e_wx")                      # (D, 4C)
    e_lstm_b = bc(get("e_lstm_b"), 4 * C)       # b_ih + b_hh
    eo_full  = get("eo_full")                   # (C, E+1)  [to_output | to_output@conv]
    eo_b     = bc(get("eo_b"), E)
    dU       = get("dU")                        # (S, S)
    u_bias   = get("u_bias")                    # (1, S)  dU_b+dW_b+conv-const term
    d_hcat   = get("d_hcat")                    # (C, S+4C) [Wh | w_hh + sqi_h@w_ih]
    d_Wc     = get("d_Wc")                      # (C, S)
    d_Vexp   = get("d_Vexp")                    # (S, S*E)  V fused with block-expand
    d_Vexp_b = bc(get("d_Vexp_b"), S * E)
    d_ctxcat = get("d_ctxcat")                  # (E, 4C+1) [sqi_ctx@w_ih | y-head(ctx)]
    d_gate_b = bc(get("d_gates_b"), 4 * C)
    W_y_h    = get("W_y_h")                     # (C, 1)    folded output head (h)
    y_b      = bc(get("y_b"), 1)

    # ---------------- encoder (input attention over features) ---------------
    h = jnp.zeros((B, C), f32)
    c = jnp.zeros((B, C), f32)
    # u_acc accumulates the decoder's loop-invariant U(conv(enc)) + biases.
    u_acc = bc(u_bias, S)
    for t in range(S):
        x_t = x_ref[t].astype(f32)                               # (B, D)
        h_proj = mm(h, e_hcat)                                   # attn + gates in one push
        a = jnp.maximum(mm(x_t, e_U) + e_att_b + h_proj[:, :D] + mm(c, e_Wc), 0.0)
        v = mm(a, e_V) + e_V_b
        ev = jnp.exp(v - jnp.max(v, axis=1, keepdims=True))
        alpha = ev * pl.reciprocal(jnp.sum(ev, axis=1, keepdims=True), approx=True)
        gates = mm(x_t * alpha, e_wx) + h_proj[:, D:] + e_lstm_b
        sg = jax.nn.sigmoid(gates)                               # full-vreg passes
        th = jnp.tanh(gates)
        c = sg[:, C:2 * C] * c + sg[:, :C] * th[:, 2 * C:3 * C]
        h = sg[:, 3 * C:] * jnp.tanh(c)
        henc = mm(h, eo_full)                                    # (B, E+1)
        enc_scr[:, t * E:(t + 1) * E] = henc[:, :E] + eo_b       # lane-major enc slab
        u_acc = u_acc + henc[:, E:E + 1] * dU[t:t + 1, :]        # conv+U(e) folded

    enc_slab = enc_scr[...]                                      # (B, S*E)

    # ---------------- decoder (temporal attention over seq) -----------------
    h = jnp.zeros((B, C), f32)
    c = jnp.zeros((B, C), f32)
    y_acc = jnp.zeros((B, S), f32)
    lane = lax.broadcasted_iota(jnp.int32, (1, S), 1)
    pow2 = (S & (S - 1)) == 0
    for t in range(S):
        h_proj = mm(h, d_hcat)                                   # attn + gates(h) in one push
        a = jnp.maximum(u_acc + h_proj[:, :S] + mm(c, d_Wc), 0.0)
        v = mm(a, d_Vexp) + d_Vexp_b                             # (B, S*E), V+expand fused
        ev = jnp.exp(v - jnp.max(v, axis=1, keepdims=True))
        # exact divide: the decoder softmax gates the context (accuracy note).
        beta_exp = (ev * float(E)) / jnp.sum(ev, axis=1, keepdims=True)
        prod = enc_slab * beta_exp
        if S * E == 128 and pow2:
            # Tree-reduce the S blocks of E lanes with XLU rolls.  Because the
            # shifts are multiples of E and S*E == lane count, every E-block of
            # the result holds the full sum regardless of roll direction.
            sh = E
            while sh < S * E:
                prod = prod + pltpu.roll(prod, shift=sh, axis=1)
                sh *= 2
            ctx = prod[:, :E]
        else:
            ctx = prod[:, :E]
            for tt in range(1, S):
                ctx = ctx + prod[:, tt * E:(tt + 1) * E]
        ctx_proj = mm(ctx, d_ctxcat)                             # gates(ctx) | y(ctx)
        gates = ctx_proj[:, :4 * C] + h_proj[:, S:] + d_gate_b
        sg = jax.nn.sigmoid(gates)
        th = jnp.tanh(gates)
        c = sg[:, C:2 * C] * c + sg[:, :C] * th[:, 2 * C:3 * C]
        h = sg[:, 3 * C:] * jnp.tanh(c)
        y = ctx_proj[:, 4 * C:] + mm(h, W_y_h) + y_b             # folded output head
        y_acc = jnp.where(lane == t, y, y_acc)                   # register-resident column

    out_ref[...] = y_acc.astype(out_ref.dtype)                   # single lane-dense store


# ----------------------------------------------------------------------------
# Wrapper
# ----------------------------------------------------------------------------
def dual_attention_seq2seq(x_bds, slab, offsets, *, seq_len, cell, enc_cell):
    """x_bds: (batch, input_dims, seq_len) -> (batch, 1, seq_len)."""
    B, D, S = x_bds.shape
    assert S == seq_len
    C, E = cell, enc_cell
    BB = 8                                    # batch rows per program (f32 sublanes)
    B_pad = max(BB, -(-B // BB) * BB)
    nb = B_pad // BB

    x_sbd = jnp.zeros((S, B_pad, D), jnp.float32)
    x_sbd = x_sbd.at[:, :B, :].set(jnp.transpose(x_bds.astype(jnp.float32), (2, 0, 1)))

    kernel = functools.partial(_dual_attention_kernel, offsets=offsets,
                               seq_len=S, cell=C, enc_cell=E, bb=BB)

    # Rough advisory cost so XLA schedules the wrapper pad/transpose/slice
    # around this latency-bound custom call.
    per_row_step = (C * (D + 4 * C) + D * D + C * D + D * D + D * 4 * C + C * (E + 1)
                    + C * (S + 4 * C) + C * S + S * (S * E) + E * (4 * C + 1) + C)
    cost = pl.CostEstimate(
        flops=2 * B_pad * S * per_row_step,
        transcendentals=B_pad * S * (D + S * E + 4 * (4 * C) + 2 * C),
        bytes_accessed=4 * (x_sbd.size + slab.size + B_pad * S))

    out = pl.pallas_call(
        kernel,
        out_shape=jax.ShapeDtypeStruct((B_pad, S), jnp.float32),
        grid=(nb,),
        in_specs=[
            pl.BlockSpec((S, BB, D), lambda b: (0, b, 0)),   # per-program batch tile
            pl.BlockSpec(slab.shape, lambda b: (0, 0)),      # packed params, replicated
        ],
        out_specs=pl.BlockSpec((BB, S), lambda b: (b, 0)),
        scratch_shapes=[pltpu.VMEM((BB, S * E), jnp.float32)],   # encoder-output lane slab
        compiler_params=pltpu.CompilerParams(
            dimension_semantics=("parallel",)),              # 2nd TC on v7x when nb > 1
        cost_estimate=cost,
    )(x_sbd, slab)
    return out[:B, None, :]                                  # (B, 1, S)


# ----------------------------------------------------------------------------
# Parameters: raw PyTorch-layout init, host-side packing into one slab
# ----------------------------------------------------------------------------
def init_raw_params(key, D, S, C, E):
    """PyTorch-style uniform init, native (out_features, in_features) layout."""
    keys = iter(jax.random.split(key, 32))

    def uni(shape, bound):
        return jax.random.uniform(next(keys), shape, jnp.float32, -bound, bound)

    def lin(out_f, in_f):
        b = 1.0 / (in_f ** 0.5)
        return uni((out_f, in_f), b), uni((out_f,), b)

    def lstm(in_f, cell):
        b = 1.0 / (cell ** 0.5)
        return (uni((4 * cell, in_f), b), uni((4 * cell, cell), b),
                uni((4 * cell,), b), uni((4 * cell,), b))

    raw = {}
    # encoder
    raw["eU_w"], raw["eU_b"] = lin(D, D)
    raw["eW_w"], raw["eW_b"] = lin(D, 2 * C)        # input order [h, c]
    raw["eV_w"], raw["eV_b"] = lin(D, D)
    raw["e_wih"], raw["e_whh"], raw["e_bih"], raw["e_bhh"] = lstm(D, C)
    raw["eo_w"], raw["eo_b"] = lin(E, C)
    # decoder (input_dims == E)
    cb = 1.0 / (E ** 0.5)
    raw["conv_w"] = uni((1, E, 1), cb)              # Conv1d(E, 1, 1)
    raw["conv_b"] = uni((1,), cb)
    raw["dU_w"], raw["dU_b"] = lin(S, S)
    raw["dW_w"], raw["dW_b"] = lin(S, 2 * C)        # input order [h, c]
    raw["dV_w"], raw["dV_b"] = lin(S, S)
    raw["sqi_w"], raw["sqi_b"] = lin(E, C + E)      # input order [context(E), h(C)]
    raw["sqo_w"], raw["sqo_b"] = lin(C, C + E)      # input order [context(E), h(C)]
    raw["d_wih"], raw["d_whh"], raw["d_bih"], raw["d_bhh"] = lstm(E, C)
    raw["do_w"], raw["do_b"] = lin(1, C)
    return raw


def pack_params(raw, *, seq_len, cell, enc_cell):
    """Fuse/fold/transpose the raw params and pack them into one f32 slab."""
    S, C, E = seq_len, cell, enc_cell
    D = raw["eU_w"].shape[0]
    row = lambda v: jnp.asarray(v).reshape(1, -1)

    # ---- encoder ----
    e_U_wt = raw["eU_w"].T
    eW_t = raw["eW_w"].T                                  # (2C, D)
    e_Wh_wt, e_Wc_wt = eW_t[:C], eW_t[C:]
    e_att_b = row(raw["eU_b"] + raw["eW_b"])
    e_V_wt = raw["eV_w"].T
    e_V_b = row(raw["eV_b"])
    e_wx_t = raw["e_wih"].T                               # (D, 4C)
    e_wh_t = raw["e_whh"].T                               # (C, 4C)
    e_lstm_b = row(raw["e_bih"] + raw["e_bhh"])
    e_hcat = jnp.concatenate([e_Wh_wt, e_wh_t], axis=1)   # (C, D+4C)
    eo_wt = raw["eo_w"].T                                 # (C, E)
    conv_vec = raw["conv_w"].reshape(E, 1)
    ec_w = eo_wt @ conv_vec                               # (C, 1)
    ec_b = raw["eo_b"] @ conv_vec[:, 0] + raw["conv_b"][0]
    eo_full = jnp.concatenate([eo_wt, ec_w], axis=1)      # (C, E+1)
    eo_b = row(raw["eo_b"])

    # ---- decoder ----
    dU_wt = raw["dU_w"].T                                 # (S, S)
    dW_t = raw["dW_w"].T
    d_Wh_wt, d_Wc_wt = dW_t[:C], dW_t[C:]
    u_bias = row(raw["dU_b"] + raw["dW_b"]) + ec_b * dU_wt.sum(axis=0, keepdims=True)
    dV_wt = raw["dV_w"].T
    expand = jnp.kron(jnp.eye(S, dtype=jnp.float32), jnp.ones((1, E), jnp.float32))
    d_Vexp = dV_wt @ expand                               # (S, S*E)
    d_Vexp_b = row(raw["dV_b"]) @ expand                  # (1, S*E)
    sqi_t = raw["sqi_w"].T                                # (C+E, E); rows [:E]=ctx, [E:]=h
    d_wx_t = raw["d_wih"].T                               # (E, 4C)
    d_wh_t = raw["d_whh"].T                               # (C, 4C)
    d_ctx_gates = sqi_t[:E] @ d_wx_t                      # (E, 4C)
    d_h_gates = d_wh_t + sqi_t[E:] @ d_wx_t               # (C, 4C)
    d_gates_b = row(raw["sqi_b"]) @ d_wx_t + row(raw["d_bih"] + raw["d_bhh"])
    d_hcat = jnp.concatenate([d_Wh_wt, d_h_gates], axis=1)    # (C, S+4C)
    sqo_t = raw["sqo_w"].T                                # (C+E, C)
    do_t = raw["do_w"].T                                  # (C, 1)
    W_y_ctx = sqo_t[:E] @ do_t                            # (E, 1)
    W_y_h = sqo_t[E:] @ do_t                              # (C, 1)
    y_b = row(raw["sqo_b"]) @ do_t + row(raw["do_b"])     # (1, 1)
    d_ctxcat = jnp.concatenate([d_ctx_gates, W_y_ctx], axis=1)  # (E, 4C+1)

    entries = [
        ("e_hcat", e_hcat), ("e_Wc", e_Wc_wt), ("e_U", e_U_wt),
        ("e_att_b", e_att_b), ("e_V", e_V_wt), ("e_V_b", e_V_b),
        ("e_wx", e_wx_t), ("e_lstm_b", e_lstm_b),
        ("eo_full", eo_full), ("eo_b", eo_b),
        ("dU", dU_wt), ("u_bias", u_bias),
        ("d_hcat", d_hcat), ("d_Wc", d_Wc_wt),
        ("d_Vexp", d_Vexp), ("d_Vexp_b", d_Vexp_b),
        ("d_ctxcat", d_ctxcat), ("d_gates_b", d_gates_b),
        ("W_y_h", W_y_h), ("y_b", y_b),
    ]
    max_w = max(int(a.shape[1]) for _, a in entries)
    slab_width = max(128, -(-max_w // 128) * 128)
    offsets = {}
    r = 0
    for name, arr in entries:
        nr, nc = int(arr.shape[0]), int(arr.shape[1])
        offsets[name] = (r, nr, nc)
        r += -(-nr // 8) * 8                              # 8-row alignment per entry
    slab = jnp.zeros((max(8, r), slab_width), jnp.float32)
    for name, arr in entries:
        r0, nr, nc = offsets[name]
        slab = slab.at[r0:r0 + nr, :nc].set(arr.astype(jnp.float32))
    return slab, offsets


# ----------------------------------------------------------------------------
# Independent pure-JAX reference: literal translation of the PyTorch module,
# operating on the RAW (un-packed, un-fused) parameters.
# ----------------------------------------------------------------------------
def reference_forward(x, raw, *, seq_len, cell, enc_cell):
    S, C, E = seq_len, cell, enc_cell
    Bt = x.shape[0]
    lin = lambda a, w, b: a @ w.T + b

    def lstm(xin, h, c, w_ih, w_hh, b_ih, b_hh):
        g = xin @ w_ih.T + b_ih + h @ w_hh.T + b_hh
        i, f, gg, o = jnp.split(g, 4, axis=1)
        c = jax.nn.sigmoid(f) * c + jax.nn.sigmoid(i) * jnp.tanh(gg)
        h = jax.nn.sigmoid(o) * jnp.tanh(c)
        return h, c

    # encoder
    h = jnp.zeros((Bt, C), jnp.float32)
    c = jnp.zeros((Bt, C), jnp.float32)
    enc_outs = []
    for t in range(S):
        x_t = x[:, :, t]
        U = lin(x_t, raw["eU_w"], raw["eU_b"])
        W = lin(jnp.concatenate([h, c], 1), raw["eW_w"], raw["eW_b"])
        A = jax.nn.relu(U + W)
        V = lin(A, raw["eV_w"], raw["eV_b"])
        alpha = jax.nn.softmax(V, axis=1)
        h, c = lstm(x_t * alpha, h, c,
                    raw["e_wih"], raw["e_whh"], raw["e_bih"], raw["e_bhh"])
        enc_outs.append(lin(h, raw["eo_w"], raw["eo_b"]))
    enc = jnp.stack(enc_outs, axis=2)                                # (B, E, S)

    # decoder
    e = jnp.einsum('bes,oe->bos', enc, raw["conv_w"][:, :, 0]) \
        + raw["conv_b"][None, :, None]                               # (B, 1, S)
    h = jnp.zeros((Bt, C), jnp.float32)
    c = jnp.zeros((Bt, C), jnp.float32)
    outs = []
    for _ in range(S):
        U = lin(e, raw["dU_w"], raw["dU_b"])
        W = lin(jnp.concatenate([h, c], 1), raw["dW_w"], raw["dW_b"])[:, None, :]
        A = jax.nn.relu(U + W)
        V = lin(A, raw["dV_w"], raw["dV_b"])
        beta = jax.nn.softmax(V, axis=2)
        ctx = jnp.sum(enc * beta, axis=2)                            # (B, E)
        att_in = lin(jnp.concatenate([ctx, h], 1), raw["sqi_w"], raw["sqi_b"])
        h, c = lstm(att_in, h, c,
                    raw["d_wih"], raw["d_whh"], raw["d_bih"], raw["d_bhh"])
        out_ctx = lin(jnp.concatenate([ctx, h], 1), raw["sqo_w"], raw["sqo_b"])
        outs.append(lin(out_ctx, raw["do_w"], raw["do_b"]))
    return jnp.stack(outs, axis=2)                                   # (B, 1, S)


if __name__ == "__main__":
    # x: (batch, input_dims, sequence_length); cell=32, encoded_cell=16.
    B, D, S, C, E = 2, 4, 8, 32, 16
    key = jax.random.PRNGKey(0)
    kx, kp = jax.random.split(key)
    x = jax.random.normal(kx, (B, D, S), jnp.float32)

    raw = init_raw_params(kp, D, S, C, E)
    slab, offsets = pack_params(raw, seq_len=S, cell=C, enc_cell=E)

    out = dual_attention_seq2seq(x, slab, offsets, seq_len=S, cell=C, enc_cell=E)
    out = jax.block_until_ready(out)
    assert out.shape == (B, 1, S), out.shape

    # Independent golden: literal PyTorch math on raw params, highest-precision
    # matmuls.  Kernel differs only by f32 re-association from weight fusion
    # and the encoder softmax's approx reciprocal (~1e-3 rel).
    with jax.default_matmul_precision("highest"):
        ref = reference_forward(x, raw, seq_len=S, cell=C, enc_cell=E)
    ref = jax.block_until_ready(ref)
    assert jnp.allclose(out, ref, atol=3e-2, rtol=3e-2), (out, ref)

    print("KERNEL_OK")
</pallas_src>

<mosaic_0001>
module attributes {stable_mosaic.version = 11 : i64} {
  func.func @_dual_attention_kernel(%arg0: i32, %arg1: memref<8x8x4xf32, #tpu.memory_space<vmem>>, %arg2: memref<312x256xf32, #tpu.memory_space<vmem>>, %arg3: memref<8x8xf32, #tpu.memory_space<vmem>>, %arg4: memref<8x128xf32, #tpu.memory_space<vmem>>) attributes {dimension_semantics = [#tpu.dimension_semantics<parallel>], iteration_bounds = array<i64: 1>, scalar_prefetch = 0 : i64, scratch_operands = 1 : i64, tpu.core_type = #tpu.core_type<tc>, window_params = [{transform_indices = @transform_0, window_bounds = array<i64: 8, 8, 4>}, {pipeline_mode = #tpu.pipeline_mode<synchronous>, transform_indices = @transform_1, window_bounds = array<i64: 312, 256>}, {transform_indices = @transform_2, window_bounds = array<i64: 8, 8>}]} {
    %c0 = arith.constant 0 : index
    %c0_0 = arith.constant 0 : index
    %0 = vector.load %arg2[%c0, %c0_0] : memref<312x256xf32, #tpu.memory_space<vmem>>, vector<32x132xf32>
    %c32 = arith.constant 32 : index
    %c0_1 = arith.constant 0 : index
    %1 = vector.load %arg2[%c32, %c0_1] : memref<312x256xf32, #tpu.memory_space<vmem>>, vector<32x4xf32>
    %c64 = arith.constant 64 : index
    %c0_2 = arith.constant 0 : index
    %2 = vector.load %arg2[%c64, %c0_2] : memref<312x256xf32, #tpu.memory_space<vmem>>, vector<4x4xf32>
    %c72 = arith.constant 72 : index
    %c0_3 = arith.constant 0 : index
    %3 = vector.load %arg2[%c72, %c0_3] : memref<312x256xf32, #tpu.memory_space<vmem>>, vector<1x4xf32>
    %4 = vector.shape_cast %3 : vector<1x4xf32> to vector<1x4xf32>
    %5 = vector.broadcast %4 : vector<1x4xf32> to vector<8x4xf32>
    %c80 = arith.constant 80 : index
    %c0_4 = arith.constant 0 : index
    %6 = vector.load %arg2[%c80, %c0_4] : memref<312x256xf32, #tpu.memory_space<vmem>>, vector<4x4xf32>
    %c88 = arith.constant 88 : index
    %c0_5 = arith.constant 0 : index
    %7 = vector.load %arg2[%c88, %c0_5] : memref<312x256xf32, #tpu.memory_space<vmem>>, vector<1x4xf32>
    %8 = vector.shape_cast %7 : vector<1x4xf32> to vector<1x4xf32>
    %9 = vector.broadcast %8 : vector<1x4xf32> to vector<8x4xf32>
    %c96 = arith.constant 96 : index
    %c0_6 = arith.constant 0 : index
    %10 = vector.load %arg2[%c96, %c0_6] : memref<312x256xf32, #tpu.memory_space<vmem>>, vector<4x128xf32>
    %c104 = arith.constant 104 : index
    %c0_7 = arith.constant 0 : index
    %11 = vector.load %arg2[%c104, %c0_7] : memref<312x256xf32, #tpu.memory_space<vmem>>, vector<1x128xf32>
    %12 = vector.shape_cast %11 : vector<1x128xf32> to vector<1x128xf32>
    %13 = vector.broadcast %12 : vector<1x128xf32> to vector<8x128xf32>
    %c112 = arith.constant 112 : index
    %c0_8 = arith.constant 0 : index
    %14 = vector.load %arg2[%c112, %c0_8] : memref<312x256xf32, #tpu.memory_space<vmem>>, vector<32x17xf32>
    %c144 = arith.constant 144 : index
    %c0_9 = arith.constant 0 : index
    %15 = vector.load %arg2[%c144, %c0_9] : memref<312x256xf32, #tpu.memory_space<vmem>>, vector<1x16xf32>
    %16 = vector.shape_cast %15 : vector<1x16xf32> to vector<1x16xf32>
    %17 = vector.broadcast %16 : vector<1x16xf32> to vector<8x16xf32>
    %c152 = arith.constant 152 : index
    %c0_10 = arith.constant 0 : index
    %18 = vector.load %arg2[%c152, %c0_10] : memref<312x256xf32, #tpu.memory_space<vmem>>, vector<8x8xf32>
    %c160 = arith.constant 160 : index
    %c0_11 = arith.constant 0 : index
    %19 = vector.load %arg2[%c160, %c0_11] : memref<312x256xf32, #tpu.memory_space<vmem>>, vector<1x8xf32>
    %c168 = arith.constant 168 : index
    %c0_12 = arith.constant 0 : index
    %20 = vector.load %arg2[%c168, %c0_12] : memref<312x256xf32, #tpu.memory_space<vmem>>, vector<32x136xf32>
    %c200 = arith.constant 200 : index
    %c0_13 = arith.constant 0 : index
    %21 = vector.load %arg2[%c200, %c0_13] : memref<312x256xf32, #tpu.memory_space<vmem>>, vector<32x8xf32>
    %c232 = arith.constant 232 : index
    %c0_14 = arith.constant 0 : index
    %22 = vector.load %arg2[%c232, %c0_14] : memref<312x256xf32, #tpu.memory_space<vmem>>, vector<8x128xf32>
    %c240 = arith.constant 240 : index
    %c0_15 = arith.constant 0 : index
    %23 = vector.load %arg2[%c240, %c0_15] : memref<312x256xf32, #tpu.memory_space<vmem>>, vector<1x128xf32>
    %24 = vector.shape_cast %23 : vector<1x128xf32> to vector<1x128xf32>
    %25 = vector.broadcast %24 : vector<1x128xf32> to vector<8x128xf32>
    %c248 = arith.constant 248 : index
    %c0_16 = arith.constant 0 : index
    %26 = vector.load %arg2[%c248, %c0_16] : memref<312x256xf32, #tpu.memory_space<vmem>>, vector<16x129xf32>
    %c264 = arith.constant 264 : index
    %c0_17 = arith.constant 0 : index
    %27 = vector.load %arg2[%c264, %c0_17] : memref<312x256xf32, #tpu.memory_space<vmem>>, vector<1x128xf32>
    %28 = vector.shape_cast %27 : vector<1x128xf32> to vector<1x128xf32>
    %29 = vector.broadcast %28 : vector<1x128xf32> to vector<8x128xf32>
    %c272 = arith.constant 272 : index
    %c0_18 = arith.constant 0 : index
    %30 = vector.load %arg2[%c272, %c0_18] : memref<312x256xf32, #tpu.memory_space<vmem>>, vector<32x1xf32>
    %c304 = arith.constant 304 : index
    %c0_19 = arith.constant 0 : index
    %31 = vector.load %arg2[%c304, %c0_19] : memref<312x256xf32, #tpu.memory_space<vmem>>, vector<1x1xf32>
    %32 = vector.shape_cast %31 : vector<1x1xf32> to vector<1x1xf32>
    %33 = vector.broadcast %32 : vector<1x1xf32> to vector<8x1xf32>
    %cst = arith.constant 0.000000e+00 : f32
    %34 = vector.broadcast %cst : f32 to vector<8x32xf32>
    %cst_20 = arith.constant 0.000000e+00 : f32
    %35 = vector.broadcast %cst_20 : f32 to vector<8x32xf32>
    %36 = vector.shape_cast %19 : vector<1x8xf32> to vector<1x8xf32>
    %37 = vector.broadcast %36 : vector<1x8xf32> to vector<8x8xf32>
    %c0_21 = arith.constant 0 : index
    %c0_22 = arith.constant 0 : index
    %c0_23 = arith.constant 0 : index
    %38 = vector.load %arg1[%c0_21, %c0_22, %c0_23] : memref<8x8x4xf32, #tpu.memory_space<vmem>>, vector<1x8x4xf32>
    %39 = vector.shape_cast %38 : vector<1x8x4xf32> to vector<8x4xf32>
    %cst_24 = arith.constant dense<0.000000e+00> : vector<8x132xf32>
    %40 = tpu.matmul %34, %0, %cst_24 {dimension_numbers = #tpu.dot_dimension_numbers<[1], [0], [0], [1], [0, 0, 1, 1], [], []>} : vector<8x32xf32>, vector<32x132xf32>, vector<8x132xf32> -> vector<8x132xf32>
    %cst_25 = arith.constant dense<0.000000e+00> : vector<8x4xf32>
    %41 = tpu.matmul %39, %2, %cst_25 {dimension_numbers = #tpu.dot_dimension_numbers<[1], [0], [0], [1], [0, 0, 1, 1], [], []>} : vector<8x4xf32>, vector<4x4xf32>, vector<8x4xf32> -> vector<8x4xf32>
    %42 = arith.addf %41, %5 : vector<8x4xf32>
    %43 = vector.extract_strided_slice %40 {offsets = [0, 0], sizes = [8, 4], strides = [1, 1]} : vector<8x132xf32> to vector<8x4xf32>
    %44 = arith.addf %42, %43 : vector<8x4xf32>
    %cst_26 = arith.constant dense<0.000000e+00> : vector<8x4xf32>
    %45 = tpu.matmul %35, %1, %cst_26 {dimension_numbers = #tpu.dot_dimension_numbers<[1], [0], [0], [1], [0, 0, 1, 1], [], []>} : vector<8x32xf32>, vector<32x4xf32>, vector<8x4xf32> -> vector<8x4xf32>
    %46 = arith.addf %44, %45 : vector<8x4xf32>
    %cst_27 = arith.constant 0.000000e+00 : f32
    %47 = vector.broadcast %cst_27 : f32 to vector<8x4xf32>
    %48 = arith.maximumf %46, %47 : vector<8x4xf32>
    %cst_28 = arith.constant dense<0.000000e+00> : vector<8x4xf32>
    %49 = tpu.matmul %48, %6, %cst_28 {dimension_numbers = #tpu.dot_dimension_numbers<[1], [0], [0], [1], [0, 0, 1, 1], [], []>} : vector<8x4xf32>, vector<4x4xf32>, vector<8x4xf32> -> vector<8x4xf32>
    %50 = arith.addf %49, %9 : vector<8x4xf32>
    %cst_29 = arith.constant dense<0xFF800000> : vector<8xf32>
    %51 = vector.multi_reduction <maximumf>, %50, %cst_29 [1] : vector<8x4xf32> to vector<8xf32>
    %52 = vector.shape_cast %51 : vector<8xf32> to vector<8x1xf32>
    %53 = vector.broadcast %52 : vector<8x1xf32> to vector<8x4xf32>
    %54 = arith.subf %50, %53 : vector<8x4xf32>
    %55 = math.exp %54 : vector<8x4xf32>
    %cst_30 = arith.constant dense<0.000000e+00> : vector<8xf32>
    %56 = vector.multi_reduction <add>, %55, %cst_30 [1] : vector<8x4xf32> to vector<8xf32>
    %57 = vector.shape_cast %56 : vector<8xf32> to vector<8x1xf32>
    %58 = tpu.reciprocal %57 {approx = true} : vector<8x1xf32> -> vector<8x1xf32>
    %59 = vector.broadcast %58 : vector<8x1xf32> to vector<8x4xf32>
    %60 = arith.mulf %55, %59 : vector<8x4xf32>
    %61 = arith.mulf %39, %60 : vector<8x4xf32>
    %cst_31 = arith.constant dense<0.000000e+00> : vector<8x128xf32>
    %62 = tpu.matmul %61, %10, %cst_31 {dimension_numbers = #tpu.dot_dimension_numbers<[1], [0], [0], [1], [0, 0, 1, 1], [], []>} : vector<8x4xf32>, vector<4x128xf32>, vector<8x128xf32> -> vector<8x128xf32>
    %63 = vector.extract_strided_slice %40 {offsets = [0, 4], sizes = [8, 128], strides = [1, 1]} : vector<8x132xf32> to vector<8x128xf32>
    %64 = arith.addf %62, %63 : vector<8x128xf32>
    %65 = arith.addf %64, %13 : vector<8x128xf32>
    %66 = arith.negf %65 : vector<8x128xf32>
    %67 = math.exp %66 : vector<8x128xf32>
    %cst_32 = arith.constant 1.000000e+00 : f32
    %68 = vector.broadcast %cst_32 : f32 to vector<8x128xf32>
    %69 = arith.addf %68, %67 : vector<8x128xf32>
    %70 = arith.divf %68, %69 : vector<8x128xf32>
    %71 = math.tanh %65 : vector<8x128xf32>
    %72 = vector.extract_strided_slice %70 {offsets = [0, 32], sizes = [8, 32], strides = [1, 1]} : vector<8x128xf32> to vector<8x32xf32>
    %73 = arith.mulf %72, %35 : vector<8x32xf32>
    %74 = vector.extract_strided_slice %70 {offsets = [0, 0], sizes = [8, 32], strides = [1, 1]} : vector<8x128xf32> to vector<8x32xf32>
    %75 = vector.extract_strided_slice %71 {offsets = [0, 64], sizes = [8, 32], strides = [1, 1]} : vector<8x128xf32> to vector<8x32xf32>
    %76 = arith.mulf %74, %75 : vector<8x32xf32>
    %77 = arith.addf %73, %76 : vector<8x32xf32>
    %78 = vector.extract_strided_slice %70 {offsets = [0, 96], sizes = [8, 32], strides = [1, 1]} : vector<8x128xf32> to vector<8x32xf32>
    %79 = math.tanh %77 : vector<8x32xf32>
    %80 = arith.mulf %78, %79 : vector<8x32xf32>
    %cst_33 = arith.constant dense<0.000000e+00> : vector<8x17xf32>
    %81 = tpu.matmul %80, %14, %cst_33 {dimension_numbers = #tpu.dot_dimension_numbers<[1], [0], [0], [1], [0, 0, 1, 1], [], []>} : vector<8x32xf32>, vector<32x17xf32>, vector<8x17xf32> -> vector<8x17xf32>
    %82 = vector.extract_strided_slice %81 {offsets = [0, 0], sizes = [8, 16], strides = [1, 1]} : vector<8x17xf32> to vector<8x16xf32>
    %83 = arith.addf %82, %17 : vector<8x16xf32>
    %c0_34 = arith.constant 0 : index
    %c0_35 = arith.constant 0 : index
    %84 = vector.load %arg4[%c0_34, %c0_35] : memref<8x128xf32, #tpu.memory_space<vmem>>, vector<8x16xf32>
    tpu.vector_store %arg4[%c0_34, %c0_35], %83 {strides = array<i32>} : memref<8x128xf32, #tpu.memory_space<vmem>>, vector<8x16xf32>,
    %85 = vector.extract_strided_slice %81 {offsets = [0, 16], sizes = [8, 1], strides = [1, 1]} : vector<8x17xf32> to vector<8x1xf32>
    %86 = vector.extract_strided_slice %18 {offsets = [0, 0], sizes = [1, 8], strides = [1, 1]} : vector<8x8xf32> to vector<1x8xf32>
    %87 = vector.broadcast %85 : vector<8x1xf32> to vector<8x8xf32>
    %88 = vector.broadcast %86 : vector<1x8xf32> to vector<8x8xf32>
    %89 = arith.mulf %87, %88 : vector<8x8xf32>
    %90 = arith.addf %37, %89 : vector<8x8xf32>
    %c1 = arith.constant 1 : index
    %c0_36 = arith.constant 0 : index
    %c0_37 = arith.constant 0 : index
    %91 = vector.load %arg1[%c1, %c0_36, %c0_37] : memref<8x8x4xf32, #tpu.memory_space<vmem>>, vector<1x8x4xf32>
    %92 = vector.shape_cast %91 : vector<1x8x4xf32> to vector<8x4xf32>
    %cst_38 = arith.constant dense<0.000000e+00> : vector<8x132xf32>
    %93 = tpu.matmul %80, %0, %cst_38 {dimension_numbers = #tpu.dot_dimension_numbers<[1], [0], [0], [1], [0, 0, 1, 1], [], []>} : vector<8x32xf32>, vector<32x132xf32>, vector<8x132xf32> -> vector<8x132xf32>
    %cst_39 = arith.constant dense<0.000000e+00> : vector<8x4xf32>
    %94 = tpu.matmul %92, %2, %cst_39 {dimension_numbers = #tpu.dot_dimension_numbers<[1], [0], [0], [1], [0, 0, 1, 1], [], []>} : vector<8x4xf32>, vector<4x4xf32>, vector<8x4xf32> -> vector<8x4xf32>
    %95 = arith.addf %94, %5 : vector<8x4xf32>
    %96 = vector.extract_strided_slice %93 {offsets = [0, 0], sizes = [8, 4], strides = [1, 1]} : vector<8x132xf32> to vector<8x4xf32>
    %97 = arith.addf %95, %96 : vector<8x4xf32>
    %cst_40 = arith.constant dense<0.000000e+00> : vector<8x4xf32>
    %98 = tpu.matmul %77, %1, %cst_40 {dimension_numbers = #tpu.dot_dimension_numbers<[1], [0], [0], [1], [0, 0, 1, 1], [], []>} : vector<8x32xf32>, vector<32x4xf32>, vector<8x4xf32> -> vector<8x4xf32>
    %99 = arith.addf %97, %98 : vector<8x4xf32>
    %cst_41 = arith.constant 0.000000e+00 : f32
    %100 = vector.broadcast %cst_41 : f32 to vector<8x4xf32>
    %101 = arith.maximumf %99, %100 : vector<8x4xf32>
    %cst_42 = arith.constant dense<0.000000e+00> : vector<8x4xf32>
    %102 = tpu.matmul %101, %6, %cst_42 {dimension_numbers = #tpu.dot_dimension_numbers<[1], [0], [0], [1], [0, 0, 1, 1], [], []>} : vector<8x4xf32>, vector<4x4xf32>, vector<8x4xf32> -> vector<8x4xf32>
    %103 = arith.addf %102, %9 : vector<8x4xf32>
    %cst_43 = arith.constant dense<0xFF800000> : vector<8xf32>
    %104 = vector.multi_reduction <maximumf>, %103, %cst_43 [1] : vector<8x4xf32> to vector<8xf32>
    %105 = vector.shape_cast %104 : vector<8xf32> to vector<8x1xf32>
    %106 = vector.broadcast %105 : vector<8x1xf32> to vector<8x4xf32>
    %107 = arith.subf %103, %106 : vector<8x4xf32>
    %108 = math.exp %107 : vector<8x4xf32>
    %cst_44 = arith.constant dense<0.000000e+00> : vector<8xf32>
    %109 = vector.multi_reduction <add>, %108, %cst_44 [1] : vector<8x4xf32> to vector<8xf32>
    %110 = vector.shape_cast %109 : vector<8xf32> to vector<8x1xf32>
    %111 = tpu.reciprocal %110 {approx = true} : vector<8x1xf32> -> vector<8x1xf32>
    %112 = vector.broadcast %111 : vector<8x1xf32> to vector<8x4xf32>
    %113 = arith.mulf %108, %112 : vector<8x4xf32>
    %114 = arith.mulf %92, %113 : vector<8x4xf32>
    %cst_45 = arith.constant dense<0.000000e+00> : vector<8x128xf32>
    %115 = tpu.matmul %114, %10, %cst_45 {dimension_numbers = #tpu.dot_dimension_numbers<[1], [0], [0], [1], [0, 0, 1, 1], [], []>} : vector<8x4xf32>, vector<4x128xf32>, vector<8x128xf32> -> vector<8x128xf32>
    %116 = vector.extract_strided_slice %93 {offsets = [0, 4], sizes = [8, 128], strides = [1, 1]} : vector<8x132xf32> to vector<8x128xf32>
    %117 = arith.addf %115, %116 : vector<8x128xf32>
    %118 = arith.addf %117, %13 : vector<8x128xf32>
    %119 = arith.negf %118 : vector<8x128xf32>
    %120 = math.exp %119 : vector<8x128xf32>
    %cst_46 = arith.constant 1.000000e+00 : f32
    %121 = vector.broadcast %cst_46 : f32 to vector<8x128xf32>
    %122 = arith.addf %121, %120 : vector<8x128xf32>
    %123 = arith.divf %121, %122 : vector<8x128xf32>
    %124 = math.tanh %118 : vector<8x128xf32>
    %125 = vector.extract_strided_slice %123 {offsets = [0, 32], sizes = [8, 32], strides = [1, 1]} : vector<8x128xf32> to vector<8x32xf32>
    %126 = arith.mulf %125, %77 : vector<8x32xf32>
    %127 = vector.extract_strided_slice %123 {offsets = [0, 0], sizes = [8, 32], strides = [1, 1]} : vector<8x128xf32> to vector<8x32xf32>
    %128 = vector.extract_strided_slice %124 {offsets = [0, 64], sizes = [8, 32], strides = [1, 1]} : vector<8x128xf32> to vector<8x32xf32>
    %129 = arith.mulf %127, %128 : vector<8x32xf32>
    %130 = arith.addf %126, %129 : vector<8x32xf32>
    %131 = vector.extract_strided_slice %123 {offsets = [0, 96], sizes = [8, 32], strides = [1, 1]} : vector<8x128xf32> to vector<8x32xf32>
    %132 = math.tanh %130 : vector<8x32xf32>
    %133 = arith.mulf %131, %132 : vector<8x32xf32>
    %cst_47 = arith.constant dense<0.000000e+00> : vector<8x17xf32>
    %134 = tpu.matmul %133, %14, %cst_47 {dimension_numbers = #tpu.dot_dimension_numbers<[1], [0], [0], [1], [0, 0, 1, 1], [], []>} : vector<8x32xf32>, vector<32x17xf32>, vector<8x17xf32> -> vector<8x17xf32>
    %135 = vector.extract_strided_slice %134 {offsets = [0, 0], sizes = [8, 16], strides = [1, 1]} : vector<8x17xf32> to vector<8x16xf32>
    %136 = arith.addf %135, %17 : vector<8x16xf32>
    %c0_48 = arith.constant 0 : index
    %c16 = arith.constant 16 : index
    %137 = vector.load %arg4[%c0_48, %c16] : memref<8x128xf32, #tpu.memory_space<vmem>>, vector<8x16xf32>
    tpu.vector_store %arg4[%c0_48, %c16], %136 {strides = array<i32>} : memref<8x128xf32, #tpu.memory_space<vmem>>, vector<8x16xf32>,
    %138 = vector.extract_strided_slice %134 {offsets = [0, 16], sizes = [8, 1], strides = [1, 1]} : vector<8x17xf32> to vector<8x1xf32>
    %139 = vector.extract_strided_slice %18 {offsets = [1, 0], sizes = [1, 8], strides = [1, 1]} : vector<8x8xf32> to vector<1x8xf32>
    %140 = vector.broadcast %138 : vector<8x1xf32> to vector<8x8xf32>
    %141 = vector.broadcast %139 : vector<1x8xf32> to vector<8x8xf32>
    %142 = arith.mulf %140, %141 : vector<8x8xf32>
    %143 = arith.addf %90, %142 : vector<8x8xf32>
    %c2 = arith.constant 2 : index
    %c0_49 = arith.constant 0 : index
    %c0_50 = arith.constant 0 : index
    %144 = vector.load %arg1[%c2, %c0_49, %c0_50] : memref<8x8x4xf32, #tpu.memory_space<vmem>>, vector<1x8x4xf32>
    %145 = vector.shape_cast %144 : vector<1x8x4xf32> to vector<8x4xf32>
    %cst_51 = arith.constant dense<0.000000e+00> : vector<8x132xf32>
    %146 = tpu.matmul %133, %0, %cst_51 {dimension_numbers = #tpu.dot_dimension_numbers<[1], [0], [0], [1], [0, 0, 1, 1], [], []>} : vector<8x32xf32>, vector<32x132xf32>, vector<8x132xf32> -> vector<8x132xf32>
    %cst_52 = arith.constant dense<0.000000e+00> : vector<8x4xf32>
    %147 = tpu.matmul %145, %2, %cst_52 {dimension_numbers = #tpu.dot_dimension_numbers<[1], [0], [0], [1], [0, 0, 1, 1], [], []>} : vector<8x4xf32>, vector<4x4xf32>, vector<8x4xf32> -> vector<8x4xf32>
    %148 = arith.addf %147, %5 : vector<8x4xf32>
    %149 = vector.extract_strided_slice %146 {offsets = [0, 0], sizes = [8, 4], strides = [1, 1]} : vector<8x132xf32> to vector<8x4xf32>
    %150 = arith.addf %148, %149 : vector<8x4xf32>
    %cst_53 = arith.constant dense<0.000000e+00> : vector<8x4xf32>
    %151 = tpu.matmul %130, %1, %cst_53 {dimension_numbers = #tpu.dot_dimension_numbers<[1], [0], [0], [1], [0, 0, 1, 1], [], []>} : vector<8x32xf32>, vector<32x4xf32>, vector<8x4xf32> -> vector<8x4xf32>
    %152 = arith.addf %150, %151 : vector<8x4xf32>
    %cst_54 = arith.constant 0.000000e+00 : f32
    %153 = vector.broadcast %cst_54 : f32 to vector<8x4xf32>
    %154 = arith.maximumf %152, %153 : vector<8x4xf32>
    %cst_55 = arith.constant dense<0.000000e+00> : vector<8x4xf32>
    %155 = tpu.matmul %154, %6, %cst_55 {dimension_numbers = #tpu.dot_dimension_numbers<[1], [0], [0], [1], [0, 0, 1, 1], [], []>} : vector<8x4xf32>, vector<4x4xf32>, vector<8x4xf32> -> vector<8x4xf32>
    %156 = arith.addf %155, %9 : vector<8x4xf32>
    %cst_56 = arith.constant dense<0xFF800000> : vector<8xf32>
    %157 = vector.multi_reduction <maximumf>, %156, %cst_56 [1] : vector<8x4xf32> to vector<8xf32>
    %158 = vector.shape_cast %157 : vector<8xf32> to vector<8x1xf32>
    %159 = vector.broadcast %158 : vector<8x1xf32> to vector<8x4xf32>
    %160 = arith.subf %156, %159 : vector<8x4xf32>
    %161 = math.exp %160 : vector<8x4xf32>
    %cst_57 = arith.constant dense<0.000000e+00> : vector<8xf32>
    %162 = vector.multi_reduction <add>, %161, %cst_57 [1] : vector<8x4xf32> to vector<8xf32>
    %163 = vector.shape_cast %162 : vector<8xf32> to vector<8x1xf32>
    %164 = tpu.reciprocal %163 {approx = true} : vector<8x1xf32> -> vector<8x1xf32>
    %165 = vector.broadcast %164 : vector<8x1xf32> to vector<8x4xf32>
    %166 = arith.mulf %161, %165 : vector<8x4xf32>
    %167 = arith.mulf %145, %166 : vector<8x4xf32>
    %cst_58 = arith.constant dense<0.000000e+00> : vector<8x128xf32>
    %168 = tpu.matmul %167, %10, %cst_58 {dimension_numbers = #tpu.dot_dimension_numbers<[1], [0], [0], [1], [0, 0, 1, 1], [], []>} : vector<8x4xf32>, vector<4x128xf32>, vector<8x128xf32> -> vector<8x128xf32>
    %169 = vector.extract_strided_slice %146 {offsets = [0, 4], sizes = [8, 128], strides = [1, 1]} : vector<8x132xf32> to vector<8x128xf32>
    %170 = arith.addf %168, %169 : vector<8x128xf32>
    %171 = arith.addf %170, %13 : vector<8x128xf32>
    %172 = arith.negf %171 : vector<8x128xf32>
    %173 = math.exp %172 : vector<8x128xf32>
    %cst_59 = arith.constant 1.000000e+00 : f32
    %174 = vector.broadcast %cst_59 : f32 to vector<8x128xf32>
    %175 = arith.addf %174, %173 : vector<8x128xf32>
    %176 = arith.divf %174, %175 : vector<8x128xf32>
    %177 = math.tanh %171 : vector<8x128xf32>
    %178 = vector.extract_strided_slice %176 {offsets = [0, 32], sizes = [8, 32], strides = [1, 1]} : vector<8x128xf32> to vector<8x32xf32>
    %179 = arith.mulf %178, %130 : vector<8x32xf32>
    %180 = vector.extract_strided_slice %176 {offsets = [0, 0], sizes = [8, 32], strides = [1, 1]} : vector<8x128xf32> to vector<8x32xf32>
    %181 = vector.extract_strided_slice %177 {offsets = [0, 64], sizes = [8, 32], strides = [1, 1]} : vector<8x128xf32> to vector<8x32xf32>
    %182 = arith.mulf %180, %181 : vector<8x32xf32>
    %183 = arith.addf %179, %182 : vector<8x32xf32>
    %184 = vector.extract_strided_slice %176 {offsets = [0, 96], sizes = [8, 32], strides = [1, 1]} : vector<8x128xf32> to vector<8x32xf32>
    %185 = math.tanh %183 : vector<8x32xf32>
    %186 = arith.mulf %184, %185 : vector<8x32xf32>
    %cst_60 = arith.constant dense<0.000000e+00> : vector<8x17xf32>
    %187 = tpu.matmul %186, %14, %cst_60 {dimension_numbers = #tpu.dot_dimension_numbers<[1], [0], [0], [1], [0, 0, 1, 1], [], []>} : vector<8x32xf32>, vector<32x17xf32>, vector<8x17xf32> -> vector<8x17xf32>
    %188 = vector.extract_strided_slice %187 {offsets = [0, 0], sizes = [8, 16], strides = [1, 1]} : vector<8x17xf32> to vector<8x16xf32>
    %189 = arith.addf %188, %17 : vector<8x16xf32>
    %c0_61 = arith.constant 0 : index
    %c32_62 = arith.constant 32 : index
    %190 = vector.load %arg4[%c0_61, %c32_62] : memref<8x128xf32, #tpu.memory_space<vmem>>, vector<8x16xf32>
    tpu.vector_store %arg4[%c0_61, %c32_62], %189 {strides = array<i32>} : memref<8x128xf32, #tpu.memory_space<vmem>>, vector<8x16xf32>,
    %191 = vector.extract_strided_slice %187 {offsets = [0, 16], sizes = [8, 1], strides = [1, 1]} : vector<8x17xf32> to vector<8x1xf32>
    %192 = vector.extract_strided_slice %18 {offsets = [2, 0], sizes = [1, 8], strides = [1, 1]} : vector<8x8xf32> to vector<1x8xf32>
    %193 = vector.broadcast %191 : vector<8x1xf32> to vector<8x8xf32>
    %194 = vector.broadcast %192 : vector<1x8xf32> to vector<8x8xf32>
    %195 = arith.mulf %193, %194 : vector<8x8xf32>
    %196 = arith.addf %143, %195 : vector<8x8xf32>
    %c3 = arith.constant 3 : index
    %c0_63 = arith.constant 0 : index
    %c0_64 = arith.constant 0 : index
    %197 = vector.load %arg1[%c3, %c0_63, %c0_64] : memref<8x8x4xf32, #tpu.memory_space<vmem>>, vector<1x8x4xf32>
    %198 = vector.shape_cast %197 : vector<1x8x4xf32> to vector<8x4xf32>
    %cst_65 = arith.constant dense<0.000000e+00> : vector<8x132xf32>
    %199 = tpu.matmul %186, %0, %cst_65 {dimension_numbers = #tpu.dot_dimension_numbers<[1], [0], [0], [1], [0, 0, 1, 1], [], []>} : vector<8x32xf32>, vector<32x132xf32>, vector<8x132xf32> -> vector<8x132xf32>
    %cst_66 = arith.constant dense<0.000000e+00> : vector<8x4xf32>
    %200 = tpu.matmul %198, %2, %cst_66 {dimension_numbers = #tpu.dot_dimension_numbers<[1], [0], [0], [1], [0, 0, 1, 1], [], []>} : vector<8x4xf32>, vector<4x4xf32>, vector<8x4xf32> -> vector<8x4xf32>
    %201 = arith.addf %200, %5 : vector<8x4xf32>
    %202 = vector.extract_strided_slice %199 {offsets = [0, 0], sizes = [8, 4], strides = [1, 1]} : vector<8x132xf32> to vector<8x4xf32>
    %203 = arith.addf %201, %202 : vector<8x4xf32>
    %cst_67 = arith.constant dense<0.000000e+00> : vector<8x4xf32>
    %204 = tpu.matmul %183, %1, %cst_67 {dimension_numbers = #tpu.dot_dimension_numbers<[1], [0], [0], [1], [0, 0, 1, 1], [], []>} : vector<8x32xf32>, vector<32x4xf32>, vector<8x4xf32> -> vector<8x4xf32>
    %205 = arith.addf %203, %204 : vector<8x4xf32>
    %cst_68 = arith.constant 0.000000e+00 : f32
    %206 = vector.broadcast %cst_68 : f32 to vector<8x4xf32>
    %207 = arith.maximumf %205, %206 : vector<8x4xf32>
    %cst_69 = arith.constant dense<0.000000e+00> : vector<8x4xf32>
    %208 = tpu.matmul %207, %6, %cst_69 {dimension_numbers = #tpu.dot_dimension_numbers<[1], [0], [0], [1], [0, 0, 1, 1], [], []>} : vector<8x4xf32>, vector<4x4xf32>, vector<8x4xf32> -> vector<8x4xf32>
    %209 = arith.addf %208, %9 : vector<8x4xf32>
    %cst_70 = arith.constant dense<0xFF800000> : vector<8xf32>
    %210 = vector.multi_reduction <maximumf>, %209, %cst_70 [1] : vector<8x4xf32> to vector<8xf32>
    %211 = vector.shape_cast %210 : vector<8xf32> to vector<8x1xf32>
    %212 = vector.broadcast %211 : vector<8x1xf32> to vector<8x4xf32>
    %213 = arith.subf %209, %212 : vector<8x4xf32>
    %214 = math.exp %213 : vector<8x4xf32>
    %cst_71 = arith.constant dense<0.000000e+00> : vector<8xf32>
    %215 = vector.multi_reduction <add>, %214, %cst_71 [1] : vector<8x4xf32> to vector<8xf32>
    %216 = vector.shape_cast %215 : vector<8xf32> to vector<8x1xf32>
    %217 = tpu.reciprocal %216 {approx = true} : vector<8x1xf32> -> vector<8x1xf32>
    %218 = vector.broadcast %217 : vector<8x1xf32> to vector<8x4xf32>
    %219 = arith.mulf %214, %218 : vector<8x4xf32>
    %220 = arith.mulf %198, %219 : vector<8x4xf32>
    %cst_72 = arith.constant dense<0.000000e+00> : vector<8x128xf32>
    %221 = tpu.matmul %220, %10, %cst_72 {dimension_numbers = #tpu.dot_dimension_numbers<[1], [0], [0], [1], [0, 0, 1, 1], [], []>} : vector<8x4xf32>, vector<4x128xf32>, vector<8x128xf32> -> vector<8x128xf32>
    %222 = vector.extract_strided_slice %199 {offsets = [0, 4], sizes = [8, 128], strides = [1, 1]} : vector<8x132xf32> to vector<8x128xf32>
    %223 = arith.addf %221, %222 : vector<8x128xf32>
    %224 = arith.addf %223, %13 : vector<8x128xf32>
    %225 = arith.negf %224 : vector<8x128xf32>
    %226 = math.exp %225 : vector<8x128xf32>
    %cst_73 = arith.constant 1.000000e+00 : f32
    %227 = vector.broadcast %cst_73 : f32 to vector<8x128xf32>
    %228 = arith.addf %227, %226 : vector<8x128xf32>
    %229 = arith.divf %227, %228 : vector<8x128xf32>
    %230 = math.tanh %224 : vector<8x128xf32>
    %231 = vector.extract_strided_slice %229 {offsets = [0, 32], sizes = [8, 32], strides = [1, 1]} : vector<8x128xf32> to vector<8x32xf32>
    %232 = arith.mulf %231, %183 : vector<8x32xf32>
    %233 = vector.extract_strided_slice %229 {offsets = [0, 0], sizes = [8, 32], strides = [1, 1]} : vector<8x128xf32> to vector<8x32xf32>
    %234 = vector.extract_strided_slice %230 {offsets = [0, 64], sizes = [8, 32], strides = [1, 1]} : vector<8x128xf32> to vector<8x32xf32>
    %235 = arith.mulf %233, %234 : vector<8x32xf32>
    %236 = arith.addf %232, %235 : vector<8x32xf32>
    %237 = vector.extract_strided_slice %229 {offsets = [0, 96], sizes = [8, 32], strides = [1, 1]} : vector<8x128xf32> to vector<8x32xf32>
    %238 = math.tanh %236 : vector<8x32xf32>
    %239 = arith.mulf %237, %238 : vector<8x32xf32>
    %cst_74 = arith.constant dense<0.000000e+00> : vector<8x17xf32>
    %240 = tpu.matmul %239, %14, %cst_74 {dimension_numbers = #tpu.dot_dimension_numbers<[1], [0], [0], [1], [0, 0, 1, 1], [], []>} : vector<8x32xf32>, vector<32x17xf32>, vector<8x17xf32> -> vector<8x17xf32>
    %241 = vector.extract_strided_slice %240 {offsets = [0, 0], sizes = [8, 16], strides = [1, 1]} : vector<8x17xf32> to vector<8x16xf32>
    %242 = arith.addf %241, %17 : vector<8x16xf32>
    %c0_75 = arith.constant 0 : index
    %c48 = arith.constant 48 : index
    %243 = vector.load %arg4[%c0_75, %c48] : memref<8x128xf32, #tpu.memory_space<vmem>>, vector<8x16xf32>
    tpu.vector_store %arg4[%c0_75, %c48], %242 {strides = array<i32>} : memref<8x128xf32, #tpu.memory_space<vmem>>, vector<8x16xf32>,
    %244 = vector.extract_strided_slice %240 {offsets = [0, 16], sizes = [8, 1], strides = [1, 1]} : vector<8x17xf32> to vector<8x1xf32>
    %245 = vector.extract_strided_slice %18 {offsets = [3, 0], sizes = [1, 8], strides = [1, 1]} : vector<8x8xf32> to vector<1x8xf32>
    %246 = vector.broadcast %244 : vector<8x1xf32> to vector<8x8xf32>
    %247 = vector.broadcast %245 : vector<1x8xf32> to vector<8x8xf32>
    %248 = arith.mulf %246, %247 : vector<8x8xf32>
    %249 = arith.addf %196, %248 : vector<8x8xf32>
    %c4 = arith.constant 4 : index
    %c0_76 = arith.constant 0 : index
    %c0_77 = arith.constant 0 : index
    %250 = vector.load %arg1[%c4, %c0_76, %c0_77] : memref<8x8x4xf32, #tpu.memory_space<vmem>>, vector<1x8x4xf32>
    %251 = vector.shape_cast %250 : vector<1x8x4xf32> to vector<8x4xf32>
    %cst_78 = arith.constant dense<0.000000e+00> : vector<8x132xf32>
    %252 = tpu.matmul %239, %0, %cst_78 {dimension_numbers = #tpu.dot_dimension_numbers<[1], [0], [0], [1], [0, 0, 1, 1], [], []>} : vector<8x32xf32>, vector<32x132xf32>, vector<8x132xf32> -> vector<8x132xf32>
    %cst_79 = arith.constant dense<0.000000e+00> : vector<8x4xf32>
    %253 = tpu.matmul %251, %2, %cst_79 {dimension_numbers = #tpu.dot_dimension_numbers<[1], [0], [0], [1], [0, 0, 1, 1], [], []>} : vector<8x4xf32>, vector<4x4xf32>, vector<8x4xf32> -> vector<8x4xf32>
    %254 = arith.addf %253, %5 : vector<8x4xf32>
    %255 = vector.extract_strided_slice %252 {offsets = [0, 0], sizes = [8, 4], strides = [1, 1]} : vector<8x132xf32> to vector<8x4xf32>
    %256 = arith.addf %254, %255 : vector<8x4xf32>
    %cst_80 = arith.constant dense<0.000000e+00> : vector<8x4xf32>
    %257 = tpu.matmul %236, %1, %cst_80 {dimension_numbers = #tpu.dot_dimension_numbers<[1], [0], [0], [1], [0, 0, 1, 1], [], []>} : vector<8x32xf32>, vector<32x4xf32>, vector<8x4xf32> -> vector<8x4xf32>
    %258 = arith.addf %256, %257 : vector<8x4xf32>
    %cst_81 = arith.constant 0.000000e+00 : f32
    %259 = vector.broadcast %cst_81 : f32 to vector<8x4xf32>
    %260 = arith.maximumf %258, %259 : vector<8x4xf32>
    %cst_82 = arith.constant dense<0.000000e+00> : vector<8x4xf32>
    %261 = tpu.matmul %260, %6, %cst_82 {dimension_numbers = #tpu.dot_dimension_numbers<[1], [0], [0], [1], [0, 0, 1, 1], [], []>} : vector<8x4xf32>, vector<4x4xf32>, vector<8x4xf32> -> vector<8x4xf32>
    %262 = arith.addf %261, %9 : vector<8x4xf32>
    %cst_83 = arith.constant dense<0xFF800000> : vector<8xf32>
    %263 = vector.multi_reduction <maximumf>, %262, %cst_83 [1] : vector<8x4xf32> to vector<8xf32>
    %264 = vector.shape_cast %263 : vector<8xf32> to vector<8x1xf32>
    %265 = vector.broadcast %264 : vector<8x1xf32> to vector<8x4xf32>
    %266 = arith.subf %262, %265 : vector<8x4xf32>
    %267 = math.exp %266 : vector<8x4xf32>
    %cst_84 = arith.constant dense<0.000000e+00> : vector<8xf32>
    %268 = vector.multi_reduction <add>, %267, %cst_84 [1] : vector<8x4xf32> to vector<8xf32>
    %269 = vector.shape_cast %268 : vector<8xf32> to vector<8x1xf32>
    %270 = tpu.reciprocal %269 {approx = true} : vector<8x1xf32> -> vector<8x1xf32>
    %271 = vector.broadcast %270 : vector<8x1xf32> to vector<8x4xf32>
    %272 = arith.mulf %267, %271 : vector<8x4xf32>
    %273 = arith.mulf %251, %272 : vector<8x4xf32>
    %cst_85 = arith.constant dense<0.000000e+00> : vector<8x128xf32>
    %274 = tpu.matmul %273, %10, %cst_85 {dimension_numbers = #tpu.dot_dimension_numbers<[1], [0], [0], [1], [0, 0, 1, 1], [], []>} : vector<8x4xf32>, vector<4x128xf32>, vector<8x128xf32> -> vector<8x128xf32>
    %275 = vector.extract_strided_slice %252 {offsets = [0, 4], sizes = [8, 128], strides = [1, 1]} : vector<8x132xf32> to vector<8x128xf32>
    %276 = arith.addf %274, %275 : vector<8x128xf32>
    %277 = arith.addf %276, %13 : vector<8x128xf32>
    %278 = arith.negf %277 : vector<8x128xf32>
    %279 = math.exp %278 : vector<8x128xf32>
    %cst_86 = arith.constant 1.000000e+00 : f32
    %280 = vector.broadcast %cst_86 : f32 to vector<8x128xf32>
    %281 = arith.addf %280, %279 : vector<8x128xf32>
    %282 = arith.divf %280, %281 : vector<8x128xf32>
    %283 = math.tanh %277 : vector<8x128xf32>
    %284 = vector.extract_strided_slice %282 {offsets = [0, 32], sizes = [8, 32], strides = [1, 1]} : vector<8x128xf32> to vector<8x32xf32>
    %285 = arith.mulf %284, %236 : vector<8x32xf32>
    %286 = vector.extract_strided_slice %282 {offsets = [0, 0], sizes = [8, 32], strides = [1, 1]} : vector<8x128xf32> to vector<8x32xf32>
    %287 = vector.extract_strided_slice %283 {offsets = [0, 64], sizes = [8, 32], strides = [1, 1]} : vector<8x128xf32> to vector<8x32xf32>
    %288 = arith.mulf %286, %287 : vector<8x32xf32>
    %289 = arith.addf %285, %288 : vector<8x32xf32>
    %290 = vector.extract_strided_slice %282 {offsets = [0, 96], sizes = [8, 32], strides = [1, 1]} : vector<8x128xf32> to vector<8x32xf32>
    %291 = math.tanh %289 : vector<8x32xf32>
    %292 = arith.mulf %290, %291 : vector<8x32xf32>
    %cst_87 = arith.constant dense<0.000000e+00> : vector<8x17xf32>
    %293 = tpu.matmul %292, %14, %cst_87 {dimension_numbers = #tpu.dot_dimension_numbers<[1], [0], [0], [1], [0, 0, 1, 1], [], []>} : vector<8x32xf32>, vector<32x17xf32>, vector<8x17xf32> -> vector<8x17xf32>
    %294 = vector.extract_strided_slice %293 {offsets = [0, 0], sizes = [8, 16], strides = [1, 1]} : vector<8x17xf32> to vector<8x16xf32>
    %295 = arith.addf %294, %17 : vector<8x16xf32>
    %c0_88 = arith.constant 0 : index
    %c64_89 = arith.constant 64 : index
    %296 = vector.load %arg4[%c0_88, %c64_89] : memref<8x128xf32, #tpu.memory_space<vmem>>, vector<8x16xf32>
    tpu.vector_store %arg4[%c0_88, %c64_89], %295 {strides = array<i32>} : memref<8x128xf32, #tpu.memory_space<vmem>>, vector<8x16xf32>,
    %297 = vector.extract_strided_slice %293 {offsets = [0, 16], sizes = [8, 1], strides = [1, 1]} : vector<8x17xf32> to vector<8x1xf32>
    %298 = vector.extract_strided_slice %18 {offsets = [4, 0], sizes = [1, 8], strides = [1, 1]} : vector<8x8xf32> to vector<1x8xf32>
    %299 = vector.broadcast %297 : vector<8x1xf32> to vector<8x8xf32>
    %300 = vector.broadcast %298 : vector<1x8xf32> to vector<8x8xf32>
    %301 = arith.mulf %299, %300 : vector<8x8xf32>
    %302 = arith.addf %249, %301 : vector<8x8xf32>
    %c5 = arith.constant 5 : index
    %c0_90 = arith.constant 0 : index
    %c0_91 = arith.constant 0 : index
    %303 = vector.load %arg1[%c5, %c0_90, %c0_91] : memref<8x8x4xf32, #tpu.memory_space<vmem>>, vector<1x8x4xf32>
    %304 = vector.shape_cast %303 : vector<1x8x4xf32> to vector<8x4xf32>
    %cst_92 = arith.constant dense<0.000000e+00> : vector<8x132xf32>
    %305 = tpu.matmul %292, %0, %cst_92 {dimension_numbers = #tpu.dot_dimension_numbers<[1], [0], [0], [1], [0, 0, 1, 1], [], []>} : vector<8x32xf32>, vector<32x132xf32>, vector<8x132xf32> -> vector<8x132xf32>
    %cst_93 = arith.constant dense<0.000000e+00> : vector<8x4xf32>
    %306 = tpu.matmul %304, %2, %cst_93 {dimension_numbers = #tpu.dot_dimension_numbers<[1], [0], [0], [1], [0, 0, 1, 1], [], []>} : vector<8x4xf32>, vector<4x4xf32>, vector<8x4xf32> -> vector<8x4xf32>
    %307 = arith.addf %306, %5 : vector<8x4xf32>
    %308 = vector.extract_strided_slice %305 {offsets = [0, 0], sizes = [8, 4], strides = [1, 1]} : vector<8x132xf32> to vector<8x4xf32>
    %309 = arith.addf %307, %308 : vector<8x4xf32>
    %cst_94 = arith.constant dense<0.000000e+00> : vector<8x4xf32>
    %310 = tpu.matmul %289, %1, %cst_94 {dimension_numbers = #tpu.dot_dimension_numbers<[1], [0], [0], [1], [0, 0, 1, 1], [], []>} : vector<8x32xf32>, vector<32x4xf32>, vector<8x4xf32> -> vector<8x4xf32>
    %311 = arith.addf %309, %310 : vector<8x4xf32>
    %cst_95 = arith.constant 0.000000e+00 : f32
    %312 = vector.broadcast %cst_95 : f32 to vector<8x4xf32>
    %313 = arith.maximumf %311, %312 : vector<8x4xf32>
    %cst_96 = arith.constant dense<0.000000e+00> : vector<8x4xf32>
    %314 = tpu.matmul %313, %6, %cst_96 {dimension_numbers = #tpu.dot_dimension_numbers<[1], [0], [0], [1], [0, 0, 1, 1], [], []>} : vector<8x4xf32>, vector<4x4xf32>, vector<8x4xf32> -> vector<8x4xf32>
    %315 = arith.addf %314, %9 : vector<8x4xf32>
    %cst_97 = arith.constant dense<0xFF800000> : vector<8xf32>
    %316 = vector.multi_reduction <maximumf>, %315, %cst_97 [1] : vector<8x4xf32> to vector<8xf32>
    %317 = vector.shape_cast %316 : vector<8xf32> to vector<8x1xf32>
    %318 = vector.broadcast %317 : vector<8x1xf32> to vector<8x4xf32>
    %319 = arith.subf %315, %318 : vector<8x4xf32>
    %320 = math.exp %319 : vector<8x4xf32>
    %cst_98 = arith.constant dense<0.000000e+00> : vector<8xf32>
    %321 = vector.multi_reduction <add>, %320, %cst_98 [1] : vector<8x4xf32> to vector<8xf32>
    %322 = vector.shape_cast %321 : vector<8xf32> to vector<8x1xf32>
    %323 = tpu.reciprocal %322 {approx = true} : vector<8x1xf32> -> vector<8x1xf32>
    %324 = vector.broadcast %323 : vector<8x1xf32> to vector<8x4xf32>
    %325 = arith.mulf %320, %324 : vector<8x4xf32>
    %326 = arith.mulf %304, %325 : vector<8x4xf32>
    %cst_99 = arith.constant dense<0.000000e+00> : vector<8x128xf32>
    %327 = tpu.matmul %326, %10, %cst_99 {dimension_numbers = #tpu.dot_dimension_numbers<[1], [0], [0], [1], [0, 0, 1, 1], [], []>} : vector<8x4xf32>, vector<4x128xf32>, vector<8x128xf32> -> vector<8x128xf32>
    %328 = vector.extract_strided_slice %305 {offsets = [0, 4], sizes = [8, 128], strides = [1, 1]} : vector<8x132xf32> to vector<8x128xf32>
    %329 = arith.addf %327, %328 : vector<8x128xf32>
    %330 = arith.addf %329, %13 : vector<8x128xf32>
    %331 = arith.negf %330 : vector<8x128xf32>
    %332 = math.exp %331 : vector<8x128xf32>
    %cst_100 = arith.constant 1.000000e+00 : f32
    %333 = vector.broadcast %cst_100 : f32 to vector<8x128xf32>
    %334 = arith.addf %333, %332 : vector<8x128xf32>
    %335 = arith.divf %333, %334 : vector<8x128xf32>
    %336 = math.tanh %330 : vector<8x128xf32>
    %337 = vector.extract_strided_slice %335 {offsets = [0, 32], sizes = [8, 32], strides = [1, 1]} : vector<8x128xf32> to vector<8x32xf32>
    %338 = arith.mulf %337, %289 : vector<8x32xf32>
    %339 = vector.extract_strided_slice %335 {offsets = [0, 0], sizes = [8, 32], strides = [1, 1]} : vector<8x128xf32> to vector<8x32xf32>
    %340 = vector.extract_strided_slice %336 {offsets = [0, 64], sizes = [8, 32], strides = [1, 1]} : vector<8x128xf32> to vector<8x32xf32>
    %341 = arith.mulf %339, %340 : vector<8x32xf32>
    %342 = arith.addf %338, %341 : vector<8x32xf32>
    %343 = vector.extract_strided_slice %335 {offsets = [0, 96], sizes = [8, 32], strides = [1, 1]} : vector<8x128xf32> to vector<8x32xf32>
    %344 = math.tanh %342 : vector<8x32xf32>
    %345 = arith.mulf %343, %344 : vector<8x32xf32>
    %cst_101 = arith.constant dense<0.000000e+00> : vector<8x17xf32>
    %346 = tpu.matmul %345, %14, %cst_101 {dimension_numbers = #tpu.dot_dimension_numbers<[1], [0], [0], [1], [0, 0, 1, 1], [], []>} : vector<8x32xf32>, vector<32x17xf32>, vector<8x17xf32> -> vector<8x17xf32>
    %347 = vector.extract_strided_slice %346 {offsets = [0, 0], sizes = [8, 16], strides = [1, 1]} : vector<8x17xf32> to vector<8x16xf32>
    %348 = arith.addf %347, %17 : vector<8x16xf32>
    %c0_102 = arith.constant 0 : index
    %c80_103 = arith.constant 80 : index
    %349 = vector.load %arg4[%c0_102, %c80_103] : memref<8x128xf32, #tpu.memory_space<vmem>>, vector<8x16xf32>
    tpu.vector_store %arg4[%c0_102, %c80_103], %348 {strides = array<i32>} : memref<8x128xf32, #tpu.memory_space<vmem>>, vector<8x16xf32>,
    %350 = vector.extract_strided_slice %346 {offsets = [0, 16], sizes = [8, 1], strides = [1, 1]} : vector<8x17xf32> to vector<8x1xf32>
    %351 = vector.extract_strided_slice %18 {offsets = [5, 0], sizes = [1, 8], strides = [1, 1]} : vector<8x8xf32> to vector<1x8xf32>
    %352 = vector.broadcast %350 : vector<8x1xf32> to vector<8x8xf32>
    %353 = vector.broadcast %351 : vector<1x8xf32> to vector<8x8xf32>
    %354 = arith.mulf %352, %353 : vector<8x8xf32>
    %355 = arith.addf %302, %354 : vector<8x8xf32>
    %c6 = arith.constant 6 : index
    %c0_104 = arith.constant 0 : index
    %c0_105 = arith.constant 0 : index
    %356 = vector.load %arg1[%c6, %c0_104, %c0_105] : memref<8x8x4xf32, #tpu.memory_space<vmem>>, vector<1x8x4xf32>
    %357 = vector.shape_cast %356 : vector<1x8x4xf32> to vector<8x4xf32>
    %cst_106 = arith.constant dense<0.000000e+00> : vector<8x132xf32>
    %358 = tpu.matmul %345, %0, %cst_106 {dimension_numbers = #tpu.dot_dimension_numbers<[1], [0], [0], [1], [0, 0, 1, 1], [], []>} : vector<8x32xf32>, vector<32x132xf32>, vector<8x132xf32> -> vector<8x132xf32>
    %cst_107 = arith.constant dense<0.000000e+00> : vector<8x4xf32>
    %359 = tpu.matmul %357, %2, %cst_107 {dimension_numbers = #tpu.dot_dimension_numbers<[1], [0], [0], [1], [0, 0, 1, 1], [], []>} : vector<8x4xf32>, vector<4x4xf32>, vector<8x4xf32> -> vector<8x4xf32>
    %360 = arith.addf %359, %5 : vector<8x4xf32>
    %361 = vector.extract_strided_slice %358 {offsets = [0, 0], sizes = [8, 4], strides = [1, 1]} : vector<8x132xf32> to vector<8x4xf32>
    %362 = arith.addf %360, %361 : vector<8x4xf32>
    %cst_108 = arith.constant dense<0.000000e+00> : vector<8x4xf32>
    %363 = tpu.matmul %342, %1, %cst_108 {dimension_numbers = #tpu.dot_dimension_numbers<[1], [0], [0], [1], [0, 0, 1, 1], [], []>} : vector<8x32xf32>, vector<32x4xf32>, vector<8x4xf32> -> vector<8x4xf32>
    %364 = arith.addf %362, %363 : vector<8x4xf32>
    %cst_109 = arith.constant 0.000000e+00 : f32
    %365 = vector.broadcast %cst_109 : f32 to vector<8x4xf32>
    %366 = arith.maximumf %364, %365 : vector<8x4xf32>
    %cst_110 = arith.constant dense<0.000000e+00> : vector<8x4xf32>
    %367 = tpu.matmul %366, %6, %cst_110 {dimension_numbers = #tpu.dot_dimension_numbers<[1], [0], [0], [1], [0, 0, 1, 1], [], []>} : vector<8x4xf32>, vector<4x4xf32>, vector<8x4xf32> -> vector<8x4xf32>
    %368 = arith.addf %367, %9 : vector<8x4xf32>
    %cst_111 = arith.constant dense<0xFF800000> : vector<8xf32>
    %369 = vector.multi_reduction <maximumf>, %368, %cst_111 [1] : vector<8x4xf32> to vector<8xf32>
    %370 = vector.shape_cast %369 : vector<8xf32> to vector<8x1xf32>
    %371 = vector.broadcast %370 : vector<8x1xf32> to vector<8x4xf32>
    %372 = arith.subf %368, %371 : vector<8x4xf32>
    %373 = math.exp %372 : vector<8x4xf32>
    %cst_112 = arith.constant dense<0.000000e+00> : vector<8xf32>
    %374 = vector.multi_reduction <add>, %373, %cst_112 [1] : vector<8x4xf32> to vector<8xf32>
    %375 = vector.shape_cast %374 : vector<8xf32> to vector<8x1xf32>
    %376 = tpu.reciprocal %375 {approx = true} : vector<8x1xf32> -> vector<8x1xf32>
    %377 = vector.broadcast %376 : vector<8x1xf32> to vector<8x4xf32>
    %378 = arith.mulf %373, %377 : vector<8x4xf32>
    %379 = arith.mulf %357, %378 : vector<8x4xf32>
    %cst_113 = arith.constant dense<0.000000e+00> : vector<8x128xf32>
    %380 = tpu.matmul %379, %10, %cst_113 {dimension_numbers = #tpu.dot_dimension_numbers<[1], [0], [0], [1], [0, 0, 1, 1], [], []>} : vector<8x4xf32>, vector<4x128xf32>, vector<8x128xf32> -> vector<8x128xf32>
    %381 = vector.extract_strided_slice %358 {offsets = [0, 4], sizes = [8, 128], strides = [1, 1]} : vector<8x132xf32> to vector<8x128xf32>
    %382 = arith.addf %380, %381 : vector<8x128xf32>
    %383 = arith.addf %382, %13 : vector<8x128xf32>
    %384 = arith.negf %383 : vector<8x128xf32>
    %385 = math.exp %384 : vector<8x128xf32>
    %cst_114 = arith.constant 1.000000e+00 : f32
    %386 = vector.broadcast %cst_114 : f32 to vector<8x128xf32>
    %387 = arith.addf %386, %385 : vector<8x128xf32>
    %388 = arith.divf %386, %387 : vector<8x128xf32>
    %389 = math.tanh %383 : vector<8x128xf32>
    %390 = vector.extract_strided_slice %388 {offsets = [0, 32], sizes = [8, 32], strides = [1, 1]} : vector<8x128xf32> to vector<8x32xf32>
    %391 = arith.mulf %390, %342 : vector<8x32xf32>
    %392 = vector.extract_strided_slice %388 {offsets = [0, 0], sizes = [8, 32], strides = [1, 1]} : vector<8x128xf32> to vector<8x32xf32>
    %393 = vector.extract_strided_slice %389 {offsets = [0, 64], sizes = [8, 32], strides = [1, 1]} : vector<8x128xf32> to vector<8x32xf32>
    %394 = arith.mulf %392, %393 : vector<8x32xf32>
    %395 = arith.addf %391, %394 : vector<8x32xf32>
    %396 = vector.extract_strided_slice %388 {offsets = [0, 96], sizes = [8, 32], strides = [1, 1]} : vector<8x128xf32> to vector<8x32xf32>
    %397 = math.tanh %395 : vector<8x32xf32>
    %398 = arith.mulf %396, %397 : vector<8x32xf32>
    %cst_115 = arith.constant dense<0.000000e+00> : vector<8x17xf32>
    %399 = tpu.matmul %398, %14, %cst_115 {dimension_numbers = #tpu.dot_dimension_numbers<[1], [0], [0], [1], [0, 0, 1, 1], [], []>} : vector<8x32xf32>, vector<32x17xf32>, vector<8x17xf32> -> vector<8x17xf32>
    %400 = vector.extract_strided_slice %399 {offsets = [0, 0], sizes = [8, 16], strides = [1, 1]} : vector<8x17xf32> to vector<8x16xf32>
    %401 = arith.addf %400, %17 : vector<8x16xf32>
    %c0_116 = arith.constant 0 : index
    %c96_117 = arith.constant 96 : index
    %402 = vector.load %arg4[%c0_116, %c96_117] : memref<8x128xf32, #tpu.memory_space<vmem>>, vector<8x16xf32>
    tpu.vector_store %arg4[%c0_116, %c96_117], %401 {strides = array<i32>} : memref<8x128xf32, #tpu.memory_space<vmem>>, vector<8x16xf32>,
    %403 = vector.extract_strided_slice %399 {offsets = [0, 16], sizes = [8, 1], strides = [1, 1]} : vector<8x17xf32> to vector<8x1xf32>
    %404 = vector.extract_strided_slice %18 {offsets = [6, 0], sizes = [1, 8], strides = [1, 1]} : vector<8x8xf32> to vector<1x8xf32>
    %405 = vector.broadcast %403 : vector<8x1xf32> to vector<8x8xf32>
    %406 = vector.broadcast %404 : vector<1x8xf32> to vector<8x8xf32>
    %407 = arith.mulf %405, %406 : vector<8x8xf32>
    %408 = arith.addf %355, %407 : vector<8x8xf32>
    %c7 = arith.constant 7 : index
    %c0_118 = arith.constant 0 : index
    %c0_119 = arith.constant 0 : index
    %409 = vector.load %arg1[%c7, %c0_118, %c0_119] : memref<8x8x4xf32, #tpu.memory_space<vmem>>, vector<1x8x4xf32>
    %410 = vector.shape_cast %409 : vector<1x8x4xf32> to vector<8x4xf32>
    %cst_120 = arith.constant dense<0.000000e+00> : vector<8x132xf32>
    %411 = tpu.matmul %398, %0, %cst_120 {dimension_numbers = #tpu.dot_dimension_numbers<[1], [0], [0], [1], [0, 0, 1, 1], [], []>} : vector<8x32xf32>, vector<32x132xf32>, vector<8x132xf32> -> vector<8x132xf32>
    %cst_121 = arith.constant dense<0.000000e+00> : vector<8x4xf32>
    %412 = tpu.matmul %410, %2, %cst_121 {dimension_numbers = #tpu.dot_dimension_numbers<[1], [0], [0], [1], [0, 0, 1, 1], [], []>} : vector<8x4xf32>, vector<4x4xf32>, vector<8x4xf32> -> vector<8x4xf32>
    %413 = arith.addf %412, %5 : vector<8x4xf32>
    %414 = vector.extract_strided_slice %411 {offsets = [0, 0], sizes = [8, 4], strides = [1, 1]} : vector<8x132xf32> to vector<8x4xf32>
    %415 = arith.addf %413, %414 : vector<8x4xf32>
    %cst_122 = arith.constant dense<0.000000e+00> : vector<8x4xf32>
    %416 = tpu.matmul %395, %1, %cst_122 {dimension_numbers = #tpu.dot_dimension_numbers<[1], [0], [0], [1], [0, 0, 1, 1], [], []>} : vector<8x32xf32>, vector<32x4xf32>, vector<8x4xf32> -> vector<8x4xf32>
    %417 = arith.addf %415, %416 : vector<8x4xf32>
    %cst_123 = arith.constant 0.000000e+00 : f32
    %418 = vector.broadcast %cst_123 : f32 to vector<8x4xf32>
    %419 = arith.maximumf %417, %418 : vector<8x4xf32>
    %cst_124 = arith.constant dense<0.000000e+00> : vector<8x4xf32>
    %420 = tpu.matmul %419, %6, %cst_124 {dimension_numbers = #tpu.dot_dimension_numbers<[1], [0], [0], [1], [0, 0, 1, 1], [], []>} : vector<8x4xf32>, vector<4x4xf32>, vector<8x4xf32> -> vector<8x4xf32>
    %421 = arith.addf %420, %9 : vector<8x4xf32>
    %cst_125 = arith.constant dense<0xFF800000> : vector<8xf32>
    %422 = vector.multi_reduction <maximumf>, %421, %cst_125 [1] : vector<8x4xf32> to vector<8xf32>
    %423 = vector.shape_cast %422 : vector<8xf32> to vector<8x1xf32>
    %424 = vector.broadcast %423 : vector<8x1xf32> to vector<8x4xf32>
    %425 = arith.subf %421, %424 : vector<8x4xf32>
    %426 = math.exp %425 : vector<8x4xf32>
    %cst_126 = arith.constant dense<0.000000e+00> : vector<8xf32>
    %427 = vector.multi_reduction <add>, %426, %cst_126 [1] : vector<8x4xf32> to vector<8xf32>
    %428 = vector.shape_cast %427 : vector<8xf32> to vector<8x1xf32>
    %429 = tpu.reciprocal %428 {approx = true} : vector<8x1xf32> -> vector<8x1xf32>
    %430 = vector.broadcast %429 : vector<8x1xf32> to vector<8x4xf32>
    %431 = arith.mulf %426, %430 : vector<8x4xf32>
    %432 = arith.mulf %410, %431 : vector<8x4xf32>
    %cst_127 = arith.constant dense<0.000000e+00> : vector<8x128xf32>
    %433 = tpu.matmul %432, %10, %cst_127 {dimension_numbers = #tpu.dot_dimension_numbers<[1], [0], [0], [1], [0, 0, 1, 1], [], []>} : vector<8x4xf32>, vector<4x128xf32>, vector<8x128xf32> -> vector<8x128xf32>
    %434 = vector.extract_strided_slice %411 {offsets = [0, 4], sizes = [8, 128], strides = [1, 1]} : vector<8x132xf32> to vector<8x128xf32>
    %435 = arith.addf %433, %434 : vector<8x128xf32>
    %436 = arith.addf %435, %13 : vector<8x128xf32>
    %437 = arith.negf %436 : vector<8x128xf32>
    %438 = math.exp %437 : vector<8x128xf32>
    %cst_128 = arith.constant 1.000000e+00 : f32
    %439 = vector.broadcast %cst_128 : f32 to vector<8x128xf32>
    %440 = arith.addf %439, %438 : vector<8x128xf32>
    %441 = arith.divf %439, %440 : vector<8x128xf32>
    %442 = math.tanh %436 : vector<8x128xf32>
    %443 = vector.extract_strided_slice %441 {offsets = [0, 32], sizes = [8, 32], strides = [1, 1]} : vector<8x128xf32> to vector<8x32xf32>
    %444 = arith.mulf %443, %395 : vector<8x32xf32>
    %445 = vector.extract_strided_slice %441 {offsets = [0, 0], sizes = [8, 32], strides = [1, 1]} : vector<8x128xf32> to vector<8x32xf32>
    %446 = vector.extract_strided_slice %442 {offsets = [0, 64], sizes = [8, 32], strides = [1, 1]} : vector<8x128xf32> to vector<8x32xf32>
    %447 = arith.mulf %445, %446 : vector<8x32xf32>
    %448 = arith.addf %444, %447 : vector<8x32xf32>
    %449 = vector.extract_strided_slice %441 {offsets = [0, 96], sizes = [8, 32], strides = [1, 1]} : vector<8x128xf32> to vector<8x32xf32>
    %450 = math.tanh %448 : vector<8x32xf32>
    %451 = arith.mulf %449, %450 : vector<8x32xf32>
    %cst_129 = arith.constant dense<0.000000e+00> : vector<8x17xf32>
    %452 = tpu.matmul %451, %14, %cst_129 {dimension_numbers = #tpu.dot_dimension_numbers<[1], [0], [0], [1], [0, 0, 1, 1], [], []>} : vector<8x32xf32>, vector<32x17xf32>, vector<8x17xf32> -> vector<8x17xf32>
    %453 = vector.extract_strided_slice %452 {offsets = [0, 0], sizes = [8, 16], strides = [1, 1]} : vector<8x17xf32> to vector<8x16xf32>
    %454 = arith.addf %453, %17 : vector<8x16xf32>
    %c0_130 = arith.constant 0 : index
    %c112_131 = arith.constant 112 : index
    %455 = vector.load %arg4[%c0_130, %c112_131] : memref<8x128xf32, #tpu.memory_space<vmem>>, vector<8x16xf32>
    tpu.vector_store %arg4[%c0_130, %c112_131], %454 {strides = array<i32>} : memref<8x128xf32, #tpu.memory_space<vmem>>, vector<8x16xf32>,
    %456 = vector.extract_strided_slice %452 {offsets = [0, 16], sizes = [8, 1], strides = [1, 1]} : vector<8x17xf32> to vector<8x1xf32>
    %457 = vector.extract_strided_slice %18 {offsets = [7, 0], sizes = [1, 8], strides = [1, 1]} : vector<8x8xf32> to vector<1x8xf32>
    %458 = vector.broadcast %456 : vector<8x1xf32> to vector<8x8xf32>
    %459 = vector.broadcast %457 : vector<1x8xf32> to vector<8x8xf32>
    %460 = arith.mulf %458, %459 : vector<8x8xf32>
    %461 = arith.addf %408, %460 : vector<8x8xf32>
    %c0_132 = arith.constant 0 : index
    %c0_133 = arith.constant 0 : index
    %462 = vector.load %arg4[%c0_132, %c0_133] : memref<8x128xf32, #tpu.memory_space<vmem>>, vector<8x128xf32>
    %cst_134 = arith.constant 0.000000e+00 : f32
    %463 = vector.broadcast %cst_134 : f32 to vector<8x32xf32>
    %cst_135 = arith.constant 0.000000e+00 : f32
    %464 = vector.broadcast %cst_135 : f32 to vector<8x32xf32>
    %cst_136 = arith.constant 0.000000e+00 : f32
    %465 = vector.broadcast %cst_136 : f32 to vector<8x8xf32>
    %466 = tpu.iota {dimensions = array<i32: 1>} : vector<1x8xi32>
    %cst_137 = arith.constant dense<0.000000e+00> : vector<8x136xf32>
    %467 = tpu.matmul %463, %20, %cst_137 {dimension_numbers = #tpu.dot_dimension_numbers<[1], [0], [0], [1], [0, 0, 1, 1], [], []>} : vector<8x32xf32>, vector<32x136xf32>, vector<8x136xf32> -> vector<8x136xf32>
    %468 = vector.extract_strided_slice %467 {offsets = [0, 0], sizes = [8, 8], strides = [1, 1]} : vector<8x136xf32> to vector<8x8xf32>
    %469 = arith.addf %461, %468 : vector<8x8xf32>
    %cst_138 = arith.constant dense<0.000000e+00> : vector<8x8xf32>
    %470 = tpu.matmul %464, %21, %cst_138 {dimension_numbers = #tpu.dot_dimension_numbers<[1], [0], [0], [1], [0, 0, 1, 1], [], []>} : vector<8x32xf32>, vector<32x8xf32>, vector<8x8xf32> -> vector<8x8xf32>
    %471 = arith.addf %469, %470 : vector<8x8xf32>
    %cst_139 = arith.constant 0.000000e+00 : f32
    %472 = vector.broadcast %cst_139 : f32 to vector<8x8xf32>
    %473 = arith.maximumf %471, %472 : vector<8x8xf32>
    %cst_140 = arith.constant dense<0.000000e+00> : vector<8x128xf32>
    %474 = tpu.matmul %473, %22, %cst_140 {dimension_numbers = #tpu.dot_dimension_numbers<[1], [0], [0], [1], [0, 0, 1, 1], [], []>} : vector<8x8xf32>, vector<8x128xf32>, vector<8x128xf32> -> vector<8x128xf32>
    %475 = arith.addf %474, %25 : vector<8x128xf32>
    %cst_141 = arith.constant dense<0xFF800000> : vector<8xf32>
    %476 = vector.multi_reduction <maximumf>, %475, %cst_141 [1] : vector<8x128xf32> to vector<8xf32>
    %477 = vector.shape_cast %476 : vector<8xf32> to vector<8x1xf32>
    %478 = vector.broadcast %477 : vector<8x1xf32> to vector<8x128xf32>
    %479 = arith.subf %475, %478 : vector<8x128xf32>
    %480 = math.exp %479 : vector<8x128xf32>
    %cst_142 = arith.constant 1.600000e+01 : f32
    %481 = vector.broadcast %cst_142 : f32 to vector<8x128xf32>
    %482 = arith.mulf %480, %481 : vector<8x128xf32>
    %cst_143 = arith.constant dense<0.000000e+00> : vector<8xf32>
    %483 = vector.multi_reduction <add>, %480, %cst_143 [1] : vector<8x128xf32> to vector<8xf32>
    %484 = vector.shape_cast %483 : vector<8xf32> to vector<8x1xf32>
    %485 = vector.broadcast %484 : vector<8x1xf32> to vector<8x128xf32>
    %486 = arith.divf %482, %485 : vector<8x128xf32>
    %487 = arith.mulf %462, %486 : vector<8x128xf32>
    %c16_i32 = arith.constant 16 : i32
    %488 = tpu.dynamic_rotate %487 by %c16_i32 dim 1 : vector<8x128xf32>, i32 -> vector<8x128xf32>
    %489 = arith.addf %487, %488 : vector<8x128xf32>
    %c32_i32 = arith.constant 32 : i32
    %490 = tpu.dynamic_rotate %489 by %c32_i32 dim 1 : vector<8x128xf32>, i32 -> vector<8x128xf32>
    %491 = arith.addf %489, %490 : vector<8x128xf32>
    %c64_i32 = arith.constant 64 : i32
    %492 = tpu.dynamic_rotate %491 by %c64_i32 dim 1 : vector<8x128xf32>, i32 -> vector<8x128xf32>
    %493 = arith.addf %491, %492 : vector<8x128xf32>
    %494 = vector.extract_strided_slice %493 {offsets = [0, 0], sizes = [8, 16], strides = [1, 1]} : vector<8x128xf32> to vector<8x16xf32>
    %cst_144 = arith.constant dense<0.000000e+00> : vector<8x129xf32>
    %495 = tpu.matmul %494, %26, %cst_144 {dimension_numbers = #tpu.dot_dimension_numbers<[1], [0], [0], [1], [0, 0, 1, 1], [], []>} : vector<8x16xf32>, vector<16x129xf32>, vector<8x129xf32> -> vector<8x129xf32>
    %496 = vector.extract_strided_slice %495 {offsets = [0, 0], sizes = [8, 128], strides = [1, 1]} : vector<8x129xf32> to vector<8x128xf32>
    %497 = vector.extract_strided_slice %467 {offsets = [0, 8], sizes = [8, 128], strides = [1, 1]} : vector<8x136xf32> to vector<8x128xf32>
    %498 = arith.addf %496, %497 : vector<8x128xf32>
    %499 = arith.addf %498, %29 : vector<8x128xf32>
    %500 = arith.negf %499 : vector<8x128xf32>
    %501 = math.exp %500 : vector<8x128xf32>
    %cst_145 = arith.constant 1.000000e+00 : f32
    %502 = vector.broadcast %cst_145 : f32 to vector<8x128xf32>
    %503 = arith.addf %502, %501 : vector<8x128xf32>
    %504 = arith.divf %502, %503 : vector<8x128xf32>
    %505 = math.tanh %499 : vector<8x128xf32>
    %506 = vector.extract_strided_slice %504 {offsets = [0, 32], sizes = [8, 32], strides = [1, 1]} : vector<8x128xf32> to vector<8x32xf32>
    %507 = arith.mulf %506, %464 : vector<8x32xf32>
    %508 = vector.extract_strided_slice %504 {offsets = [0, 0], sizes = [8, 32], strides = [1, 1]} : vector<8x128xf32> to vector<8x32xf32>
    %509 = vector.extract_strided_slice %505 {offsets = [0, 64], sizes = [8, 32], strides = [1, 1]} : vector<8x128xf32> to vector<8x32xf32>
    %510 = arith.mulf %508, %509 : vector<8x32xf32>
    %511 = arith.addf %507, %510 : vector<8x32xf32>
    %512 = vector.extract_strided_slice %504 {offsets = [0, 96], sizes = [8, 32], strides = [1, 1]} : vector<8x128xf32> to vector<8x32xf32>
    %513 = math.tanh %511 : vector<8x32xf32>
    %514 = arith.mulf %512, %513 : vector<8x32xf32>
    %515 = vector.extract_strided_slice %495 {offsets = [0, 128], sizes = [8, 1], strides = [1, 1]} : vector<8x129xf32> to vector<8x1xf32>
    %cst_146 = arith.constant dense<0.000000e+00> : vector<8x1xf32>
    %516 = tpu.matmul %514, %30, %cst_146 {dimension_numbers = #tpu.dot_dimension_numbers<[1], [0], [0], [1], [0, 0, 1, 1], [], []>} : vector<8x32xf32>, vector<32x1xf32>, vector<8x1xf32> -> vector<8x1xf32>
    %517 = arith.addf %515, %516 : vector<8x1xf32>
    %518 = arith.addf %517, %33 : vector<8x1xf32>
    %c0_i32 = arith.constant 0 : i32
    %519 = vector.broadcast %c0_i32 : i32 to vector<1x8xi32>
    %520 = arith.cmpi eq, %466, %519 : vector<1x8xi32>
    %521 = vector.shape_cast %520 : vector<1x8xi1> to vector<1x8xi1>
    %522 = vector.broadcast %521 : vector<1x8xi1> to vector<8x8xi1>
    %523 = vector.shape_cast %518 : vector<8x1xf32> to vector<8x1xf32>
    %524 = vector.broadcast %523 : vector<8x1xf32> to vector<8x8xf32>
    %525 = arith.select %522, %524, %465 : vector<8x8xi1>, vector<8x8xf32>
    %cst_147 = arith.constant dense<0.000000e+00> : vector<8x136xf32>
    %526 = tpu.matmul %514, %20, %cst_147 {dimension_numbers = #tpu.dot_dimension_numbers<[1], [0], [0], [1], [0, 0, 1, 1], [], []>} : vector<8x32xf32>, vector<32x136xf32>, vector<8x136xf32> -> vector<8x136xf32>
    %527 = vector.extract_strided_slice %526 {offsets = [0, 0], sizes = [8, 8], strides = [1, 1]} : vector<8x136xf32> to vector<8x8xf32>
    %528 = arith.addf %461, %527 : vector<8x8xf32>
    %cst_148 = arith.constant dense<0.000000e+00> : vector<8x8xf32>
    %529 = tpu.matmul %511, %21, %cst_148 {dimension_numbers = #tpu.dot_dimension_numbers<[1], [0], [0], [1], [0, 0, 1, 1], [], []>} : vector<8x32xf32>, vector<32x8xf32>, vector<8x8xf32> -> vector<8x8xf32>
    %530 = arith.addf %528, %529 : vector<8x8xf32>
    %cst_149 = arith.constant 0.000000e+00 : f32
    %531 = vector.broadcast %cst_149 : f32 to vector<8x8xf32>
    %532 = arith.maximumf %530, %531 : vector<8x8xf32>
    %cst_150 = arith.constant dense<0.000000e+00> : vector<8x128xf32>
    %533 = tpu.matmul %532, %22, %cst_150 {dimension_numbers = #tpu.dot_dimension_numbers<[1], [0], [0], [1], [0, 0, 1, 1], [], []>} : vector<8x8xf32>, vector<8x128xf32>, vector<8x128xf32> -> vector<8x128xf32>
    %534 = arith.addf %533, %25 : vector<8x128xf32>
    %cst_151 = arith.constant dense<0xFF800000> : vector<8xf32>
    %535 = vector.multi_reduction <maximumf>, %534, %cst_151 [1] : vector<8x128xf32> to vector<8xf32>
    %536 = vector.shape_cast %535 : vector<8xf32> to vector<8x1xf32>
    %537 = vector.broadcast %536 : vector<8x1xf32> to vector<8x128xf32>
    %538 = arith.subf %534, %537 : vector<8x128xf32>
    %539 = math.exp %538 : vector<8x128xf32>
    %cst_152 = arith.constant 1.600000e+01 : f32
    %540 = vector.broadcast %cst_152 : f32 to vector<8x128xf32>
    %541 = arith.mulf %539, %540 : vector<8x128xf32>
    %cst_153 = arith.constant dense<0.000000e+00> : vector<8xf32>
    %542 = vector.multi_reduction <add>, %539, %cst_153 [1] : vector<8x128xf32> to vector<8xf32>
    %543 = vector.shape_cast %542 : vector<8xf32> to vector<8x1xf32>
    %544 = vector.broadcast %543 : vector<8x1xf32> to vector<8x128xf32>
    %545 = arith.divf %541, %544 : vector<8x128xf32>
    %546 = arith.mulf %462, %545 : vector<8x128xf32>
    %c16_i32_154 = arith.constant 16 : i32
    %547 = tpu.dynamic_rotate %546 by %c16_i32_154 dim 1 : vector<8x128xf32>, i32 -> vector<8x128xf32>
    %548 = arith.addf %546, %547 : vector<8x128xf32>
    %c32_i32_155 = arith.constant 32 : i32
    %549 = tpu.dynamic_rotate %548 by %c32_i32_155 dim 1 : vector<8x128xf32>, i32 -> vector<8x128xf32>
    %550 = arith.addf %548, %549 : vector<8x128xf32>
    %c64_i32_156 = arith.constant 64 : i32
    %551 = tpu.dynamic_rotate %550 by %c64_i32_156 dim 1 : vector<8x128xf32>, i32 -> vector<8x128xf32>
    %552 = arith.addf %550, %551 : vector<8x128xf32>
    %553 = vector.extract_strided_slice %552 {offsets = [0, 0], sizes = [8, 16], strides = [1, 1]} : vector<8x128xf32> to vector<8x16xf32>
    %cst_157 = arith.constant dense<0.000000e+00> : vector<8x129xf32>
    %554 = tpu.matmul %553, %26, %cst_157 {dimension_numbers = #tpu.dot_dimension_numbers<[1], [0], [0], [1], [0, 0, 1, 1], [], []>} : vector<8x16xf32>, vector<16x129xf32>, vector<8x129xf32> -> vector<8x129xf32>
    %555 = vector.extract_strided_slice %554 {offsets = [0, 0], sizes = [8, 128], strides = [1, 1]} : vector<8x129xf32> to vector<8x128xf32>
    %556 = vector.extract_strided_slice %526 {offsets = [0, 8], sizes = [8, 128], strides = [1, 1]} : vector<8x136xf32> to vector<8x128xf32>
    %557 = arith.addf %555, %556 : vector<8x128xf32>
    %558 = arith.addf %557, %29 : vector<8x128xf32>
    %559 = arith.negf %558 : vector<8x128xf32>
    %560 = math.exp %559 : vector<8x128xf32>
    %cst_158 = arith.constant 1.000000e+00 : f32
    %561 = vector.broadcast %cst_158 : f32 to vector<8x128xf32>
    %562 = arith.addf %561, %560 : vector<8x128xf32>
    %563 = arith.divf %561, %562 : vector<8x128xf32>
    %564 = math.tanh %558 : vector<8x128xf32>
    %565 = vector.extract_strided_slice %563 {offsets = [0, 32], sizes = [8, 32], strides = [1, 1]} : vector<8x128xf32> to vector<8x32xf32>
    %566 = arith.mulf %565, %511 : vector<8x32xf32>
    %567 = vector.extract_strided_slice %563 {offsets = [0, 0], sizes = [8, 32], strides = [1, 1]} : vector<8x128xf32> to vector<8x32xf32>
    %568 = vector.extract_strided_slice %564 {offsets = [0, 64], sizes = [8, 32], strides = [1, 1]} : vector<8x128xf32> to vector<8x32xf32>
    %569 = arith.mulf %567, %568 : vector<8x32xf32>
    %570 = arith.addf %566, %569 : vector<8x32xf32>
    %571 = vector.extract_strided_slice %563 {offsets = [0, 96], sizes = [8, 32], strides = [1, 1]} : vector<8x128xf32> to vector<8x32xf32>
    %572 = math.tanh %570 : vector<8x32xf32>
    %573 = arith.mulf %571, %572 : vector<8x32xf32>
    %574 = vector.extract_strided_slice %554 {offsets = [0, 128], sizes = [8, 1], strides = [1, 1]} : vector<8x129xf32> to vector<8x1xf32>
    %cst_159 = arith.constant dense<0.000000e+00> : vector<8x1xf32>
    %575 = tpu.matmul %573, %30, %cst_159 {dimension_numbers = #tpu.dot_dimension_numbers<[1], [0], [0], [1], [0, 0, 1, 1], [], []>} : vector<8x32xf32>, vector<32x1xf32>, vector<8x1xf32> -> vector<8x1xf32>
    %576 = arith.addf %574, %575 : vector<8x1xf32>
    %577 = arith.addf %576, %33 : vector<8x1xf32>
    %c1_i32 = arith.constant 1 : i32
    %578 = vector.broadcast %c1_i32 : i32 to vector<1x8xi32>
    %579 = arith.cmpi eq, %466, %578 : vector<1x8xi32>
    %580 = vector.shape_cast %579 : vector<1x8xi1> to vector<1x8xi1>
    %581 = vector.broadcast %580 : vector<1x8xi1> to vector<8x8xi1>
    %582 = vector.shape_cast %577 : vector<8x1xf32> to vector<8x1xf32>
    %583 = vector.broadcast %582 : vector<8x1xf32> to vector<8x8xf32>
    %584 = arith.select %581, %583, %525 : vector<8x8xi1>, vector<8x8xf32>
    %cst_160 = arith.constant dense<0.000000e+00> : vector<8x136xf32>
    %585 = tpu.matmul %573, %20, %cst_160 {dimension_numbers = #tpu.dot_dimension_numbers<[1], [0], [0], [1], [0, 0, 1, 1], [], []>} : vector<8x32xf32>, vector<32x136xf32>, vector<8x136xf32> -> vector<8x136xf32>
    %586 = vector.extract_strided_slice %585 {offsets = [0, 0], sizes = [8, 8], strides = [1, 1]} : vector<8x136xf32> to vector<8x8xf32>
    %587 = arith.addf %461, %586 : vector<8x8xf32>
    %cst_161 = arith.constant dense<0.000000e+00> : vector<8x8xf32>
    %588 = tpu.matmul %570, %21, %cst_161 {dimension_numbers = #tpu.dot_dimension_numbers<[1], [0], [0], [1], [0, 0, 1, 1], [], []>} : vector<8x32xf32>, vector<32x8xf32>, vector<8x8xf32> -> vector<8x8xf32>
    %589 = arith.addf %587, %588 : vector<8x8xf32>
    %cst_162 = arith.constant 0.000000e+00 : f32
    %590 = vector.broadcast %cst_162 : f32 to vector<8x8xf32>
    %591 = arith.maximumf %589, %590 : vector<8x8xf32>
    %cst_163 = arith.constant dense<0.000000e+00> : vector<8x128xf32>
    %592 = tpu.matmul %591, %22, %cst_163 {dimension_numbers = #tpu.dot_dimension_numbers<[1], [0], [0], [1], [0, 0, 1, 1], [], []>} : vector<8x8xf32>, vector<8x128xf32>, vector<8x128xf32> -> vector<8x128xf32>
    %593 = arith.addf %592, %25 : vector<8x128xf32>
    %cst_164 = arith.constant dense<0xFF800000> : vector<8xf32>
    %594 = vector.multi_reduction <maximumf>, %593, %cst_164 [1] : vector<8x128xf32> to vector<8xf32>
    %595 = vector.shape_cast %594 : vector<8xf32> to vector<8x1xf32>
    %596 = vector.broadcast %595 : vector<8x1xf32> to vector<8x128xf32>
    %597 = arith.subf %593, %596 : vector<8x128xf32>
    %598 = math.exp %597 : vector<8x128xf32>
    %cst_165 = arith.constant 1.600000e+01 : f32
    %599 = vector.broadcast %cst_165 : f32 to vector<8x128xf32>
    %600 = arith.mulf %598, %599 : vector<8x128xf32>
    %cst_166 = arith.constant dense<0.000000e+00> : vector<8xf32>
    %601 = vector.multi_reduction <add>, %598, %cst_166 [1] : vector<8x128xf32> to vector<8xf32>
    %602 = vector.shape_cast %601 : vector<8xf32> to vector<8x1xf32>
    %603 = vector.broadcast %602 : vector<8x1xf32> to vector<8x128xf32>
    %604 = arith.divf %600, %603 : vector<8x128xf32>
    %605 = arith.mulf %462, %604 : vector<8x128xf32>
    %c16_i32_167 = arith.constant 16 : i32
    %606 = tpu.dynamic_rotate %605 by %c16_i32_167 dim 1 : vector<8x128xf32>, i32 -> vector<8x128xf32>
    %607 = arith.addf %605, %606 : vector<8x128xf32>
    %c32_i32_168 = arith.constant 32 : i32
    %608 = tpu.dynamic_rotate %607 by %c32_i32_168 dim 1 : vector<8x128xf32>, i32 -> vector<8x128xf32>
    %609 = arith.addf %607, %608 : vector<8x128xf32>
    %c64_i32_169 = arith.constant 64 : i32
    %610 = tpu.dynamic_rotate %609 by %c64_i32_169 dim 1 : vector<8x128xf32>, i32 -> vector<8x128xf32>
    %611 = arith.addf %609, %610 : vector<8x128xf32>
    %612 = vector.extract_strided_slice %611 {offsets = [0, 0], sizes = [8, 16], strides = [1, 1]} : vector<8x128xf32> to vector<8x16xf32>
    %cst_170 = arith.constant dense<0.000000e+00> : vector<8x129xf32>
    %613 = tpu.matmul %612, %26, %cst_170 {dimension_numbers = #tpu.dot_dimension_numbers<[1], [0], [0], [1], [0, 0, 1, 1], [], []>} : vector<8x16xf32>, vector<16x129xf32>, vector<8x129xf32> -> vector<8x129xf32>
    %614 = vector.extract_strided_slice %613 {offsets = [0, 0], sizes = [8, 128], strides = [1, 1]} : vector<8x129xf32> to vector<8x128xf32>
    %615 = vector.extract_strided_slice %585 {offsets = [0, 8], sizes = [8, 128], strides = [1, 1]} : vector<8x136xf32> to vector<8x128xf32>
    %616 = arith.addf %614, %615 : vector<8x128xf32>
    %617 = arith.addf %616, %29 : vector<8x128xf32>
    %618 = arith.negf %617 : vector<8x128xf32>
    %619 = math.exp %618 : vector<8x128xf32>
    %cst_171 = arith.constant 1.000000e+00 : f32
    %620 = vector.broadcast %cst_171 : f32 to vector<8x128xf32>
    %621 = arith.addf %620, %619 : vector<8x128xf32>
    %622 = arith.divf %620, %621 : vector<8x128xf32>
    %623 = math.tanh %617 : vector<8x128xf32>
    %624 = vector.extract_strided_slice %622 {offsets = [0, 32], sizes = [8, 32], strides = [1, 1]} : vector<8x128xf32> to vector<8x32xf32>
    %625 = arith.mulf %624, %570 : vector<8x32xf32>
    %626 = vector.extract_strided_slice %622 {offsets = [0, 0], sizes = [8, 32], strides = [1, 1]} : vector<8x128xf32> to vector<8x32xf32>
    %627 = vector.extract_strided_slice %623 {offsets = [0, 64], sizes = [8, 32], strides = [1, 1]} : vector<8x128xf32> to vector<8x32xf32>
    %628 = arith.mulf %626, %627 : vector<8x32xf32>
    %629 = arith.addf %625, %628 : vector<8x32xf32>
    %630 = vector.extract_strided_slice %622 {offsets = [0, 96], sizes = [8, 32], strides = [1, 1]} : vector<8x128xf32> to vector<8x32xf32>
    %631 = math.tanh %629 : vector<8x32xf32>
    %632 = arith.mulf %630, %631 : vector<8x32xf32>
    %633 = vector.extract_strided_slice %613 {offsets = [0, 128], sizes = [8, 1], strides = [1, 1]} : vector<8x129xf32> to vector<8x1xf32>
    %cst_172 = arith.constant dense<0.000000e+00> : vector<8x1xf32>
    %634 = tpu.matmul %632, %30, %cst_172 {dimension_numbers = #tpu.dot_dimension_numbers<[1], [0], [0], [1], [0, 0, 1, 1], [], []>} : vector<8x32xf32>, vector<32x1xf32>, vector<8x1xf32> -> vector<8x1xf32>
    %635 = arith.addf %633, %634 : vector<8x1xf32>
    %636 = arith.addf %635, %33 : vector<8x1xf32>
    %c2_i32 = arith.constant 2 : i32
    %637 = vector.broadcast %c2_i32 : i32 to vector<1x8xi32>
    %638 = arith.cmpi eq, %466, %637 : vector<1x8xi32>
    %639 = vector.shape_cast %638 : vector<1x8xi1> to vector<1x8xi1>
    %640 = vector.broadcast %639 : vector<1x8xi1> to vector<8x8xi1>
    %641 = vector.shape_cast %636 : vector<8x1xf32> to vector<8x1xf32>
    %642 = vector.broadcast %641 : vector<8x1xf32> to vector<8x8xf32>
    %643 = arith.select %640, %642, %584 : vector<8x8xi1>, vector<8x8xf32>
    %cst_173 = arith.constant dense<0.000000e+00> : vector<8x136xf32>
    %644 = tpu.matmul %632, %20, %cst_173 {dimension_numbers = #tpu.dot_dimension_numbers<[1], [0], [0], [1], [0, 0, 1, 1], [], []>} : vector<8x32xf32>, vector<32x136xf32>, vector<8x136xf32> -> vector<8x136xf32>
    %645 = vector.extract_strided_slice %644 {offsets = [0, 0], sizes = [8, 8], strides = [1, 1]} : vector<8x136xf32> to vector<8x8xf32>
    %646 = arith.addf %461, %645 : vector<8x8xf32>
    %cst_174 = arith.constant dense<0.000000e+00> : vector<8x8xf32>
    %647 = tpu.matmul %629, %21, %cst_174 {dimension_numbers = #tpu.dot_dimension_numbers<[1], [0], [0], [1], [0, 0, 1, 1], [], []>} : vector<8x32xf32>, vector<32x8xf32>, vector<8x8xf32> -> vector<8x8xf32>
    %648 = arith.addf %646, %647 : vector<8x8xf32>
    %cst_175 = arith.constant 0.000000e+00 : f32
    %649 = vector.broadcast %cst_175 : f32 to vector<8x8xf32>
    %650 = arith.maximumf %648, %649 : vector<8x8xf32>
    %cst_176 = arith.constant dense<0.000000e+00> : vector<8x128xf32>
    %651 = tpu.matmul %650, %22, %cst_176 {dimension_numbers = #tpu.dot_dimension_numbers<[1], [0], [0], [1], [0, 0, 1, 1], [], []>} : vector<8x8xf32>, vector<8x128xf32>, vector<8x128xf32> -> vector<8x128xf32>
    %652 = arith.addf %651, %25 : vector<8x128xf32>
    %cst_177 = arith.constant dense<0xFF800000> : vector<8xf32>
    %653 = vector.multi_reduction <maximumf>, %652, %cst_177 [1] : vector<8x128xf32> to vector<8xf32>
    %654 = vector.shape_cast %653 : vector<8xf32> to vector<8x1xf32>
    %655 = vector.broadcast %654 : vector<8x1xf32> to vector<8x128xf32>
    %656 = arith.subf %652, %655 : vector<8x128xf32>
    %657 = math.exp %656 : vector<8x128xf32>
    %cst_178 = arith.constant 1.600000e+01 : f32
    %658 = vector.broadcast %cst_178 : f32 to vector<8x128xf32>
    %659 = arith.mulf %657, %658 : vector<8x128xf32>
    %cst_179 = arith.constant dense<0.000000e+00> : vector<8xf32>
    %660 = vector.multi_reduction <add>, %657, %cst_179 [1] : vector<8x128xf32> to vector<8xf32>
    %661 = vector.shape_cast %660 : vector<8xf32> to vector<8x1xf32>
    %662 = vector.broadcast %661 : vector<8x1xf32> to vector<8x128xf32>
    %663 = arith.divf %659, %662 : vector<8x128xf32>
    %664 = arith.mulf %462, %663 : vector<8x128xf32>
    %c16_i32_180 = arith.constant 16 : i32
    %665 = tpu.dynamic_rotate %664 by %c16_i32_180 dim 1 : vector<8x128xf32>, i32 -> vector<8x128xf32>
    %666 = arith.addf %664, %665 : vector<8x128xf32>
    %c32_i32_181 = arith.constant 32 : i32
    %667 = tpu.dynamic_rotate %666 by %c32_i32_181 dim 1 : vector<8x128xf32>, i32 -> vector<8x128xf32>
    %668 = arith.addf %666, %667 : vector<8x128xf32>
    %c64_i32_182 = arith.constant 64 : i32
    %669 = tpu.dynamic_rotate %668 by %c64_i32_182 dim 1 : vector<8x128xf32>, i32 -> vector<8x128xf32>
    %670 = arith.addf %668, %669 : vector<8x128xf32>
    %671 = vector.extract_strided_slice %670 {offsets = [0, 0], sizes = [8, 16], strides = [1, 1]} : vector<8x128xf32> to vector<8x16xf32>
    %cst_183 = arith.constant dense<0.000000e+00> : vector<8x129xf32>
    %672 = tpu.matmul %671, %26, %cst_183 {dimension_numbers = #tpu.dot_dimension_numbers<[1], [0], [0], [1], [0, 0, 1, 1], [], []>} : vector<8x16xf32>, vector<16x129xf32>, vector<8x129xf32> -> vector<8x129xf32>
    %673 = vector.extract_strided_slice %672 {offsets = [0, 0], sizes = [8, 128], strides = [1, 1]} : vector<8x129xf32> to vector<8x128xf32>
    %674 = vector.extract_strided_slice %644 {offsets = [0, 8], sizes = [8, 128], strides = [1, 1]} : vector<8x136xf32> to vector<8x128xf32>
    %675 = arith.addf %673, %674 : vector<8x128xf32>
    %676 = arith.addf %675, %29 : vector<8x128xf32>
    %677 = arith.negf %676 : vector<8x128xf32>
    %678 = math.exp %677 : vector<8x128xf32>
    %cst_184 = arith.constant 1.000000e+00 : f32
    %679 = vector.broadcast %cst_184 : f32 to vector<8x128xf32>
    %680 = arith.addf %679, %678 : vector<8x128xf32>
    %681 = arith.divf %679, %680 : vector<8x128xf32>
    %682 = math.tanh %676 : vector<8x128xf32>
    %683 = vector.extract_strided_slice %681 {offsets = [0, 32], sizes = [8, 32], strides = [1, 1]} : vector<8x128xf32> to vector<8x32xf32>
    %684 = arith.mulf %683, %629 : vector<8x32xf32>
    %685 = vector.extract_strided_slice %681 {offsets = [0, 0], sizes = [8, 32], strides = [1, 1]} : vector<8x128xf32> to vector<8x32xf32>
    %686 = vector.extract_strided_slice %682 {offsets = [0, 64], sizes = [8, 32], strides = [1, 1]} : vector<8x128xf32> to vector<8x32xf32>
    %687 = arith.mulf %685, %686 : vector<8x32xf32>
    %688 = arith.addf %684, %687 : vector<8x32xf32>
    %689 = vector.extract_strided_slice %681 {offsets = [0, 96], sizes = [8, 32], strides = [1, 1]} : vector<8x128xf32> to vector<8x32xf32>
    %690 = math.tanh %688 : vector<8x32xf32>
    %691 = arith.mulf %689, %690 : vector<8x32xf32>
    %692 = vector.extract_strided_slice %672 {offsets = [0, 128], sizes = [8, 1], strides = [1, 1]} : vector<8x129xf32> to vector<8x1xf32>
    %cst_185 = arith.constant dense<0.000000e+00> : vector<8x1xf32>
    %693 = tpu.matmul %691, %30, %cst_185 {dimension_numbers = #tpu.dot_dimension_numbers<[1], [0], [0], [1], [0, 0, 1, 1], [], []>} : vector<8x32xf32>, vector<32x1xf32>, vector<8x1xf32> -> vector<8x1xf32>
    %694 = arith.addf %692, %693 : vector<8x1xf32>
    %695 = arith.addf %694, %33 : vector<8x1xf32>
    %c3_i32 = arith.constant 3 : i32
    %696 = vector.broadcast %c3_i32 : i32 to vector<1x8xi32>
    %697 = arith.cmpi eq, %466, %696 : vector<1x8xi32>
    %698 = vector.shape_cast %697 : vector<1x8xi1> to vector<1x8xi1>
    %699 = vector.broadcast %698 : vector<1x8xi1> to vector<8x8xi1>
    %700 = vector.shape_cast %695 : vector<8x1xf32> to vector<8x1xf32>
    %701 = vector.broadcast %700 : vector<8x1xf32> to vector<8x8xf32>
    %702 = arith.select %699, %701, %643 : vector<8x8xi1>, vector<8x8xf32>
    %cst_186 = arith.constant dense<0.000000e+00> : vector<8x136xf32>
    %703 = tpu.matmul %691, %20, %cst_186 {dimension_numbers = #tpu.dot_dimension_numbers<[1], [0], [0], [1], [0, 0, 1, 1], [], []>} : vector<8x32xf32>, vector<32x136xf32>, vector<8x136xf32> -> vector<8x136xf32>
    %704 = vector.extract_strided_slice %703 {offsets = [0, 0], sizes = [8, 8], strides = [1, 1]} : vector<8x136xf32> to vector<8x8xf32>
    %705 = arith.addf %461, %704 : vector<8x8xf32>
    %cst_187 = arith.constant dense<0.000000e+00> : vector<8x8xf32>
    %706 = tpu.matmul %688, %21, %cst_187 {dimension_numbers = #tpu.dot_dimension_numbers<[1], [0], [0], [1], [0, 0, 1, 1], [], []>} : vector<8x32xf32>, vector<32x8xf32>, vector<8x8xf32> -> vector<8x8xf32>
    %707 = arith.addf %705, %706 : vector<8x8xf32>
    %cst_188 = arith.constant 0.000000e+00 : f32
    %708 = vector.broadcast %cst_188 : f32 to vector<8x8xf32>
    %709 = arith.maximumf %707, %708 : vector<8x8xf32>
    %cst_189 = arith.constant dense<0.000000e+00> : vector<8x128xf32>
    %710 = tpu.matmul %709, %22, %cst_189 {dimension_numbers = #tpu.dot_dimension_numbers<[1], [0], [0], [1], [0, 0, 1, 1], [], []>} : vector<8x8xf32>, vector<8x128xf32>, vector<8x128xf32> -> vector<8x128xf32>
    %711 = arith.addf %710, %25 : vector<8x128xf32>
    %cst_190 = arith.constant dense<0xFF800000> : vector<8xf32>
    %712 = vector.multi_reduction <maximumf>, %711, %cst_190 [1] : vector<8x128xf32> to vector<8xf32>
    %713 = vector.shape_cast %712 : vector<8xf32> to vector<8x1xf32>
    %714 = vector.broadcast %713 : vector<8x1xf32> to vector<8x128xf32>
    %715 = arith.subf %711, %714 : vector<8x128xf32>
    %716 = math.exp %715 : vector<8x128xf32>
    %cst_191 = arith.constant 1.600000e+01 : f32
    %717 = vector.broadcast %cst_191 : f32 to vector<8x128xf32>
    %718 = arith.mulf %716, %717 : vector<8x128xf32>
    %cst_192 = arith.constant dense<0.000000e+00> : vector<8xf32>
    %719 = vector.multi_reduction <add>, %716, %cst_192 [1] : vector<8x128xf32> to vector<8xf32>
    %720 = vector.shape_cast %719 : vector<8xf32> to vector<8x1xf32>
    %721 = vector.broadcast %720 : vector<8x1xf32> to vector<8x128xf32>
    %722 = arith.divf %718, %721 : vector<8x128xf32>
    %723 = arith.mulf %462, %722 : vector<8x128xf32>
    %c16_i32_193 = arith.constant 16 : i32
    %724 = tpu.dynamic_rotate %723 by %c16_i32_193 dim 1 : vector<8x128xf32>, i32 -> vector<8x128xf32>
    %725 = arith.addf %723, %724 : vector<8x128xf32>
    %c32_i32_194 = arith.constant 32 : i32
    %726 = tpu.dynamic_rotate %725 by %c32_i32_194 dim 1 : vector<8x128xf32>, i32 -> vector<8x128xf32>
    %727 = arith.addf %725, %726 : vector<8x128xf32>
    %c64_i32_195 = arith.constant 64 : i32
    %728 = tpu.dynamic_rotate %727 by %c64_i32_195 dim 1 : vector<8x128xf32>, i32 -> vector<8x128xf32>
    %729 = arith.addf %727, %728 : vector<8x128xf32>
    %730 = vector.extract_strided_slice %729 {offsets = [0, 0], sizes = [8, 16], strides = [1, 1]} : vector<8x128xf32> to vector<8x16xf32>
    %cst_196 = arith.constant dense<0.000000e+00> : vector<8x129xf32>
    %731 = tpu.matmul %730, %26, %cst_196 {dimension_numbers = #tpu.dot_dimension_numbers<[1], [0], [0], [1], [0, 0, 1, 1], [], []>} : vector<8x16xf32>, vector<16x129xf32>, vector<8x129xf32> -> vector<8x129xf32>
    %732 = vector.extract_strided_slice %731 {offsets = [0, 0], sizes = [8, 128], strides = [1, 1]} : vector<8x129xf32> to vector<8x128xf32>
    %733 = vector.extract_strided_slice %703 {offsets = [0, 8], sizes = [8, 128], strides = [1, 1]} : vector<8x136xf32> to vector<8x128xf32>
    %734 = arith.addf %732, %733 : vector<8x128xf32>
    %735 = arith.addf %734, %29 : vector<8x128xf32>
    %736 = arith.negf %735 : vector<8x128xf32>
    %737 = math.exp %736 : vector<8x128xf32>
    %cst_197 = arith.constant 1.000000e+00 : f32
    %738 = vector.broadcast %cst_197 : f32 to vector<8x128xf32>
    %739 = arith.addf %738, %737 : vector<8x128xf32>
    %740 = arith.divf %738, %739 : vector<8x128xf32>
    %741 = math.tanh %735 : vector<8x128xf32>
    %742 = vector.extract_strided_slice %740 {offsets = [0, 32], sizes = [8, 32], strides = [1, 1]} : vector<8x128xf32> to vector<8x32xf32>
    %743 = arith.mulf %742, %688 : vector<8x32xf32>
    %744 = vector.extract_strided_slice %740 {offsets = [0, 0], sizes = [8, 32], strides = [1, 1]} : vector<8x128xf32> to vector<8x32xf32>
    %745 = vector.extract_strided_slice %741 {offsets = [0, 64], sizes = [8, 32], strides = [1, 1]} : vector<8x128xf32> to vector<8x32xf32>
    %746 = arith.mulf %744, %745 : vector<8x32xf32>
    %747 = arith.addf %743, %746 : vector<8x32xf32>
    %748 = vector.extract_strided_slice %740 {offsets = [0, 96], sizes = [8, 32], strides = [1, 1]} : vector<8x128xf32> to vector<8x32xf32>
    %749 = math.tanh %747 : vector<8x32xf32>
    %750 = arith.mulf %748, %749 : vector<8x32xf32>
    %751 = vector.extract_strided_slice %731 {offsets = [0, 128], sizes = [8, 1], strides = [1, 1]} : vector<8x129xf32> to vector<8x1xf32>
    %cst_198 = arith.constant dense<0.000000e+00> : vector<8x1xf32>
    %752 = tpu.matmul %750, %30, %cst_198 {dimension_numbers = #tpu.dot_dimension_numbers<[1], [0], [0], [1], [0, 0, 1, 1], [], []>} : vector<8x32xf32>, vector<32x1xf32>, vector<8x1xf32> -> vector<8x1xf32>
    %753 = arith.addf %751, %752 : vector<8x1xf32>
    %754 = arith.addf %753, %33 : vector<8x1xf32>
    %c4_i32 = arith.constant 4 : i32
    %755 = vector.broadcast %c4_i32 : i32 to vector<1x8xi32>
    %756 = arith.cmpi eq, %466, %755 : vector<1x8xi32>
    %757 = vector.shape_cast %756 : vector<1x8xi1> to vector<1x8xi1>
    %758 = vector.broadcast %757 : vector<1x8xi1> to vector<8x8xi1>
    %759 = vector.shape_cast %754 : vector<8x1xf32> to vector<8x1xf32>
    %760 = vector.broadcast %759 : vector<8x1xf32> to vector<8x8xf32>
    %761 = arith.select %758, %760, %702 : vector<8x8xi1>, vector<8x8xf32>
    %cst_199 = arith.constant dense<0.000000e+00> : vector<8x136xf32>
    %762 = tpu.matmul %750, %20, %cst_199 {dimension_numbers = #tpu.dot_dimension_numbers<[1], [0], [0], [1], [0, 0, 1, 1], [], []>} : vector<8x32xf32>, vector<32x136xf32>, vector<8x136xf32> -> vector<8x136xf32>
    %763 = vector.extract_strided_slice %762 {offsets = [0, 0], sizes = [8, 8], strides = [1, 1]} : vector<8x136xf32> to vector<8x8xf32>
    %764 = arith.addf %461, %763 : vector<8x8xf32>
    %cst_200 = arith.constant dense<0.000000e+00> : vector<8x8xf32>
    %765 = tpu.matmul %747, %21, %cst_200 {dimension_numbers = #tpu.dot_dimension_numbers<[1], [0], [0], [1], [0, 0, 1, 1], [], []>} : vector<8x32xf32>, vector<32x8xf32>, vector<8x8xf32> -> vector<8x8xf32>
    %766 = arith.addf %764, %765 : vector<8x8xf32>
    %cst_201 = arith.constant 0.000000e+00 : f32
    %767 = vector.broadcast %cst_201 : f32 to vector<8x8xf32>
    %768 = arith.maximumf %766, %767 : vector<8x8xf32>
    %cst_202 = arith.constant dense<0.000000e+00> : vector<8x128xf32>
    %769 = tpu.matmul %768, %22, %cst_202 {dimension_numbers = #tpu.dot_dimension_numbers<[1], [0], [0], [1], [0, 0, 1, 1], [], []>} : vector<8x8xf32>, vector<8x128xf32>, vector<8x128xf32> -> vector<8x128xf32>
    %770 = arith.addf %769, %25 : vector<8x128xf32>
    %cst_203 = arith.constant dense<0xFF800000> : vector<8xf32>
    %771 = vector.multi_reduction <maximumf>, %770, %cst_203 [1] : vector<8x128xf32> to vector<8xf32>
    %772 = vector.shape_cast %771 : vector<8xf32> to vector<8x1xf32>
    %773 = vector.broadcast %772 : vector<8x1xf32> to vector<8x128xf32>
    %774 = arith.subf %770, %773 : vector<8x128xf32>
    %775 = math.exp %774 : vector<8x128xf32>
    %cst_204 = arith.constant 1.600000e+01 : f32
    %776 = vector.broadcast %cst_204 : f32 to vector<8x128xf32>
    %777 = arith.mulf %775, %776 : vector<8x128xf32>
    %cst_205 = arith.constant dense<0.000000e+00> : vector<8xf32>
    %778 = vector.multi_reduction <add>, %775, %cst_205 [1] : vector<8x128xf32> to vector<8xf32>
    %779 = vector.shape_cast %778 : vector<8xf32> to vector<8x1xf32>
    %780 = vector.broadcast %779 : vector<8x1xf32> to vector<8x128xf32>
    %781 = arith.divf %777, %780 : vector<8x128xf32>
    %782 = arith.mulf %462, %781 : vector<8x128xf32>
    %c16_i32_206 = arith.constant 16 : i32
    %783 = tpu.dynamic_rotate %782 by %c16_i32_206 dim 1 : vector<8x128xf32>, i32 -> vector<8x128xf32>
    %784 = arith.addf %782, %783 : vector<8x128xf32>
    %c32_i32_207 = arith.constant 32 : i32
    %785 = tpu.dynamic_rotate %784 by %c32_i32_207 dim 1 : vector<8x128xf32>, i32 -> vector<8x128xf32>
    %786 = arith.addf %784, %785 : vector<8x128xf32>
    %c64_i32_208 = arith.constant 64 : i32
    %787 = tpu.dynamic_rotate %786 by %c64_i32_208 dim 1 : vector<8x128xf32>, i32 -> vector<8x128xf32>
    %788 = arith.addf %786, %787 : vector<8x128xf32>
    %789 = vector.extract_strided_slice %788 {offsets = [0, 0], sizes = [8, 16], strides = [1, 1]} : vector<8x128xf32> to vector<8x16xf32>
    %cst_209 = arith.constant dense<0.000000e+00> : vector<8x129xf32>
    %790 = tpu.matmul %789, %26, %cst_209 {dimension_numbers = #tpu.dot_dimension_numbers<[1], [0], [0], [1], [0, 0, 1, 1], [], []>} : vector<8x16xf32>, vector<16x129xf32>, vector<8x129xf32> -> vector<8x129xf32>
    %791 = vector.extract_strided_slice %790 {offsets = [0, 0], sizes = [8, 128], strides = [1, 1]} : vector<8x129xf32> to vector<8x128xf32>
    %792 = vector.extract_strided_slice %762 {offsets = [0, 8], sizes = [8, 128], strides = [1, 1]} : vector<8x136xf32> to vector<8x128xf32>
    %793 = arith.addf %791, %792 : vector<8x128xf32>
    %794 = arith.addf %793, %29 : vector<8x128xf32>
    %795 = arith.negf %794 : vector<8x128xf32>
    %796 = math.exp %795 : vector<8x128xf32>
    %cst_210 = arith.constant 1.000000e+00 : f32
    %797 = vector.broadcast %cst_210 : f32 to vector<8x128xf32>
    %798 = arith.addf %797, %796 : vector<8x128xf32>
    %799 = arith.divf %797, %798 : vector<8x128xf32>
    %800 = math.tanh %794 : vector<8x128xf32>
    %801 = vector.extract_strided_slice %799 {offsets = [0, 32], sizes = [8, 32], strides = [1, 1]} : vector<8x128xf32> to vector<8x32xf32>
    %802 = arith.mulf %801, %747 : vector<8x32xf32>
    %803 = vector.extract_strided_slice %799 {offsets = [0, 0], sizes = [8, 32], strides = [1, 1]} : vector<8x128xf32> to vector<8x32xf32>
    %804 = vector.extract_strided_slice %800 {offsets = [0, 64], sizes = [8, 32], strides = [1, 1]} : vector<8x128xf32> to vector<8x32xf32>
    %805 = arith.mulf %803, %804 : vector<8x32xf32>
    %806 = arith.addf %802, %805 : vector<8x32xf32>
    %807 = vector.extract_strided_slice %799 {offsets = [0, 96], sizes = [8, 32], strides = [1, 1]} : vector<8x128xf32> to vector<8x32xf32>
    %808 = math.tanh %806 : vector<8x32xf32>
    %809 = arith.mulf %807, %808 : vector<8x32xf32>
    %810 = vector.extract_strided_slice %790 {offsets = [0, 128], sizes = [8, 1], strides = [1, 1]} : vector<8x129xf32> to vector<8x1xf32>
    %cst_211 = arith.constant dense<0.000000e+00> : vector<8x1xf32>
    %811 = tpu.matmul %809, %30, %cst_211 {dimension_numbers = #tpu.dot_dimension_numbers<[1], [0], [0], [1], [0, 0, 1, 1], [], []>} : vector<8x32xf32>, vector<32x1xf32>, vector<8x1xf32> -> vector<8x1xf32>
    %812 = arith.addf %810, %811 : vector<8x1xf32>
    %813 = arith.addf %812, %33 : vector<8x1xf32>
    %c5_i32 = arith.constant 5 : i32
    %814 = vector.broadcast %c5_i32 : i32 to vector<1x8xi32>
    %815 = arith.cmpi eq, %466, %814 : vector<1x8xi32>
    %816 = vector.shape_cast %815 : vector<1x8xi1> to vector<1x8xi1>
    %817 = vector.broadcast %816 : vector<1x8xi1> to vector<8x8xi1>
    %818 = vector.shape_cast %813 : vector<8x1xf32> to vector<8x1xf32>
    %819 = vector.broadcast %818 : vector<8x1xf32> to vector<8x8xf32>
    %820 = arith.select %817, %819, %761 : vector<8x8xi1>, vector<8x8xf32>
    %cst_212 = arith.constant dense<0.000000e+00> : vector<8x136xf32>
    %821 = tpu.matmul %809, %20, %cst_212 {dimension_numbers = #tpu.dot_dimension_numbers<[1], [0], [0], [1], [0, 0, 1, 1], [], []>} : vector<8x32xf32>, vector<32x136xf32>, vector<8x136xf32> -> vector<8x136xf32>
    %822 = vector.extract_strided_slice %821 {offsets = [0, 0], sizes = [8, 8], strides = [1, 1]} : vector<8x136xf32> to vector<8x8xf32>
    %823 = arith.addf %461, %822 : vector<8x8xf32>
    %cst_213 = arith.constant dense<0.000000e+00> : vector<8x8xf32>
    %824 = tpu.matmul %806, %21, %cst_213 {dimension_numbers = #tpu.dot_dimension_numbers<[1], [0], [0], [1], [0, 0, 1, 1], [], []>} : vector<8x32xf32>, vector<32x8xf32>, vector<8x8xf32> -> vector<8x8xf32>
    %825 = arith.addf %823, %824 : vector<8x8xf32>
    %cst_214 = arith.constant 0.000000e+00 : f32
    %826 = vector.broadcast %cst_214 : f32 to vector<8x8xf32>
    %827 = arith.maximumf %825, %826 : vector<8x8xf32>
    %cst_215 = arith.constant dense<0.000000e+00> : vector<8x128xf32>
    %828 = tpu.matmul %827, %22, %cst_215 {dimension_numbers = #tpu.dot_dimension_numbers<[1], [0], [0], [1], [0, 0, 1, 1], [], []>} : vector<8x8xf32>, vector<8x128xf32>, vector<8x128xf32> -> vector<8x128xf32>
    %829 = arith.addf %828, %25 : vector<8x128xf32>
    %cst_216 = arith.constant dense<0xFF800000> : vector<8xf32>
    %830 = vector.multi_reduction <maximumf>, %829, %cst_216 [1] : vector<8x128xf32> to vector<8xf32>
    %831 = vector.shape_cast %830 : vector<8xf32> to vector<8x1xf32>
    %832 = vector.broadcast %831 : vector<8x1xf32> to vector<8x128xf32>
    %833 = arith.subf %829, %832 : vector<8x128xf32>
    %834 = math.exp %833 : vector<8x128xf32>
    %cst_217 = arith.constant 1.600000e+01 : f32
    %835 = vector.broadcast %cst_217 : f32 to vector<8x128xf32>
    %836 = arith.mulf %834, %835 : vector<8x128xf32>
    %cst_218 = arith.constant dense<0.000000e+00> : vector<8xf32>
    %837 = vector.multi_reduction <add>, %834, %cst_218 [1] : vector<8x128xf32> to vector<8xf32>
    %838 = vector.shape_cast %837 : vector<8xf32> to vector<8x1xf32>
    %839 = vector.broadcast %838 : vector<8x1xf32> to vector<8x128xf32>
    %840 = arith.divf %836, %839 : vector<8x128xf32>
    %841 = arith.mulf %462, %840 : vector<8x128xf32>
    %c16_i32_219 = arith.constant 16 : i32
    %842 = tpu.dynamic_rotate %841 by %c16_i32_219 dim 1 : vector<8x128xf32>, i32 -> vector<8x128xf32>
    %843 = arith.addf %841, %842 : vector<8x128xf32>
    %c32_i32_220 = arith.constant 32 : i32
    %844 = tpu.dynamic_rotate %843 by %c32_i32_220 dim 1 : vector<8x128xf32>, i32 -> vector<8x128xf32>
    %845 = arith.addf %843, %844 : vector<8x128xf32>
    %c64_i32_221 = arith.constant 64 : i32
    %846 = tpu.dynamic_rotate %845 by %c64_i32_221 dim 1 : vector<8x128xf32>, i32 -> vector<8x128xf32>
    %847 = arith.addf %845, %846 : vector<8x128xf32>
    %848 = vector.extract_strided_slice %847 {offsets = [0, 0], sizes = [8, 16], strides = [1, 1]} : vector<8x128xf32> to vector<8x16xf32>
    %cst_222 = arith.constant dense<0.000000e+00> : vector<8x129xf32>
    %849 = tpu.matmul %848, %26, %cst_222 {dimension_numbers = #tpu.dot_dimension_numbers<[1], [0], [0], [1], [0, 0, 1, 1], [], []>} : vector<8x16xf32>, vector<16x129xf32>, vector<8x129xf32> -> vector<8x129xf32>
    %850 = vector.extract_strided_slice %849 {offsets = [0, 0], sizes = [8, 128], strides = [1, 1]} : vector<8x129xf32> to vector<8x128xf32>
    %851 = vector.extract_strided_slice %821 {offsets = [0, 8], sizes = [8, 128], strides = [1, 1]} : vector<8x136xf32> to vector<8x128xf32>
    %852 = arith.addf %850, %851 : vector<8x128xf32>
    %853 = arith.addf %852, %29 : vector<8x128xf32>
    %854 = arith.negf %853 : vector<8x128xf32>
    %855 = math.exp %854 : vector<8x128xf32>
    %cst_223 = arith.constant 1.000000e+00 : f32
    %856 = vector.broadcast %cst_223 : f32 to vector<8x128xf32>
    %857 = arith.addf %856, %855 : vector<8x128xf32>
    %858 = arith.divf %856, %857 : vector<8x128xf32>
    %859 = math.tanh %853 : vector<8x128xf32>
    %860 = vector.extract_strided_slice %858 {offsets = [0, 32], sizes = [8, 32], strides = [1, 1]} : vector<8x128xf32> to vector<8x32xf32>
    %861 = arith.mulf %860, %806 : vector<8x32xf32>
    %862 = vector.extract_strided_slice %858 {offsets = [0, 0], sizes = [8, 32], strides = [1, 1]} : vector<8x128xf32> to vector<8x32xf32>
    %863 = vector.extract_strided_slice %859 {offsets = [0, 64], sizes = [8, 32], strides = [1, 1]} : vector<8x128xf32> to vector<8x32xf32>
    %864 = arith.mulf %862, %863 : vector<8x32xf32>
    %865 = arith.addf %861, %864 : vector<8x32xf32>
    %866 = vector.extract_strided_slice %858 {offsets = [0, 96], sizes = [8, 32], strides = [1, 1]} : vector<8x128xf32> to vector<8x32xf32>
    %867 = math.tanh %865 : vector<8x32xf32>
    %868 = arith.mulf %866, %867 : vector<8x32xf32>
    %869 = vector.extract_strided_slice %849 {offsets = [0, 128], sizes = [8, 1], strides = [1, 1]} : vector<8x129xf32> to vector<8x1xf32>
    %cst_224 = arith.constant dense<0.000000e+00> : vector<8x1xf32>
    %870 = tpu.matmul %868, %30, %cst_224 {dimension_numbers = #tpu.dot_dimension_numbers<[1], [0], [0], [1], [0, 0, 1, 1], [], []>} : vector<8x32xf32>, vector<32x1xf32>, vector<8x1xf32> -> vector<8x1xf32>
    %871 = arith.addf %869, %870 : vector<8x1xf32>
    %872 = arith.addf %871, %33 : vector<8x1xf32>
    %c6_i32 = arith.constant 6 : i32
    %873 = vector.broadcast %c6_i32 : i32 to vector<1x8xi32>
    %874 = arith.cmpi eq, %466, %873 : vector<1x8xi32>
    %875 = vector.shape_cast %874 : vector<1x8xi1> to vector<1x8xi1>
    %876 = vector.broadcast %875 : vector<1x8xi1> to vector<8x8xi1>
    %877 = vector.shape_cast %872 : vector<8x1xf32> to vector<8x1xf32>
    %878 = vector.broadcast %877 : vector<8x1xf32> to vector<8x8xf32>
    %879 = arith.select %876, %878, %820 : vector<8x8xi1>, vector<8x8xf32>
    %cst_225 = arith.constant dense<0.000000e+00> : vector<8x136xf32>
    %880 = tpu.matmul %868, %20, %cst_225 {dimension_numbers = #tpu.dot_dimension_numbers<[1], [0], [0], [1], [0, 0, 1, 1], [], []>} : vector<8x32xf32>, vector<32x136xf32>, vector<8x136xf32> -> vector<8x136xf32>
    %881 = vector.extract_strided_slice %880 {offsets = [0, 0], sizes = [8, 8], strides = [1, 1]} : vector<8x136xf32> to vector<8x8xf32>
    %882 = arith.addf %461, %881 : vector<8x8xf32>
    %cst_226 = arith.constant dense<0.000000e+00> : vector<8x8xf32>
    %883 = tpu.matmul %865, %21, %cst_226 {dimension_numbers = #tpu.dot_dimension_numbers<[1], [0], [0], [1], [0, 0, 1, 1], [], []>} : vector<8x32xf32>, vector<32x8xf32>, vector<8x8xf32> -> vector<8x8xf32>
    %884 = arith.addf %882, %883 : vector<8x8xf32>
    %cst_227 = arith.constant 0.000000e+00 : f32
    %885 = vector.broadcast %cst_227 : f32 to vector<8x8xf32>
    %886 = arith.maximumf %884, %885 : vector<8x8xf32>
    %cst_228 = arith.constant dense<0.000000e+00> : vector<8x128xf32>
    %887 = tpu.matmul %886, %22, %cst_228 {dimension_numbers = #tpu.dot_dimension_numbers<[1], [0], [0], [1], [0, 0, 1, 1], [], []>} : vector<8x8xf32>, vector<8x128xf32>, vector<8x128xf32> -> vector<8x128xf32>
    %888 = arith.addf %887, %25 : vector<8x128xf32>
    %cst_229 = arith.constant dense<0xFF800000> : vector<8xf32>
    %889 = vector.multi_reduction <maximumf>, %888, %cst_229 [1] : vector<8x128xf32> to vector<8xf32>
    %890 = vector.shape_cast %889 : vector<8xf32> to vector<8x1xf32>
    %891 = vector.broadcast %890 : vector<8x1xf32> to vector<8x128xf32>
    %892 = arith.subf %888, %891 : vector<8x128xf32>
    %893 = math.exp %892 : vector<8x128xf32>
    %cst_230 = arith.constant 1.600000e+01 : f32
    %894 = vector.broadcast %cst_230 : f32 to vector<8x128xf32>
    %895 = arith.mulf %893, %894 : vector<8x128xf32>
    %cst_231 = arith.constant dense<0.000000e+00> : vector<8xf32>
    %896 = vector.multi_reduction <add>, %893, %cst_231 [1] : vector<8x128xf32> to vector<8xf32>
    %897 = vector.shape_cast %896 : vector<8xf32> to vector<8x1xf32>
    %898 = vector.broadcast %897 : vector<8x1xf32> to vector<8x128xf32>
    %899 = arith.divf %895, %898 : vector<8x128xf32>
    %900 = arith.mulf %462, %899 : vector<8x128xf32>
    %c16_i32_232 = arith.constant 16 : i32
    %901 = tpu.dynamic_rotate %900 by %c16_i32_232 dim 1 : vector<8x128xf32>, i32 -> vector<8x128xf32>
    %902 = arith.addf %900, %901 : vector<8x128xf32>
    %c32_i32_233 = arith.constant 32 : i32
    %903 = tpu.dynamic_rotate %902 by %c32_i32_233 dim 1 : vector<8x128xf32>, i32 -> vector<8x128xf32>
    %904 = arith.addf %902, %903 : vector<8x128xf32>
    %c64_i32_234 = arith.constant 64 : i32
    %905 = tpu.dynamic_rotate %904 by %c64_i32_234 dim 1 : vector<8x128xf32>, i32 -> vector<8x128xf32>
    %906 = arith.addf %904, %905 : vector<8x128xf32>
    %907 = vector.extract_strided_slice %906 {offsets = [0, 0], sizes = [8, 16], strides = [1, 1]} : vector<8x128xf32> to vector<8x16xf32>
    %cst_235 = arith.constant dense<0.000000e+00> : vector<8x129xf32>
    %908 = tpu.matmul %907, %26, %cst_235 {dimension_numbers = #tpu.dot_dimension_numbers<[1], [0], [0], [1], [0, 0, 1, 1], [], []>} : vector<8x16xf32>, vector<16x129xf32>, vector<8x129xf32> -> vector<8x129xf32>
    %909 = vector.extract_strided_slice %908 {offsets = [0, 0], sizes = [8, 128], strides = [1, 1]} : vector<8x129xf32> to vector<8x128xf32>
    %910 = vector.extract_strided_slice %880 {offsets = [0, 8], sizes = [8, 128], strides = [1, 1]} : vector<8x136xf32> to vector<8x128xf32>
    %911 = arith.addf %909, %910 : vector<8x128xf32>
    %912 = arith.addf %911, %29 : vector<8x128xf32>
    %913 = arith.negf %912 : vector<8x128xf32>
    %914 = math.exp %913 : vector<8x128xf32>
    %cst_236 = arith.constant 1.000000e+00 : f32
    %915 = vector.broadcast %cst_236 : f32 to vector<8x128xf32>
    %916 = arith.addf %915, %914 : vector<8x128xf32>
    %917 = arith.divf %915, %916 : vector<8x128xf32>
    %918 = math.tanh %912 : vector<8x128xf32>
    %919 = vector.extract_strided_slice %917 {offsets = [0, 32], sizes = [8, 32], strides = [1, 1]} : vector<8x128xf32> to vector<8x32xf32>
    %920 = arith.mulf %919, %865 : vector<8x32xf32>
    %921 = vector.extract_strided_slice %917 {offsets = [0, 0], sizes = [8, 32], strides = [1, 1]} : vector<8x128xf32> to vector<8x32xf32>
    %922 = vector.extract_strided_slice %918 {offsets = [0, 64], sizes = [8, 32], strides = [1, 1]} : vector<8x128xf32> to vector<8x32xf32>
    %923 = arith.mulf %921, %922 : vector<8x32xf32>
    %924 = arith.addf %920, %923 : vector<8x32xf32>
    %925 = vector.extract_strided_slice %917 {offsets = [0, 96], sizes = [8, 32], strides = [1, 1]} : vector<8x128xf32> to vector<8x32xf32>
    %926 = math.tanh %924 : vector<8x32xf32>
    %927 = arith.mulf %925, %926 : vector<8x32xf32>
    %928 = vector.extract_strided_slice %908 {offsets = [0, 128], sizes = [8, 1], strides = [1, 1]} : vector<8x129xf32> to vector<8x1xf32>
    %cst_237 = arith.constant dense<0.000000e+00> : vector<8x1xf32>
    %929 = tpu.matmul %927, %30, %cst_237 {dimension_numbers = #tpu.dot_dimension_numbers<[1], [0], [0], [1], [0, 0, 1, 1], [], []>} : vector<8x32xf32>, vector<32x1xf32>, vector<8x1xf32> -> vector<8x1xf32>
    %930 = arith.addf %928, %929 : vector<8x1xf32>
    %931 = arith.addf %930, %33 : vector<8x1xf32>
    %c7_i32 = arith.constant 7 : i32
    %932 = vector.broadcast %c7_i32 : i32 to vector<1x8xi32>
    %933 = arith.cmpi eq, %466, %932 : vector<1x8xi32>
    %934 = vector.shape_cast %933 : vector<1x8xi1> to vector<1x8xi1>
    %935 = vector.broadcast %934 : vector<1x8xi1> to vector<8x8xi1>
    %936 = vector.shape_cast %931 : vector<8x1xf32> to vector<8x1xf32>
    %937 = vector.broadcast %936 : vector<8x1xf32> to vector<8x8xf32>
    %938 = arith.select %935, %937, %879 : vector<8x8xi1>, vector<8x8xf32>
    %c0_238 = arith.constant 0 : index
    %c0_239 = arith.constant 0 : index
    %939 = vector.load %arg3[%c0_238, %c0_239] : memref<8x8xf32, #tpu.memory_space<vmem>>, vector<8x8xf32>
    tpu.vector_store %arg3[%c0_238, %c0_239], %938 {strides = array<i32>} : memref<8x8xf32, #tpu.memory_space<vmem>>, vector<8x8xf32>,
    return
  }
  func.func @transform_0(%arg0: i32) -> (i32, i32, i32) {
    %c0_i32 = arith.constant 0 : i32
    %c0_i32_0 = arith.constant 0 : i32
    %c0_i32_1 = arith.constant 0 : i32
    return %c0_i32, %arg0, %c0_i32_0 : i32, i32, i32
  }
  func.func @transform_1(%arg0: i32) -> (i32, i32) {
    %c0_i32 = arith.constant 0 : i32
    %c0_i32_0 = arith.constant 0 : i32
    %c0_i32_1 = arith.constant 0 : i32
    return %c0_i32, %c0_i32_0 : i32, i32
  }
  func.func @transform_2(%arg0: i32) -> (i32, i32) {
    %c0_i32 = arith.constant 0 : i32
    %c0_i32_0 = arith.constant 0 : i32
    return %arg0, %c0_i32 : i32, i32
  }
}

</mosaic_0001>

<llo_original>
// kernel: tpu_custom_call.1
$region0: #{tpu_custom_call.1}
  #allocation0 [shape = 'u32[]', space=smem, size = 0x4, offset = 0x4, fixed_abs, tag = 'smem constant byte address 0x4 - core index']
  #allocation1 [shape = 'u32[144,128]{1,0:T(1,128)}', space=vmem, size = 0x12000, scoped, tag = 'internal scratch']
  #allocation2 [shape = 'f32[8,128]{1,0:T(8,128)}', space=vmem, size = 0x1000, scoped, tag = 'scratch operand']
  %s0 = inlined_call_operand.vmem [shape: f32[8,8,4], index: 0, kind: input, shape index: {}]
  %s1 = inlined_call_operand.hbm [shape: f32[312,256], index: 1, kind: input, shape index: {}]
  %s2 = inlined_call_operand.hbm [shape: f32[8,8], index: 2, kind: output, shape index: {}]
  %s3 = sld [smem:[#allocation0]]
  $region22: #{tpu_custom_call.1} parent=0
    _
  %s5 = ssub.s32 1, %s3
  %s6 = scalar_select 0, %s5, %s3
  $region1: #{tpu_custom_call.1} parent=0
    #allocation3 [shape = 'u8[319488]{0}', space=vmem, size = 0x4e000, scoped, tag = 'input window, operand 1, single buffered']
    #allocation4 [shape = 's32[1]{0}', space=sflag, size = 0x4, scoped, tag = 'scoped memory for tpu_custom_call.1']
    #allocation5 [shape = 's32[1]{0}', space=sflag, size = 0x4, scoped, tag = 'scoped memory for tpu_custom_call.1']
    #allocation6 [shape = 'u8[4096]{0}', space=vmem, size = 0x1000, scoped, tag = 'output window, operand 0, single buffered']
    %7 = vsyncpa [#allocation4], 0
    %8 = vsyncpa [#allocation5], 0
    // Predicated region
    $region2: #{tpu_custom_call.1} parent=1 // pred_check
      _
    $region3: #{tpu_custom_call.1} parent=1 // pred_check_branch
      %10 = sbr.rel (0) target = $region5
    $region4: #{tpu_custom_call.1} parent=1 // pred_region
      _
    $region5: #{tpu_custom_call.1} parent=1 // pred_fallthru
      _
    // Predicated region
    $region6: #{tpu_custom_call.1} parent=1 // pred_check
      _
    $region7: #{tpu_custom_call.1} parent=1 // pred_check_branch
      %12 = sbr.rel (0) target = $region9
    $region8: #{tpu_custom_call.1} parent=1 // pred_region
      %s14 = ssub.s32 9984, 9984
      %15 = vsyncadd [#allocation4], %s14
      %s16 = sshll.u32 [#allocation3], 4
      %s17 = int_to_ptr.vmem [resolvable:$true] %s16
      %22 = dma.hbm_to_vmem [thread:$0]  %s1, 9984, %s17, [#allocation4], 256, 256, 16
    $region9: #{tpu_custom_call.1} parent=1 // pred_fallthru
      _
    // Predicated region
    $region10: #{tpu_custom_call.1} parent=1 // pred_check
      _
    $region11: #{tpu_custom_call.1} parent=1 // pred_check_branch
      %24 = sbr.rel (0) target = $region13
    $region12: #{tpu_custom_call.1} parent=1 // pred_region
      %25 = dma.done [#allocation4], 9984
    $region13: #{tpu_custom_call.1} parent=1 // pred_fallthru
      _
    %v26 = vld [vmem:[#allocation3] sm:$0xff]
    %v27 = vld [vmem:[#allocation3 + $0x8] sm:$0xff]
    %v28 = vld [vmem:[#allocation3 + $0x10] sm:$0xff]
    %v29 = vld [vmem:[#allocation3 + $0x18] sm:$0xff]
    %v30 = vld [vmem:[#allocation3 + $0x20] sm:$0xff]
    %v31 = vld [vmem:[#allocation3 + $0x28] sm:$0xff]
    %v32 = vld [vmem:[#allocation3 + $0x30] sm:$0xff]
    %v33 = vld [vmem:[#allocation3 + $0x38] sm:$0xff]
    %v34 = vld [vmem:[#allocation3 + $0x40] sm:$0xff]
    %v35 = vld [vmem:[#allocation3 + $0x50] sm:$0xff]
    %v36 = vld [vmem:[#allocation3 + $0x60] sm:$0xff]
    %v37 = vld [vmem:[#allocation3 + $0x70] sm:$0xff]
    %v38 = vld [vmem:[#allocation3 + $0x80] sm:$0xf]
    %v39 = vld [vmem:[#allocation3 + $0x90] ss:$0 sm:$0xff]
    %v40 = vld [vmem:[#allocation3 + $0xa0] sm:$0xf]
    %v41 = vld [vmem:[#allocation3 + $0xb0] ss:$0 sm:$0xff]
    %v42 = vld [vmem:[#allocation3 + $0xc0] sm:$0xf]
    %v43 = vld [vmem:[#allocation3 + $0xd0] ss:$0 sm:$0xff]
    %v44 = vld [vmem:[#allocation3 + $0xe0] sm:$0xff]
    %v45 = vld [vmem:[#allocation3 + $0xf0] sm:$0xff]
    %v46 = vld [vmem:[#allocation3 + $0x100] sm:$0xff]
    %v47 = vld [vmem:[#allocation3 + $0x110] sm:$0xff]
    %v48 = vld [vmem:[#allocation3 + $0x120] ss:$0 sm:$0xff]
    %v49 = vld [vmem:[#allocation3 + $0x130] sm:$0xff]
    %v50 = vld [vmem:[#allocation3 + $0x140] ss:$0 sm:$0xff]
    %v51 = vld [vmem:[#allocation3 + $0x150] sm:$0xff]
    %v52 = vld [vmem:[#allocation3 + $0x158] sm:$0xff]
    %v53 = vld [vmem:[#allocation3 + $0x160] sm:$0xff]
    %v54 = vld [vmem:[#allocation3 + $0x168] sm:$0xff]
    %v55 = vld [vmem:[#allocation3 + $0x170] sm:$0xff]
    %v56 = vld [vmem:[#allocation3 + $0x178] sm:$0xff]
    %v57 = vld [vmem:[#allocation3 + $0x180] sm:$0xff]
    %v58 = vld [vmem:[#allocation3 + $0x188] sm:$0xff]
    %v59 = vld [vmem:[#allocation3 + $0x190] sm:$0xff]
    %v60 = vld [vmem:[#allocation3 + $0x1a0] sm:$0xff]
    %v61 = vld [vmem:[#allocation3 + $0x1b0] sm:$0xff]
    %v62 = vld [vmem:[#allocation3 + $0x1c0] sm:$0xff]
    %v63 = vld [vmem:[#allocation3 + $0x1d0] sm:$0xff]
    %v64 = vld [vmem:[#allocation3 + $0x1e0] ss:$0 sm:$0xff]
    %v65 = vld [vmem:[#allocation3 + $0x1f0] sm:$0xff]
    %v66 = vld [vmem:[#allocation3 + $0x1f8] sm:$0xff]
    %v67 = vld [vmem:[#allocation3 + $0x200] sm:$0xff]
    %v68 = vld [vmem:[#allocation3 + $0x208] sm:$0xff]
    %v69 = vld [vmem:[#allocation3 + $0x210] ss:$0 sm:$0xff]
    %v70 = vld [vmem:[#allocation3 + $0x220] sm:$0xff]
    %v71 = vld [vmem:[#allocation3 + $0x230] sm:$0xff]
    %v72 = vld [vmem:[#allocation3 + $0x240] sm:$0xff]
    %v73 = vld [vmem:[#allocation3 + $0x250] sm:$0xff]
    %v74 = vld [vmem:[#allocation3 + $0x260] ss:$0 sm:$0xff]
    %v75 = vld [vmem:[%s0] sm:$0xff]
    %vm76 = vcmask 261120
    %v78 = vsel %vm76, 0.0, 0
    %80 = vmatprep.subr.mxu0 %v27
    %81 = vmatpush1.msra.mxu0 %v26
    %82 = vmatprep.subr.mxu0 %v29
    %83 = vmatpush1.msra.mxu0 %v28
    %84 = vmatprep.subr.mxu0 %v31
    %85 = vmatpush1.msra.mxu0 %v30
    %86 = vmatprep.subr.mxu0 %v33
    %87 = vmatpush1.msra.mxu0 %v32
    %88 = vmatprep.subr.mxu0 0.0
    %89 = vmatpush1.msra.mxu0 0.0
    %90 = vmatprep.subr.mxu0 0.0
    %91 = vmatpush1.msra.mxu0 0.0
    %92 = vmatprep.subr.mxu0 0.0
    %93 = vmatpush1.msra.mxu0 0.0
    %94 = vmatprep.subr.mxu0 0.0
    %95 = vmatpush1.msra.mxu0 0.0
    %96 = vmatprep.subr.mxu0 0.0
    %97 = vmatpush1.msra.mxu0 0.0
    %98 = vmatprep.subr.mxu0 0.0
    %99 = vmatpush1.msra.mxu0 0.0
    %100 = vmatprep.subr.mxu0 0.0
    %101 = vmatpush1.msra.mxu0 0.0
    %102 = vmatprep.subr.mxu0 0.0
    %103 = vmatpush1.msra.mxu0 0.0
    %104 = vmatprep.subr.mxu0 0.0
    %105 = vmatpush1.msra.mxu0 0.0
    %106 = vmatprep.subr.mxu0 0.0
    %107 = vmatpush1.msra.mxu0 0.0
    %108 = vmatprep.subr.mxu0 0.0
    %109 = vmatpush1.msra.mxu0 0.0
    %110 = vmatprep.subr.mxu0 0.0
    %111 = vmatpush1.msra.mxu0 0.0
    %112 = vmatprep.subr.mxu0 0.0
    %113 = vmatpush1.msra.mxu0 0.0
    %114 = vmatprep.subr.mxu0 0.0
    %115 = vmatpush1.msra.mxu0 0.0
    %116 = vmatprep.subr.mxu0 0.0
    %117 = vmatpush1.msra.mxu0 0.0
    %118 = vmatprep.subr.mxu0 0.0
    %119 = vmatpush1.msra.mxu0 0.0
    %120 = vmatprep.subr.mxu0 0.0
    %121 = vmatpush1.msra.mxu0 0.0
    %122 = vmatprep.subr.mxu0 0.0
    %123 = vmatpush1.msra.mxu0 0.0
    %124 = vmatprep.subr.mxu0 0.0
    %125 = vmatpush1.msra.mxu0 0.0
    %126 = vmatprep.subr.mxu0 0.0
    %127 = vmatpush1.msra.mxu0 0.0
    %128 = vmatprep.subr.mxu0 0.0
    %129 = vmatpush1.msra.mxu0 0.0
    %130 = vmatprep.subr.mxu0 0.0
    %131 = vmatpush1.msra.mxu0 0.0
    %132 = vmatprep.subr.mxu0 0.0
    %133 = vmatpush1.msra.mxu0 0.0
    %134 = vmatprep.subr.mxu0 0.0
    %135 = vmatpush1.msra.mxu0 0.0
    %136 = vmatprep.subr.mxu0 0.0
    %137 = vmatpush1.msra.mxu0 0.0
    %138 = vmatprep.subr.mxu0 0.0
    %139 = vmatpush1.msra.mxu0 0.0
    %140 = vmatprep.subr.mxu0 0.0
    %141 = vmatpush1.msra.mxu0 0.0
    %142 = vmatprep.subr.mxu0 0.0
    %143 = vmatpush1.msra.mxu0 0.0
    %144 = vmatprep.mubr.f32.mxu0 0.0
    %145 = vmatmul.mubr.f32.gmra.mrb[0].mxu0 %v78
    %v146 = vpop.f32.mrb[0].mxu0
    %v147 = vadd.f32 0.0, %v146
    %v148 = vpop.f32.mrb[0].mxu0
    %v149 = vadd.f32 0.0, %v148
    %150 = vdwg.mxu0
    %vm151 = vcmask 31744
    %v153 = vsel %vm151, %v75, 0
    %vm155 = vcmask 1043456
    %v157 = vsel %vm155, %v38, 0
    %159 = vmatprep.subr.mxu0 0.0
    %160 = vmatpush1.msra.mxu0 %v157
    %161 = vmatprep.subr.mxu0 0.0
    %162 = vmatpush1.msra.mxu0 0.0
    %163 = vmatprep.subr.mxu0 0.0
    %164 = vmatpush1.msra.mxu0 0.0
    %165 = vmatprep.subr.mxu0 0.0
    %166 = vmatpush1.msra.mxu0 0.0
    %167 = vmatprep.subr.mxu0 0.0
    %168 = vmatpush1.msra.mxu0 0.0
    %169 = vmatprep.subr.mxu0 0.0
    %170 = vmatpush1.msra.mxu0 0.0
    %171 = vmatprep.subr.mxu0 0.0
    %172 = vmatpush1.msra.mxu0 0.0
    %173 = vmatprep.subr.mxu0 0.0
    %174 = vmatpush1.msra.mxu0 0.0
    %175 = vmatprep.subr.mxu0 0.0
    %176 = vmatpush1.msra.mxu0 0.0
    %177 = vmatprep.subr.mxu0 0.0
    %178 = vmatpush1.msra.mxu0 0.0
    %179 = vmatprep.subr.mxu0 0.0
    %180 = vmatpush1.msra.mxu0 0.0
    %181 = vmatprep.subr.mxu0 0.0
    %182 = vmatpush1.msra.mxu0 0.0
    %183 = vmatprep.subr.mxu0 0.0
    %184 = vmatpush1.msra.mxu0 0.0
    %185 = vmatprep.subr.mxu0 0.0
    %186 = vmatpush1.msra.mxu0 0.0
    %187 = vmatprep.subr.mxu0 0.0
    %188 = vmatpush1.msra.mxu0 0.0
    %189 = vmatprep.subr.mxu0 0.0
    %190 = vmatpush1.msra.mxu0 0.0
    %191 = vmatprep.subr.mxu0 0.0
    %192 = vmatpush1.msra.mxu0 0.0
    %193 = vmatprep.subr.mxu0 0.0
    %194 = vmatpush1.msra.mxu0 0.0
    %195 = vmatprep.subr.mxu0 0.0
    %196 = vmatpush1.msra.mxu0 0.0
    %197 = vmatprep.subr.mxu0 0.0
    %198 = vmatpush1.msra.mxu0 0.0
    %199 = vmatprep.subr.mxu0 0.0
    %200 = vmatpush1.msra.mxu0 0.0
    %201 = vmatprep.subr.mxu0 0.0
    %202 = vmatpush1.msra.mxu0 0.0
    %203 = vmatprep.subr.mxu0 0.0
    %204 = vmatpush1.msra.mxu0 0.0
    %205 = vmatprep.subr.mxu0 0.0
    %206 = vmatpush1.msra.mxu0 0.0
    %207 = vmatprep.subr.mxu0 0.0
    %208 = vmatpush1.msra.mxu0 0.0
    %209 = vmatprep.subr.mxu0 0.0
    %210 = vmatpush1.msra.mxu0 0.0
    %211 = vmatprep.subr.mxu0 0.0
    %212 = vmatpush1.msra.mxu0 0.0
    %213 = vmatprep.subr.mxu0 0.0
    %214 = vmatpush1.msra.mxu0 0.0
    %215 = vmatprep.subr.mxu0 0.0
    %216 = vmatpush1.msra.mxu0 0.0
    %217 = vmatprep.subr.mxu0 0.0
    %218 = vmatpush1.msra.mxu0 0.0
    %219 = vmatprep.subr.mxu0 0.0
    %220 = vmatpush1.msra.mxu0 0.0
    %221 = vmatprep.subr.mxu0 0.0
    %222 = vmatpush1.msra.mxu0 0.0
    %223 = vmatprep.mubr.f32.mxu0 0.0
    %224 = vmatmul.mubr.f32.gmra.mrb[0].mxu0 %v153
    %v225 = vpop.f32.mrb[0].mxu0
    %v226 = vadd.f32 %v39, %v225
    %v227 = vpop.f32.mrb[0].mxu0
    %228 = vdwg.mxu0
    %v229 = vadd.f32 %v226, %v147
    %230 = vmatprep.subr.mxu0 0.0
    %231 = vmatpush1.msra.mxu0 %v34
    %232 = vmatprep.subr.mxu0 0.0
    %233 = vmatpush1.msra.mxu0 %v35
    %234 = vmatprep.subr.mxu0 0.0
    %235 = vmatpush1.msra.mxu0 %v36
    %236 = vmatprep.subr.mxu0 0.0
    %237 = vmatpush1.msra.mxu0 %v37
    %238 = vmatprep.subr.mxu0 0.0
    %239 = vmatpush1.msra.mxu0 0.0
    %240 = vmatprep.subr.mxu0 0.0
    %241 = vmatpush1.msra.mxu0 0.0
    %242 = vmatprep.subr.mxu0 0.0
    %243 = vmatpush1.msra.mxu0 0.0
    %244 = vmatprep.subr.mxu0 0.0
    %245 = vmatpush1.msra.mxu0 0.0
    %246 = vmatprep.subr.mxu0 0.0
    %247 = vmatpush1.msra.mxu0 0.0
    %248 = vmatprep.subr.mxu0 0.0
    %249 = vmatpush1.msra.mxu0 0.0
    %250 = vmatprep.subr.mxu0 0.0
    %251 = vmatpush1.msra.mxu0 0.0
    %252 = vmatprep.subr.mxu0 0.0
    %253 = vmatpush1.msra.mxu0 0.0
    %254 = vmatprep.subr.mxu0 0.0
    %255 = vmatpush1.msra.mxu0 0.0
    %256 = vmatprep.subr.mxu0 0.0
    %257 = vmatpush1.msra.mxu0 0.0
    %258 = vmatprep.subr.mxu0 0.0
    %259 = vmatpush1.msra.mxu0 0.0
    %260 = vmatprep.subr.mxu0 0.0
    %261 = vmatpush1.msra.mxu0 0.0
    %262 = vmatprep.subr.mxu0 0.0
    %263 = vmatpush1.msra.mxu0 0.0
    %264 = vmatprep.subr.mxu0 0.0
    %265 = vmatpush1.msra.mxu0 0.0
    %266 = vmatprep.subr.mxu0 0.0
    %267 = vmatpush1.msra.mxu0 0.0
    %268 = vmatprep.subr.mxu0 0.0
    %269 = vmatpush1.msra.mxu0 0.0
    %270 = vmatprep.subr.mxu0 0.0
    %271 = vmatpush1.msra.mxu0 0.0
    %272 = vmatprep.subr.mxu0 0.0
    %273 = vmatpush1.msra.mxu0 0.0
    %274 = vmatprep.subr.mxu0 0.0
    %275 = vmatpush1.msra.mxu0 0.0
    %276 = vmatprep.subr.mxu0 0.0
    %277 = vmatpush1.msra.mxu0 0.0
    %278 = vmatprep.subr.mxu0 0.0
    %279 = vmatpush1.msra.mxu0 0.0
    %280 = vmatprep.subr.mxu0 0.0
    %281 = vmatpush1.msra.mxu0 0.0
    %282 = vmatprep.subr.mxu0 0.0
    %283 = vmatpush1.msra.mxu0 0.0
    %284 = vmatprep.subr.mxu0 0.0
    %285 = vmatpush1.msra.mxu0 0.0
    %286 = vmatprep.subr.mxu0 0.0
    %287 = vmatpush1.msra.mxu0 0.0
    %288 = vmatprep.subr.mxu0 0.0
    %289 = vmatpush1.msra.mxu0 0.0
    %290 = vmatprep.subr.mxu0 0.0
    %291 = vmatpush1.msra.mxu0 0.0
    %292 = vmatprep.subr.mxu0 0.0
    %293 = vmatpush1.msra.mxu0 0.0
    %294 = vmatprep.mubr.f32.mxu0 0.0
    %295 = vmatmul.mubr.f32.gmra.mrb[0].mxu0 %v78
    %v296 = vpop.f32.mrb[0].mxu0
    %v297 = vadd.f32 0.0, %v296
    %v298 = vpop.f32.mrb[0].mxu0
    %299 = vdwg.mxu0
    %v300 = vadd.f32 %v229, %v297
    %v301 = vmax.f32 %v300, 0.0
    %v303 = vsel %vm151, %v301, 0
    %v306 = vsel %vm155, %v40, 0
    %308 = vmatprep.subr.mxu0 0.0
    %309 = vmatpush1.msra.mxu0 %v306
    %310 = vmatprep.subr.mxu0 0.0
    %311 = vmatpush1.msra.mxu0 0.0
    %312 = vmatprep.subr.mxu0 0.0
    %313 = vmatpush1.msra.mxu0 0.0
    %314 = vmatprep.subr.mxu0 0.0
    %315 = vmatpush1.msra.mxu0 0.0
    %316 = vmatprep.subr.mxu0 0.0
    %317 = vmatpush1.msra.mxu0 0.0
    %318 = vmatprep.subr.mxu0 0.0
    %319 = vmatpush1.msra.mxu0 0.0
    %320 = vmatprep.subr.mxu0 0.0
    %321 = vmatpush1.msra.mxu0 0.0
    %322 = vmatprep.subr.mxu0 0.0
    %323 = vmatpush1.msra.mxu0 0.0
    %324 = vmatprep.subr.mxu0 0.0
    %325 = vmatpush1.msra.mxu0 0.0
    %326 = vmatprep.subr.mxu0 0.0
    %327 = vmatpush1.msra.mxu0 0.0
    %328 = vmatprep.subr.mxu0 0.0
    %329 = vmatpush1.msra.mxu0 0.0
    %330 = vmatprep.subr.mxu0 0.0
    %331 = vmatpush1.msra.mxu0 0.0
    %332 = vmatprep.subr.mxu0 0.0
    %333 = vmatpush1.msra.mxu0 0.0
    %334 = vmatprep.subr.mxu0 0.0
    %335 = vmatpush1.msra.mxu0 0.0
    %336 = vmatprep.subr.mxu0 0.0
    %337 = vmatpush1.msra.mxu0 0.0
    %338 = vmatprep.subr.mxu0 0.0
    %339 = vmatpush1.msra.mxu0 0.0
    %340 = vmatprep.subr.mxu0 0.0
    %341 = vmatpush1.msra.mxu0 0.0
    %342 = vmatprep.subr.mxu0 0.0
    %343 = vmatpush1.msra.mxu0 0.0
    %344 = vmatprep.subr.mxu0 0.0
    %345 = vmatpush1.msra.mxu0 0.0
    %346 = vmatprep.subr.mxu0 0.0
    %347 = vmatpush1.msra.mxu0 0.0
    %348 = vmatprep.subr.mxu0 0.0
    %349 = vmatpush1.msra.mxu0 0.0
    %350 = vmatprep.subr.mxu0 0.0
    %351 = vmatpush1.msra.mxu0 0.0
    %352 = vmatprep.subr.mxu0 0.0
    %353 = vmatpush1.msra.mxu0 0.0
    %354 = vmatprep.subr.mxu0 0.0
    %355 = vmatpush1.msra.mxu0 0.0
    %356 = vmatprep.subr.mxu0 0.0
    %357 = vmatpush1.msra.mxu0 0.0
    %358 = vmatprep.subr.mxu0 0.0
    %359 = vmatpush1.msra.mxu0 0.0
    %360 = vmatprep.subr.mxu0 0.0
    %361 = vmatpush1.msra.mxu0 0.0
    %362 = vmatprep.subr.mxu0 0.0
    %363 = vmatpush1.msra.mxu0 0.0
    %364 = vmatprep.subr.mxu0 0.0
    %365 = vmatpush1.msra.mxu0 0.0
    %366 = vmatprep.subr.mxu0 0.0
    %367 = vmatpush1.msra.mxu0 0.0
    %368 = vmatprep.subr.mxu0 0.0
    %369 = vmatpush1.msra.mxu0 0.0
    %370 = vmatprep.subr.mxu0 0.0
    %371 = vmatpush1.msra.mxu0 0.0
    %372 = vmatprep.mubr.f32.mxu0 0.0
    %373 = vmatmul.mubr.f32.gmra.mrb[0].mxu0 %v303
    %v374 = vpop.f32.mrb[0].mxu0
    %v375 = vadd.f32 %v41, %v374
    %v376 = vpop.f32.mrb[0].mxu0
    %377 = vdwg.mxu0
    %v378 = vsel %vm151, %v375, -inf
    %379 = vmax.xlane.f32.xlu0 %v378
    %v380 = vpop.xlane.xlu0 %379
    %v381 = vsub.f32 %v375, %v380
    %v382 = vmul.f32 %v381, 1.442695
    %v383 = vpow.pop %v382
    %v384 = vsel %vm151, %v383, 0.0
    %385 = vadd.xlane.f32.xlu0 %v384
    %v386 = vpop.xlane.xlu0 %385
    %v387 = vrcp.pop %v386
    %v388 = vmul.f32 %v383, %v387
    %v389 = vmul.f32 %v75, %v388
    %392 = vrot.lane.b32.xlu0 %v147, 124
    %v393 = vpop.permute.xlu0 %392
    %394 = vrot.lane.b32.xlu0 %v149, 124
    %v395 = vpop.permute.xlu0 %394
    %vm396 = vcmask 1014784
    %v397 = vsel %vm396, %v393, %v395
    %v400 = vsel %vm151, %v389, 0
    %v403 = vsel %vm155, %v42, 0
    %405 = vmatprep.subr.mxu0 0.0
    %406 = vmatpush1.msra.mxu0 %v403
    %407 = vmatprep.subr.mxu0 0.0
    %408 = vmatpush1.msra.mxu0 0.0
    %409 = vmatprep.subr.mxu0 0.0
    %410 = vmatpush1.msra.mxu0 0.0
    %411 = vmatprep.subr.mxu0 0.0
    %412 = vmatpush1.msra.mxu0 0.0
    %413 = vmatprep.subr.mxu0 0.0
    %414 = vmatpush1.msra.mxu0 0.0
    %415 = vmatprep.subr.mxu0 0.0
    %416 = vmatpush1.msra.mxu0 0.0
    %417 = vmatprep.subr.mxu0 0.0
    %418 = vmatpush1.msra.mxu0 0.0
    %419 = vmatprep.subr.mxu0 0.0
    %420 = vmatpush1.msra.mxu0 0.0
    %421 = vmatprep.subr.mxu0 0.0
    %422 = vmatpush1.msra.mxu0 0.0
    %423 = vmatprep.subr.mxu0 0.0
    %424 = vmatpush1.msra.mxu0 0.0
    %425 = vmatprep.subr.mxu0 0.0
    %426 = vmatpush1.msra.mxu0 0.0
    %427 = vmatprep.subr.mxu0 0.0
    %428 = vmatpush1.msra.mxu0 0.0
    %429 = vmatprep.subr.mxu0 0.0
    %430 = vmatpush1.msra.mxu0 0.0
    %431 = vmatprep.subr.mxu0 0.0
    %432 = vmatpush1.msra.mxu0 0.0
    %433 = vmatprep.subr.mxu0 0.0
    %434 = vmatpush1.msra.mxu0 0.0
    %435 = vmatprep.subr.mxu0 0.0
    %436 = vmatpush1.msra.mxu0 0.0
    %437 = vmatprep.subr.mxu0 0.0
    %438 = vmatpush1.msra.mxu0 0.0
    %439 = vmatprep.subr.mxu0 0.0
    %440 = vmatpush1.msra.mxu0 0.0
    %441 = vmatprep.subr.mxu0 0.0
    %442 = vmatpush1.msra.mxu0 0.0
    %443 = vmatprep.subr.mxu0 0.0
    %444 = vmatpush1.msra.mxu0 0.0
    %445 = vmatprep.subr.mxu0 0.0
    %446 = vmatpush1.msra.mxu0 0.0
    %447 = vmatprep.subr.mxu0 0.0
    %448 = vmatpush1.msra.mxu0 0.0
    %449 = vmatprep.subr.mxu0 0.0
    %450 = vmatpush1.msra.mxu0 0.0
    %451 = vmatprep.subr.mxu0 0.0
    %452 = vmatpush1.msra.mxu0 0.0
    %453 = vmatprep.subr.mxu0 0.0
    %454 = vmatpush1.msra.mxu0 0.0
    %455 = vmatprep.subr.mxu0 0.0
    %456 = vmatpush1.msra.mxu0 0.0
    %457 = vmatprep.subr.mxu0 0.0
    %458 = vmatpush1.msra.mxu0 0.0
    %459 = vmatprep.subr.mxu0 0.0
    %460 = vmatpush1.msra.mxu0 0.0
    %461 = vmatprep.subr.mxu0 0.0
    %462 = vmatpush1.msra.mxu0 0.0
    %463 = vmatprep.subr.mxu0 0.0
    %464 = vmatpush1.msra.mxu0 0.0
    %465 = vmatprep.subr.mxu0 0.0
    %466 = vmatpush1.msra.mxu0 0.0
    %467 = vmatprep.subr.mxu0 0.0
    %468 = vmatpush1.msra.mxu0 0.0
    %469 = vmatprep.mubr.f32.mxu0 0.0
    %470 = vmatmul.mubr.f32.gmra.mrb[0].mxu0 %v400
    %v471 = vpop.f32.mrb[0].mxu0
    %v472 = vadd.f32 %v397, %v471
    %v473 = vpop.f32.mrb[0].mxu0
    %474 = vdwg.mxu0
    %v475 = vadd.f32 %v472, %v43
    %v476 = vxor.u32 %v475, 2147483648
    %v477 = vmul.f32 %v476, 1.442695
    %v478 = vpow.pop %v477
    %v479 = vadd.f32 %v478, 1.0
    %v480 = vrcp.pop %v479
    %v481 = vmul.f32 1.0, %v480
    %v482 = vtanh.pop %v475
    %v483 = vmul.f32 %v481, 0.0
    %485 = vrot.lane.b32.xlu0 %v482, 64
    %v486 = vpop.permute.xlu0 %485
    %v488 = vmul.f32 %v481, %v486
    %490 = vrot.lane.b32.xlu0 %v488, 32
    %v491 = vpop.permute.xlu0 %490
    %v493 = vadd.f32 %v483, %v491
    %v494 = vtanh.pop %v493
    %496 = vrot.lane.b32.xlu0 %v494, 64
    %v497 = vpop.permute.xlu0 %496
    %v499 = vmul.f32 %v481, %v497
    %501 = vrot.lane.b32.xlu0 %v499, 32
    %v502 = vpop.permute.xlu0 %501
    %v503 = vsel %vm76, %v502, 0
    %505 = vmatprep.subr.mxu0 0.0
    %506 = vmatpush1.msra.mxu0 %v44
    %507 = vmatprep.subr.mxu0 0.0
    %508 = vmatpush1.msra.mxu0 %v45
    %509 = vmatprep.subr.mxu0 0.0
    %510 = vmatpush1.msra.mxu0 %v46
    %511 = vmatprep.subr.mxu0 0.0
    %512 = vmatpush1.msra.mxu0 %v47
    %513 = vmatprep.subr.mxu0 0.0
    %514 = vmatpush1.msra.mxu0 0.0
    %515 = vmatprep.subr.mxu0 0.0
    %516 = vmatpush1.msra.mxu0 0.0
    %517 = vmatprep.subr.mxu0 0.0
    %518 = vmatpush1.msra.mxu0 0.0
    %519 = vmatprep.subr.mxu0 0.0
    %520 = vmatpush1.msra.mxu0 0.0
    %521 = vmatprep.subr.mxu0 0.0
    %522 = vmatpush1.msra.mxu0 0.0
    %523 = vmatprep.subr.mxu0 0.0
    %524 = vmatpush1.msra.mxu0 0.0
    %525 = vmatprep.subr.mxu0 0.0
    %526 = vmatpush1.msra.mxu0 0.0
    %527 = vmatprep.subr.mxu0 0.0
    %528 = vmatpush1.msra.mxu0 0.0
    %529 = vmatprep.subr.mxu0 0.0
    %530 = vmatpush1.msra.mxu0 0.0
    %531 = vmatprep.subr.mxu0 0.0
    %532 = vmatpush1.msra.mxu0 0.0
    %533 = vmatprep.subr.mxu0 0.0
    %534 = vmatpush1.msra.mxu0 0.0
    %535 = vmatprep.subr.mxu0 0.0
    %536 = vmatpush1.msra.mxu0 0.0
    %537 = vmatprep.subr.mxu0 0.0
    %538 = vmatpush1.msra.mxu0 0.0
    %539 = vmatprep.subr.mxu0 0.0
    %540 = vmatpush1.msra.mxu0 0.0
    %541 = vmatprep.subr.mxu0 0.0
    %542 = vmatpush1.msra.mxu0 0.0
    %543 = vmatprep.subr.mxu0 0.0
    %544 = vmatpush1.msra.mxu0 0.0
    %545 = vmatprep.subr.mxu0 0.0
    %546 = vmatpush1.msra.mxu0 0.0
    %547 = vmatprep.subr.mxu0 0.0
    %548 = vmatpush1.msra.mxu0 0.0
    %549 = vmatprep.subr.mxu0 0.0
    %550 = vmatpush1.msra.mxu0 0.0
    %551 = vmatprep.subr.mxu0 0.0
    %552 = vmatpush1.msra.mxu0 0.0
    %553 = vmatprep.subr.mxu0 0.0
    %554 = vmatpush1.msra.mxu0 0.0
    %555 = vmatprep.subr.mxu0 0.0
    %556 = vmatpush1.msra.mxu0 0.0
    %557 = vmatprep.subr.mxu0 0.0
    %558 = vmatpush1.msra.mxu0 0.0
    %559 = vmatprep.subr.mxu0 0.0
    %560 = vmatpush1.msra.mxu0 0.0
    %561 = vmatprep.subr.mxu0 0.0
    %562 = vmatpush1.msra.mxu0 0.0
    %563 = vmatprep.subr.mxu0 0.0
    %564 = vmatpush1.msra.mxu0 0.0
    %565 = vmatprep.subr.mxu0 0.0
    %566 = vmatpush1.msra.mxu0 0.0
    %567 = vmatprep.subr.mxu0 0.0
    %568 = vmatpush1.msra.mxu0 0.0
    %569 = vmatprep.mubr.f32.mxu0 0.0
    %570 = vmatmul.mubr.f32.gmra.mrb[0].mxu0 %v503
    %v571 = vpop.f32.mrb[0].mxu0
    %v572 = vadd.f32 0.0, %v571
    %v573 = vpop.f32.mrb[0].mxu0
    %574 = vdwg.mxu0
    %v575 = vadd.f32 %v572, %v48
    %vm576 = vcmask 130048
    %577 = vst.msk [vmem:[#allocation2] sm:$0xff] %vm576, %v575
    %579 = vset.pattern.permute.xlu0 16
    %580 = vperm.xlu0 %579, %v572
    %v581 = vpop.permute.xlu0 %580
    %v583 = vlaneseq
    %v584 = vshrl.u32 %v583, 7
    %v585 = vsub.s32 0, %v584
    %v586 = vrot.slane %v49, %v585
    %v587 = vmul.f32 %v581, %v586
    %v588 = vadd.f32 %v50, %v587
    %s589 = scalar_lea.vmem %s0, 8
    %v590 = vld [vmem:[%s589] sm:$0xff]
    %591 = vmatprep.subr.mxu0 %v27
    %592 = vmatpush1.msra.mxu0 %v26
    %593 = vmatprep.subr.mxu0 %v29
    %594 = vmatpush1.msra.mxu0 %v28
    %595 = vmatprep.subr.mxu0 %v31
    %596 = vmatpush1.msra.mxu0 %v30
    %597 = vmatprep.subr.mxu0 %v33
    %598 = vmatpush1.msra.mxu0 %v32
    %599 = vmatprep.subr.mxu0 0.0
    %600 = vmatpush1.msra.mxu0 0.0
    %601 = vmatprep.subr.mxu0 0.0
    %602 = vmatpush1.msra.mxu0 0.0
    %603 = vmatprep.subr.mxu0 0.0
    %604 = vmatpush1.msra.mxu0 0.0
    %605 = vmatprep.subr.mxu0 0.0
    %606 = vmatpush1.msra.mxu0 0.0
    %607 = vmatprep.subr.mxu0 0.0
    %608 = vmatpush1.msra.mxu0 0.0
    %609 = vmatprep.subr.mxu0 0.0
    %610 = vmatpush1.msra.mxu0 0.0
    %611 = vmatprep.subr.mxu0 0.0
    %612 = vmatpush1.msra.mxu0 0.0
    %613 = vmatprep.subr.mxu0 0.0
    %614 = vmatpush1.msra.mxu0 0.0
    %615 = vmatprep.subr.mxu0 0.0
    %616 = vmatpush1.msra.mxu0 0.0
    %617 = vmatprep.subr.mxu0 0.0
    %618 = vmatpush1.msra.mxu0 0.0
    %619 = vmatprep.subr.mxu0 0.0
    %620 = vmatpush1.msra.mxu0 0.0
    %621 = vmatprep.subr.mxu0 0.0
    %622 = vmatpush1.msra.mxu0 0.0
    %623 = vmatprep.subr.mxu0 0.0
    %624 = vmatpush1.msra.mxu0 0.0
    %625 = vmatprep.subr.mxu0 0.0
    %626 = vmatpush1.msra.mxu0 0.0
    %627 = vmatprep.subr.mxu0 0.0
    %628 = vmatpush1.msra.mxu0 0.0
    %629 = vmatprep.subr.mxu0 0.0
    %630 = vmatpush1.msra.mxu0 0.0
    %631 = vmatprep.subr.mxu0 0.0
    %632 = vmatpush1.msra.mxu0 0.0
    %633 = vmatprep.subr.mxu0 0.0
    %634 = vmatpush1.msra.mxu0 0.0
    %635 = vmatprep.subr.mxu0 0.0
    %636 = vmatpush1.msra.mxu0 0.0
    %637 = vmatprep.subr.mxu0 0.0
    %638 = vmatpush1.msra.mxu0 0.0
    %639 = vmatprep.subr.mxu0 0.0
    %640 = vmatpush1.msra.mxu0 0.0
    %641 = vmatprep.subr.mxu0 0.0
    %642 = vmatpush1.msra.mxu0 0.0
    %643 = vmatprep.subr.mxu0 0.0
    %644 = vmatpush1.msra.mxu0 0.0
    %645 = vmatprep.subr.mxu0 0.0
    %646 = vmatpush1.msra.mxu0 0.0
    %647 = vmatprep.subr.mxu0 0.0
    %648 = vmatpush1.msra.mxu0 0.0
    %649 = vmatprep.subr.mxu0 0.0
    %650 = vmatpush1.msra.mxu0 0.0
    %651 = vmatprep.subr.mxu0 0.0
    %652 = vmatpush1.msra.mxu0 0.0
    %653 = vmatprep.subr.mxu0 0.0
    %654 = vmatpush1.msra.mxu0 0.0
    %655 = vmatprep.mubr.f32.mxu0 0.0
    %656 = vmatmul.mubr.f32.gmra.mrb[0].mxu0 %v503
    %v657 = vpop.f32.mrb[0].mxu0
    %v658 = vadd.f32 0.0, %v657
    %v659 = vpop.f32.mrb[0].mxu0
    %v660 = vadd.f32 0.0, %v659
    %661 = vdwg.mxu0
    %v663 = vsel %vm151, %v590, 0
    %665 = vmatprep.subr.mxu0 0.0
    %666 = vmatpush1.msra.mxu0 %v157
    %667 = vmatprep.subr.mxu0 0.0
    %668 = vmatpush1.msra.mxu0 0.0
    %669 = vmatprep.subr.mxu0 0.0
    %670 = vmatpush1.msra.mxu0 0.0
    %671 = vmatprep.subr.mxu0 0.0
    %672 = vmatpush1.msra.mxu0 0.0
    %673 = vmatprep.subr.mxu0 0.0
    %674 = vmatpush1.msra.mxu0 0.0
    %675 = vmatprep.subr.mxu0 0.0
    %676 = vmatpush1.msra.mxu0 0.0
    %677 = vmatprep.subr.mxu0 0.0
    %678 = vmatpush1.msra.mxu0 0.0
    %679 = vmatprep.subr.mxu0 0.0
    %680 = vmatpush1.msra.mxu0 0.0
    %681 = vmatprep.subr.mxu0 0.0
    %682 = vmatpush1.msra.mxu0 0.0
    %683 = vmatprep.subr.mxu0 0.0
    %684 = vmatpush1.msra.mxu0 0.0
    %685 = vmatprep.subr.mxu0 0.0
    %686 = vmatpush1.msra.mxu0 0.0
    %687 = vmatprep.subr.mxu0 0.0
    %688 = vmatpush1.msra.mxu0 0.0
    %689 = vmatprep.subr.mxu0 0.0
    %690 = vmatpush1.msra.mxu0 0.0
    %691 = vmatprep.subr.mxu0 0.0
    %692 = vmatpush1.msra.mxu0 0.0
    %693 = vmatprep.subr.mxu0 0.0
    %694 = vmatpush1.msra.mxu0 0.0
    %695 = vmatprep.subr.mxu0 0.0
    %696 = vmatpush1.msra.mxu0 0.0
    %697 = vmatprep.subr.mxu0 0.0
    %698 = vmatpush1.msra.mxu0 0.0
    %699 = vmatprep.subr.mxu0 0.0
    %700 = vmatpush1.msra.mxu0 0.0
    %701 = vmatprep.subr.mxu0 0.0
    %702 = vmatpush1.msra.mxu0 0.0
    %703 = vmatprep.subr.mxu0 0.0
    %704 = vmatpush1.msra.mxu0 0.0
    %705 = vmatprep.subr.mxu0 0.0
    %706 = vmatpush1.msra.mxu0 0.0
    %707 = vmatprep.subr.mxu0 0.0
    %708 = vmatpush1.msra.mxu0 0.0
    %709 = vmatprep.subr.mxu0 0.0
    %710 = vmatpush1.msra.mxu0 0.0
    %711 = vmatprep.subr.mxu0 0.0
    %712 = vmatpush1.msra.mxu0 0.0
    %713 = vmatprep.subr.mxu0 0.0
    %714 = vmatpush1.msra.mxu0 0.0
    %715 = vmatprep.subr.mxu0 0.0
    %716 = vmatpush1.msra.mxu0 0.0
    %717 = vmatprep.subr.mxu0 0.0
    %718 = vmatpush1.msra.mxu0 0.0
    %719 = vmatprep.subr.mxu0 0.0
    %720 = vmatpush1.msra.mxu0 0.0
    %721 = vmatprep.subr.mxu0 0.0
    %722 = vmatpush1.msra.mxu0 0.0
    %723 = vmatprep.subr.mxu0 0.0
    %724 = vmatpush1.msra.mxu0 0.0
    %725 = vmatprep.subr.mxu0 0.0
    %726 = vmatpush1.msra.mxu0 0.0
    %727 = vmatprep.subr.mxu0 0.0
    %728 = vmatpush1.msra.mxu0 0.0
    %729 = vmatprep.mubr.f32.mxu0 0.0
    %730 = vmatmul.mubr.f32.gmra.mrb[0].mxu0 %v663
    %v731 = vpop.f32.mrb[0].mxu0
    %v732 = vadd.f32 %v39, %v731
    %v733 = vpop.f32.mrb[0].mxu0
    %734 = vdwg.mxu0
    %v735 = vadd.f32 %v732, %v658
    %737 = vrot.lane.b32.xlu0 %v493, 96
    %v738 = vpop.permute.xlu0 %737
    %v739 = vsel %vm76, %v738, 0
    %741 = vmatprep.subr.mxu0 0.0
    %742 = vmatpush1.msra.mxu0 %v34
    %743 = vmatprep.subr.mxu0 0.0
    %744 = vmatpush1.msra.mxu0 %v35
    %745 = vmatprep.subr.mxu0 0.0
    %746 = vmatpush1.msra.mxu0 %v36
    %747 = vmatprep.subr.mxu0 0.0
    %748 = vmatpush1.msra.mxu0 %v37
    %749 = vmatprep.subr.mxu0 0.0
    %750 = vmatpush1.msra.mxu0 0.0
    %751 = vmatprep.subr.mxu0 0.0
    %752 = vmatpush1.msra.mxu0 0.0
    %753 = vmatprep.subr.mxu0 0.0
    %754 = vmatpush1.msra.mxu0 0.0
    %755 = vmatprep.subr.mxu0 0.0
    %756 = vmatpush1.msra.mxu0 0.0
    %757 = vmatprep.subr.mxu0 0.0
    %758 = vmatpush1.msra.mxu0 0.0
    %759 = vmatprep.subr.mxu0 0.0
    %760 = vmatpush1.msra.mxu0 0.0
    %761 = vmatprep.subr.mxu0 0.0
    %762 = vmatpush1.msra.mxu0 0.0
    %763 = vmatprep.subr.mxu0 0.0
    %764 = vmatpush1.msra.mxu0 0.0
    %765 = vmatprep.subr.mxu0 0.0
    %766 = vmatpush1.msra.mxu0 0.0
    %767 = vmatprep.subr.mxu0 0.0
    %768 = vmatpush1.msra.mxu0 0.0
    %769 = vmatprep.subr.mxu0 0.0
    %770 = vmatpush1.msra.mxu0 0.0
    %771 = vmatprep.subr.mxu0 0.0
    %772 = vmatpush1.msra.mxu0 0.0
    %773 = vmatprep.subr.mxu0 0.0
    %774 = vmatpush1.msra.mxu0 0.0
    %775 = vmatprep.subr.mxu0 0.0
    %776 = vmatpush1.msra.mxu0 0.0
    %777 = vmatprep.subr.mxu0 0.0
    %778 = vmatpush1.msra.mxu0 0.0
    %779 = vmatprep.subr.mxu0 0.0
    %780 = vmatpush1.msra.mxu0 0.0
    %781 = vmatprep.subr.mxu0 0.0
    %782 = vmatpush1.msra.mxu0 0.0
    %783 = vmatprep.subr.mxu0 0.0
    %784 = vmatpush1.msra.mxu0 0.0
    %785 = vmatprep.subr.mxu0 0.0
    %786 = vmatpush1.msra.mxu0 0.0
    %787 = vmatprep.subr.mxu0 0.0
    %788 = vmatpush1.msra.mxu0 0.0
    %789 = vmatprep.subr.mxu0 0.0
    %790 = vmatpush1.msra.mxu0 0.0
    %791 = vmatprep.subr.mxu0 0.0
    %792 = vmatpush1.msra.mxu0 0.0
    %793 = vmatprep.subr.mxu0 0.0
    %794 = vmatpush1.msra.mxu0 0.0
    %795 = vmatprep.subr.mxu0 0.0
    %796 = vmatpush1.msra.mxu0 0.0
    %797 = vmatprep.subr.mxu0 0.0
    %798 = vmatpush1.msra.mxu0 0.0
    %799 = vmatprep.subr.mxu0 0.0
    %800 = vmatpush1.msra.mxu0 0.0
    %801 = vmatprep.subr.mxu0 0.0
    %802 = vmatpush1.msra.mxu0 0.0
    %803 = vmatprep.subr.mxu0 0.0
    %804 = vmatpush1.msra.mxu0 0.0
    %805 = vmatprep.mubr.f32.mxu0 0.0
    %806 = vmatmul.mubr.f32.gmra.mrb[0].mxu0 %v739
    %v807 = vpop.f32.mrb[0].mxu0
    %v808 = vadd.f32 0.0, %v807
    %v809 = vpop.f32.mrb[0].mxu0
    %810 = vdwg.mxu0
    %v811 = vadd.f32 %v735, %v808
    %v812 = vmax.f32 %v811, 0.0
    %v814 = vsel %vm151, %v812, 0
    %816 = vmatprep.subr.mxu0 0.0
    %817 = vmatpush1.msra.mxu0 %v306
    %818 = vmatprep.subr.mxu0 0.0
    %819 = vmatpush1.msra.mxu0 0.0
    %820 = vmatprep.subr.mxu0 0.0
    %821 = vmatpush1.msra.mxu0 0.0
    %822 = vmatprep.subr.mxu0 0.0
    %823 = vmatpush1.msra.mxu0 0.0
    %824 = vmatprep.subr.mxu0 0.0
    %825 = vmatpush1.msra.mxu0 0.0
    %826 = vmatprep.subr.mxu0 0.0
    %827 = vmatpush1.msra.mxu0 0.0
    %828 = vmatprep.subr.mxu0 0.0
    %829 = vmatpush1.msra.mxu0 0.0
    %830 = vmatprep.subr.mxu0 0.0
    %831 = vmatpush1.msra.mxu0 0.0
    %832 = vmatprep.subr.mxu0 0.0
    %833 = vmatpush1.msra.mxu0 0.0
    %834 = vmatprep.subr.mxu0 0.0
    %835 = vmatpush1.msra.mxu0 0.0
    %836 = vmatprep.subr.mxu0 0.0
    %837 = vmatpush1.msra.mxu0 0.0
    %838 = vmatprep.subr.mxu0 0.0
    %839 = vmatpush1.msra.mxu0 0.0
    %840 = vmatprep.subr.mxu0 0.0
    %841 = vmatpush1.msra.mxu0 0.0
    %842 = vmatprep.subr.mxu0 0.0
    %843 = vmatpush1.msra.mxu0 0.0
    %844 = vmatprep.subr.mxu0 0.0
    %845 = vmatpush1.msra.mxu0 0.0
    %846 = vmatprep.subr.mxu0 0.0
    %847 = vmatpush1.msra.mxu0 0.0
    %848 = vmatprep.subr.mxu0 0.0
    %849 = vmatpush1.msra.mxu0 0.0
    %850 = vmatprep.subr.mxu0 0.0
    %851 = vmatpush1.msra.mxu0 0.0
    %852 = vmatprep.subr.mxu0 0.0
    %853 = vmatpush1.msra.mxu0 0.0
    %854 = vmatprep.subr.mxu0 0.0
    %855 = vmatpush1.msra.mxu0 0.0
    %856 = vmatprep.subr.mxu0 0.0
    %857 = vmatpush1.msra.mxu0 0.0
    %858 = vmatprep.subr.mxu0 0.0
    %859 = vmatpush1.msra.mxu0 0.0
    %860 = vmatprep.subr.mxu0 0.0
    %861 = vmatpush1.msra.mxu0 0.0
    %862 = vmatprep.subr.mxu0 0.0
    %863 = vmatpush1.msra.mxu0 0.0
    %864 = vmatprep.subr.mxu0 0.0
    %865 = vmatpush1.msra.mxu0 0.0
    %866 = vmatprep.subr.mxu0 0.0
    %867 = vmatpush1.msra.mxu0 0.0
    %868 = vmatprep.subr.mxu0 0.0
    %869 = vmatpush1.msra.mxu0 0.0
    %870 = vmatprep.subr.mxu0 0.0
    %871 = vmatpush1.msra.mxu0 0.0
    %872 = vmatprep.subr.mxu0 0.0
    %873 = vmatpush1.msra.mxu0 0.0
    %874 = vmatprep.subr.mxu0 0.0
    %875 = vmatpush1.msra.mxu0 0.0
    %876 = vmatprep.subr.mxu0 0.0
    %877 = vmatpush1.msra.mxu0 0.0
    %878 = vmatprep.subr.mxu0 0.0
    %879 = vmatpush1.msra.mxu0 0.0
    %880 = vmatprep.mubr.f32.mxu0 0.0
    %881 = vmatmul.mubr.f32.gmra.mrb[0].mxu0 %v814
    %v882 = vpop.f32.mrb[0].mxu0
    %v883 = vadd.f32 %v41, %v882
    %v884 = vpop.f32.mrb[0].mxu0
    %885 = vdwg.mxu0
    %v886 = vsel %vm151, %v883, -inf
    %887 = vmax.xlane.f32.xlu0 %v886
    %v888 = vpop.xlane.xlu0 %887
    %v889 = vsub.f32 %v883, %v888
    %v890 = vmul.f32 %v889, 1.442695
    %v891 = vpow.pop %v890
    %v892 = vsel %vm151, %v891, 0.0
    %893 = vadd.xlane.f32.xlu0 %v892
    %v894 = vpop.xlane.xlu0 %893
    %v895 = vrcp.pop %v894
    %v896 = vmul.f32 %v891, %v895
    %v897 = vmul.f32 %v590, %v896
    %900 = vrot.lane.b32.xlu0 %v658, 124
    %v901 = vpop.permute.xlu0 %900
    %902 = vrot.lane.b32.xlu0 %v660, 124
    %v903 = vpop.permute.xlu0 %902
    %v904 = vsel %vm396, %v901, %v903
    %v907 = vsel %vm151, %v897, 0
    %909 = vmatprep.subr.mxu0 0.0
    %910 = vmatpush1.msra.mxu0 %v403
    %911 = vmatprep.subr.mxu0 0.0
    %912 = vmatpush1.msra.mxu0 0.0
    %913 = vmatprep.subr.mxu0 0.0
    %914 = vmatpush1.msra.mxu0 0.0
    %915 = vmatprep.subr.mxu0 0.0
    %916 = vmatpush1.msra.mxu0 0.0
    %917 = vmatprep.subr.mxu0 0.0
    %918 = vmatpush1.msra.mxu0 0.0
    %919 = vmatprep.subr.mxu0 0.0
    %920 = vmatpush1.msra.mxu0 0.0
    %921 = vmatprep.subr.mxu0 0.0
    %922 = vmatpush1.msra.mxu0 0.0
    %923 = vmatprep.subr.mxu0 0.0
    %924 = vmatpush1.msra.mxu0 0.0
    %925 = vmatprep.subr.mxu0 0.0
    %926 = vmatpush1.msra.mxu0 0.0
    %927 = vmatprep.subr.mxu0 0.0
    %928 = vmatpush1.msra.mxu0 0.0
    %929 = vmatprep.subr.mxu0 0.0
    %930 = vmatpush1.msra.mxu0 0.0
    %931 = vmatprep.subr.mxu0 0.0
    %932 = vmatpush1.msra.mxu0 0.0
    %933 = vmatprep.subr.mxu0 0.0
    %934 = vmatpush1.msra.mxu0 0.0
    %935 = vmatprep.subr.mxu0 0.0
    %936 = vmatpush1.msra.mxu0 0.0
    %937 = vmatprep.subr.mxu0 0.0
    %938 = vmatpush1.msra.mxu0 0.0
    %939 = vmatprep.subr.mxu0 0.0
    %940 = vmatpush1.msra.mxu0 0.0
    %941 = vmatprep.subr.mxu0 0.0
    %942 = vmatpush1.msra.mxu0 0.0
    %943 = vmatprep.subr.mxu0 0.0
    %944 = vmatpush1.msra.mxu0 0.0
    %945 = vmatprep.subr.mxu0 0.0
    %946 = vmatpush1.msra.mxu0 0.0
    %947 = vmatprep.subr.mxu0 0.0
    %948 = vmatpush1.msra.mxu0 0.0
    %949 = vmatprep.subr.mxu0 0.0
    %950 = vmatpush1.msra.mxu0 0.0
    %951 = vmatprep.subr.mxu0 0.0
    %952 = vmatpush1.msra.mxu0 0.0
    %953 = vmatprep.subr.mxu0 0.0
    %954 = vmatpush1.msra.mxu0 0.0
    %955 = vmatprep.subr.mxu0 0.0
    %956 = vmatpush1.msra.mxu0 0.0
    %957 = vmatprep.subr.mxu0 0.0
    %958 = vmatpush1.msra.mxu0 0.0
    %959 = vmatprep.subr.mxu0 0.0
    %960 = vmatpush1.msra.mxu0 0.0
    %961 = vmatprep.subr.mxu0 0.0
    %962 = vmatpush1.msra.mxu0 0.0
    %963 = vmatprep.subr.mxu0 0.0
    %964 = vmatpush1.msra.mxu0 0.0
    %965 = vmatprep.subr.mxu0 0.0
    %966 = vmatpush1.msra.mxu0 0.0
    %967 = vmatprep.subr.mxu0 0.0
    %968 = vmatpush1.msra.mxu0 0.0
    %969 = vmatprep.subr.mxu0 0.0
    %970 = vmatpush1.msra.mxu0 0.0
    %971 = vmatprep.subr.mxu0 0.0
    %972 = vmatpush1.msra.mxu0 0.0
    %973 = vmatprep.mubr.f32.mxu0 0.0
    %974 = vmatmul.mubr.f32.gmra.mrb[0].mxu0 %v907
    %v975 = vpop.f32.mrb[0].mxu0
    %v976 = vadd.f32 %v904, %v975
    %v977 = vpop.f32.mrb[0].mxu0
    %978 = vdwg.mxu0
    %v979 = vadd.f32 %v976, %v43
    %v980 = vxor.u32 %v979, 2147483648
    %v981 = vmul.f32 %v980, 1.442695
    %v982 = vpow.pop %v981
    %v983 = vadd.f32 %v982, 1.0
    %v984 = vrcp.pop %v983
    %v985 = vmul.f32 1.0, %v984
    %v986 = vtanh.pop %v979
    %v987 = vmul.f32 %v985, %v493
    %989 = vrot.lane.b32.xlu0 %v986, 64
    %v990 = vpop.permute.xlu0 %989
    %v992 = vmul.f32 %v985, %v990
    %994 = vrot.lane.b32.xlu0 %v992, 32
    %v995 = vpop.permute.xlu0 %994
    %v997 = vadd.f32 %v987, %v995
    %v998 = vtanh.pop %v997
    %1000 = vrot.lane.b32.xlu0 %v998, 64
    %v1001 = vpop.permute.xlu0 %1000
    %v1003 = vmul.f32 %v985, %v1001
    %1005 = vrot.lane.b32.xlu0 %v1003, 32
    %v1006 = vpop.permute.xlu0 %1005
    %v1007 = vsel %vm76, %v1006, 0
    %1009 = vmatprep.subr.mxu0 0.0
    %1010 = vmatpush1.msra.mxu0 %v44
    %1011 = vmatprep.subr.mxu0 0.0
    %1012 = vmatpush1.msra.mxu0 %v45
    %1013 = vmatprep.subr.mxu0 0.0
    %1014 = vmatpush1.msra.mxu0 %v46
    %1015 = vmatprep.subr.mxu0 0.0
    %1016 = vmatpush1.msra.mxu0 %v47
    %1017 = vmatprep.subr.mxu0 0.0
    %1018 = vmatpush1.msra.mxu0 0.0
    %1019 = vmatprep.subr.mxu0 0.0
    %1020 = vmatpush1.msra.mxu0 0.0
    %1021 = vmatprep.subr.mxu0 0.0
    %1022 = vmatpush1.msra.mxu0 0.0
    %1023 = vmatprep.subr.mxu0 0.0
    %1024 = vmatpush1.msra.mxu0 0.0
    %1025 = vmatprep.subr.mxu0 0.0
    %1026 = vmatpush1.msra.mxu0 0.0
    %1027 = vmatprep.subr.mxu0 0.0
    %1028 = vmatpush1.msra.mxu0 0.0
    %1029 = vmatprep.subr.mxu0 0.0
    %1030 = vmatpush1.msra.mxu0 0.0
    %1031 = vmatprep.subr.mxu0 0.0
    %1032 = vmatpush1.msra.mxu0 0.0
    %1033 = vmatprep.subr.mxu0 0.0
    %1034 = vmatpush1.msra.mxu0 0.0
    %1035 = vmatprep.subr.mxu0 0.0
    %1036 = vmatpush1.msra.mxu0 0.0
    %1037 = vmatprep.subr.mxu0 0.0
    %1038 = vmatpush1.msra.mxu0 0.0
    %1039 = vmatprep.subr.mxu0 0.0
    %1040 = vmatpush1.msra.mxu0 0.0
    %1041 = vmatprep.subr.mxu0 0.0
    %1042 = vmatpush1.msra.mxu0 0.0
    %1043 = vmatprep.subr.mxu0 0.0
    %1044 = vmatpush1.msra.mxu0 0.0
    %1045 = vmatprep.subr.mxu0 0.0
    %1046 = vmatpush1.msra.mxu0 0.0
    %1047 = vmatprep.subr.mxu0 0.0
    %1048 = vmatpush1.msra.mxu0 0.0
    %1049 = vmatprep.subr.mxu0 0.0
    %1050 = vmatpush1.msra.mxu0 0.0
    %1051 = vmatprep.subr.mxu0 0.0
    %1052 = vmatpush1.msra.mxu0 0.0
    %1053 = vmatprep.subr.mxu0 0.0
    %1054 = vmatpush1.msra.mxu0 0.0
    %1055 = vmatprep.subr.mxu0 0.0
    %1056 = vmatpush1.msra.mxu0 0.0
    %1057 = vmatprep.subr.mxu0 0.0
    %1058 = vmatpush1.msra.mxu0 0.0
    %1059 = vmatprep.subr.mxu0 0.0
    %1060 = vmatpush1.msra.mxu0 0.0
    %1061 = vmatprep.subr.mxu0 0.0
    %1062 = vmatpush1.msra.mxu0 0.0
    %1063 = vmatprep.subr.mxu0 0.0
    %1064 = vmatpush1.msra.mxu0 0.0
    %1065 = vmatprep.subr.mxu0 0.0
    %1066 = vmatpush1.msra.mxu0 0.0
    %1067 = vmatprep.subr.mxu0 0.0
    %1068 = vmatpush1.msra.mxu0 0.0
    %1069 = vmatprep.subr.mxu0 0.0
    %1070 = vmatpush1.msra.mxu0 0.0
    %1071 = vmatprep.subr.mxu0 0.0
    %1072 = vmatpush1.msra.mxu0 0.0
    %1073 = vmatprep.mubr.f32.mxu0 0.0
    %1074 = vmatmul.mubr.f32.gmra.mrb[0].mxu0 %v1007
    %v1075 = vpop.f32.mrb[0].mxu0
    %v1076 = vadd.f32 0.0, %v1075
    %v1077 = vpop.f32.mrb[0].mxu0
    %1078 = vdwg.mxu0
    %v1079 = vadd.f32 %v1076, %v48
    %1081 = vrot.lane.b32.xlu0 %v1079, 16
    %v1082 = vpop.permute.xlu0 %1081
    %vm1084 = vcmask 261248
    %1085 = vst.msk [vmem:[#allocation2] sm:$0xff] %vm1084, %v1082
    %1087 = vset.pattern.permute.xlu0 16
    %1088 = vperm.xlu0 %1087, %v1076
    %v1089 = vpop.permute.xlu0 %1088
    %v1091 = vlaneseq
    %v1092 = vshrl.u32 %v1091, 7
    %v1093 = vsub.s32 1, %v1092
    %v1094 = vrot.slane %v49, %v1093
    %v1095 = vmul.f32 %v1089, %v1094
    %v1096 = vadd.f32 %v588, %v1095
    %s1097 = scalar_lea.vmem %s0, 16
    %v1098 = vld [vmem:[%s1097] sm:$0xff]
    %1099 = vmatprep.subr.mxu0 %v27
    %1100 = vmatpush1.msra.mxu0 %v26
    %1101 = vmatprep.subr.mxu0 %v29
    %1102 = vmatpush1.msra.mxu0 %v28
    %1103 = vmatprep.subr.mxu0 %v31
    %1104 = vmatpush1.msra.mxu0 %v30
    %1105 = vmatprep.subr.mxu0 %v33
    %1106 = vmatpush1.msra.mxu0 %v32
    %1107 = vmatprep.subr.mxu0 0.0
    %1108 = vmatpush1.msra.mxu0 0.0
    %1109 = vmatprep.subr.mxu0 0.0
    %1110 = vmatpush1.msra.mxu0 0.0
    %1111 = vmatprep.subr.mxu0 0.0
    %1112 = vmatpush1.msra.mxu0 0.0
    %1113 = vmatprep.subr.mxu0 0.0
    %1114 = vmatpush1.msra.mxu0 0.0
    %1115 = vmatprep.subr.mxu0 0.0
    %1116 = vmatpush1.msra.mxu0 0.0
    %1117 = vmatprep.subr.mxu0 0.0
    %1118 = vmatpush1.msra.mxu0 0.0
    %1119 = vmatprep.subr.mxu0 0.0
    %1120 = vmatpush1.msra.mxu0 0.0
    %1121 = vmatprep.subr.mxu0 0.0
    %1122 = vmatpush1.msra.mxu0 0.0
    %1123 = vmatprep.subr.mxu0 0.0
    %1124 = vmatpush1.msra.mxu0 0.0
    %1125 = vmatprep.subr.mxu0 0.0
    %1126 = vmatpush1.msra.mxu0 0.0
    %1127 = vmatprep.subr.mxu0 0.0
    %1128 = vmatpush1.msra.mxu0 0.0
    %1129 = vmatprep.subr.mxu0 0.0
    %1130 = vmatpush1.msra.mxu0 0.0
    %1131 = vmatprep.subr.mxu0 0.0
    %1132 = vmatpush1.msra.mxu0 0.0
    %1133 = vmatprep.subr.mxu0 0.0
    %1134 = vmatpush1.msra.mxu0 0.0
    %1135 = vmatprep.subr.mxu0 0.0
    %1136 = vmatpush1.msra.mxu0 0.0
    %1137 = vmatprep.subr.mxu0 0.0
    %1138 = vmatpush1.msra.mxu0 0.0
    %1139 = vmatprep.subr.mxu0 0.0
    %1140 = vmatpush1.msra.mxu0 0.0
    %1141 = vmatprep.subr.mxu0 0.0
    %1142 = vmatpush1.msra.mxu0 0.0
    %1143 = vmatprep.subr.mxu0 0.0
    %1144 = vmatpush1.msra.mxu0 0.0
    %1145 = vmatprep.subr.mxu0 0.0
    %1146 = vmatpush1.msra.mxu0 0.0
    %1147 = vmatprep.subr.mxu0 0.0
    %1148 = vmatpush1.msra.mxu0 0.0
    %1149 = vmatprep.subr.mxu0 0.0
    %1150 = vmatpush1.msra.mxu0 0.0
    %1151 = vmatprep.subr.mxu0 0.0
    %1152 = vmatpush1.msra.mxu0 0.0
    %1153 = vmatprep.subr.mxu0 0.0
    %1154 = vmatpush1.msra.mxu0 0.0
    %1155 = vmatprep.subr.mxu0 0.0
    %1156 = vmatpush1.msra.mxu0 0.0
    %1157 = vmatprep.subr.mxu0 0.0
    %1158 = vmatpush1.msra.mxu0 0.0
    %1159 = vmatprep.subr.mxu0 0.0
    %1160 = vmatpush1.msra.mxu0 0.0
    %1161 = vmatprep.subr.mxu0 0.0
    %1162 = vmatpush1.msra.mxu0 0.0
    %1163 = vmatprep.mubr.f32.mxu0 0.0
    %1164 = vmatmul.mubr.f32.gmra.mrb[0].mxu0 %v1007
    %v1165 = vpop.f32.mrb[0].mxu0
    %v1166 = vadd.f32 0.0, %v1165
    %v1167 = vpop.f32.mrb[0].mxu0
    %v1168 = vadd.f32 0.0, %v1167
    %1169 = vdwg.mxu0
    %v1171 = vsel %vm151, %v1098, 0
    %1173 = vmatprep.subr.mxu0 0.0
    %1174 = vmatpush1.msra.mxu0 %v157
    %1175 = vmatprep.subr.mxu0 0.0
    %1176 = vmatpush1.msra.mxu0 0.0
    %1177 = vmatprep.subr.mxu0 0.0
    %1178 = vmatpush1.msra.mxu0 0.0
    %1179 = vmatprep.subr.mxu0 0.0
    %1180 = vmatpush1.msra.mxu0 0.0
    %1181 = vmatprep.subr.mxu0 0.0
    %1182 = vmatpush1.msra.mxu0 0.0
    %1183 = vmatprep.subr.mxu0 0.0
    %1184 = vmatpush1.msra.mxu0 0.0
    %1185 = vmatprep.subr.mxu0 0.0
    %1186 = vmatpush1.msra.mxu0 0.0
    %1187 = vmatprep.subr.mxu0 0.0
    %1188 = vmatpush1.msra.mxu0 0.0
    %1189 = vmatprep.subr.mxu0 0.0
    %1190 = vmatpush1.msra.mxu0 0.0
    %1191 = vmatprep.subr.mxu0 0.0
    %1192 = vmatpush1.msra.mxu0 0.0
    %1193 = vmatprep.subr.mxu0 0.0
    %1194 = vmatpush1.msra.mxu0 0.0
    %1195 = vmatprep.subr.mxu0 0.0
    %1196 = vmatpush1.msra.mxu0 0.0
    %1197 = vmatprep.subr.mxu0 0.0
    %1198 = vmatpush1.msra.mxu0 0.0
    %1199 = vmatprep.subr.mxu0 0.0
    %1200 = vmatpush1.msra.mxu0 0.0
    %1201 = vmatprep.subr.mxu0 0.0
    %1202 = vmatpush1.msra.mxu0 0.0
    %1203 = vmatprep.subr.mxu0 0.0
    %1204 = vmatpush1.msra.mxu0 0.0
    %1205 = vmatprep.subr.mxu0 0.0
    %1206 = vmatpush1.msra.mxu0 0.0
    %1207 = vmatprep.subr.mxu0 0.0
    %1208 = vmatpush1.msra.mxu0 0.0
    %1209 = vmatprep.subr.mxu0 0.0
    %1210 = vmatpush1.msra.mxu0 0.0
    %1211 = vmatprep.subr.mxu0 0.0
    %1212 = vmatpush1.msra.mxu0 0.0
    %1213 = vmatprep.subr.mxu0 0.0
    %1214 = vmatpush1.msra.mxu0 0.0
    %1215 = vmatprep.subr.mxu0 0.0
    %1216 = vmatpush1.msra.mxu0 0.0
    %1217 = vmatprep.subr.mxu0 0.0
    %1218 = vmatpush1.msra.mxu0 0.0
    %1219 = vmatprep.subr.mxu0 0.0
    %1220 = vmatpush1.msra.mxu0 0.0
    %1221 = vmatprep.subr.mxu0 0.0
    %1222 = vmatpush1.msra.mxu0 0.0
    %1223 = vmatprep.subr.mxu0 0.0
    %1224 = vmatpush1.msra.mxu0 0.0
    %1225 = vmatprep.subr.mxu0 0.0
    %1226 = vmatpush1.msra.mxu0 0.0
    %1227 = vmatprep.subr.mxu0 0.0
    %1228 = vmatpush1.msra.mxu0 0.0
    %1229 = vmatprep.subr.mxu0 0.0
    %1230 = vmatpush1.msra.mxu0 0.0
    %1231 = vmatprep.subr.mxu0 0.0
    %1232 = vmatpush1.msra.mxu0 0.0
    %1233 = vmatprep.subr.mxu0 0.0
    %1234 = vmatpush1.msra.mxu0 0.0
    %1235 = vmatprep.subr.mxu0 0.0
    %1236 = vmatpush1.msra.mxu0 0.0
    %1237 = vmatprep.mubr.f32.mxu0 0.0
    %1238 = vmatmul.mubr.f32.gmra.mrb[0].mxu0 %v1171
    %v1239 = vpop.f32.mrb[0].mxu0
    %v1240 = vadd.f32 %v39, %v1239
    %v1241 = vpop.f32.mrb[0].mxu0
    %1242 = vdwg.mxu0
    %v1243 = vadd.f32 %v1240, %v1166
    %1245 = vrot.lane.b32.xlu0 %v997, 96
    %v1246 = vpop.permute.xlu0 %1245
    %v1247 = vsel %vm76, %v1246, 0
    %1249 = vmatprep.subr.mxu0 0.0
    %1250 = vmatpush1.msra.mxu0 %v34
    %1251 = vmatprep.subr.mxu0 0.0
    %1252 = vmatpush1.msra.mxu0 %v35
    %1253 = vmatprep.subr.mxu0 0.0
    %1254 = vmatpush1.msra.mxu0 %v36
    %1255 = vmatprep.subr.mxu0 0.0
    %1256 = vmatpush1.msra.mxu0 %v37
    %1257 = vmatprep.subr.mxu0 0.0
    %1258 = vmatpush1.msra.mxu0 0.0
    %1259 = vmatprep.subr.mxu0 0.0
    %1260 = vmatpush1.msra.mxu0 0.0
    %1261 = vmatprep.subr.mxu0 0.0
    %1262 = vmatpush1.msra.mxu0 0.0
    %1263 = vmatprep.subr.mxu0 0.0
    %1264 = vmatpush1.msra.mxu0 0.0
    %1265 = vmatprep.subr.mxu0 0.0
    %1266 = vmatpush1.msra.mxu0 0.0
    %1267 = vmatprep.subr.mxu0 0.0
    %1268 = vmatpush1.msra.mxu0 0.0
    %1269 = vmatprep.subr.mxu0 0.0
    %1270 = vmatpush1.msra.mxu0 0.0
    %1271 = vmatprep.subr.mxu0 0.0
    %1272 = vmatpush1.msra.mxu0 0.0
    %1273 = vmatprep.subr.mxu0 0.0
    %1274 = vmatpush1.msra.mxu0 0.0
    %1275 = vmatprep.subr.mxu0 0.0
    %1276 = vmatpush1.msra.mxu0 0.0
    %1277 = vmatprep.subr.mxu0 0.0
    %1278 = vmatpush1.msra.mxu0 0.0
    %1279 = vmatprep.subr.mxu0 0.0
    %1280 = vmatpush1.msra.mxu0 0.0
    %1281 = vmatprep.subr.mxu0 0.0
    %1282 = vmatpush1.msra.mxu0 0.0
    %1283 = vmatprep.subr.mxu0 0.0
    %1284 = vmatpush1.msra.mxu0 0.0
    %1285 = vmatprep.subr.mxu0 0.0
    %1286 = vmatpush1.msra.mxu0 0.0
    %1287 = vmatprep.subr.mxu0 0.0
    %1288 = vmatpush1.msra.mxu0 0.0
    %1289 = vmatprep.subr.mxu0 0.0
    %1290 = vmatpush1.msra.mxu0 0.0
    %1291 = vmatprep.subr.mxu0 0.0
    %1292 = vmatpush1.msra.mxu0 0.0
    %1293 = vmatprep.subr.mxu0 0.0
    %1294 = vmatpush1.msra.mxu0 0.0
    %1295 = vmatprep.subr.mxu0 0.0
    %1296 = vmatpush1.msra.mxu0 0.0
    %1297 = vmatprep.subr.mxu0 0.0
    %1298 = vmatpush1.msra.mxu0 0.0
    %1299 = vmatprep.subr.mxu0 0.0
    %1300 = vmatpush1.msra.mxu0 0.0
    %1301 = vmatprep.subr.mxu0 0.0
    %1302 = vmatpush1.msra.mxu0 0.0
    %1303 = vmatprep.subr.mxu0 0.0
    %1304 = vmatpush1.msra.mxu0 0.0
    %1305 = vmatprep.subr.mxu0 0.0
    %1306 = vmatpush1.msra.mxu0 0.0
    %1307 = vmatprep.subr.mxu0 0.0
    %1308 = vmatpush1.msra.mxu0 0.0
    %1309 = vmatprep.subr.mxu0 0.0
    %1310 = vmatpush1.msra.mxu0 0.0
    %1311 = vmatprep.subr.mxu0 0.0
    %1312 = vmatpush1.msra.mxu0 0.0
    %1313 = vmatprep.mubr.f32.mxu0 0.0
    %1314 = vmatmul.mubr.f32.gmra.mrb[0].mxu0 %v1247
    %v1315 = vpop.f32.mrb[0].mxu0
    %v1316 = vadd.f32 0.0, %v1315
    %v1317 = vpop.f32.mrb[0].mxu0
    %1318 = vdwg.mxu0
    %v1319 = vadd.f32 %v1243, %v1316
    %v1320 = vmax.f32 %v1319, 0.0
    %v1322 = vsel %vm151, %v1320, 0
    %1324 = vmatprep.subr.mxu0 0.0
    %1325 = vmatpush1.msra.mxu0 %v306
    %1326 = vmatprep.subr.mxu0 0.0
    %1327 = vmatpush1.msra.mxu0 0.0
    %1328 = vmatprep.subr.mxu0 0.0
    %1329 = vmatpush1.msra.mxu0 0.0
    %1330 = vmatprep.subr.mxu0 0.0
    %1331 = vmatpush1.msra.mxu0 0.0
    %1332 = vmatprep.subr.mxu0 0.0
    %1333 = vmatpush1.msra.mxu0 0.0
    %1334 = vmatprep.subr.mxu0 0.0
    %1335 = vmatpush1.msra.mxu0 0.0
    %1336 = vmatprep.subr.mxu0 0.0
    %1337 = vmatpush1.msra.mxu0 0.0
    %1338 = vmatprep.subr.mxu0 0.0
    %1339 = vmatpush1.msra.mxu0 0.0
    %1340 = vmatprep.subr.mxu0 0.0
    %1341 = vmatpush1.msra.mxu0 0.0
    %1342 = vmatprep.subr.mxu0 0.0
    %1343 = vmatpush1.msra.mxu0 0.0
    %1344 = vmatprep.subr.mxu0 0.0
    %1345 = vmatpush1.msra.mxu0 0.0
    %1346 = vmatprep.subr.mxu0 0.0
    %1347 = vmatpush1.msra.mxu0 0.0
    %1348 = vmatprep.subr.mxu0 0.0
    %1349 = vmatpush1.msra.mxu0 0.0
    %1350 = vmatprep.subr.mxu0 0.0
    %1351 = vmatpush1.msra.mxu0 0.0
    %1352 = vmatprep.subr.mxu0 0.0
    %1353 = vmatpush1.msra.mxu0 0.0
    %1354 = vmatprep.subr.mxu0 0.0
    %1355 = vmatpush1.msra.mxu0 0.0
    %1356 = vmatprep.subr.mxu0 0.0
    %1357 = vmatpush1.msra.mxu0 0.0
    %1358 = vmatprep.subr.mxu0 0.0
    %1359 = vmatpush1.msra.mxu0 0.0
    %1360 = vmatprep.subr.mxu0 0.0
    %1361 = vmatpush1.msra.mxu0 0.0
    %1362 = vmatprep.subr.mxu0 0.0
    %1363 = vmatpush1.msra.mxu0 0.0
    %1364 = vmatprep.subr.mxu0 0.0
    %1365 = vmatpush1.msra.mxu0 0.0
    %1366 = vmatprep.subr.mxu0 0.0
    %1367 = vmatpush1.msra.mxu0 0.0
    %1368 = vmatprep.subr.mxu0 0.0
    %1369 = vmatpush1.msra.mxu0 0.0
    %1370 = vmatprep.subr.mxu0 0.0
    %1371 = vmatpush1.msra.mxu0 0.0
    %1372 = vmatprep.subr.mxu0 0.0
    %1373 = vmatpush1.msra.mxu0 0.0
    %1374 = vmatprep.subr.mxu0 0.0
    %1375 = vmatpush1.msra.mxu0 0.0
    %1376 = vmatprep.subr.mxu0 0.0
    %1377 = vmatpush1.msra.mxu0 0.0
    %1378 = vmatprep.subr.mxu0 0.0
    %1379 = vmatpush1.msra.mxu0 0.0
    %1380 = vmatprep.subr.mxu0 0.0
    %1381 = vmatpush1.msra.mxu0 0.0
    %1382 = vmatprep.subr.mxu0 0.0
    %1383 = vmatpush1.msra.mxu0 0.0
    %1384 = vmatprep.subr.mxu0 0.0
    %1385 = vmatpush1.msra.mxu0 0.0
    %1386 = vmatprep.subr.mxu0 0.0
    %1387 = vmatpush1.msra.mxu0 0.0
    %1388 = vmatprep.mubr.f32.mxu0 0.0
    %1389 = vmatmul.mubr.f32.gmra.mrb[0].mxu0 %v1322
    %v1390 = vpop.f32.mrb[0].mxu0
    %v1391 = vadd.f32 %v41, %v1390
    %v1392 = vpop.f32.mrb[0].mxu0
    %1393 = vdwg.mxu0
    %v1394 = vsel %vm151, %v1391, -inf
    %1395 = vmax.xlane.f32.xlu0 %v1394
    %v1396 = vpop.xlane.xlu0 %1395
    %v1397 = vsub.f32 %v1391, %v1396
    %v1398 = vmul.f32 %v1397, 1.442695
    %v1399 = vpow.pop %v1398
    %v1400 = vsel %vm151, %v1399, 0.0
    %1401 = vadd.xlane.f32.xlu0 %v1400
    %v1402 = vpop.xlane.xlu0 %1401
    %v1403 = vrcp.pop %v1402
    %v1404 = vmul.f32 %v1399, %v1403
    %v1405 = vmul.f32 %v1098, %v1404
    %1408 = vrot.lane.b32.xlu0 %v1166, 124
    %v1409 = vpop.permute.xlu0 %1408
    %1410 = vrot.lane.b32.xlu0 %v1168, 124
    %v1411 = vpop.permute.xlu0 %1410
    %v1412 = vsel %vm396, %v1409, %v1411
    %v1415 = vsel %vm151, %v1405, 0
    %1417 = vmatprep.subr.mxu0 0.0
    %1418 = vmatpush1.msra.mxu0 %v403
    %1419 = vmatprep.subr.mxu0 0.0
    %1420 = vmatpush1.msra.mxu0 0.0
    %1421 = vmatprep.subr.mxu0 0.0
    %1422 = vmatpush1.msra.mxu0 0.0
    %1423 = vmatprep.subr.mxu0 0.0
    %1424 = vmatpush1.msra.mxu0 0.0
    %1425 = vmatprep.subr.mxu0 0.0
    %1426 = vmatpush1.msra.mxu0 0.0
    %1427 = vmatprep.subr.mxu0 0.0
    %1428 = vmatpush1.msra.mxu0 0.0
    %1429 = vmatprep.subr.mxu0 0.0
    %1430 = vmatpush1.msra.mxu0 0.0
    %1431 = vmatprep.subr.mxu0 0.0
    %1432 = vmatpush1.msra.mxu0 0.0
    %1433 = vmatprep.subr.mxu0 0.0
    %1434 = vmatpush1.msra.mxu0 0.0
    %1435 = vmatprep.subr.mxu0 0.0
    %1436 = vmatpush1.msra.mxu0 0.0
    %1437 = vmatprep.subr.mxu0 0.0
    %1438 = vmatpush1.msra.mxu0 0.0
    %1439 = vmatprep.subr.mxu0 0.0
    %1440 = vmatpush1.msra.mxu0 0.0
    %1441 = vmatprep.subr.mxu0 0.0
    %1442 = vmatpush1.msra.mxu0 0.0
    %1443 = vmatprep.subr.mxu0 0.0
    %1444 = vmatpush1.msra.mxu0 0.0
    %1445 = vmatprep.subr.mxu0 0.0
    %1446 = vmatpush1.msra.mxu0 0.0
    %1447 = vmatprep.subr.mxu0 0.0
    %1448 = vmatpush1.msra.mxu0 0.0
    %1449 = vmatprep.subr.mxu0 0.0
    %1450 = vmatpush1.msra.mxu0 0.0
    %1451 = vmatprep.subr.mxu0 0.0
    %1452 = vmatpush1.msra.mxu0 0.0
    %1453 = vmatprep.subr.mxu0 0.0
    %1454 = vmatpush1.msra.mxu0 0.0
    %1455 = vmatprep.subr.mxu0 0.0
    %1456 = vmatpush1.msra.mxu0 0.0
    %1457 = vmatprep.subr.mxu0 0.0
    %1458 = vmatpush1.msra.mxu0 0.0
    %1459 = vmatprep.subr.mxu0 0.0
    %1460 = vmatpush1.msra.mxu0 0.0
    %1461 = vmatprep.subr.mxu0 0.0
    %1462 = vmatpush1.msra.mxu0 0.0
    %1463 = vmatprep.subr.mxu0 0.0
    %1464 = vmatpush1.msra.mxu0 0.0
    %1465 = vmatprep.subr.mxu0 0.0
    %1466 = vmatpush1.msra.mxu0 0.0
    %1467 = vmatprep.subr.mxu0 0.0
    %1468 = vmatpush1.msra.mxu0 0.0
    %1469 = vmatprep.subr.mxu0 0.0
    %1470 = vmatpush1.msra.mxu0 0.0
    %1471 = vmatprep.subr.mxu0 0.0
    %1472 = vmatpush1.msra.mxu0 0.0
    %1473 = vmatprep.subr.mxu0 0.0
    %1474 = vmatpush1.msra.mxu0 0.0
    %1475 = vmatprep.subr.mxu0 0.0
    %1476 = vmatpush1.msra.mxu0 0.0
    %1477 = vmatprep.subr.mxu0 0.0
    %1478 = vmatpush1.msra.mxu0 0.0
    %1479 = vmatprep.subr.mxu0 0.0
    %1480 = vmatpush1.msra.mxu0 0.0
    %1481 = vmatprep.mubr.f32.mxu0 0.0
    %1482 = vmatmul.mubr.f32.gmra.mrb[0].mxu0 %v1415
    %v1483 = vpop.f32.mrb[0].mxu0
    %v1484 = vadd.f32 %v1412, %v1483
    %v1485 = vpop.f32.mrb[0].mxu0
    %1486 = vdwg.mxu0
    %v1487 = vadd.f32 %v1484, %v43
    %v1488 = vxor.u32 %v1487, 2147483648
    %v1489 = vmul.f32 %v1488, 1.442695
    %v1490 = vpow.pop %v1489
    %v1491 = vadd.f32 %v1490, 1.0
    %v1492 = vrcp.pop %v1491
    %v1493 = vmul.f32 1.0, %v1492
    %v1494 = vtanh.pop %v1487
    %v1495 = vmul.f32 %v1493, %v997
    %1497 = vrot.lane.b32.xlu0 %v1494, 64
    %v1498 = vpop.permute.xlu0 %1497
    %v1500 = vmul.f32 %v1493, %v1498
    %1502 = vrot.lane.b32.xlu0 %v1500, 32
    %v1503 = vpop.permute.xlu0 %1502
    %v1505 = vadd.f32 %v1495, %v1503
    %v1506 = vtanh.pop %v1505
    %1508 = vrot.lane.b32.xlu0 %v1506, 64
    %v1509 = vpop.permute.xlu0 %1508
    %v1511 = vmul.f32 %v1493, %v1509
    %1513 = vrot.lane.b32.xlu0 %v1511, 32
    %v1514 = vpop.permute.xlu0 %1513
    %v1515 = vsel %vm76, %v1514, 0
    %1517 = vmatprep.subr.mxu0 0.0
    %1518 = vmatpush1.msra.mxu0 %v44
    %1519 = vmatprep.subr.mxu0 0.0
    %1520 = vmatpush1.msra.mxu0 %v45
    %1521 = vmatprep.subr.mxu0 0.0
    %1522 = vmatpush1.msra.mxu0 %v46
    %1523 = vmatprep.subr.mxu0 0.0
    %1524 = vmatpush1.msra.mxu0 %v47
    %1525 = vmatprep.subr.mxu0 0.0
    %1526 = vmatpush1.msra.mxu0 0.0
    %1527 = vmatprep.subr.mxu0 0.0
    %1528 = vmatpush1.msra.mxu0 0.0
    %1529 = vmatprep.subr.mxu0 0.0
    %1530 = vmatpush1.msra.mxu0 0.0
    %1531 = vmatprep.subr.mxu0 0.0
    %1532 = vmatpush1.msra.mxu0 0.0
    %1533 = vmatprep.subr.mxu0 0.0
    %1534 = vmatpush1.msra.mxu0 0.0
    %1535 = vmatprep.subr.mxu0 0.0
    %1536 = vmatpush1.msra.mxu0 0.0
    %1537 = vmatprep.subr.mxu0 0.0
    %1538 = vmatpush1.msra.mxu0 0.0
    %1539 = vmatprep.subr.mxu0 0.0
    %1540 = vmatpush1.msra.mxu0 0.0
    %1541 = vmatprep.subr.mxu0 0.0
    %1542 = vmatpush1.msra.mxu0 0.0
    %1543 = vmatprep.subr.mxu0 0.0
    %1544 = vmatpush1.msra.mxu0 0.0
    %1545 = vmatprep.subr.mxu0 0.0
    %1546 = vmatpush1.msra.mxu0 0.0
    %1547 = vmatprep.subr.mxu0 0.0
    %1548 = vmatpush1.msra.mxu0 0.0
    %1549 = vmatprep.subr.mxu0 0.0
    %1550 = vmatpush1.msra.mxu0 0.0
    %1551 = vmatprep.subr.mxu0 0.0
    %1552 = vmatpush1.msra.mxu0 0.0
    %1553 = vmatprep.subr.mxu0 0.0
    %1554 = vmatpush1.msra.mxu0 0.0
    %1555 = vmatprep.subr.mxu0 0.0
    %1556 = vmatpush1.msra.mxu0 0.0
    %1557 = vmatprep.subr.mxu0 0.0
    %1558 = vmatpush1.msra.mxu0 0.0
    %1559 = vmatprep.subr.mxu0 0.0
    %1560 = vmatpush1.msra.mxu0 0.0
    %1561 = vmatprep.subr.mxu0 0.0
    %1562 = vmatpush1.msra.mxu0 0.0
    %1563 = vmatprep.subr.mxu0 0.0
    %1564 = vmatpush1.msra.mxu0 0.0
    %1565 = vmatprep.subr.mxu0 0.0
    %1566 = vmatpush1.msra.mxu0 0.0
    %1567 = vmatprep.subr.mxu0 0.0
    %1568 = vmatpush1.msra.mxu0 0.0
    %1569 = vmatprep.subr.mxu0 0.0
    %1570 = vmatpush1.msra.mxu0 0.0
    %1571 = vmatprep.subr.mxu0 0.0
    %1572 = vmatpush1.msra.mxu0 0.0
    %1573 = vmatprep.subr.mxu0 0.0
    %1574 = vmatpush1.msra.mxu0 0.0
    %1575 = vmatprep.subr.mxu0 0.0
    %1576 = vmatpush1.msra.mxu0 0.0
    %1577 = vmatprep.subr.mxu0 0.0
    %1578 = vmatpush1.msra.mxu0 0.0
    %1579 = vmatprep.subr.mxu0 0.0
    %1580 = vmatpush1.msra.mxu0 0.0
    %1581 = vmatprep.mubr.f32.mxu0 0.0
    %1582 = vmatmul.mubr.f32.gmra.mrb[0].mxu0 %v1515
    %v1583 = vpop.f32.mrb[0].mxu0
    %v1584 = vadd.f32 0.0, %v1583
    %v1585 = vpop.f32.mrb[0].mxu0
    %1586 = vdwg.mxu0
    %v1587 = vadd.f32 %v1584, %v48
    %1589 = vrot.lane.b32.xlu0 %v1587, 32
    %v1590 = vpop.permute.xlu0 %1589
    %vm1592 = vcmask 392448
    %1593 = vst.msk [vmem:[#allocation2] sm:$0xff] %vm1592, %v1590
    %1595 = vset.pattern.permute.xlu0 16
    %1596 = vperm.xlu0 %1595, %v1584
    %v1597 = vpop.permute.xlu0 %1596
    %v1599 = vlaneseq
    %v1600 = vshrl.u32 %v1599, 7
    %v1601 = vsub.s32 2, %v1600
    %v1602 = vrot.slane %v49, %v1601
    %v1603 = vmul.f32 %v1597, %v1602
    %v1604 = vadd.f32 %v1096, %v1603
    %s1605 = scalar_lea.vmem %s0, 24
    %v1606 = vld [vmem:[%s1605] sm:$0xff]
    %1607 = vmatprep.subr.mxu0 %v27
    %1608 = vmatpush1.msra.mxu0 %v26
    %1609 = vmatprep.subr.mxu0 %v29
    %1610 = vmatpush1.msra.mxu0 %v28
    %1611 = vmatprep.subr.mxu0 %v31
    %1612 = vmatpush1.msra.mxu0 %v30
    %1613 = vmatprep.subr.mxu0 %v33
    %1614 = vmatpush1.msra.mxu0 %v32
    %1615 = vmatprep.subr.mxu0 0.0
    %1616 = vmatpush1.msra.mxu0 0.0
    %1617 = vmatprep.subr.mxu0 0.0
    %1618 = vmatpush1.msra.mxu0 0.0
    %1619 = vmatprep.subr.mxu0 0.0
    %1620 = vmatpush1.msra.mxu0 0.0
    %1621 = vmatprep.subr.mxu0 0.0
    %1622 = vmatpush1.msra.mxu0 0.0
    %1623 = vmatprep.subr.mxu0 0.0
    %1624 = vmatpush1.msra.mxu0 0.0
    %1625 = vmatprep.subr.mxu0 0.0
    %1626 = vmatpush1.msra.mxu0 0.0
    %1627 = vmatprep.subr.mxu0 0.0
    %1628 = vmatpush1.msra.mxu0 0.0
    %1629 = vmatprep.subr.mxu0 0.0
    %1630 = vmatpush1.msra.mxu0 0.0
    %1631 = vmatprep.subr.mxu0 0.0
    %1632 = vmatpush1.msra.mxu0 0.0
    %1633 = vmatprep.subr.mxu0 0.0
    %1634 = vmatpush1.msra.mxu0 0.0
    %1635 = vmatprep.subr.mxu0 0.0
    %1636 = vmatpush1.msra.mxu0 0.0
    %1637 = vmatprep.subr.mxu0 0.0
    %1638 = vmatpush1.msra.mxu0 0.0
    %1639 = vmatprep.subr.mxu0 0.0
    %1640 = vmatpush1.msra.mxu0 0.0
    %1641 = vmatprep.subr.mxu0 0.0
    %1642 = vmatpush1.msra.mxu0 0.0
    %1643 = vmatprep.subr.mxu0 0.0
    %1644 = vmatpush1.msra.mxu0 0.0
    %1645 = vmatprep.subr.mxu0 0.0
    %1646 = vmatpush1.msra.mxu0 0.0
    %1647 = vmatprep.subr.mxu0 0.0
    %1648 = vmatpush1.msra.mxu0 0.0
    %1649 = vmatprep.subr.mxu0 0.0
    %1650 = vmatpush1.msra.mxu0 0.0
    %1651 = vmatprep.subr.mxu0 0.0
    %1652 = vmatpush1.msra.mxu0 0.0
    %1653 = vmatprep.subr.mxu0 0.0
    %1654 = vmatpush1.msra.mxu0 0.0
    %1655 = vmatprep.subr.mxu0 0.0
    %1656 = vmatpush1.msra.mxu0 0.0
    %1657 = vmatprep.subr.mxu0 0.0
    %1658 = vmatpush1.msra.mxu0 0.0
    %1659 = vmatprep.subr.mxu0 0.0
    %1660 = vmatpush1.msra.mxu0 0.0
    %1661 = vmatprep.subr.mxu0 0.0
    %1662 = vmatpush1.msra.mxu0 0.0
    %1663 = vmatprep.subr.mxu0 0.0
    %1664 = vmatpush1.msra.mxu0 0.0
    %1665 = vmatprep.subr.mxu0 0.0
    %1666 = vmatpush1.msra.mxu0 0.0
    %1667 = vmatprep.subr.mxu0 0.0
    %1668 = vmatpush1.msra.mxu0 0.0
    %1669 = vmatprep.subr.mxu0 0.0
    %1670 = vmatpush1.msra.mxu0 0.0
    %1671 = vmatprep.mubr.f32.mxu0 0.0
    %1672 = vmatmul.mubr.f32.gmra.mrb[0].mxu0 %v1515
    %v1673 = vpop.f32.mrb[0].mxu0
    %v1674 = vadd.f32 0.0, %v1673
    %v1675 = vpop.f32.mrb[0].mxu0
    %v1676 = vadd.f32 0.0, %v1675
    %1677 = vdwg.mxu0
    %v1679 = vsel %vm151, %v1606, 0
    %1681 = vmatprep.subr.mxu0 0.0
    %1682 = vmatpush1.msra.mxu0 %v157
    %1683 = vmatprep.subr.mxu0 0.0
    %1684 = vmatpush1.msra.mxu0 0.0
    %1685 = vmatprep.subr.mxu0 0.0
    %1686 = vmatpush1.msra.mxu0 0.0
    %1687 = vmatprep.subr.mxu0 0.0
    %1688 = vmatpush1.msra.mxu0 0.0
    %1689 = vmatprep.subr.mxu0 0.0
    %1690 = vmatpush1.msra.mxu0 0.0
    %1691 = vmatprep.subr.mxu0 0.0
    %1692 = vmatpush1.msra.mxu0 0.0
    %1693 = vmatprep.subr.mxu0 0.0
    %1694 = vmatpush1.msra.mxu0 0.0
    %1695 = vmatprep.subr.mxu0 0.0
    %1696 = vmatpush1.msra.mxu0 0.0
    %1697 = vmatprep.subr.mxu0 0.0
    %1698 = vmatpush1.msra.mxu0 0.0
    %1699 = vmatprep.subr.mxu0 0.0
    %1700 = vmatpush1.msra.mxu0 0.0
    %1701 = vmatprep.subr.mxu0 0.0
    %1702 = vmatpush1.msra.mxu0 0.0
    %1703 = vmatprep.subr.mxu0 0.0
    %1704 = vmatpush1.msra.mxu0 0.0
    %1705 = vmatprep.subr.mxu0 0.0
    %1706 = vmatpush1.msra.mxu0 0.0
    %1707 = vmatprep.subr.mxu0 0.0
    %1708 = vmatpush1.msra.mxu0 0.0
    %1709 = vmatprep.subr.mxu0 0.0
    %1710 = vmatpush1.msra.mxu0 0.0
    %1711 = vmatprep.subr.mxu0 0.0
    %1712 = vmatpush1.msra.mxu0 0.0
    %1713 = vmatprep.subr.mxu0 0.0
    %1714 = vmatpush1.msra.mxu0 0.0
    %1715 = vmatprep.subr.mxu0 0.0
    %1716 = vmatpush1.msra.mxu0 0.0
    %1717 = vmatprep.subr.mxu0 0.0
    %1718 = vmatpush1.msra.mxu0 0.0
    %1719 = vmatprep.subr.mxu0 0.0
    %1720 = vmatpush1.msra.mxu0 0.0
    %1721 = vmatprep.subr.mxu0 0.0
    %1722 = vmatpush1.msra.mxu0 0.0
    %1723 = vmatprep.subr.mxu0 0.0
    %1724 = vmatpush1.msra.mxu0 0.0
    %1725 = vmatprep.subr.mxu0 0.0
    %1726 = vmatpush1.msra.mxu0 0.0
    %1727 = vmatprep.subr.mxu0 0.0
    %1728 = vmatpush1.msra.mxu0 0.0
    %1729 = vmatprep.subr.mxu0 0.0
    %1730 = vmatpush1.msra.mxu0 0.0
    %1731 = vmatprep.subr.mxu0 0.0
    %1732 = vmatpush1.msra.mxu0 0.0
    %1733 = vmatprep.subr.mxu0 0.0
    %1734 = vmatpush1.msra.mxu0 0.0
    %1735 = vmatprep.subr.mxu0 0.0
    %1736 = vmatpush1.msra.mxu0 0.0
    %1737 = vmatprep.subr.mxu0 0.0
    %1738 = vmatpush1.msra.mxu0 0.0
    %1739 = vmatprep.subr.mxu0 0.0
    %1740 = vmatpush1.msra.mxu0 0.0
    %1741 = vmatprep.subr.mxu0 0.0
    %1742 = vmatpush1.msra.mxu0 0.0
    %1743 = vmatprep.subr.mxu0 0.0
    %1744 = vmatpush1.msra.mxu0 0.0
    %1745 = vmatprep.mubr.f32.mxu0 0.0
    %1746 = vmatmul.mubr.f32.gmra.mrb[0].mxu0 %v1679
    %v1747 = vpop.f32.mrb[0].mxu0
    %v1748 = vadd.f32 %v39, %v1747
    %v1749 = vpop.f32.mrb[0].mxu0
    %1750 = vdwg.mxu0
    %v1751 = vadd.f32 %v1748, %v1674
    %1753 = vrot.lane.b32.xlu0 %v1505, 96
    %v1754 = vpop.permute.xlu0 %1753
    %v1755 = vsel %vm76, %v1754, 0
    %1757 = vmatprep.subr.mxu0 0.0
    %1758 = vmatpush1.msra.mxu0 %v34
    %1759 = vmatprep.subr.mxu0 0.0
    %1760 = vmatpush1.msra.mxu0 %v35
    %1761 = vmatprep.subr.mxu0 0.0
    %1762 = vmatpush1.msra.mxu0 %v36
    %1763 = vmatprep.subr.mxu0 0.0
    %1764 = vmatpush1.msra.mxu0 %v37
    %1765 = vmatprep.subr.mxu0 0.0
    %1766 = vmatpush1.msra.mxu0 0.0
    %1767 = vmatprep.subr.mxu0 0.0
    %1768 = vmatpush1.msra.mxu0 0.0
    %1769 = vmatprep.subr.mxu0 0.0
    %1770 = vmatpush1.msra.mxu0 0.0
    %1771 = vmatprep.subr.mxu0 0.0
    %1772 = vmatpush1.msra.mxu0 0.0
    %1773 = vmatprep.subr.mxu0 0.0
    %1774 = vmatpush1.msra.mxu0 0.0
    %1775 = vmatprep.subr.mxu0 0.0
    %1776 = vmatpush1.msra.mxu0 0.0
    %1777 = vmatprep.subr.mxu0 0.0
    %1778 = vmatpush1.msra.mxu0 0.0
    %1779 = vmatprep.subr.mxu0 0.0
    %1780 = vmatpush1.msra.mxu0 0.0
    %1781 = vmatprep.subr.mxu0 0.0
    %1782 = vmatpush1.msra.mxu0 0.0
    %1783 = vmatprep.subr.mxu0 0.0
    %1784 = vmatpush1.msra.mxu0 0.0
    %1785 = vmatprep.subr.mxu0 0.0
    %1786 = vmatpush1.msra.mxu0 0.0
    %1787 = vmatprep.subr.mxu0 0.0
    %1788 = vmatpush1.msra.mxu0 0.0
    %1789 = vmatprep.subr.mxu0 0.0
    %1790 = vmatpush1.msra.mxu0 0.0
    %1791 = vmatprep.subr.mxu0 0.0
    %1792 = vmatpush1.msra.mxu0 0.0
    %1793 = vmatprep.subr.mxu0 0.0
    %1794 = vmatpush1.msra.mxu0 0.0
    %1795 = vmatprep.subr.mxu0 0.0
    %1796 = vmatpush1.msra.mxu0 0.0
    %1797 = vmatprep.subr.mxu0 0.0
    %1798 = vmatpush1.msra.mxu0 0.0
    %1799 = vmatprep.subr.mxu0 0.0
    %1800 = vmatpush1.msra.mxu0 0.0
    %1801 = vmatprep.subr.mxu0 0.0
    %1802 = vmatpush1.msra.mxu0 0.0
    %1803 = vmatprep.subr.mxu0 0.0
    %1804 = vmatpush1.msra.mxu0 0.0
    %1805 = vmatprep.subr.mxu0 0.0
    %1806 = vmatpush1.msra.mxu0 0.0
    %1807 = vmatprep.subr.mxu0 0.0
    %1808 = vmatpush1.msra.mxu0 0.0
    %1809 = vmatprep.subr.mxu0 0.0
    %1810 = vmatpush1.msra.mxu0 0.0
    %1811 = vmatprep.subr.mxu0 0.0
    %1812 = vmatpush1.msra.mxu0 0.0
    %1813 = vmatprep.subr.mxu0 0.0
    %1814 = vmatpush1.msra.mxu0 0.0
    %1815 = vmatprep.subr.mxu0 0.0
    %1816 = vmatpush1.msra.mxu0 0.0
    %1817 = vmatprep.subr.mxu0 0.0
    %1818 = vmatpush1.msra.mxu0 0.0
    %1819 = vmatprep.subr.mxu0 0.0
    %1820 = vmatpush1.msra.mxu0 0.0
    %1821 = vmatprep.mubr.f32.mxu0 0.0
    %1822 = vmatmul.mubr.f32.gmra.mrb[0].mxu0 %v1755
    %v1823 = vpop.f32.mrb[0].mxu0
    %v1824 = vadd.f32 0.0, %v1823
    %v1825 = vpop.f32.mrb[0].mxu0
    %1826 = vdwg.mxu0
    %v1827 = vadd.f32 %v1751, %v1824
    %v1828 = vmax.f32 %v1827, 0.0
    %v1830 = vsel %vm151, %v1828, 0
    %1832 = vmatprep.subr.mxu0 0.0
    %1833 = vmatpush1.msra.mxu0 %v306
    %1834 = vmatprep.subr.mxu0 0.0
    %1835 = vmatpush1.msra.mxu0 0.0
    %1836 = vmatprep.subr.mxu0 0.0
    %1837 = vmatpush1.msra.mxu0 0.0
    %1838 = vmatprep.subr.mxu0 0.0
    %1839 = vmatpush1.msra.mxu0 0.0
    %1840 = vmatprep.subr.mxu0 0.0
    %1841 = vmatpush1.msra.mxu0 0.0
    %1842 = vmatprep.subr.mxu0 0.0
    %1843 = vmatpush1.msra.mxu0 0.0
    %1844 = vmatprep.subr.mxu0 0.0
    %1845 = vmatpush1.msra.mxu0 0.0
    %1846 = vmatprep.subr.mxu0 0.0
    %1847 = vmatpush1.msra.mxu0 0.0
    %1848 = vmatprep.subr.mxu0 0.0
    %1849 = vmatpush1.msra.mxu0 0.0
    %1850 = vmatprep.subr.mxu0 0.0
    %1851 = vmatpush1.msra.mxu0 0.0
    %1852 = vmatprep.subr.mxu0 0.0
    %1853 = vmatpush1.msra.mxu0 0.0
    %1854 = vmatprep.subr.mxu0 0.0
    %1855 = vmatpush1.msra.mxu0 0.0
    %1856 = vmatprep.subr.mxu0 0.0
    %1857 = vmatpush1.msra.mxu0 0.0
    %1858 = vmatprep.subr.mxu0 0.0
    %1859 = vmatpush1.msra.mxu0 0.0
    %1860 = vmatprep.subr.mxu0 0.0
    %1861 = vmatpush1.msra.mxu0 0.0
    %1862 = vmatprep.subr.mxu0 0.0
    %1863 = vmatpush1.msra.mxu0 0.0
    %1864 = vmatprep.subr.mxu0 0.0
    %1865 = vmatpush1.msra.mxu0 0.0
    %1866 = vmatprep.subr.mxu0 0.0
    %1867 = vmatpush1.msra.mxu0 0.0
    %1868 = vmatprep.subr.mxu0 0.0
    %1869 = vmatpush1.msra.mxu0 0.0
    %1870 = vmatprep.subr.mxu0 0.0
    %1871 = vmatpush1.msra.mxu0 0.0
    %1872 = vmatprep.subr.mxu0 0.0
    %1873 = vmatpush1.msra.mxu0 0.0
    %1874 = vmatprep.subr.mxu0 0.0
    %1875 = vmatpush1.msra.mxu0 0.0
    %1876 = vmatprep.subr.mxu0 0.0
    %1877 = vmatpush1.msra.mxu0 0.0
    %1878 = vmatprep.subr.mxu0 0.0
    %1879 = vmatpush1.msra.mxu0 0.0
    %1880 = vmatprep.subr.mxu0 0.0
    %1881 = vmatpush1.msra.mxu0 0.0
    %1882 = vmatprep.subr.mxu0 0.0
    %1883 = vmatpush1.msra.mxu0 0.0
    %1884 = vmatprep.subr.mxu0 0.0
    %1885 = vmatpush1.msra.mxu0 0.0
    %1886 = vmatprep.subr.mxu0 0.0
    %1887 = vmatpush1.msra.mxu0 0.0
    %1888 = vmatprep.subr.mxu0 0.0
    %1889 = vmatpush1.msra.mxu0 0.0
    %1890 = vmatprep.subr.mxu0 0.0
    %1891 = vmatpush1.msra.mxu0 0.0
    %1892 = vmatprep.subr.mxu0 0.0
    %1893 = vmatpush1.msra.mxu0 0.0
    %1894 = vmatprep.subr.mxu0 0.0
    %1895 = vmatpush1.msra.mxu0 0.0
    %1896 = vmatprep.mubr.f32.mxu0 0.0
    %1897 = vmatmul.mubr.f32.gmra.mrb[0].mxu0 %v1830
    %v1898 = vpop.f32.mrb[0].mxu0
    %v1899 = vadd.f32 %v41, %v1898
    %v1900 = vpop.f32.mrb[0].mxu0
    %1901 = vdwg.mxu0
    %v1902 = vsel %vm151, %v1899, -inf
    %1903 = vmax.xlane.f32.xlu0 %v1902
    %v1904 = vpop.xlane.xlu0 %1903
    %v1905 = vsub.f32 %v1899, %v1904
    %v1906 = vmul.f32 %v1905, 1.442695
    %v1907 = vpow.pop %v1906
    %v1908 = vsel %vm151, %v1907, 0.0
    %1909 = vadd.xlane.f32.xlu0 %v1908
    %v1910 = vpop.xlane.xlu0 %1909
    %v1911 = vrcp.pop %v1910
    %v1912 = vmul.f32 %v1907, %v1911
    %v1913 = vmul.f32 %v1606, %v1912
    %1916 = vrot.lane.b32.xlu0 %v1674, 124
    %v1917 = vpop.permute.xlu0 %1916
    %1918 = vrot.lane.b32.xlu0 %v1676, 124
    %v1919 = vpop.permute.xlu0 %1918
    %v1920 = vsel %vm396, %v1917, %v1919
    %v1923 = vsel %vm151, %v1913, 0
    %1925 = vmatprep.subr.mxu0 0.0
    %1926 = vmatpush1.msra.mxu0 %v403
    %1927 = vmatprep.subr.mxu0 0.0
    %1928 = vmatpush1.msra.mxu0 0.0
    %1929 = vmatprep.subr.mxu0 0.0
    %1930 = vmatpush1.msra.mxu0 0.0
    %1931 = vmatprep.subr.mxu0 0.0
    %1932 = vmatpush1.msra.mxu0 0.0
    %1933 = vmatprep.subr.mxu0 0.0
    %1934 = vmatpush1.msra.mxu0 0.0
    %1935 = vmatprep.subr.mxu0 0.0
    %1936 = vmatpush1.msra.mxu0 0.0
    %1937 = vmatprep.subr.mxu0 0.0
    %1938 = vmatpush1.msra.mxu0 0.0
    %1939 = vmatprep.subr.mxu0 0.0
    %1940 = vmatpush1.msra.mxu0 0.0
    %1941 = vmatprep.subr.mxu0 0.0
    %1942 = vmatpush1.msra.mxu0 0.0
    %1943 = vmatprep.subr.mxu0 0.0
    %1944 = vmatpush1.msra.mxu0 0.0
    %1945 = vmatprep.subr.mxu0 0.0
    %1946 = vmatpush1.msra.mxu0 0.0
    %1947 = vmatprep.subr.mxu0 0.0
    %1948 = vmatpush1.msra.mxu0 0.0
    %1949 = vmatprep.subr.mxu0 0.0
    %1950 = vmatpush1.msra.mxu0 0.0
    %1951 = vmatprep.subr.mxu0 0.0
    %1952 = vmatpush1.msra.mxu0 0.0
    %1953 = vmatprep.subr.mxu0 0.0
    %1954 = vmatpush1.msra.mxu0 0.0
    %1955 = vmatprep.subr.mxu0 0.0
    %1956 = vmatpush1.msra.mxu0 0.0
    %1957 = vmatprep.subr.mxu0 0.0
    %1958 = vmatpush1.msra.mxu0 0.0
    %1959 = vmatprep.subr.mxu0 0.0
    %1960 = vmatpush1.msra.mxu0 0.0
    %1961 = vmatprep.subr.mxu0 0.0
    %1962 = vmatpush1.msra.mxu0 0.0
    %1963 = vmatprep.subr.mxu0 0.0
    %1964 = vmatpush1.msra.mxu0 0.0
    %1965 = vmatprep.subr.mxu0 0.0
    %1966 = vmatpush1.msra.mxu0 0.0
    %1967 = vmatprep.subr.mxu0 0.0
    %1968 = vmatpush1.msra.mxu0 0.0
    %1969 = vmatprep.subr.mxu0 0.0
    %1970 = vmatpush1.msra.mxu0 0.0
    %1971 = vmatprep.subr.mxu0 0.0
    %1972 = vmatpush1.msra.mxu0 0.0
    %1973 = vmatprep.subr.mxu0 0.0
    %1974 = vmatpush1.msra.mxu0 0.0
    %1975 = vmatprep.subr.mxu0 0.0
    %1976 = vmatpush1.msra.mxu0 0.0
    %1977 = vmatprep.subr.mxu0 0.0
    %1978 = vmatpush1.msra.mxu0 0.0
    %1979 = vmatprep.subr.mxu0 0.0
    %1980 = vmatpush1.msra.mxu0 0.0
    %1981 = vmatprep.subr.mxu0 0.0
    %1982 = vmatpush1.msra.mxu0 0.0
    %1983 = vmatprep.subr.mxu0 0.0
    %1984 = vmatpush1.msra.mxu0 0.0
    %1985 = vmatprep.subr.mxu0 0.0
    %1986 = vmatpush1.msra.mxu0 0.0
    %1987 = vmatprep.subr.mxu0 0.0
    %1988 = vmatpush1.msra.mxu0 0.0
    %1989 = vmatprep.mubr.f32.mxu0 0.0
    %1990 = vmatmul.mubr.f32.gmra.mrb[0].mxu0 %v1923
    %v1991 = vpop.f32.mrb[0].mxu0
    %v1992 = vadd.f32 %v1920, %v1991
    %v1993 = vpop.f32.mrb[0].mxu0
    %1994 = vdwg.mxu0
    %v1995 = vadd.f32 %v1992, %v43
    %v1996 = vxor.u32 %v1995, 2147483648
    %v1997 = vmul.f32 %v1996, 1.442695
    %v1998 = vpow.pop %v1997
    %v1999 = vadd.f32 %v1998, 1.0
    %v2000 = vrcp.pop %v1999
    %v2001 = vmul.f32 1.0, %v2000
    %v2002 = vtanh.pop %v1995
    %v2003 = vmul.f32 %v2001, %v1505
    %2005 = vrot.lane.b32.xlu0 %v2002, 64
    %v2006 = vpop.permute.xlu0 %2005
    %v2008 = vmul.f32 %v2001, %v2006
    %2010 = vrot.lane.b32.xlu0 %v2008, 32
    %v2011 = vpop.permute.xlu0 %2010
    %v2013 = vadd.f32 %v2003, %v2011
    %v2014 = vtanh.pop %v2013
    %2016 = vrot.lane.b32.xlu0 %v2014, 64
    %v2017 = vpop.permute.xlu0 %2016
    %v2019 = vmul.f32 %v2001, %v2017
    %2021 = vrot.lane.b32.xlu0 %v2019, 32
    %v2022 = vpop.permute.xlu0 %2021
    %v2023 = vsel %vm76, %v2022, 0
    %2025 = vmatprep.subr.mxu0 0.0
    %2026 = vmatpush1.msra.mxu0 %v44
    %2027 = vmatprep.subr.mxu0 0.0
    %2028 = vmatpush1.msra.mxu0 %v45
    %2029 = vmatprep.subr.mxu0 0.0
    %2030 = vmatpush1.msra.mxu0 %v46
    %2031 = vmatprep.subr.mxu0 0.0
    %2032 = vmatpush1.msra.mxu0 %v47
    %2033 = vmatprep.subr.mxu0 0.0
    %2034 = vmatpush1.msra.mxu0 0.0
    %2035 = vmatprep.subr.mxu0 0.0
    %2036 = vmatpush1.msra.mxu0 0.0
    %2037 = vmatprep.subr.mxu0 0.0
    %2038 = vmatpush1.msra.mxu0 0.0
    %2039 = vmatprep.subr.mxu0 0.0
    %2040 = vmatpush1.msra.mxu0 0.0
    %2041 = vmatprep.subr.mxu0 0.0
    %2042 = vmatpush1.msra.mxu0 0.0
    %2043 = vmatprep.subr.mxu0 0.0
    %2044 = vmatpush1.msra.mxu0 0.0
    %2045 = vmatprep.subr.mxu0 0.0
    %2046 = vmatpush1.msra.mxu0 0.0
    %2047 = vmatprep.subr.mxu0 0.0
    %2048 = vmatpush1.msra.mxu0 0.0
    %2049 = vmatprep.subr.mxu0 0.0
    %2050 = vmatpush1.msra.mxu0 0.0
    %2051 = vmatprep.subr.mxu0 0.0
    %2052 = vmatpush1.msra.mxu0 0.0
    %2053 = vmatprep.subr.mxu0 0.0
    %2054 = vmatpush1.msra.mxu0 0.0
    %2055 = vmatprep.subr.mxu0 0.0
    %2056 = vmatpush1.msra.mxu0 0.0
    %2057 = vmatprep.subr.mxu0 0.0
    %2058 = vmatpush1.msra.mxu0 0.0
    %2059 = vmatprep.subr.mxu0 0.0
    %2060 = vmatpush1.msra.mxu0 0.0
    %2061 = vmatprep.subr.mxu0 0.0
    %2062 = vmatpush1.msra.mxu0 0.0
    %2063 = vmatprep.subr.mxu0 0.0
    %2064 = vmatpush1.msra.mxu0 0.0
    %2065 = vmatprep.subr.mxu0 0.0
    %2066 = vmatpush1.msra.mxu0 0.0
    %2067 = vmatprep.subr.mxu0 0.0
    %2068 = vmatpush1.msra.mxu0 0.0
    %2069 = vmatprep.subr.mxu0 0.0
    %2070 = vmatpush1.msra.mxu0 0.0
    %2071 = vmatprep.subr.mxu0 0.0
    %2072 = vmatpush1.msra.mxu0 0.0
    %2073 = vmatprep.subr.mxu0 0.0
    %2074 = vmatpush1.msra.mxu0 0.0
    %2075 = vmatprep.subr.mxu0 0.0
    %2076 = vmatpush1.msra.mxu0 0.0
    %2077 = vmatprep.subr.mxu0 0.0
    %2078 = vmatpush1.msra.mxu0 0.0
    %2079 = vmatprep.subr.mxu0 0.0
    %2080 = vmatpush1.msra.mxu0 0.0
    %2081 = vmatprep.subr.mxu0 0.0
    %2082 = vmatpush1.msra.mxu0 0.0
    %2083 = vmatprep.subr.mxu0 0.0
    %2084 = vmatpush1.msra.mxu0 0.0
    %2085 = vmatprep.subr.mxu0 0.0
    %2086 = vmatpush1.msra.mxu0 0.0
    %2087 = vmatprep.subr.mxu0 0.0
    %2088 = vmatpush1.msra.mxu0 0.0
    %2089 = vmatprep.mubr.f32.mxu0 0.0
    %2090 = vmatmul.mubr.f32.gmra.mrb[0].mxu0 %v2023
    %v2091 = vpop.f32.mrb[0].mxu0
    %v2092 = vadd.f32 0.0, %v2091
    %v2093 = vpop.f32.mrb[0].mxu0
    %2094 = vdwg.mxu0
    %v2095 = vadd.f32 %v2092, %v48
    %2097 = vrot.lane.b32.xlu0 %v2095, 48
    %v2098 = vpop.permute.xlu0 %2097
    %vm2100 = vcmask 523648
    %2101 = vst.msk [vmem:[#allocation2] sm:$0xff] %vm2100, %v2098
    %2103 = vset.pattern.permute.xlu0 16
    %2104 = vperm.xlu0 %2103, %v2092
    %v2105 = vpop.permute.xlu0 %2104
    %v2107 = vlaneseq
    %v2108 = vshrl.u32 %v2107, 7
    %v2109 = vsub.s32 3, %v2108
    %v2110 = vrot.slane %v49, %v2109
    %v2111 = vmul.f32 %v2105, %v2110
    %v2112 = vadd.f32 %v1604, %v2111
    %s2113 = scalar_lea.vmem %s0, 32
    %v2114 = vld [vmem:[%s2113] sm:$0xff]
    %2115 = vmatprep.subr.mxu0 %v27
    %2116 = vmatpush1.msra.mxu0 %v26
    %2117 = vmatprep.subr.mxu0 %v29
    %2118 = vmatpush1.msra.mxu0 %v28
    %2119 = vmatprep.subr.mxu0 %v31
    %2120 = vmatpush1.msra.mxu0 %v30
    %2121 = vmatprep.subr.mxu0 %v33
    %2122 = vmatpush1.msra.mxu0 %v32
    %2123 = vmatprep.subr.mxu0 0.0
    %2124 = vmatpush1.msra.mxu0 0.0
    %2125 = vmatprep.subr.mxu0 0.0
    %2126 = vmatpush1.msra.mxu0 0.0
    %2127 = vmatprep.subr.mxu0 0.0
    %2128 = vmatpush1.msra.mxu0 0.0
    %2129 = vmatprep.subr.mxu0 0.0
    %2130 = vmatpush1.msra.mxu0 0.0
    %2131 = vmatprep.subr.mxu0 0.0
    %2132 = vmatpush1.msra.mxu0 0.0
    %2133 = vmatprep.subr.mxu0 0.0
    %2134 = vmatpush1.msra.mxu0 0.0
    %2135 = vmatprep.subr.mxu0 0.0
    %2136 = vmatpush1.msra.mxu0 0.0
    %2137 = vmatprep.subr.mxu0 0.0
    %2138 = vmatpush1.msra.mxu0 0.0
    %2139 = vmatprep.subr.mxu0 0.0
    %2140 = vmatpush1.msra.mxu0 0.0
    %2141 = vmatprep.subr.mxu0 0.0
    %2142 = vmatpush1.msra.mxu0 0.0
    %2143 = vmatprep.subr.mxu0 0.0
    %2144 = vmatpush1.msra.mxu0 0.0
    %2145 = vmatprep.subr.mxu0 0.0
    %2146 = vmatpush1.msra.mxu0 0.0
    %2147 = vmatprep.subr.mxu0 0.0
    %2148 = vmatpush1.msra.mxu0 0.0
    %2149 = vmatprep.subr.mxu0 0.0
    %2150 = vmatpush1.msra.mxu0 0.0
    %2151 = vmatprep.subr.mxu0 0.0
    %2152 = vmatpush1.msra.mxu0 0.0
    %2153 = vmatprep.subr.mxu0 0.0
    %2154 = vmatpush1.msra.mxu0 0.0
    %2155 = vmatprep.subr.mxu0 0.0
    %2156 = vmatpush1.msra.mxu0 0.0
    %2157 = vmatprep.subr.mxu0 0.0
    %2158 = vmatpush1.msra.mxu0 0.0
    %2159 = vmatprep.subr.mxu0 0.0
    %2160 = vmatpush1.msra.mxu0 0.0
    %2161 = vmatprep.subr.mxu0 0.0
    %2162 = vmatpush1.msra.mxu0 0.0
    %2163 = vmatprep.subr.mxu0 0.0
    %2164 = vmatpush1.msra.mxu0 0.0
    %2165 = vmatprep.subr.mxu0 0.0
    %2166 = vmatpush1.msra.mxu0 0.0
    %2167 = vmatprep.subr.mxu0 0.0
    %2168 = vmatpush1.msra.mxu0 0.0
    %2169 = vmatprep.subr.mxu0 0.0
    %2170 = vmatpush1.msra.mxu0 0.0
    %2171 = vmatprep.subr.mxu0 0.0
    %2172 = vmatpush1.msra.mxu0 0.0
    %2173 = vmatprep.subr.mxu0 0.0
    %2174 = vmatpush1.msra.mxu0 0.0
    %2175 = vmatprep.subr.mxu0 0.0
    %2176 = vmatpush1.msra.mxu0 0.0
    %2177 = vmatprep.subr.mxu0 0.0
    %2178 = vmatpush1.msra.mxu0 0.0
    %2179 = vmatprep.mubr.f32.mxu0 0.0
    %2180 = vmatmul.mubr.f32.gmra.mrb[0].mxu0 %v2023
    %v2181 = vpop.f32.mrb[0].mxu0
    %v2182 = vadd.f32 0.0, %v2181
    %v2183 = vpop.f32.mrb[0].mxu0
    %v2184 = vadd.f32 0.0, %v2183
    %2185 = vdwg.mxu0
    %v2187 = vsel %vm151, %v2114, 0
    %2189 = vmatprep.subr.mxu0 0.0
    %2190 = vmatpush1.msra.mxu0 %v157
    %2191 = vmatprep.subr.mxu0 0.0
    %2192 = vmatpush1.msra.mxu0 0.0
    %2193 = vmatprep.subr.mxu0 0.0
    %2194 = vmatpush1.msra.mxu0 0.0
    %2195 = vmatprep.subr.mxu0 0.0
    %2196 = vmatpush1.msra.mxu0 0.0
    %2197 = vmatprep.subr.mxu0 0.0
    %2198 = vmatpush1.msra.mxu0 0.0
    %2199 = vmatprep.subr.mxu0 0.0
    %2200 = vmatpush1.msra.mxu0 0.0
    %2201 = vmatprep.subr.mxu0 0.0
    %2202 = vmatpush1.msra.mxu0 0.0
    %2203 = vmatprep.subr.mxu0 0.0
    %2204 = vmatpush1.msra.mxu0 0.0
    %2205 = vmatprep.subr.mxu0 0.0
    %2206 = vmatpush1.msra.mxu0 0.0
    %2207 = vmatprep.subr.mxu0 0.0
    %2208 = vmatpush1.msra.mxu0 0.0
    %2209 = vmatprep.subr.mxu0 0.0
    %2210 = vmatpush1.msra.mxu0 0.0
    %2211 = vmatprep.subr.mxu0 0.0
    %2212 = vmatpush1.msra.mxu0 0.0
    %2213 = vmatprep.subr.mxu0 0.0
    %2214 = vmatpush1.msra.mxu0 0.0
    %2215 = vmatprep.subr.mxu0 0.0
    %2216 = vmatpush1.msra.mxu0 0.0
    %2217 = vmatprep.subr.mxu0 0.0
    %2218 = vmatpush1.msra.mxu0 0.0
    %2219 = vmatprep.subr.mxu0 0.0
    %2220 = vmatpush1.msra.mxu0 0.0
    %2221 = vmatprep.subr.mxu0 0.0
    %2222 = vmatpush1.msra.mxu0 0.0
    %2223 = vmatprep.subr.mxu0 0.0
    %2224 = vmatpush1.msra.mxu0 0.0
    %2225 = vmatprep.subr.mxu0 0.0
    %2226 = vmatpush1.msra.mxu0 0.0
    %2227 = vmatprep.subr.mxu0 0.0
    %2228 = vmatpush1.msra.mxu0 0.0
    %2229 = vmatprep.subr.mxu0 0.0
    %2230 = vmatpush1.msra.mxu0 0.0
    %2231 = vmatprep.subr.mxu0 0.0
    %2232 = vmatpush1.msra.mxu0 0.0
    %2233 = vmatprep.subr.mxu0 0.0
    %2234 = vmatpush1.msra.mxu0 0.0
    %2235 = vmatprep.subr.mxu0 0.0
    %2236 = vmatpush1.msra.mxu0 0.0
    %2237 = vmatprep.subr.mxu0 0.0
    %2238 = vmatpush1.msra.mxu0 0.0
    %2239 = vmatprep.subr.mxu0 0.0
    %2240 = vmatpush1.msra.mxu0 0.0
    %2241 = vmatprep.subr.mxu0 0.0
    %2242 = vmatpush1.msra.mxu0 0.0
    %2243 = vmatprep.subr.mxu0 0.0
    %2244 = vmatpush1.msra.mxu0 0.0
    %2245 = vmatprep.subr.mxu0 0.0
    %2246 = vmatpush1.msra.mxu0 0.0
    %2247 = vmatprep.subr.mxu0 0.0
    %2248 = vmatpush1.msra.mxu0 0.0
    %2249 = vmatprep.subr.mxu0 0.0
    %2250 = vmatpush1.msra.mxu0 0.0
    %2251 = vmatprep.subr.mxu0 0.0
    %2252 = vmatpush1.msra.mxu0 0.0
    %2253 = vmatprep.mubr.f32.mxu0 0.0
    %2254 = vmatmul.mubr.f32.gmra.mrb[0].mxu0 %v2187
    %v2255 = vpop.f32.mrb[0].mxu0
    %v2256 = vadd.f32 %v39, %v2255
    %v2257 = vpop.f32.mrb[0].mxu0
    %2258 = vdwg.mxu0
    %v2259 = vadd.f32 %v2256, %v2182
    %2261 = vrot.lane.b32.xlu0 %v2013, 96
    %v2262 = vpop.permute.xlu0 %2261
    %v2263 = vsel %vm76, %v2262, 0
    %2265 = vmatprep.subr.mxu0 0.0
    %2266 = vmatpush1.msra.mxu0 %v34
    %2267 = vmatprep.subr.mxu0 0.0
    %2268 = vmatpush1.msra.mxu0 %v35
    %2269 = vmatprep.subr.mxu0 0.0
    %2270 = vmatpush1.msra.mxu0 %v36
    %2271 = vmatprep.subr.mxu0 0.0
    %2272 = vmatpush1.msra.mxu0 %v37
    %2273 = vmatprep.subr.mxu0 0.0
    %2274 = vmatpush1.msra.mxu0 0.0
    %2275 = vmatprep.subr.mxu0 0.0
    %2276 = vmatpush1.msra.mxu0 0.0
    %2277 = vmatprep.subr.mxu0 0.0
    %2278 = vmatpush1.msra.mxu0 0.0
    %2279 = vmatprep.subr.mxu0 0.0
    %2280 = vmatpush1.msra.mxu0 0.0
    %2281 = vmatprep.subr.mxu0 0.0
    %2282 = vmatpush1.msra.mxu0 0.0
    %2283 = vmatprep.subr.mxu0 0.0
    %2284 = vmatpush1.msra.mxu0 0.0
    %2285 = vmatprep.subr.mxu0 0.0
    %2286 = vmatpush1.msra.mxu0 0.0
    %2287 = vmatprep.subr.mxu0 0.0
    %2288 = vmatpush1.msra.mxu0 0.0
    %2289 = vmatprep.subr.mxu0 0.0
    %2290 = vmatpush1.msra.mxu0 0.0
    %2291 = vmatprep.subr.mxu0 0.0
    %2292 = vmatpush1.msra.mxu0 0.0
    %2293 = vmatprep.subr.mxu0 0.0
    %2294 = vmatpush1.msra.mxu0 0.0
    %2295 = vmatprep.subr.mxu0 0.0
    %2296 = vmatpush1.msra.mxu0 0.0
    %2297 = vmatprep.subr.mxu0 0.0
    %2298 = vmatpush1.msra.mxu0 0.0
    %2299 = vmatprep.subr.mxu0 0.0
    %2300 = vmatpush1.msra.mxu0 0.0
    %2301 = vmatprep.subr.mxu0 0.0
    %2302 = vmatpush1.msra.mxu0 0.0
    %2303 = vmatprep.subr.mxu0 0.0
    %2304 = vmatpush1.msra.mxu0 0.0
    %2305 = vmatprep.subr.mxu0 0.0
    %2306 = vmatpush1.msra.mxu0 0.0
    %2307 = vmatprep.subr.mxu0 0.0
    %2308 = vmatpush1.msra.mxu0 0.0
    %2309 = vmatprep.subr.mxu0 0.0
    %2310 = vmatpush1.msra.mxu0 0.0
    %2311 = vmatprep.subr.mxu0 0.0
    %2312 = vmatpush1.msra.mxu0 0.0
    %2313 = vmatprep.subr.mxu0 0.0
    %2314 = vmatpush1.msra.mxu0 0.0
    %2315 = vmatprep.subr.mxu0 0.0
    %2316 = vmatpush1.msra.mxu0 0.0
    %2317 = vmatprep.subr.mxu0 0.0
    %2318 = vmatpush1.msra.mxu0 0.0
    %2319 = vmatprep.subr.mxu0 0.0
    %2320 = vmatpush1.msra.mxu0 0.0
    %2321 = vmatprep.subr.mxu0 0.0
    %2322 = vmatpush1.msra.mxu0 0.0
    %2323 = vmatprep.subr.mxu0 0.0
    %2324 = vmatpush1.msra.mxu0 0.0
    %2325 = vmatprep.subr.mxu0 0.0
    %2326 = vmatpush1.msra.mxu0 0.0
    %2327 = vmatprep.subr.mxu0 0.0
    %2328 = vmatpush1.msra.mxu0 0.0
    %2329 = vmatprep.mubr.f32.mxu0 0.0
    %2330 = vmatmul.mubr.f32.gmra.mrb[0].mxu0 %v2263
    %v2331 = vpop.f32.mrb[0].mxu0
    %v2332 = vadd.f32 0.0, %v2331
    %v2333 = vpop.f32.mrb[0].mxu0
    %2334 = vdwg.mxu0
    %v2335 = vadd.f32 %v2259, %v2332
    %v2336 = vmax.f32 %v2335, 0.0
    %v2338 = vsel %vm151, %v2336, 0
    %2340 = vmatprep.subr.mxu0 0.0
    %2341 = vmatpush1.msra.mxu0 %v306
    %2342 = vmatprep.subr.mxu0 0.0
    %2343 = vmatpush1.msra.mxu0 0.0
    %2344 = vmatprep.subr.mxu0 0.0
    %2345 = vmatpush1.msra.mxu0 0.0
    %2346 = vmatprep.subr.mxu0 0.0
    %2347 = vmatpush1.msra.mxu0 0.0
    %2348 = vmatprep.subr.mxu0 0.0
    %2349 = vmatpush1.msra.mxu0 0.0
    %2350 = vmatprep.subr.mxu0 0.0
    %2351 = vmatpush1.msra.mxu0 0.0
    %2352 = vmatprep.subr.mxu0 0.0
    %2353 = vmatpush1.msra.mxu0 0.0
    %2354 = vmatprep.subr.mxu0 0.0
    %2355 = vmatpush1.msra.mxu0 0.0
    %2356 = vmatprep.subr.mxu0 0.0
    %2357 = vmatpush1.msra.mxu0 0.0
    %2358 = vmatprep.subr.mxu0 0.0
    %2359 = vmatpush1.msra.mxu0 0.0
    %2360 = vmatprep.subr.mxu0 0.0
    %2361 = vmatpush1.msra.mxu0 0.0
    %2362 = vmatprep.subr.mxu0 0.0
    %2363 = vmatpush1.msra.mxu0 0.0
    %2364 = vmatprep.subr.mxu0 0.0
    %2365 = vmatpush1.msra.mxu0 0.0
    %2366 = vmatprep.subr.mxu0 0.0
    %2367 = vmatpush1.msra.mxu0 0.0
    %2368 = vmatprep.subr.mxu0 0.0
    %2369 = vmatpush1.msra.mxu0 0.0
    %2370 = vmatprep.subr.mxu0 0.0
    %2371 = vmatpush1.msra.mxu0 0.0
    %2372 = vmatprep.subr.mxu0 0.0
    %2373 = vmatpush1.msra.mxu0 0.0
    %2374 = vmatprep.subr.mxu0 0.0
    %2375 = vmatpush1.msra.mxu0 0.0
    %2376 = vmatprep.subr.mxu0 0.0
    %2377 = vmatpush1.msra.mxu0 0.0
    %2378 = vmatprep.subr.mxu0 0.0
    %2379 = vmatpush1.msra.mxu0 0.0
    %2380 = vmatprep.subr.mxu0 0.0
    %2381 = vmatpush1.msra.mxu0 0.0
    %2382 = vmatprep.subr.mxu0 0.0
    %2383 = vmatpush1.msra.mxu0 0.0
    %2384 = vmatprep.subr.mxu0 0.0
    %2385 = vmatpush1.msra.mxu0 0.0
    %2386 = vmatprep.subr.mxu0 0.0
    %2387 = vmatpush1.msra.mxu0 0.0
    %2388 = vmatprep.subr.mxu0 0.0
    %2389 = vmatpush1.msra.mxu0 0.0
    %2390 = vmatprep.subr.mxu0 0.0
    %2391 = vmatpush1.msra.mxu0 0.0
    %2392 = vmatprep.subr.mxu0 0.0
    %2393 = vmatpush1.msra.mxu0 0.0
    %2394 = vmatprep.subr.mxu0 0.0
    %2395 = vmatpush1.msra.mxu0 0.0
    %2396 = vmatprep.subr.mxu0 0.0
    %2397 = vmatpush1.msra.mxu0 0.0
    %2398 = vmatprep.subr.mxu0 0.0
    %2399 = vmatpush1.msra.mxu0 0.0
    %2400 = vmatprep.subr.mxu0 0.0
    %2401 = vmatpush1.msra.mxu0 0.0
    %2402 = vmatprep.subr.mxu0 0.0
    %2403 = vmatpush1.msra.mxu0 0.0
    %2404 = vmatprep.mubr.f32.mxu0 0.0
    %2405 = vmatmul.mubr.f32.gmra.mrb[0].mxu0 %v2338
    %v2406 = vpop.f32.mrb[0].mxu0
    %v2407 = vadd.f32 %v41, %v2406
    %v2408 = vpop.f32.mrb[0].mxu0
    %2409 = vdwg.mxu0
    %v2410 = vsel %vm151, %v2407, -inf
    %2411 = vmax.xlane.f32.xlu0 %v2410
    %v2412 = vpop.xlane.xlu0 %2411
    %v2413 = vsub.f32 %v2407, %v2412
    %v2414 = vmul.f32 %v2413, 1.442695
    %v2415 = vpow.pop %v2414
    %v2416 = vsel %vm151, %v2415, 0.0
    %2417 = vadd.xlane.f32.xlu0 %v2416
    %v2418 = vpop.xlane.xlu0 %2417
    %v2419 = vrcp.pop %v2418
    %v2420 = vmul.f32 %v2415, %v2419
    %v2421 = vmul.f32 %v2114, %v2420
    %2424 = vrot.lane.b32.xlu0 %v2182, 124
    %v2425 = vpop.permute.xlu0 %2424
    %2426 = vrot.lane.b32.xlu0 %v2184, 124
    %v2427 = vpop.permute.xlu0 %2426
    %v2428 = vsel %vm396, %v2425, %v2427
    %v2431 = vsel %vm151, %v2421, 0
    %2433 = vmatprep.subr.mxu0 0.0
    %2434 = vmatpush1.msra.mxu0 %v403
    %2435 = vmatprep.subr.mxu0 0.0
    %2436 = vmatpush1.msra.mxu0 0.0
    %2437 = vmatprep.subr.mxu0 0.0
    %2438 = vmatpush1.msra.mxu0 0.0
    %2439 = vmatprep.subr.mxu0 0.0
    %2440 = vmatpush1.msra.mxu0 0.0
    %2441 = vmatprep.subr.mxu0 0.0
    %2442 = vmatpush1.msra.mxu0 0.0
    %2443 = vmatprep.subr.mxu0 0.0
    %2444 = vmatpush1.msra.mxu0 0.0
    %2445 = vmatprep.subr.mxu0 0.0
    %2446 = vmatpush1.msra.mxu0 0.0
    %2447 = vmatprep.subr.mxu0 0.0
    %2448 = vmatpush1.msra.mxu0 0.0
    %2449 = vmatprep.subr.mxu0 0.0
    %2450 = vmatpush1.msra.mxu0 0.0
    %2451 = vmatprep.subr.mxu0 0.0
    %2452 = vmatpush1.msra.mxu0 0.0
    %2453 = vmatprep.subr.mxu0 0.0
    %2454 = vmatpush1.msra.mxu0 0.0
    %2455 = vmatprep.subr.mxu0 0.0
    %2456 = vmatpush1.msra.mxu0 0.0
    %2457 = vmatprep.subr.mxu0 0.0
    %2458 = vmatpush1.msra.mxu0 0.0
    %2459 = vmatprep.subr.mxu0 0.0
    %2460 = vmatpush1.msra.mxu0 0.0
    %2461 = vmatprep.subr.mxu0 0.0
    %2462 = vmatpush1.msra.mxu0 0.0
    %2463 = vmatprep.subr.mxu0 0.0
    %2464 = vmatpush1.msra.mxu0 0.0
    %2465 = vmatprep.subr.mxu0 0.0
    %2466 = vmatpush1.msra.mxu0 0.0
    %2467 = vmatprep.subr.mxu0 0.0
    %2468 = vmatpush1.msra.mxu0 0.0
    %2469 = vmatprep.subr.mxu0 0.0
    %2470 = vmatpush1.msra.mxu0 0.0
    %2471 = vmatprep.subr.mxu0 0.0
    %2472 = vmatpush1.msra.mxu0 0.0
    %2473 = vmatprep.subr.mxu0 0.0
    %2474 = vmatpush1.msra.mxu0 0.0
    %2475 = vmatprep.subr.mxu0 0.0
    %2476 = vmatpush1.msra.mxu0 0.0
    %2477 = vmatprep.subr.mxu0 0.0
    %2478 = vmatpush1.msra.mxu0 0.0
    %2479 = vmatprep.subr.mxu0 0.0
    %2480 = vmatpush1.msra.mxu0 0.0
    %2481 = vmatprep.subr.mxu0 0.0
    %2482 = vmatpush1.msra.mxu0 0.0
    %2483 = vmatprep.subr.mxu0 0.0
    %2484 = vmatpush1.msra.mxu0 0.0
    %2485 = vmatprep.subr.mxu0 0.0
    %2486 = vmatpush1.msra.mxu0 0.0
    %2487 = vmatprep.subr.mxu0 0.0
    %2488 = vmatpush1.msra.mxu0 0.0
    %2489 = vmatprep.subr.mxu0 0.0
    %2490 = vmatpush1.msra.mxu0 0.0
    %2491 = vmatprep.subr.mxu0 0.0
    %2492 = vmatpush1.msra.mxu0 0.0
    %2493 = vmatprep.subr.mxu0 0.0
    %2494 = vmatpush1.msra.mxu0 0.0
    %2495 = vmatprep.subr.mxu0 0.0
    %2496 = vmatpush1.msra.mxu0 0.0
    %2497 = vmatprep.mubr.f32.mxu0 0.0
    %2498 = vmatmul.mubr.f32.gmra.mrb[0].mxu0 %v2431
    %v2499 = vpop.f32.mrb[0].mxu0
    %v2500 = vadd.f32 %v2428, %v2499
    %v2501 = vpop.f32.mrb[0].mxu0
    %2502 = vdwg.mxu0
    %v2503 = vadd.f32 %v2500, %v43
    %v2504 = vxor.u32 %v2503, 2147483648
    %v2505 = vmul.f32 %v2504, 1.442695
    %v2506 = vpow.pop %v2505
    %v2507 = vadd.f32 %v2506, 1.0
    %v2508 = vrcp.pop %v2507
    %v2509 = vmul.f32 1.0, %v2508
    %v2510 = vtanh.pop %v2503
    %v2511 = vmul.f32 %v2509, %v2013
    %2513 = vrot.lane.b32.xlu0 %v2510, 64
    %v2514 = vpop.permute.xlu0 %2513
    %v2516 = vmul.f32 %v2509, %v2514
    %2518 = vrot.lane.b32.xlu0 %v2516, 32
    %v2519 = vpop.permute.xlu0 %2518
    %v2521 = vadd.f32 %v2511, %v2519
    %v2522 = vtanh.pop %v2521
    %2524 = vrot.lane.b32.xlu0 %v2522, 64
    %v2525 = vpop.permute.xlu0 %2524
    %v2527 = vmul.f32 %v2509, %v2525
    %2529 = vrot.lane.b32.xlu0 %v2527, 32
    %v2530 = vpop.permute.xlu0 %2529
    %v2531 = vsel %vm76, %v2530, 0
    %2533 = vmatprep.subr.mxu0 0.0
    %2534 = vmatpush1.msra.mxu0 %v44
    %2535 = vmatprep.subr.mxu0 0.0
    %2536 = vmatpush1.msra.mxu0 %v45
    %2537 = vmatprep.subr.mxu0 0.0
    %2538 = vmatpush1.msra.mxu0 %v46
    %2539 = vmatprep.subr.mxu0 0.0
    %2540 = vmatpush1.msra.mxu0 %v47
    %2541 = vmatprep.subr.mxu0 0.0
    %2542 = vmatpush1.msra.mxu0 0.0
    %2543 = vmatprep.subr.mxu0 0.0
    %2544 = vmatpush1.msra.mxu0 0.0
    %2545 = vmatprep.subr.mxu0 0.0
    %2546 = vmatpush1.msra.mxu0 0.0
    %2547 = vmatprep.subr.mxu0 0.0
    %2548 = vmatpush1.msra.mxu0 0.0
    %2549 = vmatprep.subr.mxu0 0.0
    %2550 = vmatpush1.msra.mxu0 0.0
    %2551 = vmatprep.subr.mxu0 0.0
    %2552 = vmatpush1.msra.mxu0 0.0
    %2553 = vmatprep.subr.mxu0 0.0
    %2554 = vmatpush1.msra.mxu0 0.0
    %2555 = vmatprep.subr.mxu0 0.0
    %2556 = vmatpush1.msra.mxu0 0.0
    %2557 = vmatprep.subr.mxu0 0.0
    %2558 = vmatpush1.msra.mxu0 0.0
    %2559 = vmatprep.subr.mxu0 0.0
    %2560 = vmatpush1.msra.mxu0 0.0
    %2561 = vmatprep.subr.mxu0 0.0
    %2562 = vmatpush1.msra.mxu0 0.0
    %2563 = vmatprep.subr.mxu0 0.0
    %2564 = vmatpush1.msra.mxu0 0.0
    %2565 = vmatprep.subr.mxu0 0.0
    %2566 = vmatpush1.msra.mxu0 0.0
    %2567 = vmatprep.subr.mxu0 0.0
    %2568 = vmatpush1.msra.mxu0 0.0
    %2569 = vmatprep.subr.mxu0 0.0
    %2570 = vmatpush1.msra.mxu0 0.0
    %2571 = vmatprep.subr.mxu0 0.0
    %2572 = vmatpush1.msra.mxu0 0.0
    %2573 = vmatprep.subr.mxu0 0.0
    %2574 = vmatpush1.msra.mxu0 0.0
    %2575 = vmatprep.subr.mxu0 0.0
    %2576 = vmatpush1.msra.mxu0 0.0
    %2577 = vmatprep.subr.mxu0 0.0
    %2578 = vmatpush1.msra.mxu0 0.0
    %2579 = vmatprep.subr.mxu0 0.0
    %2580 = vmatpush1.msra.mxu0 0.0
    %2581 = vmatprep.subr.mxu0 0.0
    %2582 = vmatpush1.msra.mxu0 0.0
    %2583 = vmatprep.subr.mxu0 0.0
    %2584 = vmatpush1.msra.mxu0 0.0
    %2585 = vmatprep.subr.mxu0 0.0
    %2586 = vmatpush1.msra.mxu0 0.0
    %2587 = vmatprep.subr.mxu0 0.0
    %2588 = vmatpush1.msra.mxu0 0.0
    %2589 = vmatprep.subr.mxu0 0.0
    %2590 = vmatpush1.msra.mxu0 0.0
    %2591 = vmatprep.subr.mxu0 0.0
    %2592 = vmatpush1.msra.mxu0 0.0
    %2593 = vmatprep.subr.mxu0 0.0
    %2594 = vmatpush1.msra.mxu0 0.0
    %2595 = vmatprep.subr.mxu0 0.0
    %2596 = vmatpush1.msra.mxu0 0.0
    %2597 = vmatprep.mubr.f32.mxu0 0.0
    %2598 = vmatmul.mubr.f32.gmra.mrb[0].mxu0 %v2531
    %v2599 = vpop.f32.mrb[0].mxu0
    %v2600 = vadd.f32 0.0, %v2599
    %v2601 = vpop.f32.mrb[0].mxu0
    %2602 = vdwg.mxu0
    %v2603 = vadd.f32 %v2600, %v48
    %2605 = vrot.lane.b32.xlu0 %v2603, 64
    %v2606 = vpop.permute.xlu0 %2605
    %vm2608 = vcmask 654848
    %2609 = vst.msk [vmem:[#allocation2] sm:$0xff] %vm2608, %v2606
    %2611 = vset.pattern.permute.xlu0 16
    %2612 = vperm.xlu0 %2611, %v2600
    %v2613 = vpop.permute.xlu0 %2612
    %v2615 = vlaneseq
    %v2616 = vshrl.u32 %v2615, 7
    %v2617 = vsub.s32 4, %v2616
    %v2618 = vrot.slane %v49, %v2617
    %v2619 = vmul.f32 %v2613, %v2618
    %v2620 = vadd.f32 %v2112, %v2619
    %s2621 = scalar_lea.vmem %s0, 40
    %v2622 = vld [vmem:[%s2621] sm:$0xff]
    %2623 = vmatprep.subr.mxu0 %v27
    %2624 = vmatpush1.msra.mxu0 %v26
    %2625 = vmatprep.subr.mxu0 %v29
    %2626 = vmatpush1.msra.mxu0 %v28
    %2627 = vmatprep.subr.mxu0 %v31
    %2628 = vmatpush1.msra.mxu0 %v30
    %2629 = vmatprep.subr.mxu0 %v33
    %2630 = vmatpush1.msra.mxu0 %v32
    %2631 = vmatprep.subr.mxu0 0.0
    %2632 = vmatpush1.msra.mxu0 0.0
    %2633 = vmatprep.subr.mxu0 0.0
    %2634 = vmatpush1.msra.mxu0 0.0
    %2635 = vmatprep.subr.mxu0 0.0
    %2636 = vmatpush1.msra.mxu0 0.0
    %2637 = vmatprep.subr.mxu0 0.0
    %2638 = vmatpush1.msra.mxu0 0.0
    %2639 = vmatprep.subr.mxu0 0.0
    %2640 = vmatpush1.msra.mxu0 0.0
    %2641 = vmatprep.subr.mxu0 0.0
    %2642 = vmatpush1.msra.mxu0 0.0
    %2643 = vmatprep.subr.mxu0 0.0
    %2644 = vmatpush1.msra.mxu0 0.0
    %2645 = vmatprep.subr.mxu0 0.0
    %2646 = vmatpush1.msra.mxu0 0.0
    %2647 = vmatprep.subr.mxu0 0.0
    %2648 = vmatpush1.msra.mxu0 0.0
    %2649 = vmatprep.subr.mxu0 0.0
    %2650 = vmatpush1.msra.mxu0 0.0
    %2651 = vmatprep.subr.mxu0 0.0
    %2652 = vmatpush1.msra.mxu0 0.0
    %2653 = vmatprep.subr.mxu0 0.0
    %2654 = vmatpush1.msra.mxu0 0.0
    %2655 = vmatprep.subr.mxu0 0.0
    %2656 = vmatpush1.msra.mxu0 0.0
    %2657 = vmatprep.subr.mxu0 0.0
    %2658 = vmatpush1.msra.mxu0 0.0
    %2659 = vmatprep.subr.mxu0 0.0
    %2660 = vmatpush1.msra.mxu0 0.0
    %2661 = vmatprep.subr.mxu0 0.0
    %2662 = vmatpush1.msra.mxu0 0.0
    %2663 = vmatprep.subr.mxu0 0.0
    %2664 = vmatpush1.msra.mxu0 0.0
    %2665 = vmatprep.subr.mxu0 0.0
    %2666 = vmatpush1.msra.mxu0 0.0
    %2667 = vmatprep.subr.mxu0 0.0
    %2668 = vmatpush1.msra.mxu0 0.0
    %2669 = vmatprep.subr.mxu0 0.0
    %2670 = vmatpush1.msra.mxu0 0.0
    %2671 = vmatprep.subr.mxu0 0.0
    %2672 = vmatpush1.msra.mxu0 0.0
    %2673 = vmatprep.subr.mxu0 0.0
    %2674 = vmatpush1.msra.mxu0 0.0
    %2675 = vmatprep.subr.mxu0 0.0
    %2676 = vmatpush1.msra.mxu0 0.0
    %2677 = vmatprep.subr.mxu0 0.0
    %2678 = vmatpush1.msra.mxu0 0.0
    %2679 = vmatprep.subr.mxu0 0.0
    %2680 = vmatpush1.msra.mxu0 0.0
    %2681 = vmatprep.subr.mxu0 0.0
    %2682 = vmatpush1.msra.mxu0 0.0
    %2683 = vmatprep.subr.mxu0 0.0
    %2684 = vmatpush1.msra.mxu0 0.0
    %2685 = vmatprep.subr.mxu0 0.0
    %2686 = vmatpush1.msra.mxu0 0.0
    %2687 = vmatprep.mubr.f32.mxu0 0.0
    %2688 = vmatmul.mubr.f32.gmra.mrb[0].mxu0 %v2531
    %v2689 = vpop.f32.mrb[0].mxu0
    %v2690 = vadd.f32 0.0, %v2689
    %v2691 = vpop.f32.mrb[0].mxu0
    %v2692 = vadd.f32 0.0, %v2691
    %2693 = vdwg.mxu0
    %v2695 = vsel %vm151, %v2622, 0
    %2697 = vmatprep.subr.mxu0 0.0
    %2698 = vmatpush1.msra.mxu0 %v157
    %2699 = vmatprep.subr.mxu0 0.0
    %2700 = vmatpush1.msra.mxu0 0.0
    %2701 = vmatprep.subr.mxu0 0.0
    %2702 = vmatpush1.msra.mxu0 0.0
    %2703 = vmatprep.subr.mxu0 0.0
    %2704 = vmatpush1.msra.mxu0 0.0
    %2705 = vmatprep.subr.mxu0 0.0
    %2706 = vmatpush1.msra.mxu0 0.0
    %2707 = vmatprep.subr.mxu0 0.0
    %2708 = vmatpush1.msra.mxu0 0.0
    %2709 = vmatprep.subr.mxu0 0.0
    %2710 = vmatpush1.msra.mxu0 0.0
    %2711 = vmatprep.subr.mxu0 0.0
    %2712 = vmatpush1.msra.mxu0 0.0
    %2713 = vmatprep.subr.mxu0 0.0
    %2714 = vmatpush1.msra.mxu0 0.0
    %2715 = vmatprep.subr.mxu0 0.0
    %2716 = vmatpush1.msra.mxu0 0.0
    %2717 = vmatprep.subr.mxu0 0.0
    %2718 = vmatpush1.msra.mxu0 0.0
    %2719 = vmatprep.subr.mxu0 0.0
    %2720 = vmatpush1.msra.mxu0 0.0
    %2721 = vmatprep.subr.mxu0 0.0
    %2722 = vmatpush1.msra.mxu0 0.0
    %2723 = vmatprep.subr.mxu0 0.0
    %2724 = vmatpush1.msra.mxu0 0.0
    %2725 = vmatprep.subr.mxu0 0.0
    %2726 = vmatpush1.msra.mxu0 0.0
    %2727 = vmatprep.subr.mxu0 0.0
    %2728 = vmatpush1.msra.mxu0 0.0
    %2729 = vmatprep.subr.mxu0 0.0
    %2730 = vmatpush1.msra.mxu0 0.0
    %2731 = vmatprep.subr.mxu0 0.0
    %2732 = vmatpush1.msra.mxu0 0.0
    %2733 = vmatprep.subr.mxu0 0.0
    %2734 = vmatpush1.msra.mxu0 0.0
    %2735 = vmatprep.subr.mxu0 0.0
    %2736 = vmatpush1.msra.mxu0 0.0
    %2737 = vmatprep.subr.mxu0 0.0
    %2738 = vmatpush1.msra.mxu0 0.0
    %2739 = vmatprep.subr.mxu0 0.0
    %2740 = vmatpush1.msra.mxu0 0.0
    %2741 = vmatprep.subr.mxu0 0.0
    %2742 = vmatpush1.msra.mxu0 0.0
    %2743 = vmatprep.subr.mxu0 0.0
    %2744 = vmatpush1.msra.mxu0 0.0
    %2745 = vmatprep.subr.mxu0 0.0
    %2746 = vmatpush1.msra.mxu0 0.0
    %2747 = vmatprep.subr.mxu0 0.0
    %2748 = vmatpush1.msra.mxu0 0.0
    %2749 = vmatprep.subr.mxu0 0.0
    %2750 = vmatpush1.msra.mxu0 0.0
    %2751 = vmatprep.subr.mxu0 0.0
    %2752 = vmatpush1.msra.mxu0 0.0
    %2753 = vmatprep.subr.mxu0 0.0
    %2754 = vmatpush1.msra.mxu0 0.0
    %2755 = vmatprep.subr.mxu0 0.0
    %2756 = vmatpush1.msra.mxu0 0.0
    %2757 = vmatprep.subr.mxu0 0.0
    %2758 = vmatpush1.msra.mxu0 0.0
    %2759 = vmatprep.subr.mxu0 0.0
    %2760 = vmatpush1.msra.mxu0 0.0
    %2761 = vmatprep.mubr.f32.mxu0 0.0
    %2762 = vmatmul.mubr.f32.gmra.mrb[0].mxu0 %v2695
    %v2763 = vpop.f32.mrb[0].mxu0
    %v2764 = vadd.f32 %v39, %v2763
    %v2765 = vpop.f32.mrb[0].mxu0
    %2766 = vdwg.mxu0
    %v2767 = vadd.f32 %v2764, %v2690
    %2769 = vrot.lane.b32.xlu0 %v2521, 96
    %v2770 = vpop.permute.xlu0 %2769
    %v2771 = vsel %vm76, %v2770, 0
    %2773 = vmatprep.subr.mxu0 0.0
    %2774 = vmatpush1.msra.mxu0 %v34
    %2775 = vmatprep.subr.mxu0 0.0
    %2776 = vmatpush1.msra.mxu0 %v35
    %2777 = vmatprep.subr.mxu0 0.0
    %2778 = vmatpush1.msra.mxu0 %v36
    %2779 = vmatprep.subr.mxu0 0.0
    %2780 = vmatpush1.msra.mxu0 %v37
    %2781 = vmatprep.subr.mxu0 0.0
    %2782 = vmatpush1.msra.mxu0 0.0
    %2783 = vmatprep.subr.mxu0 0.0
    %2784 = vmatpush1.msra.mxu0 0.0
    %2785 = vmatprep.subr.mxu0 0.0
    %2786 = vmatpush1.msra.mxu0 0.0
    %2787 = vmatprep.subr.mxu0 0.0
    %2788 = vmatpush1.msra.mxu0 0.0
    %2789 = vmatprep.subr.mxu0 0.0
    %2790 = vmatpush1.msra.mxu0 0.0
    %2791 = vmatprep.subr.mxu0 0.0
    %2792 = vmatpush1.msra.mxu0 0.0
    %2793 = vmatprep.subr.mxu0 0.0
    %2794 = vmatpush1.msra.mxu0 0.0
    %2795 = vmatprep.subr.mxu0 0.0
    %2796 = vmatpush1.msra.mxu0 0.0
    %2797 = vmatprep.subr.mxu0 0.0
    %2798 = vmatpush1.msra.mxu0 0.0
    %2799 = vmatprep.subr.mxu0 0.0
    %2800 = vmatpush1.msra.mxu0 0.0
    %2801 = vmatprep.subr.mxu0 0.0
    %2802 = vmatpush1.msra.mxu0 0.0
    %2803 = vmatprep.subr.mxu0 0.0
    %2804 = vmatpush1.msra.mxu0 0.0
    %2805 = vmatprep.subr.mxu0 0.0
    %2806 = vmatpush1.msra.mxu0 0.0
    %2807 = vmatprep.subr.mxu0 0.0
    %2808 = vmatpush1.msra.mxu0 0.0
    %2809 = vmatprep.subr.mxu0 0.0
    %2810 = vmatpush1.msra.mxu0 0.0
    %2811 = vmatprep.subr.mxu0 0.0
    %2812 = vmatpush1.msra.mxu0 0.0
    %2813 = vmatprep.subr.mxu0 0.0
    %2814 = vmatpush1.msra.mxu0 0.0
    %2815 = vmatprep.subr.mxu0 0.0
    %2816 = vmatpush1.msra.mxu0 0.0
    %2817 = vmatprep.subr.mxu0 0.0
    %2818 = vmatpush1.msra.mxu0 0.0
    %2819 = vmatprep.subr.mxu0 0.0
    %2820 = vmatpush1.msra.mxu0 0.0
    %2821 = vmatprep.subr.mxu0 0.0
    %2822 = vmatpush1.msra.mxu0 0.0
    %2823 = vmatprep.subr.mxu0 0.0
    %2824 = vmatpush1.msra.mxu0 0.0
    %2825 = vmatprep.subr.mxu0 0.0
    %2826 = vmatpush1.msra.mxu0 0.0
    %2827 = vmatprep.subr.mxu0 0.0
    %2828 = vmatpush1.msra.mxu0 0.0
    %2829 = vmatprep.subr.mxu0 0.0
    %2830 = vmatpush1.msra.mxu0 0.0
    %2831 = vmatprep.subr.mxu0 0.0
    %2832 = vmatpush1.msra.mxu0 0.0
    %2833 = vmatprep.subr.mxu0 0.0
    %2834 = vmatpush1.msra.mxu0 0.0
    %2835 = vmatprep.subr.mxu0 0.0
    %2836 = vmatpush1.msra.mxu0 0.0
    %2837 = vmatprep.mubr.f32.mxu0 0.0
    %2838 = vmatmul.mubr.f32.gmra.mrb[0].mxu0 %v2771
    %v2839 = vpop.f32.mrb[0].mxu0
    %v2840 = vadd.f32 0.0, %v2839
    %v2841 = vpop.f32.mrb[0].mxu0
    %2842 = vdwg.mxu0
    %v2843 = vadd.f32 %v2767, %v2840
    %v2844 = vmax.f32 %v2843, 0.0
    %v2846 = vsel %vm151, %v2844, 0
    %2848 = vmatprep.subr.mxu0 0.0
    %2849 = vmatpush1.msra.mxu0 %v306
    %2850 = vmatprep.subr.mxu0 0.0
    %2851 = vmatpush1.msra.mxu0 0.0
    %2852 = vmatprep.subr.mxu0 0.0
    %2853 = vmatpush1.msra.mxu0 0.0
    %2854 = vmatprep.subr.mxu0 0.0
    %2855 = vmatpush1.msra.mxu0 0.0
    %2856 = vmatprep.subr.mxu0 0.0
    %2857 = vmatpush1.msra.mxu0 0.0
    %2858 = vmatprep.subr.mxu0 0.0
    %2859 = vmatpush1.msra.mxu0 0.0
    %2860 = vmatprep.subr.mxu0 0.0
    %2861 = vmatpush1.msra.mxu0 0.0
    %2862 = vmatprep.subr.mxu0 0.0
    %2863 = vmatpush1.msra.mxu0 0.0
    %2864 = vmatprep.subr.mxu0 0.0
    %2865 = vmatpush1.msra.mxu0 0.0
    %2866 = vmatprep.subr.mxu0 0.0
    %2867 = vmatpush1.msra.mxu0 0.0
    %2868 = vmatprep.subr.mxu0 0.0
    %2869 = vmatpush1.msra.mxu0 0.0
    %2870 = vmatprep.subr.mxu0 0.0
    %2871 = vmatpush1.msra.mxu0 0.0
    %2872 = vmatprep.subr.mxu0 0.0
    %2873 = vmatpush1.msra.mxu0 0.0
    %2874 = vmatprep.subr.mxu0 0.0
    %2875 = vmatpush1.msra.mxu0 0.0
    %2876 = vmatprep.subr.mxu0 0.0
    %2877 = vmatpush1.msra.mxu0 0.0
    %2878 = vmatprep.subr.mxu0 0.0
    %2879 = vmatpush1.msra.mxu0 0.0
    %2880 = vmatprep.subr.mxu0 0.0
    %2881 = vmatpush1.msra.mxu0 0.0
    %2882 = vmatprep.subr.mxu0 0.0
    %2883 = vmatpush1.msra.mxu0 0.0
    %2884 = vmatprep.subr.mxu0 0.0
    %2885 = vmatpush1.msra.mxu0 0.0
    %2886 = vmatprep.subr.mxu0 0.0
    %2887 = vmatpush1.msra.mxu0 0.0
    %2888 = vmatprep.subr.mxu0 0.0
    %2889 = vmatpush1.msra.mxu0 0.0
    %2890 = vmatprep.subr.mxu0 0.0
    %2891 = vmatpush1.msra.mxu0 0.0
    %2892 = vmatprep.subr.mxu0 0.0
    %2893 = vmatpush1.msra.mxu0 0.0
    %2894 = vmatprep.subr.mxu0 0.0
    %2895 = vmatpush1.msra.mxu0 0.0
    %2896 = vmatprep.subr.mxu0 0.0
    %2897 = vmatpush1.msra.mxu0 0.0
    %2898 = vmatprep.subr.mxu0 0.0
    %2899 = vmatpush1.msra.mxu0 0.0
    %2900 = vmatprep.subr.mxu0 0.0
    %2901 = vmatpush1.msra.mxu0 0.0
    %2902 = vmatprep.subr.mxu0 0.0
    %2903 = vmatpush1.msra.mxu0 0.0
    %2904 = vmatprep.subr.mxu0 0.0
    %2905 = vmatpush1.msra.mxu0 0.0
    %2906 = vmatprep.subr.mxu0 0.0
    %2907 = vmatpush1.msra.mxu0 0.0
    %2908 = vmatprep.subr.mxu0 0.0
    %2909 = vmatpush1.msra.mxu0 0.0
    %2910 = vmatprep.subr.mxu0 0.0
    %2911 = vmatpush1.msra.mxu0 0.0
    %2912 = vmatprep.mubr.f32.mxu0 0.0
    %2913 = vmatmul.mubr.f32.gmra.mrb[0].mxu0 %v2846
    %v2914 = vpop.f32.mrb[0].mxu0
    %v2915 = vadd.f32 %v41, %v2914
    %v2916 = vpop.f32.mrb[0].mxu0
    %2917 = vdwg.mxu0
    %v2918 = vsel %vm151, %v2915, -inf
    %2919 = vmax.xlane.f32.xlu0 %v2918
    %v2920 = vpop.xlane.xlu0 %2919
    %v2921 = vsub.f32 %v2915, %v2920
    %v2922 = vmul.f32 %v2921, 1.442695
    %v2923 = vpow.pop %v2922
    %v2924 = vsel %vm151, %v2923, 0.0
    %2925 = vadd.xlane.f32.xlu0 %v2924
    %v2926 = vpop.xlane.xlu0 %2925
    %v2927 = vrcp.pop %v2926
    %v2928 = vmul.f32 %v2923, %v2927
    %v2929 = vmul.f32 %v2622, %v2928
    %2932 = vrot.lane.b32.xlu0 %v2690, 124
    %v2933 = vpop.permute.xlu0 %2932
    %2934 = vrot.lane.b32.xlu0 %v2692, 124
    %v2935 = vpop.permute.xlu0 %2934
    %v2936 = vsel %vm396, %v2933, %v2935
    %v2939 = vsel %vm151, %v2929, 0
    %2941 = vmatprep.subr.mxu0 0.0
    %2942 = vmatpush1.msra.mxu0 %v403
    %2943 = vmatprep.subr.mxu0 0.0
    %2944 = vmatpush1.msra.mxu0 0.0
    %2945 = vmatprep.subr.mxu0 0.0
    %2946 = vmatpush1.msra.mxu0 0.0
    %2947 = vmatprep.subr.mxu0 0.0
    %2948 = vmatpush1.msra.mxu0 0.0
    %2949 = vmatprep.subr.mxu0 0.0
    %2950 = vmatpush1.msra.mxu0 0.0
    %2951 = vmatprep.subr.mxu0 0.0
    %2952 = vmatpush1.msra.mxu0 0.0
    %2953 = vmatprep.subr.mxu0 0.0
    %2954 = vmatpush1.msra.mxu0 0.0
    %2955 = vmatprep.subr.mxu0 0.0
    %2956 = vmatpush1.msra.mxu0 0.0
    %2957 = vmatprep.subr.mxu0 0.0
    %2958 = vmatpush1.msra.mxu0 0.0
    %2959 = vmatprep.subr.mxu0 0.0
    %2960 = vmatpush1.msra.mxu0 0.0
    %2961 = vmatprep.subr.mxu0 0.0
    %2962 = vmatpush1.msra.mxu0 0.0
    %2963 = vmatprep.subr.mxu0 0.0
    %2964 = vmatpush1.msra.mxu0 0.0
    %2965 = vmatprep.subr.mxu0 0.0
    %2966 = vmatpush1.msra.mxu0 0.0
    %2967 = vmatprep.subr.mxu0 0.0
    %2968 = vmatpush1.msra.mxu0 0.0
    %2969 = vmatprep.subr.mxu0 0.0
    %2970 = vmatpush1.msra.mxu0 0.0
    %2971 = vmatprep.subr.mxu0 0.0
    %2972 = vmatpush1.msra.mxu0 0.0
    %2973 = vmatprep.subr.mxu0 0.0
    %2974 = vmatpush1.msra.mxu0 0.0
    %2975 = vmatprep.subr.mxu0 0.0
    %2976 = vmatpush1.msra.mxu0 0.0
    %2977 = vmatprep.subr.mxu0 0.0
    %2978 = vmatpush1.msra.mxu0 0.0
    %2979 = vmatprep.subr.mxu0 0.0
    %2980 = vmatpush1.msra.mxu0 0.0
    %2981 = vmatprep.subr.mxu0 0.0
    %2982 = vmatpush1.msra.mxu0 0.0
    %2983 = vmatprep.subr.mxu0 0.0
    %2984 = vmatpush1.msra.mxu0 0.0
    %2985 = vmatprep.subr.mxu0 0.0
    %2986 = vmatpush1.msra.mxu0 0.0
    %2987 = vmatprep.subr.mxu0 0.0
    %2988 = vmatpush1.msra.mxu0 0.0
    %2989 = vmatprep.subr.mxu0 0.0
    %2990 = vmatpush1.msra.mxu0 0.0
    %2991 = vmatprep.subr.mxu0 0.0
    %2992 = vmatpush1.msra.mxu0 0.0
    %2993 = vmatprep.subr.mxu0 0.0
    %2994 = vmatpush1.msra.mxu0 0.0
    %2995 = vmatprep.subr.mxu0 0.0
    %2996 = vmatpush1.msra.mxu0 0.0
    %2997 = vmatprep.subr.mxu0 0.0
    %2998 = vmatpush1.msra.mxu0 0.0
    %2999 = vmatprep.subr.mxu0 0.0
    %3000 = vmatpush1.msra.mxu0 0.0
    %3001 = vmatprep.subr.mxu0 0.0
    %3002 = vmatpush1.msra.mxu0 0.0
    %3003 = vmatprep.subr.mxu0 0.0
    %3004 = vmatpush1.msra.mxu0 0.0
    %3005 = vmatprep.mubr.f32.mxu0 0.0
    %3006 = vmatmul.mubr.f32.gmra.mrb[0].mxu0 %v2939
    %v3007 = vpop.f32.mrb[0].mxu0
    %v3008 = vadd.f32 %v2936, %v3007
    %v3009 = vpop.f32.mrb[0].mxu0
    %3010 = vdwg.mxu0
    %v3011 = vadd.f32 %v3008, %v43
    %v3012 = vxor.u32 %v3011, 2147483648
    %v3013 = vmul.f32 %v3012, 1.442695
    %v3014 = vpow.pop %v3013
    %v3015 = vadd.f32 %v3014, 1.0
    %v3016 = vrcp.pop %v3015
    %v3017 = vmul.f32 1.0, %v3016
    %v3018 = vtanh.pop %v3011
    %v3019 = vmul.f32 %v3017, %v2521
    %3021 = vrot.lane.b32.xlu0 %v3018, 64
    %v3022 = vpop.permute.xlu0 %3021
    %v3024 = vmul.f32 %v3017, %v3022
    %3026 = vrot.lane.b32.xlu0 %v3024, 32
    %v3027 = vpop.permute.xlu0 %3026
    %v3029 = vadd.f32 %v3019, %v3027
    %v3030 = vtanh.pop %v3029
    %3032 = vrot.lane.b32.xlu0 %v3030, 64
    %v3033 = vpop.permute.xlu0 %3032
    %v3035 = vmul.f32 %v3017, %v3033
    %3037 = vrot.lane.b32.xlu0 %v3035, 32
    %v3038 = vpop.permute.xlu0 %3037
    %v3039 = vsel %vm76, %v3038, 0
    %3041 = vmatprep.subr.mxu0 0.0
    %3042 = vmatpush1.msra.mxu0 %v44
    %3043 = vmatprep.subr.mxu0 0.0
    %3044 = vmatpush1.msra.mxu0 %v45
    %3045 = vmatprep.subr.mxu0 0.0
    %3046 = vmatpush1.msra.mxu0 %v46
    %3047 = vmatprep.subr.mxu0 0.0
    %3048 = vmatpush1.msra.mxu0 %v47
    %3049 = vmatprep.subr.mxu0 0.0
    %3050 = vmatpush1.msra.mxu0 0.0
    %3051 = vmatprep.subr.mxu0 0.0
    %3052 = vmatpush1.msra.mxu0 0.0
    %3053 = vmatprep.subr.mxu0 0.0
    %3054 = vmatpush1.msra.mxu0 0.0
    %3055 = vmatprep.subr.mxu0 0.0
    %3056 = vmatpush1.msra.mxu0 0.0
    %3057 = vmatprep.subr.mxu0 0.0
    %3058 = vmatpush1.msra.mxu0 0.0
    %3059 = vmatprep.subr.mxu0 0.0
    %3060 = vmatpush1.msra.mxu0 0.0
    %3061 = vmatprep.subr.mxu0 0.0
    %3062 = vmatpush1.msra.mxu0 0.0
    %3063 = vmatprep.subr.mxu0 0.0
    %3064 = vmatpush1.msra.mxu0 0.0
    %3065 = vmatprep.subr.mxu0 0.0
    %3066 = vmatpush1.msra.mxu0 0.0
    %3067 = vmatprep.subr.mxu0 0.0
    %3068 = vmatpush1.msra.mxu0 0.0
    %3069 = vmatprep.subr.mxu0 0.0
    %3070 = vmatpush1.msra.mxu0 0.0
    %3071 = vmatprep.subr.mxu0 0.0
    %3072 = vmatpush1.msra.mxu0 0.0
    %3073 = vmatprep.subr.mxu0 0.0
    %3074 = vmatpush1.msra.mxu0 0.0
    %3075 = vmatprep.subr.mxu0 0.0
    %3076 = vmatpush1.msra.mxu0 0.0
    %3077 = vmatprep.subr.mxu0 0.0
    %3078 = vmatpush1.msra.mxu0 0.0
    %3079 = vmatprep.subr.mxu0 0.0
    %3080 = vmatpush1.msra.mxu0 0.0
    %3081 = vmatprep.subr.mxu0 0.0
    %3082 = vmatpush1.msra.mxu0 0.0
    %3083 = vmatprep.subr.mxu0 0.0
    %3084 = vmatpush1.msra.mxu0 0.0
    %3085 = vmatprep.subr.mxu0 0.0
    %3086 = vmatpush1.msra.mxu0 0.0
    %3087 = vmatprep.subr.mxu0 0.0
    %3088 = vmatpush1.msra.mxu0 0.0
    %3089 = vmatprep.subr.mxu0 0.0
    %3090 = vmatpush1.msra.mxu0 0.0
    %3091 = vmatprep.subr.mxu0 0.0
    %3092 = vmatpush1.msra.mxu0 0.0
    %3093 = vmatprep.subr.mxu0 0.0
    %3094 = vmatpush1.msra.mxu0 0.0
    %3095 = vmatprep.subr.mxu0 0.0
    %3096 = vmatpush1.msra.mxu0 0.0
    %3097 = vmatprep.subr.mxu0 0.0
    %3098 = vmatpush1.msra.mxu0 0.0
    %3099 = vmatprep.subr.mxu0 0.0
    %3100 = vmatpush1.msra.mxu0 0.0
    %3101 = vmatprep.subr.mxu0 0.0
    %3102 = vmatpush1.msra.mxu0 0.0
    %3103 = vmatprep.subr.mxu0 0.0
    %3104 = vmatpush1.msra.mxu0 0.0
    %3105 = vmatprep.mubr.f32.mxu0 0.0
    %3106 = vmatmul.mubr.f32.gmra.mrb[0].mxu0 %v3039
    %v3107 = vpop.f32.mrb[0].mxu0
    %v3108 = vadd.f32 0.0, %v3107
    %v3109 = vpop.f32.mrb[0].mxu0
    %3110 = vdwg.mxu0
    %v3111 = vadd.f32 %v3108, %v48
    %3113 = vrot.lane.b32.xlu0 %v3111, 80
    %v3114 = vpop.permute.xlu0 %3113
    %vm3116 = vcmask 786048
    %3117 = vst.msk [vmem:[#allocation2] sm:$0xff] %vm3116, %v3114
    %3119 = vset.pattern.permute.xlu0 16
    %3120 = vperm.xlu0 %3119, %v3108
    %v3121 = vpop.permute.xlu0 %3120
    %v3123 = vlaneseq
    %v3124 = vshrl.u32 %v3123, 7
    %v3125 = vsub.s32 5, %v3124
    %v3126 = vrot.slane %v49, %v3125
    %v3127 = vmul.f32 %v3121, %v3126
    %v3128 = vadd.f32 %v2620, %v3127
    %s3129 = scalar_lea.vmem %s0, 48
    %v3130 = vld [vmem:[%s3129] sm:$0xff]
    %3131 = vmatprep.subr.mxu0 %v27
    %3132 = vmatpush1.msra.mxu0 %v26
    %3133 = vmatprep.subr.mxu0 %v29
    %3134 = vmatpush1.msra.mxu0 %v28
    %3135 = vmatprep.subr.mxu0 %v31
    %3136 = vmatpush1.msra.mxu0 %v30
    %3137 = vmatprep.subr.mxu0 %v33
    %3138 = vmatpush1.msra.mxu0 %v32
    %3139 = vmatprep.subr.mxu0 0.0
    %3140 = vmatpush1.msra.mxu0 0.0
    %3141 = vmatprep.subr.mxu0 0.0
    %3142 = vmatpush1.msra.mxu0 0.0
    %3143 = vmatprep.subr.mxu0 0.0
    %3144 = vmatpush1.msra.mxu0 0.0
    %3145 = vmatprep.subr.mxu0 0.0
    %3146 = vmatpush1.msra.mxu0 0.0
    %3147 = vmatprep.subr.mxu0 0.0
    %3148 = vmatpush1.msra.mxu0 0.0
    %3149 = vmatprep.subr.mxu0 0.0
    %3150 = vmatpush1.msra.mxu0 0.0
    %3151 = vmatprep.subr.mxu0 0.0
    %3152 = vmatpush1.msra.mxu0 0.0
    %3153 = vmatprep.subr.mxu0 0.0
    %3154 = vmatpush1.msra.mxu0 0.0
    %3155 = vmatprep.subr.mxu0 0.0
    %3156 = vmatpush1.msra.mxu0 0.0
    %3157 = vmatprep.subr.mxu0 0.0
    %3158 = vmatpush1.msra.mxu0 0.0
    %3159 = vmatprep.subr.mxu0 0.0
    %3160 = vmatpush1.msra.mxu0 0.0
    %3161 = vmatprep.subr.mxu0 0.0
    %3162 = vmatpush1.msra.mxu0 0.0
    %3163 = vmatprep.subr.mxu0 0.0
    %3164 = vmatpush1.msra.mxu0 0.0
    %3165 = vmatprep.subr.mxu0 0.0
    %3166 = vmatpush1.msra.mxu0 0.0
    %3167 = vmatprep.subr.mxu0 0.0
    %3168 = vmatpush1.msra.mxu0 0.0
    %3169 = vmatprep.subr.mxu0 0.0
    %3170 = vmatpush1.msra.mxu0 0.0
    %3171 = vmatprep.subr.mxu0 0.0
    %3172 = vmatpush1.msra.mxu0 0.0
    %3173 = vmatprep.subr.mxu0 0.0
    %3174 = vmatpush1.msra.mxu0 0.0
    %3175 = vmatprep.subr.mxu0 0.0
    %3176 = vmatpush1.msra.mxu0 0.0
    %3177 = vmatprep.subr.mxu0 0.0
    %3178 = vmatpush1.msra.mxu0 0.0
    %3179 = vmatprep.subr.mxu0 0.0
    %3180 = vmatpush1.msra.mxu0 0.0
    %3181 = vmatprep.subr.mxu0 0.0
    %3182 = vmatpush1.msra.mxu0 0.0
    %3183 = vmatprep.subr.mxu0 0.0
    %3184 = vmatpush1.msra.mxu0 0.0
    %3185 = vmatprep.subr.mxu0 0.0
    %3186 = vmatpush1.msra.mxu0 0.0
    %3187 = vmatprep.subr.mxu0 0.0
    %3188 = vmatpush1.msra.mxu0 0.0
    %3189 = vmatprep.subr.mxu0 0.0
    %3190 = vmatpush1.msra.mxu0 0.0
    %3191 = vmatprep.subr.mxu0 0.0
    %3192 = vmatpush1.msra.mxu0 0.0
    %3193 = vmatprep.subr.mxu0 0.0
    %3194 = vmatpush1.msra.mxu0 0.0
    %3195 = vmatprep.mubr.f32.mxu0 0.0
    %3196 = vmatmul.mubr.f32.gmra.mrb[0].mxu0 %v3039
    %v3197 = vpop.f32.mrb[0].mxu0
    %v3198 = vadd.f32 0.0, %v3197
    %v3199 = vpop.f32.mrb[0].mxu0
    %v3200 = vadd.f32 0.0, %v3199
    %3201 = vdwg.mxu0
    %v3203 = vsel %vm151, %v3130, 0
    %3205 = vmatprep.subr.mxu0 0.0
    %3206 = vmatpush1.msra.mxu0 %v157
    %3207 = vmatprep.subr.mxu0 0.0
    %3208 = vmatpush1.msra.mxu0 0.0
    %3209 = vmatprep.subr.mxu0 0.0
    %3210 = vmatpush1.msra.mxu0 0.0
    %3211 = vmatprep.subr.mxu0 0.0
    %3212 = vmatpush1.msra.mxu0 0.0
    %3213 = vmatprep.subr.mxu0 0.0
    %3214 = vmatpush1.msra.mxu0 0.0
    %3215 = vmatprep.subr.mxu0 0.0
    %3216 = vmatpush1.msra.mxu0 0.0
    %3217 = vmatprep.subr.mxu0 0.0
    %3218 = vmatpush1.msra.mxu0 0.0
    %3219 = vmatprep.subr.mxu0 0.0
    %3220 = vmatpush1.msra.mxu0 0.0
    %3221 = vmatprep.subr.mxu0 0.0
    %3222 = vmatpush1.msra.mxu0 0.0
    %3223 = vmatprep.subr.mxu0 0.0
    %3224 = vmatpush1.msra.mxu0 0.0
    %3225 = vmatprep.subr.mxu0 0.0
    %3226 = vmatpush1.msra.mxu0 0.0
    %3227 = vmatprep.subr.mxu0 0.0
    %3228 = vmatpush1.msra.mxu0 0.0
    %3229 = vmatprep.subr.mxu0 0.0
    %3230 = vmatpush1.msra.mxu0 0.0
    %3231 = vmatprep.subr.mxu0 0.0
    %3232 = vmatpush1.msra.mxu0 0.0
    %3233 = vmatprep.subr.mxu0 0.0
    %3234 = vmatpush1.msra.mxu0 0.0
    %3235 = vmatprep.subr.mxu0 0.0
    %3236 = vmatpush1.msra.mxu0 0.0
    %3237 = vmatprep.subr.mxu0 0.0
    %3238 = vmatpush1.msra.mxu0 0.0
    %3239 = vmatprep.subr.mxu0 0.0
    %3240 = vmatpush1.msra.mxu0 0.0
    %3241 = vmatprep.subr.mxu0 0.0
    %3242 = vmatpush1.msra.mxu0 0.0
    %3243 = vmatprep.subr.mxu0 0.0
    %3244 = vmatpush1.msra.mxu0 0.0
    %3245 = vmatprep.subr.mxu0 0.0
    %3246 = vmatpush1.msra.mxu0 0.0
    %3247 = vmatprep.subr.mxu0 0.0
    %3248 = vmatpush1.msra.mxu0 0.0
    %3249 = vmatprep.subr.mxu0 0.0
    %3250 = vmatpush1.msra.mxu0 0.0
    %3251 = vmatprep.subr.mxu0 0.0
    %3252 = vmatpush1.msra.mxu0 0.0
    %3253 = vmatprep.subr.mxu0 0.0
    %3254 = vmatpush1.msra.mxu0 0.0
    %3255 = vmatprep.subr.mxu0 0.0
    %3256 = vmatpush1.msra.mxu0 0.0
    %3257 = vmatprep.subr.mxu0 0.0
    %3258 = vmatpush1.msra.mxu0 0.0
    %3259 = vmatprep.subr.mxu0 0.0
    %3260 = vmatpush1.msra.mxu0 0.0
    %3261 = vmatprep.subr.mxu0 0.0
    %3262 = vmatpush1.msra.mxu0 0.0
    %3263 = vmatprep.subr.mxu0 0.0
    %3264 = vmatpush1.msra.mxu0 0.0
    %3265 = vmatprep.subr.mxu0 0.0
    %3266 = vmatpush1.msra.mxu0 0.0
    %3267 = vmatprep.subr.mxu0 0.0
    %3268 = vmatpush1.msra.mxu0 0.0
    %3269 = vmatprep.mubr.f32.mxu0 0.0
    %3270 = vmatmul.mubr.f32.gmra.mrb[0].mxu0 %v3203
    %v3271 = vpop.f32.mrb[0].mxu0
    %v3272 = vadd.f32 %v39, %v3271
    %v3273 = vpop.f32.mrb[0].mxu0
    %3274 = vdwg.mxu0
    %v3275 = vadd.f32 %v3272, %v3198
    %3277 = vrot.lane.b32.xlu0 %v3029, 96
    %v3278 = vpop.permute.xlu0 %3277
    %v3279 = vsel %vm76, %v3278, 0
    %3281 = vmatprep.subr.mxu0 0.0
    %3282 = vmatpush1.msra.mxu0 %v34
    %3283 = vmatprep.subr.mxu0 0.0
    %3284 = vmatpush1.msra.mxu0 %v35
    %3285 = vmatprep.subr.mxu0 0.0
    %3286 = vmatpush1.msra.mxu0 %v36
    %3287 = vmatprep.subr.mxu0 0.0
    %3288 = vmatpush1.msra.mxu0 %v37
    %3289 = vmatprep.subr.mxu0 0.0
    %3290 = vmatpush1.msra.mxu0 0.0
    %3291 = vmatprep.subr.mxu0 0.0
    %3292 = vmatpush1.msra.mxu0 0.0
    %3293 = vmatprep.subr.mxu0 0.0
    %3294 = vmatpush1.msra.mxu0 0.0
    %3295 = vmatprep.subr.mxu0 0.0
    %3296 = vmatpush1.msra.mxu0 0.0
    %3297 = vmatprep.subr.mxu0 0.0
    %3298 = vmatpush1.msra.mxu0 0.0
    %3299 = vmatprep.subr.mxu0 0.0
    %3300 = vmatpush1.msra.mxu0 0.0
    %3301 = vmatprep.subr.mxu0 0.0
    %3302 = vmatpush1.msra.mxu0 0.0
    %3303 = vmatprep.subr.mxu0 0.0
    %3304 = vmatpush1.msra.mxu0 0.0
    %3305 = vmatprep.subr.mxu0 0.0
    %3306 = vmatpush1.msra.mxu0 0.0
    %3307 = vmatprep.subr.mxu0 0.0
    %3308 = vmatpush1.msra.mxu0 0.0
    %3309 = vmatprep.subr.mxu0 0.0
    %3310 = vmatpush1.msra.mxu0 0.0
    %3311 = vmatprep.subr.mxu0 0.0
    %3312 = vmatpush1.msra.mxu0 0.0
    %3313 = vmatprep.subr.mxu0 0.0
    %3314 = vmatpush1.msra.mxu0 0.0
    %3315 = vmatprep.subr.mxu0 0.0
    %3316 = vmatpush1.msra.mxu0 0.0
    %3317 = vmatprep.subr.mxu0 0.0
    %3318 = vmatpush1.msra.mxu0 0.0
    %3319 = vmatprep.subr.mxu0 0.0
    %3320 = vmatpush1.msra.mxu0 0.0
    %3321 = vmatprep.subr.mxu0 0.0
    %3322 = vmatpush1.msra.mxu0 0.0
    %3323 = vmatprep.subr.mxu0 0.0
    %3324 = vmatpush1.msra.mxu0 0.0
    %3325 = vmatprep.subr.mxu0 0.0
    %3326 = vmatpush1.msra.mxu0 0.0
    %3327 = vmatprep.subr.mxu0 0.0
    %3328 = vmatpush1.msra.mxu0 0.0
    %3329 = vmatprep.subr.mxu0 0.0
    %3330 = vmatpush1.msra.mxu0 0.0
    %3331 = vmatprep.subr.mxu0 0.0
    %3332 = vmatpush1.msra.mxu0 0.0
    %3333 = vmatprep.subr.mxu0 0.0
    %3334 = vmatpush1.msra.mxu0 0.0
    %3335 = vmatprep.subr.mxu0 0.0
    %3336 = vmatpush1.msra.mxu0 0.0
    %3337 = vmatprep.subr.mxu0 0.0
    %3338 = vmatpush1.msra.mxu0 0.0
    %3339 = vmatprep.subr.mxu0 0.0
    %3340 = vmatpush1.msra.mxu0 0.0
    %3341 = vmatprep.subr.mxu0 0.0
    %3342 = vmatpush1.msra.mxu0 0.0
    %3343 = vmatprep.subr.mxu0 0.0
    %3344 = vmatpush1.msra.mxu0 0.0
    %3345 = vmatprep.mubr.f32.mxu0 0.0
    %3346 = vmatmul.mubr.f32.gmra.mrb[0].mxu0 %v3279
    %v3347 = vpop.f32.mrb[0].mxu0
    %v3348 = vadd.f32 0.0, %v3347
    %v3349 = vpop.f32.mrb[0].mxu0
    %3350 = vdwg.mxu0
    %v3351 = vadd.f32 %v3275, %v3348
    %v3352 = vmax.f32 %v3351, 0.0
    %v3354 = vsel %vm151, %v3352, 0
    %3356 = vmatprep.subr.mxu0 0.0
    %3357 = vmatpush1.msra.mxu0 %v306
    %3358 = vmatprep.subr.mxu0 0.0
    %3359 = vmatpush1.msra.mxu0 0.0
    %3360 = vmatprep.subr.mxu0 0.0
    %3361 = vmatpush1.msra.mxu0 0.0
    %3362 = vmatprep.subr.mxu0 0.0
    %3363 = vmatpush1.msra.mxu0 0.0
    %3364 = vmatprep.subr.mxu0 0.0
    %3365 = vmatpush1.msra.mxu0 0.0
    %3366 = vmatprep.subr.mxu0 0.0
    %3367 = vmatpush1.msra.mxu0 0.0
    %3368 = vmatprep.subr.mxu0 0.0
    %3369 = vmatpush1.msra.mxu0 0.0
    %3370 = vmatprep.subr.mxu0 0.0
    %3371 = vmatpush1.msra.mxu0 0.0
    %3372 = vmatprep.subr.mxu0 0.0
    %3373 = vmatpush1.msra.mxu0 0.0
    %3374 = vmatprep.subr.mxu0 0.0
    %3375 = vmatpush1.msra.mxu0 0.0
    %3376 = vmatprep.subr.mxu0 0.0
    %3377 = vmatpush1.msra.mxu0 0.0
    %3378 = vmatprep.subr.mxu0 0.0
    %3379 = vmatpush1.msra.mxu0 0.0
    %3380 = vmatprep.subr.mxu0 0.0
    %3381 = vmatpush1.msra.mxu0 0.0
    %3382 = vmatprep.subr.mxu0 0.0
    %3383 = vmatpush1.msra.mxu0 0.0
    %3384 = vmatprep.subr.mxu0 0.0
    %3385 = vmatpush1.msra.mxu0 0.0
    %3386 = vmatprep.subr.mxu0 0.0
    %3387 = vmatpush1.msra.mxu0 0.0
    %3388 = vmatprep.subr.mxu0 0.0
    %3389 = vmatpush1.msra.mxu0 0.0
    %3390 = vmatprep.subr.mxu0 0.0
    %3391 = vmatpush1.msra.mxu0 0.0
    %3392 = vmatprep.subr.mxu0 0.0
    %3393 = vmatpush1.msra.mxu0 0.0
    %3394 = vmatprep.subr.mxu0 0.0
    %3395 = vmatpush1.msra.mxu0 0.0
    %3396 = vmatprep.subr.mxu0 0.0
    %3397 = vmatpush1.msra.mxu0 0.0
    %3398 = vmatprep.subr.mxu0 0.0
    %3399 = vmatpush1.msra.mxu0 0.0
    %3400 = vmatprep.subr.mxu0 0.0
    %3401 = vmatpush1.msra.mxu0 0.0
    %3402 = vmatprep.subr.mxu0 0.0
    %3403 = vmatpush1.msra.mxu0 0.0
    %3404 = vmatprep.subr.mxu0 0.0
    %3405 = vmatpush1.msra.mxu0 0.0
    %3406 = vmatprep.subr.mxu0 0.0
    %3407 = vmatpush1.msra.mxu0 0.0
    %3408 = vmatprep.subr.mxu0 0.0
    %3409 = vmatpush1.msra.mxu0 0.0
    %3410 = vmatprep.subr.mxu0 0.0
    %3411 = vmatpush1.msra.mxu0 0.0
    %3412 = vmatprep.subr.mxu0 0.0
    %3413 = vmatpush1.msra.mxu0 0.0
    %3414 = vmatprep.subr.mxu0 0.0
    %3415 = vmatpush1.msra.mxu0 0.0
    %3416 = vmatprep.subr.mxu0 0.0
    %3417 = vmatpush1.msra.mxu0 0.0
    %3418 = vmatprep.subr.mxu0 0.0
    %3419 = vmatpush1.msra.mxu0 0.0
    %3420 = vmatprep.mubr.f32.mxu0 0.0
    %3421 = vmatmul.mubr.f32.gmra.mrb[0].mxu0 %v3354
    %v3422 = vpop.f32.mrb[0].mxu0
    %v3423 = vadd.f32 %v41, %v3422
    %v3424 = vpop.f32.mrb[0].mxu0
    %3425 = vdwg.mxu0
    %v3426 = vsel %vm151, %v3423, -inf
    %3427 = vmax.xlane.f32.xlu0 %v3426
    %v3428 = vpop.xlane.xlu0 %3427
    %v3429 = vsub.f32 %v3423, %v3428
    %v3430 = vmul.f32 %v3429, 1.442695
    %v3431 = vpow.pop %v3430
    %v3432 = vsel %vm151, %v3431, 0.0
    %3433 = vadd.xlane.f32.xlu0 %v3432
    %v3434 = vpop.xlane.xlu0 %3433
    %v3435 = vrcp.pop %v3434
    %v3436 = vmul.f32 %v3431, %v3435
    %v3437 = vmul.f32 %v3130, %v3436
    %3440 = vrot.lane.b32.xlu0 %v3198, 124
    %v3441 = vpop.permute.xlu0 %3440
    %3442 = vrot.lane.b32.xlu0 %v3200, 124
    %v3443 = vpop.permute.xlu0 %3442
    %v3444 = vsel %vm396, %v3441, %v3443
    %v3447 = vsel %vm151, %v3437, 0
    %3449 = vmatprep.subr.mxu0 0.0
    %3450 = vmatpush1.msra.mxu0 %v403
    %3451 = vmatprep.subr.mxu0 0.0
    %3452 = vmatpush1.msra.mxu0 0.0
    %3453 = vmatprep.subr.mxu0 0.0
    %3454 = vmatpush1.msra.mxu0 0.0
    %3455 = vmatprep.subr.mxu0 0.0
    %3456 = vmatpush1.msra.mxu0 0.0
    %3457 = vmatprep.subr.mxu0 0.0
    %3458 = vmatpush1.msra.mxu0 0.0
    %3459 = vmatprep.subr.mxu0 0.0
    %3460 = vmatpush1.msra.mxu0 0.0
    %3461 = vmatprep.subr.mxu0 0.0
    %3462 = vmatpush1.msra.mxu0 0.0
    %3463 = vmatprep.subr.mxu0 0.0
    %3464 = vmatpush1.msra.mxu0 0.0
    %3465 = vmatprep.subr.mxu0 0.0
    %3466 = vmatpush1.msra.mxu0 0.0
    %3467 = vmatprep.subr.mxu0 0.0
    %3468 = vmatpush1.msra.mxu0 0.0
    %3469 = vmatprep.subr.mxu0 0.0
    %3470 = vmatpush1.msra.mxu0 0.0
    %3471 = vmatprep.subr.mxu0 0.0
    %3472 = vmatpush1.msra.mxu0 0.0
    %3473 = vmatprep.subr.mxu0 0.0
    %3474 = vmatpush1.msra.mxu0 0.0
    %3475 = vmatprep.subr.mxu0 0.0
    %3476 = vmatpush1.msra.mxu0 0.0
    %3477 = vmatprep.subr.mxu0 0.0
    %3478 = vmatpush1.msra.mxu0 0.0
    %3479 = vmatprep.subr.mxu0 0.0
    %3480 = vmatpush1.msra.mxu0 0.0
    %3481 = vmatprep.subr.mxu0 0.0
    %3482 = vmatpush1.msra.mxu0 0.0
    %3483 = vmatprep.subr.mxu0 0.0
    %3484 = vmatpush1.msra.mxu0 0.0
    %3485 = vmatprep.subr.mxu0 0.0
    %3486 = vmatpush1.msra.mxu0 0.0
    %3487 = vmatprep.subr.mxu0 0.0
    %3488 = vmatpush1.msra.mxu0 0.0
    %3489 = vmatprep.subr.mxu0 0.0
    %3490 = vmatpush1.msra.mxu0 0.0
    %3491 = vmatprep.subr.mxu0 0.0
    %3492 = vmatpush1.msra.mxu0 0.0
    %3493 = vmatprep.subr.mxu0 0.0
    %3494 = vmatpush1.msra.mxu0 0.0
    %3495 = vmatprep.subr.mxu0 0.0
    %3496 = vmatpush1.msra.mxu0 0.0
    %3497 = vmatprep.subr.mxu0 0.0
    %3498 = vmatpush1.msra.mxu0 0.0
    %3499 = vmatprep.subr.mxu0 0.0
    %3500 = vmatpush1.msra.mxu0 0.0
    %3501 = vmatprep.subr.mxu0 0.0
    %3502 = vmatpush1.msra.mxu0 0.0
    %3503 = vmatprep.subr.mxu0 0.0
    %3504 = vmatpush1.msra.mxu0 0.0
    %3505 = vmatprep.subr.mxu0 0.0
    %3506 = vmatpush1.msra.mxu0 0.0
    %3507 = vmatprep.subr.mxu0 0.0
    %3508 = vmatpush1.msra.mxu0 0.0
    %3509 = vmatprep.subr.mxu0 0.0
    %3510 = vmatpush1.msra.mxu0 0.0
    %3511 = vmatprep.subr.mxu0 0.0
    %3512 = vmatpush1.msra.mxu0 0.0
    %3513 = vmatprep.mubr.f32.mxu0 0.0
    %3514 = vmatmul.mubr.f32.gmra.mrb[0].mxu0 %v3447
    %v3515 = vpop.f32.mrb[0].mxu0
    %v3516 = vadd.f32 %v3444, %v3515
    %v3517 = vpop.f32.mrb[0].mxu0
    %3518 = vdwg.mxu0
    %v3519 = vadd.f32 %v3516, %v43
    %v3520 = vxor.u32 %v3519, 2147483648
    %v3521 = vmul.f32 %v3520, 1.442695
    %v3522 = vpow.pop %v3521
    %v3523 = vadd.f32 %v3522, 1.0
    %v3524 = vrcp.pop %v3523
    %v3525 = vmul.f32 1.0, %v3524
    %v3526 = vtanh.pop %v3519
    %v3527 = vmul.f32 %v3525, %v3029
    %3529 = vrot.lane.b32.xlu0 %v3526, 64
    %v3530 = vpop.permute.xlu0 %3529
    %v3532 = vmul.f32 %v3525, %v3530
    %3534 = vrot.lane.b32.xlu0 %v3532, 32
    %v3535 = vpop.permute.xlu0 %3534
    %v3537 = vadd.f32 %v3527, %v3535
    %v3538 = vtanh.pop %v3537
    %3540 = vrot.lane.b32.xlu0 %v3538, 64
    %v3541 = vpop.permute.xlu0 %3540
    %v3543 = vmul.f32 %v3525, %v3541
    %3545 = vrot.lane.b32.xlu0 %v3543, 32
    %v3546 = vpop.permute.xlu0 %3545
    %v3547 = vsel %vm76, %v3546, 0
    %3549 = vmatprep.subr.mxu0 0.0
    %3550 = vmatpush1.msra.mxu0 %v44
    %3551 = vmatprep.subr.mxu0 0.0
    %3552 = vmatpush1.msra.mxu0 %v45
    %3553 = vmatprep.subr.mxu0 0.0
    %3554 = vmatpush1.msra.mxu0 %v46
    %3555 = vmatprep.subr.mxu0 0.0
    %3556 = vmatpush1.msra.mxu0 %v47
    %3557 = vmatprep.subr.mxu0 0.0
    %3558 = vmatpush1.msra.mxu0 0.0
    %3559 = vmatprep.subr.mxu0 0.0
    %3560 = vmatpush1.msra.mxu0 0.0
    %3561 = vmatprep.subr.mxu0 0.0
    %3562 = vmatpush1.msra.mxu0 0.0
    %3563 = vmatprep.subr.mxu0 0.0
    %3564 = vmatpush1.msra.mxu0 0.0
    %3565 = vmatprep.subr.mxu0 0.0
    %3566 = vmatpush1.msra.mxu0 0.0
    %3567 = vmatprep.subr.mxu0 0.0
    %3568 = vmatpush1.msra.mxu0 0.0
    %3569 = vmatprep.subr.mxu0 0.0
    %3570 = vmatpush1.msra.mxu0 0.0
    %3571 = vmatprep.subr.mxu0 0.0
    %3572 = vmatpush1.msra.mxu0 0.0
    %3573 = vmatprep.subr.mxu0 0.0
    %3574 = vmatpush1.msra.mxu0 0.0
    %3575 = vmatprep.subr.mxu0 0.0
    %3576 = vmatpush1.msra.mxu0 0.0
    %3577 = vmatprep.subr.mxu0 0.0
    %3578 = vmatpush1.msra.mxu0 0.0
    %3579 = vmatprep.subr.mxu0 0.0
    %3580 = vmatpush1.msra.mxu0 0.0
    %3581 = vmatprep.subr.mxu0 0.0
    %3582 = vmatpush1.msra.mxu0 0.0
    %3583 = vmatprep.subr.mxu0 0.0
    %3584 = vmatpush1.msra.mxu0 0.0
    %3585 = vmatprep.subr.mxu0 0.0
    %3586 = vmatpush1.msra.mxu0 0.0
    %3587 = vmatprep.subr.mxu0 0.0
    %3588 = vmatpush1.msra.mxu0 0.0
    %3589 = vmatprep.subr.mxu0 0.0
    %3590 = vmatpush1.msra.mxu0 0.0
    %3591 = vmatprep.subr.mxu0 0.0
    %3592 = vmatpush1.msra.mxu0 0.0
    %3593 = vmatprep.subr.mxu0 0.0
    %3594 = vmatpush1.msra.mxu0 0.0
    %3595 = vmatprep.subr.mxu0 0.0
    %3596 = vmatpush1.msra.mxu0 0.0
    %3597 = vmatprep.subr.mxu0 0.0
    %3598 = vmatpush1.msra.mxu0 0.0
    %3599 = vmatprep.subr.mxu0 0.0
    %3600 = vmatpush1.msra.mxu0 0.0
    %3601 = vmatprep.subr.mxu0 0.0
    %3602 = vmatpush1.msra.mxu0 0.0
    %3603 = vmatprep.subr.mxu0 0.0
    %3604 = vmatpush1.msra.mxu0 0.0
    %3605 = vmatprep.subr.mxu0 0.0
    %3606 = vmatpush1.msra.mxu0 0.0
    %3607 = vmatprep.subr.mxu0 0.0
    %3608 = vmatpush1.msra.mxu0 0.0
    %3609 = vmatprep.subr.mxu0 0.0
    %3610 = vmatpush1.msra.mxu0 0.0
    %3611 = vmatprep.subr.mxu0 0.0
    %3612 = vmatpush1.msra.mxu0 0.0
    %3613 = vmatprep.mubr.f32.mxu0 0.0
    %3614 = vmatmul.mubr.f32.gmra.mrb[0].mxu0 %v3547
    %v3615 = vpop.f32.mrb[0].mxu0
    %v3616 = vadd.f32 0.0, %v3615
    %v3617 = vpop.f32.mrb[0].mxu0
    %3618 = vdwg.mxu0
    %v3619 = vadd.f32 %v3616, %v48
    %3621 = vrot.lane.b32.xlu0 %v3619, 96
    %v3622 = vpop.permute.xlu0 %3621
    %vm3624 = vcmask 917248
    %3625 = vst.msk [vmem:[#allocation2] sm:$0xff] %vm3624, %v3622
    %3627 = vset.pattern.permute.xlu0 16
    %3628 = vperm.xlu0 %3627, %v3616
    %v3629 = vpop.permute.xlu0 %3628
    %v3631 = vlaneseq
    %v3632 = vshrl.u32 %v3631, 7
    %v3633 = vsub.s32 6, %v3632
    %v3634 = vrot.slane %v49, %v3633
    %v3635 = vmul.f32 %v3629, %v3634
    %v3636 = vadd.f32 %v3128, %v3635
    %s3637 = scalar_lea.vmem %s0, 56
    %v3638 = vld [vmem:[%s3637] sm:$0xff]
    %3639 = vmatprep.subr.mxu0 %v27
    %3640 = vmatpush1.msra.mxu0 %v26
    %3641 = vmatprep.subr.mxu0 %v29
    %3642 = vmatpush1.msra.mxu0 %v28
    %3643 = vmatprep.subr.mxu0 %v31
    %3644 = vmatpush1.msra.mxu0 %v30
    %3645 = vmatprep.subr.mxu0 %v33
    %3646 = vmatpush1.msra.mxu0 %v32
    %3647 = vmatprep.subr.mxu0 0.0
    %3648 = vmatpush1.msra.mxu0 0.0
    %3649 = vmatprep.subr.mxu0 0.0
    %3650 = vmatpush1.msra.mxu0 0.0
    %3651 = vmatprep.subr.mxu0 0.0
    %3652 = vmatpush1.msra.mxu0 0.0
    %3653 = vmatprep.subr.mxu0 0.0
    %3654 = vmatpush1.msra.mxu0 0.0
    %3655 = vmatprep.subr.mxu0 0.0
    %3656 = vmatpush1.msra.mxu0 0.0
    %3657 = vmatprep.subr.mxu0 0.0
    %3658 = vmatpush1.msra.mxu0 0.0
    %3659 = vmatprep.subr.mxu0 0.0
    %3660 = vmatpush1.msra.mxu0 0.0
    %3661 = vmatprep.subr.mxu0 0.0
    %3662 = vmatpush1.msra.mxu0 0.0
    %3663 = vmatprep.subr.mxu0 0.0
    %3664 = vmatpush1.msra.mxu0 0.0
    %3665 = vmatprep.subr.mxu0 0.0
    %3666 = vmatpush1.msra.mxu0 0.0
    %3667 = vmatprep.subr.mxu0 0.0
    %3668 = vmatpush1.msra.mxu0 0.0
    %3669 = vmatprep.subr.mxu0 0.0
    %3670 = vmatpush1.msra.mxu0 0.0
    %3671 = vmatprep.subr.mxu0 0.0
    %3672 = vmatpush1.msra.mxu0 0.0
    %3673 = vmatprep.subr.mxu0 0.0
    %3674 = vmatpush1.msra.mxu0 0.0
    %3675 = vmatprep.subr.mxu0 0.0
    %3676 = vmatpush1.msra.mxu0 0.0
    %3677 = vmatprep.subr.mxu0 0.0
    %3678 = vmatpush1.msra.mxu0 0.0
    %3679 = vmatprep.subr.mxu0 0.0
    %3680 = vmatpush1.msra.mxu0 0.0
    %3681 = vmatprep.subr.mxu0 0.0
    %3682 = vmatpush1.msra.mxu0 0.0
    %3683 = vmatprep.subr.mxu0 0.0
    %3684 = vmatpush1.msra.mxu0 0.0
    %3685 = vmatprep.subr.mxu0 0.0
    %3686 = vmatpush1.msra.mxu0 0.0
    %3687 = vmatprep.subr.mxu0 0.0
    %3688 = vmatpush1.msra.mxu0 0.0
    %3689 = vmatprep.subr.mxu0 0.0
    %3690 = vmatpush1.msra.mxu0 0.0
    %3691 = vmatprep.subr.mxu0 0.0
    %3692 = vmatpush1.msra.mxu0 0.0
    %3693 = vmatprep.subr.mxu0 0.0
    %3694 = vmatpush1.msra.mxu0 0.0
    %3695 = vmatprep.subr.mxu0 0.0
    %3696 = vmatpush1.msra.mxu0 0.0
    %3697 = vmatprep.subr.mxu0 0.0
    %3698 = vmatpush1.msra.mxu0 0.0
    %3699 = vmatprep.subr.mxu0 0.0
    %3700 = vmatpush1.msra.mxu0 0.0
    %3701 = vmatprep.subr.mxu0 0.0
    %3702 = vmatpush1.msra.mxu0 0.0
    %3703 = vmatprep.mubr.f32.mxu0 0.0
    %3704 = vmatmul.mubr.f32.gmra.mrb[0].mxu0 %v3547
    %v3705 = vpop.f32.mrb[0].mxu0
    %v3706 = vadd.f32 0.0, %v3705
    %v3707 = vpop.f32.mrb[0].mxu0
    %v3708 = vadd.f32 0.0, %v3707
    %3709 = vdwg.mxu0
    %v3711 = vsel %vm151, %v3638, 0
    %3713 = vmatprep.subr.mxu0 0.0
    %3714 = vmatpush1.msra.mxu0 %v157
    %3715 = vmatprep.subr.mxu0 0.0
    %3716 = vmatpush1.msra.mxu0 0.0
    %3717 = vmatprep.subr.mxu0 0.0
    %3718 = vmatpush1.msra.mxu0 0.0
    %3719 = vmatprep.subr.mxu0 0.0
    %3720 = vmatpush1.msra.mxu0 0.0
    %3721 = vmatprep.subr.mxu0 0.0
    %3722 = vmatpush1.msra.mxu0 0.0
    %3723 = vmatprep.subr.mxu0 0.0
    %3724 = vmatpush1.msra.mxu0 0.0
    %3725 = vmatprep.subr.mxu0 0.0
    %3726 = vmatpush1.msra.mxu0 0.0
    %3727 = vmatprep.subr.mxu0 0.0
    %3728 = vmatpush1.msra.mxu0 0.0
    %3729 = vmatprep.subr.mxu0 0.0
    %3730 = vmatpush1.msra.mxu0 0.0
    %3731 = vmatprep.subr.mxu0 0.0
    %3732 = vmatpush1.msra.mxu0 0.0
    %3733 = vmatprep.subr.mxu0 0.0
    %3734 = vmatpush1.msra.mxu0 0.0
    %3735 = vmatprep.subr.mxu0 0.0
    %3736 = vmatpush1.msra.mxu0 0.0
    %3737 = vmatprep.subr.mxu0 0.0
    %3738 = vmatpush1.msra.mxu0 0.0
    %3739 = vmatprep.subr.mxu0 0.0
    %3740 = vmatpush1.msra.mxu0 0.0
    %3741 = vmatprep.subr.mxu0 0.0
    %3742 = vmatpush1.msra.mxu0 0.0
    %3743 = vmatprep.subr.mxu0 0.0
    %3744 = vmatpush1.msra.mxu0 0.0
    %3745 = vmatprep.subr.mxu0 0.0
    %3746 = vmatpush1.msra.mxu0 0.0
    %3747 = vmatprep.subr.mxu0 0.0
    %3748 = vmatpush1.msra.mxu0 0.0
    %3749 = vmatprep.subr.mxu0 0.0
    %3750 = vmatpush1.msra.mxu0 0.0
    %3751 = vmatprep.subr.mxu0 0.0
    %3752 = vmatpush1.msra.mxu0 0.0
    %3753 = vmatprep.subr.mxu0 0.0
    %3754 = vmatpush1.msra.mxu0 0.0
    %3755 = vmatprep.subr.mxu0 0.0
    %3756 = vmatpush1.msra.mxu0 0.0
    %3757 = vmatprep.subr.mxu0 0.0
    %3758 = vmatpush1.msra.mxu0 0.0
    %3759 = vmatprep.subr.mxu0 0.0
    %3760 = vmatpush1.msra.mxu0 0.0
    %3761 = vmatprep.subr.mxu0 0.0
    %3762 = vmatpush1.msra.mxu0 0.0
    %3763 = vmatprep.subr.mxu0 0.0
    %3764 = vmatpush1.msra.mxu0 0.0
    %3765 = vmatprep.subr.mxu0 0.0
    %3766 = vmatpush1.msra.mxu0 0.0
    %3767 = vmatprep.subr.mxu0 0.0
    %3768 = vmatpush1.msra.mxu0 0.0
    %3769 = vmatprep.subr.mxu0 0.0
    %3770 = vmatpush1.msra.mxu0 0.0
    %3771 = vmatprep.subr.mxu0 0.0
    %3772 = vmatpush1.msra.mxu0 0.0
    %3773 = vmatprep.subr.mxu0 0.0
    %3774 = vmatpush1.msra.mxu0 0.0
    %3775 = vmatprep.subr.mxu0 0.0
    %3776 = vmatpush1.msra.mxu0 0.0
    %3777 = vmatprep.mubr.f32.mxu0 0.0
    %3778 = vmatmul.mubr.f32.gmra.mrb[0].mxu0 %v3711
    %v3779 = vpop.f32.mrb[0].mxu0
    %v3780 = vadd.f32 %v39, %v3779
    %v3781 = vpop.f32.mrb[0].mxu0
    %3782 = vdwg.mxu0
    %v3783 = vadd.f32 %v3780, %v3706
    %3785 = vrot.lane.b32.xlu0 %v3537, 96
    %v3786 = vpop.permute.xlu0 %3785
    %v3787 = vsel %vm76, %v3786, 0
    %3789 = vmatprep.subr.mxu0 0.0
    %3790 = vmatpush1.msra.mxu0 %v34
    %3791 = vmatprep.subr.mxu0 0.0
    %3792 = vmatpush1.msra.mxu0 %v35
    %3793 = vmatprep.subr.mxu0 0.0
    %3794 = vmatpush1.msra.mxu0 %v36
    %3795 = vmatprep.subr.mxu0 0.0
    %3796 = vmatpush1.msra.mxu0 %v37
    %3797 = vmatprep.subr.mxu0 0.0
    %3798 = vmatpush1.msra.mxu0 0.0
    %3799 = vmatprep.subr.mxu0 0.0
    %3800 = vmatpush1.msra.mxu0 0.0
    %3801 = vmatprep.subr.mxu0 0.0
    %3802 = vmatpush1.msra.mxu0 0.0
    %3803 = vmatprep.subr.mxu0 0.0
    %3804 = vmatpush1.msra.mxu0 0.0
    %3805 = vmatprep.subr.mxu0 0.0
    %3806 = vmatpush1.msra.mxu0 0.0
    %3807 = vmatprep.subr.mxu0 0.0
    %3808 = vmatpush1.msra.mxu0 0.0
    %3809 = vmatprep.subr.mxu0 0.0
    %3810 = vmatpush1.msra.mxu0 0.0
    %3811 = vmatprep.subr.mxu0 0.0
    %3812 = vmatpush1.msra.mxu0 0.0
    %3813 = vmatprep.subr.mxu0 0.0
    %3814 = vmatpush1.msra.mxu0 0.0
    %3815 = vmatprep.subr.mxu0 0.0
    %3816 = vmatpush1.msra.mxu0 0.0
    %3817 = vmatprep.subr.mxu0 0.0
    %3818 = vmatpush1.msra.mxu0 0.0
    %3819 = vmatprep.subr.mxu0 0.0
    %3820 = vmatpush1.msra.mxu0 0.0
    %3821 = vmatprep.subr.mxu0 0.0
    %3822 = vmatpush1.msra.mxu0 0.0
    %3823 = vmatprep.subr.mxu0 0.0
    %3824 = vmatpush1.msra.mxu0 0.0
    %3825 = vmatprep.subr.mxu0 0.0
    %3826 = vmatpush1.msra.mxu0 0.0
    %3827 = vmatprep.subr.mxu0 0.0
    %3828 = vmatpush1.msra.mxu0 0.0
    %3829 = vmatprep.subr.mxu0 0.0
    %3830 = vmatpush1.msra.mxu0 0.0
    %3831 = vmatprep.subr.mxu0 0.0
    %3832 = vmatpush1.msra.mxu0 0.0
    %3833 = vmatprep.subr.mxu0 0.0
    %3834 = vmatpush1.msra.mxu0 0.0
    %3835 = vmatprep.subr.mxu0 0.0
    %3836 = vmatpush1.msra.mxu0 0.0
    %3837 = vmatprep.subr.mxu0 0.0
    %3838 = vmatpush1.msra.mxu0 0.0
    %3839 = vmatprep.subr.mxu0 0.0
    %3840 = vmatpush1.msra.mxu0 0.0
    %3841 = vmatprep.subr.mxu0 0.0
    %3842 = vmatpush1.msra.mxu0 0.0
    %3843 = vmatprep.subr.mxu0 0.0
    %3844 = vmatpush1.msra.mxu0 0.0
    %3845 = vmatprep.subr.mxu0 0.0
    %3846 = vmatpush1.msra.mxu0 0.0
    %3847 = vmatprep.subr.mxu0 0.0
    %3848 = vmatpush1.msra.mxu0 0.0
    %3849 = vmatprep.subr.mxu0 0.0
    %3850 = vmatpush1.msra.mxu0 0.0
    %3851 = vmatprep.subr.mxu0 0.0
    %3852 = vmatpush1.msra.mxu0 0.0
    %3853 = vmatprep.mubr.f32.mxu0 0.0
    %3854 = vmatmul.mubr.f32.gmra.mrb[0].mxu0 %v3787
    %v3855 = vpop.f32.mrb[0].mxu0
    %v3856 = vadd.f32 0.0, %v3855
    %v3857 = vpop.f32.mrb[0].mxu0
    %3858 = vdwg.mxu0
    %v3859 = vadd.f32 %v3783, %v3856
    %v3860 = vmax.f32 %v3859, 0.0
    %v3862 = vsel %vm151, %v3860, 0
    %3864 = vmatprep.subr.mxu0 0.0
    %3865 = vmatpush1.msra.mxu0 %v306
    %3866 = vmatprep.subr.mxu0 0.0
    %3867 = vmatpush1.msra.mxu0 0.0
    %3868 = vmatprep.subr.mxu0 0.0
    %3869 = vmatpush1.msra.mxu0 0.0
    %3870 = vmatprep.subr.mxu0 0.0
    %3871 = vmatpush1.msra.mxu0 0.0
    %3872 = vmatprep.subr.mxu0 0.0
    %3873 = vmatpush1.msra.mxu0 0.0
    %3874 = vmatprep.subr.mxu0 0.0
    %3875 = vmatpush1.msra.mxu0 0.0
    %3876 = vmatprep.subr.mxu0 0.0
    %3877 = vmatpush1.msra.mxu0 0.0
    %3878 = vmatprep.subr.mxu0 0.0
    %3879 = vmatpush1.msra.mxu0 0.0
    %3880 = vmatprep.subr.mxu0 0.0
    %3881 = vmatpush1.msra.mxu0 0.0
    %3882 = vmatprep.subr.mxu0 0.0
    %3883 = vmatpush1.msra.mxu0 0.0
    %3884 = vmatprep.subr.mxu0 0.0
    %3885 = vmatpush1.msra.mxu0 0.0
    %3886 = vmatprep.subr.mxu0 0.0
    %3887 = vmatpush1.msra.mxu0 0.0
    %3888 = vmatprep.subr.mxu0 0.0
    %3889 = vmatpush1.msra.mxu0 0.0
    %3890 = vmatprep.subr.mxu0 0.0
    %3891 = vmatpush1.msra.mxu0 0.0
    %3892 = vmatprep.subr.mxu0 0.0
    %3893 = vmatpush1.msra.mxu0 0.0
    %3894 = vmatprep.subr.mxu0 0.0
    %3895 = vmatpush1.msra.mxu0 0.0
    %3896 = vmatprep.subr.mxu0 0.0
    %3897 = vmatpush1.msra.mxu0 0.0
    %3898 = vmatprep.subr.mxu0 0.0
    %3899 = vmatpush1.msra.mxu0 0.0
    %3900 = vmatprep.subr.mxu0 0.0
    %3901 = vmatpush1.msra.mxu0 0.0
    %3902 = vmatprep.subr.mxu0 0.0
    %3903 = vmatpush1.msra.mxu0 0.0
    %3904 = vmatprep.subr.mxu0 0.0
    %3905 = vmatpush1.msra.mxu0 0.0
    %3906 = vmatprep.subr.mxu0 0.0
    %3907 = vmatpush1.msra.mxu0 0.0
    %3908 = vmatprep.subr.mxu0 0.0
    %3909 = vmatpush1.msra.mxu0 0.0
    %3910 = vmatprep.subr.mxu0 0.0
    %3911 = vmatpush1.msra.mxu0 0.0
    %3912 = vmatprep.subr.mxu0 0.0
    %3913 = vmatpush1.msra.mxu0 0.0
    %3914 = vmatprep.subr.mxu0 0.0
    %3915 = vmatpush1.msra.mxu0 0.0
    %3916 = vmatprep.subr.mxu0 0.0
    %3917 = vmatpush1.msra.mxu0 0.0
    %3918 = vmatprep.subr.mxu0 0.0
    %3919 = vmatpush1.msra.mxu0 0.0
    %3920 = vmatprep.subr.mxu0 0.0
    %3921 = vmatpush1.msra.mxu0 0.0
    %3922 = vmatprep.subr.mxu0 0.0
    %3923 = vmatpush1.msra.mxu0 0.0
    %3924 = vmatprep.subr.mxu0 0.0
    %3925 = vmatpush1.msra.mxu0 0.0
    %3926 = vmatprep.subr.mxu0 0.0
    %3927 = vmatpush1.msra.mxu0 0.0
    %3928 = vmatprep.mubr.f32.mxu0 0.0
    %3929 = vmatmul.mubr.f32.gmra.mrb[0].mxu0 %v3862
    %v3930 = vpop.f32.mrb[0].mxu0
    %v3931 = vadd.f32 %v41, %v3930
    %v3932 = vpop.f32.mrb[0].mxu0
    %3933 = vdwg.mxu0
    %v3934 = vsel %vm151, %v3931, -inf
    %3935 = vmax.xlane.f32.xlu0 %v3934
    %v3936 = vpop.xlane.xlu0 %3935
    %v3937 = vsub.f32 %v3931, %v3936
    %v3938 = vmul.f32 %v3937, 1.442695
    %v3939 = vpow.pop %v3938
    %v3940 = vsel %vm151, %v3939, 0.0
    %3941 = vadd.xlane.f32.xlu0 %v3940
    %v3942 = vpop.xlane.xlu0 %3941
    %v3943 = vrcp.pop %v3942
    %v3944 = vmul.f32 %v3939, %v3943
    %v3945 = vmul.f32 %v3638, %v3944
    %3948 = vrot.lane.b32.xlu0 %v3706, 124
    %v3949 = vpop.permute.xlu0 %3948
    %3950 = vrot.lane.b32.xlu0 %v3708, 124
    %v3951 = vpop.permute.xlu0 %3950
    %v3952 = vsel %vm396, %v3949, %v3951
    %v3955 = vsel %vm151, %v3945, 0
    %3957 = vmatprep.subr.mxu0 0.0
    %3958 = vmatpush1.msra.mxu0 %v403
    %3959 = vmatprep.subr.mxu0 0.0
    %3960 = vmatpush1.msra.mxu0 0.0
    %3961 = vmatprep.subr.mxu0 0.0
    %3962 = vmatpush1.msra.mxu0 0.0
    %3963 = vmatprep.subr.mxu0 0.0
    %3964 = vmatpush1.msra.mxu0 0.0
    %3965 = vmatprep.subr.mxu0 0.0
    %3966 = vmatpush1.msra.mxu0 0.0
    %3967 = vmatprep.subr.mxu0 0.0
    %3968 = vmatpush1.msra.mxu0 0.0
    %3969 = vmatprep.subr.mxu0 0.0
    %3970 = vmatpush1.msra.mxu0 0.0
    %3971 = vmatprep.subr.mxu0 0.0
    %3972 = vmatpush1.msra.mxu0 0.0
    %3973 = vmatprep.subr.mxu0 0.0
    %3974 = vmatpush1.msra.mxu0 0.0
    %3975 = vmatprep.subr.mxu0 0.0
    %3976 = vmatpush1.msra.mxu0 0.0
    %3977 = vmatprep.subr.mxu0 0.0
    %3978 = vmatpush1.msra.mxu0 0.0
    %3979 = vmatprep.subr.mxu0 0.0
    %3980 = vmatpush1.msra.mxu0 0.0
    %3981 = vmatprep.subr.mxu0 0.0
    %3982 = vmatpush1.msra.mxu0 0.0
    %3983 = vmatprep.subr.mxu0 0.0
    %3984 = vmatpush1.msra.mxu0 0.0
    %3985 = vmatprep.subr.mxu0 0.0
    %3986 = vmatpush1.msra.mxu0 0.0
    %3987 = vmatprep.subr.mxu0 0.0
    %3988 = vmatpush1.msra.mxu0 0.0
    %3989 = vmatprep.subr.mxu0 0.0
    %3990 = vmatpush1.msra.mxu0 0.0
    %3991 = vmatprep.subr.mxu0 0.0
    %3992 = vmatpush1.msra.mxu0 0.0
    %3993 = vmatprep.subr.mxu0 0.0
    %3994 = vmatpush1.msra.mxu0 0.0
    %3995 = vmatprep.subr.mxu0 0.0
    %3996 = vmatpush1.msra.mxu0 0.0
    %3997 = vmatprep.subr.mxu0 0.0
    %3998 = vmatpush1.msra.mxu0 0.0
    %3999 = vmatprep.subr.mxu0 0.0
    %4000 = vmatpush1.msra.mxu0 0.0
    %4001 = vmatprep.subr.mxu0 0.0
    %4002 = vmatpush1.msra.mxu0 0.0
    %4003 = vmatprep.subr.mxu0 0.0
    %4004 = vmatpush1.msra.mxu0 0.0
    %4005 = vmatprep.subr.mxu0 0.0
    %4006 = vmatpush1.msra.mxu0 0.0
    %4007 = vmatprep.subr.mxu0 0.0
    %4008 = vmatpush1.msra.mxu0 0.0
    %4009 = vmatprep.subr.mxu0 0.0
    %4010 = vmatpush1.msra.mxu0 0.0
    %4011 = vmatprep.subr.mxu0 0.0
    %4012 = vmatpush1.msra.mxu0 0.0
    %4013 = vmatprep.subr.mxu0 0.0
    %4014 = vmatpush1.msra.mxu0 0.0
    %4015 = vmatprep.subr.mxu0 0.0
    %4016 = vmatpush1.msra.mxu0 0.0
    %4017 = vmatprep.subr.mxu0 0.0
    %4018 = vmatpush1.msra.mxu0 0.0
    %4019 = vmatprep.subr.mxu0 0.0
    %4020 = vmatpush1.msra.mxu0 0.0
    %4021 = vmatprep.mubr.f32.mxu0 0.0
    %4022 = vmatmul.mubr.f32.gmra.mrb[0].mxu0 %v3955
    %v4023 = vpop.f32.mrb[0].mxu0
    %v4024 = vadd.f32 %v3952, %v4023
    %v4025 = vpop.f32.mrb[0].mxu0
    %4026 = vdwg.mxu0
    %v4027 = vadd.f32 %v4024, %v43
    %v4028 = vxor.u32 %v4027, 2147483648
    %v4029 = vmul.f32 %v4028, 1.442695
    %v4030 = vpow.pop %v4029
    %v4031 = vadd.f32 %v4030, 1.0
    %v4032 = vrcp.pop %v4031
    %v4033 = vmul.f32 1.0, %v4032
    %v4034 = vtanh.pop %v4027
    %v4035 = vmul.f32 %v4033, %v3537
    %4037 = vrot.lane.b32.xlu0 %v4034, 64
    %v4038 = vpop.permute.xlu0 %4037
    %v4040 = vmul.f32 %v4033, %v4038
    %4042 = vrot.lane.b32.xlu0 %v4040, 32
    %v4043 = vpop.permute.xlu0 %4042
    %v4045 = vadd.f32 %v4035, %v4043
    %v4046 = vtanh.pop %v4045
    %4048 = vrot.lane.b32.xlu0 %v4046, 64
    %v4049 = vpop.permute.xlu0 %4048
    %v4051 = vmul.f32 %v4033, %v4049
    %4053 = vrot.lane.b32.xlu0 %v4051, 32
    %v4054 = vpop.permute.xlu0 %4053
    %v4055 = vsel %vm76, %v4054, 0
    %4057 = vmatprep.subr.mxu0 0.0
    %4058 = vmatpush1.msra.mxu0 %v44
    %4059 = vmatprep.subr.mxu0 0.0
    %4060 = vmatpush1.msra.mxu0 %v45
    %4061 = vmatprep.subr.mxu0 0.0
    %4062 = vmatpush1.msra.mxu0 %v46
    %4063 = vmatprep.subr.mxu0 0.0
    %4064 = vmatpush1.msra.mxu0 %v47
    %4065 = vmatprep.subr.mxu0 0.0
    %4066 = vmatpush1.msra.mxu0 0.0
    %4067 = vmatprep.subr.mxu0 0.0
    %4068 = vmatpush1.msra.mxu0 0.0
    %4069 = vmatprep.subr.mxu0 0.0
    %4070 = vmatpush1.msra.mxu0 0.0
    %4071 = vmatprep.subr.mxu0 0.0
    %4072 = vmatpush1.msra.mxu0 0.0
    %4073 = vmatprep.subr.mxu0 0.0
    %4074 = vmatpush1.msra.mxu0 0.0
    %4075 = vmatprep.subr.mxu0 0.0
    %4076 = vmatpush1.msra.mxu0 0.0
    %4077 = vmatprep.subr.mxu0 0.0
    %4078 = vmatpush1.msra.mxu0 0.0
    %4079 = vmatprep.subr.mxu0 0.0
    %4080 = vmatpush1.msra.mxu0 0.0
    %4081 = vmatprep.subr.mxu0 0.0
    %4082 = vmatpush1.msra.mxu0 0.0
    %4083 = vmatprep.subr.mxu0 0.0
    %4084 = vmatpush1.msra.mxu0 0.0
    %4085 = vmatprep.subr.mxu0 0.0
    %4086 = vmatpush1.msra.mxu0 0.0
    %4087 = vmatprep.subr.mxu0 0.0
    %4088 = vmatpush1.msra.mxu0 0.0
    %4089 = vmatprep.subr.mxu0 0.0
    %4090 = vmatpush1.msra.mxu0 0.0
    %4091 = vmatprep.subr.mxu0 0.0
    %4092 = vmatpush1.msra.mxu0 0.0
    %4093 = vmatprep.subr.mxu0 0.0
    %4094 = vmatpush1.msra.mxu0 0.0
    %4095 = vmatprep.subr.mxu0 0.0
    %4096 = vmatpush1.msra.mxu0 0.0
    %4097 = vmatprep.subr.mxu0 0.0
    %4098 = vmatpush1.msra.mxu0 0.0
    %4099 = vmatprep.subr.mxu0 0.0
    %4100 = vmatpush1.msra.mxu0 0.0
    %4101 = vmatprep.subr.mxu0 0.0
    %4102 = vmatpush1.msra.mxu0 0.0
    %4103 = vmatprep.subr.mxu0 0.0
    %4104 = vmatpush1.msra.mxu0 0.0
    %4105 = vmatprep.subr.mxu0 0.0
    %4106 = vmatpush1.msra.mxu0 0.0
    %4107 = vmatprep.subr.mxu0 0.0
    %4108 = vmatpush1.msra.mxu0 0.0
    %4109 = vmatprep.subr.mxu0 0.0
    %4110 = vmatpush1.msra.mxu0 0.0
    %4111 = vmatprep.subr.mxu0 0.0
    %4112 = vmatpush1.msra.mxu0 0.0
    %4113 = vmatprep.subr.mxu0 0.0
    %4114 = vmatpush1.msra.mxu0 0.0
    %4115 = vmatprep.subr.mxu0 0.0
    %4116 = vmatpush1.msra.mxu0 0.0
    %4117 = vmatprep.subr.mxu0 0.0
    %4118 = vmatpush1.msra.mxu0 0.0
    %4119 = vmatprep.subr.mxu0 0.0
    %4120 = vmatpush1.msra.mxu0 0.0
    %4121 = vmatprep.mubr.f32.mxu0 0.0
    %4122 = vmatmul.mubr.f32.gmra.mrb[0].mxu0 %v4055
    %v4123 = vpop.f32.mrb[0].mxu0
    %v4124 = vadd.f32 0.0, %v4123
    %v4125 = vpop.f32.mrb[0].mxu0
    %4126 = vdwg.mxu0
    %v4127 = vadd.f32 %v4124, %v48
    %4129 = vrot.lane.b32.xlu0 %v4127, 112
    %v4130 = vpop.permute.xlu0 %4129
    %vm4132 = vcmask 1048448
    %4133 = vst.msk [vmem:[#allocation2] sm:$0xff] %vm4132, %v4130
    %4135 = vset.pattern.permute.xlu0 16
    %4136 = vperm.xlu0 %4135, %v4124
    %v4137 = vpop.permute.xlu0 %4136
    %v4139 = vlaneseq
    %v4140 = vshrl.u32 %v4139, 7
    %v4141 = vsub.s32 7, %v4140
    %v4142 = vrot.slane %v49, %v4141
    %v4143 = vmul.f32 %v4137, %v4142
    %v4144 = vadd.f32 %v3636, %v4143
    %v4145 = vld [vmem:[#allocation2] sm:$0xff]
    %v4146 = vlaneseq
    %v4147 = vand.u32 %v4146, 127
    %4148 = vmatprep.subr.mxu0 %v52
    %4149 = vmatpush1.msra.mxu0 %v51
    %4150 = vmatprep.subr.mxu0 %v54
    %4151 = vmatpush1.msra.mxu0 %v53
    %4152 = vmatprep.subr.mxu0 %v56
    %4153 = vmatpush1.msra.mxu0 %v55
    %4154 = vmatprep.subr.mxu0 %v58
    %4155 = vmatpush1.msra.mxu0 %v57
    %4156 = vmatprep.subr.mxu0 0.0
    %4157 = vmatpush1.msra.mxu0 0.0
    %4158 = vmatprep.subr.mxu0 0.0
    %4159 = vmatpush1.msra.mxu0 0.0
    %4160 = vmatprep.subr.mxu0 0.0
    %4161 = vmatpush1.msra.mxu0 0.0
    %4162 = vmatprep.subr.mxu0 0.0
    %4163 = vmatpush1.msra.mxu0 0.0
    %4164 = vmatprep.subr.mxu0 0.0
    %4165 = vmatpush1.msra.mxu0 0.0
    %4166 = vmatprep.subr.mxu0 0.0
    %4167 = vmatpush1.msra.mxu0 0.0
    %4168 = vmatprep.subr.mxu0 0.0
    %4169 = vmatpush1.msra.mxu0 0.0
    %4170 = vmatprep.subr.mxu0 0.0
    %4171 = vmatpush1.msra.mxu0 0.0
    %4172 = vmatprep.subr.mxu0 0.0
    %4173 = vmatpush1.msra.mxu0 0.0
    %4174 = vmatprep.subr.mxu0 0.0
    %4175 = vmatpush1.msra.mxu0 0.0
    %4176 = vmatprep.subr.mxu0 0.0
    %4177 = vmatpush1.msra.mxu0 0.0
    %4178 = vmatprep.subr.mxu0 0.0
    %4179 = vmatpush1.msra.mxu0 0.0
    %4180 = vmatprep.subr.mxu0 0.0
    %4181 = vmatpush1.msra.mxu0 0.0
    %4182 = vmatprep.subr.mxu0 0.0
    %4183 = vmatpush1.msra.mxu0 0.0
    %4184 = vmatprep.subr.mxu0 0.0
    %4185 = vmatpush1.msra.mxu0 0.0
    %4186 = vmatprep.subr.mxu0 0.0
    %4187 = vmatpush1.msra.mxu0 0.0
    %4188 = vmatprep.subr.mxu0 0.0
    %4189 = vmatpush1.msra.mxu0 0.0
    %4190 = vmatprep.subr.mxu0 0.0
    %4191 = vmatpush1.msra.mxu0 0.0
    %4192 = vmatprep.subr.mxu0 0.0
    %4193 = vmatpush1.msra.mxu0 0.0
    %4194 = vmatprep.subr.mxu0 0.0
    %4195 = vmatpush1.msra.mxu0 0.0
    %4196 = vmatprep.subr.mxu0 0.0
    %4197 = vmatpush1.msra.mxu0 0.0
    %4198 = vmatprep.subr.mxu0 0.0
    %4199 = vmatpush1.msra.mxu0 0.0
    %4200 = vmatprep.subr.mxu0 0.0
    %4201 = vmatpush1.msra.mxu0 0.0
    %4202 = vmatprep.subr.mxu0 0.0
    %4203 = vmatpush1.msra.mxu0 0.0
    %4204 = vmatprep.subr.mxu0 0.0
    %4205 = vmatpush1.msra.mxu0 0.0
    %4206 = vmatprep.subr.mxu0 0.0
    %4207 = vmatpush1.msra.mxu0 0.0
    %4208 = vmatprep.subr.mxu0 0.0
    %4209 = vmatpush1.msra.mxu0 0.0
    %4210 = vmatprep.subr.mxu0 0.0
    %4211 = vmatpush1.msra.mxu0 0.0
    %4212 = vmatprep.mubr.f32.mxu0 0.0
    %4213 = vmatmul.mubr.f32.gmra.mrb[0].mxu0 %v78
    %v4214 = vpop.f32.mrb[0].mxu0
    %v4215 = vadd.f32 0.0, %v4214
    %v4216 = vpop.f32.mrb[0].mxu0
    %v4217 = vadd.f32 0.0, %v4216
    %4218 = vdwg.mxu0
    %v4219 = vadd.f32 %v4144, %v4215
    %4220 = vmatprep.subr.mxu0 0.0
    %4221 = vmatpush1.msra.mxu0 %v59
    %4222 = vmatprep.subr.mxu0 0.0
    %4223 = vmatpush1.msra.mxu0 %v60
    %4224 = vmatprep.subr.mxu0 0.0
    %4225 = vmatpush1.msra.mxu0 %v61
    %4226 = vmatprep.subr.mxu0 0.0
    %4227 = vmatpush1.msra.mxu0 %v62
    %4228 = vmatprep.subr.mxu0 0.0
    %4229 = vmatpush1.msra.mxu0 0.0
    %4230 = vmatprep.subr.mxu0 0.0
    %4231 = vmatpush1.msra.mxu0 0.0
    %4232 = vmatprep.subr.mxu0 0.0
    %4233 = vmatpush1.msra.mxu0 0.0
    %4234 = vmatprep.subr.mxu0 0.0
    %4235 = vmatpush1.msra.mxu0 0.0
    %4236 = vmatprep.subr.mxu0 0.0
    %4237 = vmatpush1.msra.mxu0 0.0
    %4238 = vmatprep.subr.mxu0 0.0
    %4239 = vmatpush1.msra.mxu0 0.0
    %4240 = vmatprep.subr.mxu0 0.0
    %4241 = vmatpush1.msra.mxu0 0.0
    %4242 = vmatprep.subr.mxu0 0.0
    %4243 = vmatpush1.msra.mxu0 0.0
    %4244 = vmatprep.subr.mxu0 0.0
    %4245 = vmatpush1.msra.mxu0 0.0
    %4246 = vmatprep.subr.mxu0 0.0
    %4247 = vmatpush1.msra.mxu0 0.0
    %4248 = vmatprep.subr.mxu0 0.0
    %4249 = vmatpush1.msra.mxu0 0.0
    %4250 = vmatprep.subr.mxu0 0.0
    %4251 = vmatpush1.msra.mxu0 0.0
    %4252 = vmatprep.subr.mxu0 0.0
    %4253 = vmatpush1.msra.mxu0 0.0
    %4254 = vmatprep.subr.mxu0 0.0
    %4255 = vmatpush1.msra.mxu0 0.0
    %4256 = vmatprep.subr.mxu0 0.0
    %4257 = vmatpush1.msra.mxu0 0.0
    %4258 = vmatprep.subr.mxu0 0.0
    %4259 = vmatpush1.msra.mxu0 0.0
    %4260 = vmatprep.subr.mxu0 0.0
    %4261 = vmatpush1.msra.mxu0 0.0
    %4262 = vmatprep.subr.mxu0 0.0
    %4263 = vmatpush1.msra.mxu0 0.0
    %4264 = vmatprep.subr.mxu0 0.0
    %4265 = vmatpush1.msra.mxu0 0.0
    %4266 = vmatprep.subr.mxu0 0.0
    %4267 = vmatpush1.msra.mxu0 0.0
    %4268 = vmatprep.subr.mxu0 0.0
    %4269 = vmatpush1.msra.mxu0 0.0
    %4270 = vmatprep.subr.mxu0 0.0
    %4271 = vmatpush1.msra.mxu0 0.0
    %4272 = vmatprep.subr.mxu0 0.0
    %4273 = vmatpush1.msra.mxu0 0.0
    %4274 = vmatprep.subr.mxu0 0.0
    %4275 = vmatpush1.msra.mxu0 0.0
    %4276 = vmatprep.subr.mxu0 0.0
    %4277 = vmatpush1.msra.mxu0 0.0
    %4278 = vmatprep.subr.mxu0 0.0
    %4279 = vmatpush1.msra.mxu0 0.0
    %4280 = vmatprep.subr.mxu0 0.0
    %4281 = vmatpush1.msra.mxu0 0.0
    %4282 = vmatprep.subr.mxu0 0.0
    %4283 = vmatpush1.msra.mxu0 0.0
    %4284 = vmatprep.mubr.f32.mxu0 0.0
    %4285 = vmatmul.mubr.f32.gmra.mrb[0].mxu0 %v78
    %v4286 = vpop.f32.mrb[0].mxu0
    %v4287 = vadd.f32 0.0, %v4286
    %v4288 = vpop.f32.mrb[0].mxu0
    %4289 = vdwg.mxu0
    %v4290 = vadd.f32 %v4219, %v4287
    %v4291 = vmax.f32 %v4290, 0.0
    %vm4292 = vcmask 64512
    %v4294 = vsel %vm4292, %v4291, 0
    %4296 = vmatprep.subr.mxu0 0.0
    %4297 = vmatpush1.msra.mxu0 %v63
    %4298 = vmatprep.subr.mxu0 0.0
    %4299 = vmatpush1.msra.mxu0 0.0
    %4300 = vmatprep.subr.mxu0 0.0
    %4301 = vmatpush1.msra.mxu0 0.0
    %4302 = vmatprep.subr.mxu0 0.0
    %4303 = vmatpush1.msra.mxu0 0.0
    %4304 = vmatprep.subr.mxu0 0.0
    %4305 = vmatpush1.msra.mxu0 0.0
    %4306 = vmatprep.subr.mxu0 0.0
    %4307 = vmatpush1.msra.mxu0 0.0
    %4308 = vmatprep.subr.mxu0 0.0
    %4309 = vmatpush1.msra.mxu0 0.0
    %4310 = vmatprep.subr.mxu0 0.0
    %4311 = vmatpush1.msra.mxu0 0.0
    %4312 = vmatprep.subr.mxu0 0.0
    %4313 = vmatpush1.msra.mxu0 0.0
    %4314 = vmatprep.subr.mxu0 0.0
    %4315 = vmatpush1.msra.mxu0 0.0
    %4316 = vmatprep.subr.mxu0 0.0
    %4317 = vmatpush1.msra.mxu0 0.0
    %4318 = vmatprep.subr.mxu0 0.0
    %4319 = vmatpush1.msra.mxu0 0.0
    %4320 = vmatprep.subr.mxu0 0.0
    %4321 = vmatpush1.msra.mxu0 0.0
    %4322 = vmatprep.subr.mxu0 0.0
    %4323 = vmatpush1.msra.mxu0 0.0
    %4324 = vmatprep.subr.mxu0 0.0
    %4325 = vmatpush1.msra.mxu0 0.0
    %4326 = vmatprep.subr.mxu0 0.0
    %4327 = vmatpush1.msra.mxu0 0.0
    %4328 = vmatprep.subr.mxu0 0.0
    %4329 = vmatpush1.msra.mxu0 0.0
    %4330 = vmatprep.subr.mxu0 0.0
    %4331 = vmatpush1.msra.mxu0 0.0
    %4332 = vmatprep.subr.mxu0 0.0
    %4333 = vmatpush1.msra.mxu0 0.0
    %4334 = vmatprep.subr.mxu0 0.0
    %4335 = vmatpush1.msra.mxu0 0.0
    %4336 = vmatprep.subr.mxu0 0.0
    %4337 = vmatpush1.msra.mxu0 0.0
    %4338 = vmatprep.subr.mxu0 0.0
    %4339 = vmatpush1.msra.mxu0 0.0
    %4340 = vmatprep.subr.mxu0 0.0
    %4341 = vmatpush1.msra.mxu0 0.0
    %4342 = vmatprep.subr.mxu0 0.0
    %4343 = vmatpush1.msra.mxu0 0.0
    %4344 = vmatprep.subr.mxu0 0.0
    %4345 = vmatpush1.msra.mxu0 0.0
    %4346 = vmatprep.subr.mxu0 0.0
    %4347 = vmatpush1.msra.mxu0 0.0
    %4348 = vmatprep.subr.mxu0 0.0
    %4349 = vmatpush1.msra.mxu0 0.0
    %4350 = vmatprep.subr.mxu0 0.0
    %4351 = vmatpush1.msra.mxu0 0.0
    %4352 = vmatprep.subr.mxu0 0.0
    %4353 = vmatpush1.msra.mxu0 0.0
    %4354 = vmatprep.subr.mxu0 0.0
    %4355 = vmatpush1.msra.mxu0 0.0
    %4356 = vmatprep.subr.mxu0 0.0
    %4357 = vmatpush1.msra.mxu0 0.0
    %4358 = vmatprep.subr.mxu0 0.0
    %4359 = vmatpush1.msra.mxu0 0.0
    %4360 = vmatprep.mubr.f32.mxu0 0.0
    %4361 = vmatmul.mubr.f32.gmra.mrb[0].mxu0 %v4294
    %v4362 = vpop.f32.mrb[0].mxu0
    %v4363 = vadd.f32 %v64, %v4362
    %v4364 = vpop.f32.mrb[0].mxu0
    %4365 = vdwg.mxu0
    %4366 = vmax.xlane.f32.xlu0 %v4363
    %v4367 = vpop.xlane.xlu0 %4366
    %v4368 = vsub.f32 %v4363, %v4367
    %v4369 = vmul.f32 %v4368, 1.442695
    %v4370 = vpow.pop %v4369
    %v4371 = vmul.f32 %v4370, 16.0
    %4372 = vadd.xlane.f32.xlu0 %v4370
    %v4373 = vpop.xlane.xlu0 %4372
    %v4374 = vrcp.pop %v4373
    %v4375 = vmul.f32 %v4371, %v4374
    %v4376 = vmul.f32 %v4145, %v4375
    %4377 = vrot.lane.b32.xlu0 %v4376, 16
    %v4378 = vpop.permute.xlu0 %4377
    %v4379 = vadd.f32 %v4376, %v4378
    %4380 = vrot.lane.b32.xlu0 %v4379, 32
    %v4381 = vpop.permute.xlu0 %4380
    %v4382 = vadd.f32 %v4379, %v4381
    %4383 = vrot.lane.b32.xlu0 %v4382, 64
    %v4384 = vpop.permute.xlu0 %4383
    %v4385 = vadd.f32 %v4382, %v4384
    %v4387 = vsel %vm576, %v4385, 0
    %4389 = vmatprep.subr.mxu0 %v66
    %4390 = vmatpush1.msra.mxu0 %v65
    %4391 = vmatprep.subr.mxu0 %v68
    %4392 = vmatpush1.msra.mxu0 %v67
    %4393 = vmatprep.subr.mxu0 0.0
    %4394 = vmatpush1.msra.mxu0 0.0
    %4395 = vmatprep.subr.mxu0 0.0
    %4396 = vmatpush1.msra.mxu0 0.0
    %4397 = vmatprep.subr.mxu0 0.0
    %4398 = vmatpush1.msra.mxu0 0.0
    %4399 = vmatprep.subr.mxu0 0.0
    %4400 = vmatpush1.msra.mxu0 0.0
    %4401 = vmatprep.subr.mxu0 0.0
    %4402 = vmatpush1.msra.mxu0 0.0
    %4403 = vmatprep.subr.mxu0 0.0
    %4404 = vmatpush1.msra.mxu0 0.0
    %4405 = vmatprep.subr.mxu0 0.0
    %4406 = vmatpush1.msra.mxu0 0.0
    %4407 = vmatprep.subr.mxu0 0.0
    %4408 = vmatpush1.msra.mxu0 0.0
    %4409 = vmatprep.subr.mxu0 0.0
    %4410 = vmatpush1.msra.mxu0 0.0
    %4411 = vmatprep.subr.mxu0 0.0
    %4412 = vmatpush1.msra.mxu0 0.0
    %4413 = vmatprep.subr.mxu0 0.0
    %4414 = vmatpush1.msra.mxu0 0.0
    %4415 = vmatprep.subr.mxu0 0.0
    %4416 = vmatpush1.msra.mxu0 0.0
    %4417 = vmatprep.subr.mxu0 0.0
    %4418 = vmatpush1.msra.mxu0 0.0
    %4419 = vmatprep.subr.mxu0 0.0
    %4420 = vmatpush1.msra.mxu0 0.0
    %4421 = vmatprep.subr.mxu0 0.0
    %4422 = vmatpush1.msra.mxu0 0.0
    %4423 = vmatprep.subr.mxu0 0.0
    %4424 = vmatpush1.msra.mxu0 0.0
    %4425 = vmatprep.subr.mxu0 0.0
    %4426 = vmatpush1.msra.mxu0 0.0
    %4427 = vmatprep.subr.mxu0 0.0
    %4428 = vmatpush1.msra.mxu0 0.0
    %4429 = vmatprep.subr.mxu0 0.0
    %4430 = vmatpush1.msra.mxu0 0.0
    %4431 = vmatprep.subr.mxu0 0.0
    %4432 = vmatpush1.msra.mxu0 0.0
    %4433 = vmatprep.subr.mxu0 0.0
    %4434 = vmatpush1.msra.mxu0 0.0
    %4435 = vmatprep.subr.mxu0 0.0
    %4436 = vmatpush1.msra.mxu0 0.0
    %4437 = vmatprep.subr.mxu0 0.0
    %4438 = vmatpush1.msra.mxu0 0.0
    %4439 = vmatprep.subr.mxu0 0.0
    %4440 = vmatpush1.msra.mxu0 0.0
    %4441 = vmatprep.subr.mxu0 0.0
    %4442 = vmatpush1.msra.mxu0 0.0
    %4443 = vmatprep.subr.mxu0 0.0
    %4444 = vmatpush1.msra.mxu0 0.0
    %4445 = vmatprep.subr.mxu0 0.0
    %4446 = vmatpush1.msra.mxu0 0.0
    %4447 = vmatprep.subr.mxu0 0.0
    %4448 = vmatpush1.msra.mxu0 0.0
    %4449 = vmatprep.subr.mxu0 0.0
    %4450 = vmatpush1.msra.mxu0 0.0
    %4451 = vmatprep.subr.mxu0 0.0
    %4452 = vmatpush1.msra.mxu0 0.0
    %4453 = vmatprep.mubr.f32.mxu0 0.0
    %4454 = vmatmul.mubr.f32.gmra.mrb[0].mxu0 %v4387
    %v4455 = vpop.f32.mrb[0].mxu0
    %v4456 = vadd.f32 0.0, %v4455
    %v4457 = vpop.f32.mrb[0].mxu0
    %v4458 = vadd.f32 0.0, %v4457
    %4459 = vdwg.mxu0
    %4462 = vrot.lane.b32.xlu0 %v4215, 120
    %v4463 = vpop.permute.xlu0 %4462
    %4464 = vrot.lane.b32.xlu0 %v4217, 120
    %v4465 = vpop.permute.xlu0 %4464
    %vm4466 = vcmask 982016
    %v4467 = vsel %vm4466, %v4463, %v4465
    %v4469 = vadd.f32 %v4456, %v4467
    %v4470 = vadd.f32 %v4469, %v69
    %v4471 = vxor.u32 %v4470, 2147483648
    %v4472 = vmul.f32 %v4471, 1.442695
    %v4473 = vpow.pop %v4472
    %v4474 = vadd.f32 %v4473, 1.0
    %v4475 = vrcp.pop %v4474
    %v4476 = vmul.f32 1.0, %v4475
    %v4477 = vtanh.pop %v4470
    %v4478 = vmul.f32 %v4476, 0.0
    %4480 = vrot.lane.b32.xlu0 %v4477, 64
    %v4481 = vpop.permute.xlu0 %4480
    %v4483 = vmul.f32 %v4476, %v4481
    %4485 = vrot.lane.b32.xlu0 %v4483, 32
    %v4486 = vpop.permute.xlu0 %4485
    %v4488 = vadd.f32 %v4478, %v4486
    %v4489 = vtanh.pop %v4488
    %4491 = vrot.lane.b32.xlu0 %v4489, 64
    %v4492 = vpop.permute.xlu0 %4491
    %v4494 = vmul.f32 %v4476, %v4492
    %4496 = vrot.lane.b32.xlu0 %v4494, 32
    %v4497 = vpop.permute.xlu0 %4496
    %v4498 = vsel %vm76, %v4497, 0
    %4500 = vmatprep.subr.mxu0 0.0
    %4501 = vmatpush1.msra.mxu0 %v70
    %4502 = vmatprep.subr.mxu0 0.0
    %4503 = vmatpush1.msra.mxu0 %v71
    %4504 = vmatprep.subr.mxu0 0.0
    %4505 = vmatpush1.msra.mxu0 %v72
    %4506 = vmatprep.subr.mxu0 0.0
    %4507 = vmatpush1.msra.mxu0 %v73
    %4508 = vmatprep.subr.mxu0 0.0
    %4509 = vmatpush1.msra.mxu0 0.0
    %4510 = vmatprep.subr.mxu0 0.0
    %4511 = vmatpush1.msra.mxu0 0.0
    %4512 = vmatprep.subr.mxu0 0.0
    %4513 = vmatpush1.msra.mxu0 0.0
    %4514 = vmatprep.subr.mxu0 0.0
    %4515 = vmatpush1.msra.mxu0 0.0
    %4516 = vmatprep.subr.mxu0 0.0
    %4517 = vmatpush1.msra.mxu0 0.0
    %4518 = vmatprep.subr.mxu0 0.0
    %4519 = vmatpush1.msra.mxu0 0.0
    %4520 = vmatprep.subr.mxu0 0.0
    %4521 = vmatpush1.msra.mxu0 0.0
    %4522 = vmatprep.subr.mxu0 0.0
    %4523 = vmatpush1.msra.mxu0 0.0
    %4524 = vmatprep.subr.mxu0 0.0
    %4525 = vmatpush1.msra.mxu0 0.0
    %4526 = vmatprep.subr.mxu0 0.0
    %4527 = vmatpush1.msra.mxu0 0.0
    %4528 = vmatprep.subr.mxu0 0.0
    %4529 = vmatpush1.msra.mxu0 0.0
    %4530 = vmatprep.subr.mxu0 0.0
    %4531 = vmatpush1.msra.mxu0 0.0
    %4532 = vmatprep.subr.mxu0 0.0
    %4533 = vmatpush1.msra.mxu0 0.0
    %4534 = vmatprep.subr.mxu0 0.0
    %4535 = vmatpush1.msra.mxu0 0.0
    %4536 = vmatprep.subr.mxu0 0.0
    %4537 = vmatpush1.msra.mxu0 0.0
    %4538 = vmatprep.subr.mxu0 0.0
    %4539 = vmatpush1.msra.mxu0 0.0
    %4540 = vmatprep.subr.mxu0 0.0
    %4541 = vmatpush1.msra.mxu0 0.0
    %4542 = vmatprep.subr.mxu0 0.0
    %4543 = vmatpush1.msra.mxu0 0.0
    %4544 = vmatprep.subr.mxu0 0.0
    %4545 = vmatpush1.msra.mxu0 0.0
    %4546 = vmatprep.subr.mxu0 0.0
    %4547 = vmatpush1.msra.mxu0 0.0
    %4548 = vmatprep.subr.mxu0 0.0
    %4549 = vmatpush1.msra.mxu0 0.0
    %4550 = vmatprep.subr.mxu0 0.0
    %4551 = vmatpush1.msra.mxu0 0.0
    %4552 = vmatprep.subr.mxu0 0.0
    %4553 = vmatpush1.msra.mxu0 0.0
    %4554 = vmatprep.subr.mxu0 0.0
    %4555 = vmatpush1.msra.mxu0 0.0
    %4556 = vmatprep.subr.mxu0 0.0
    %4557 = vmatpush1.msra.mxu0 0.0
    %4558 = vmatprep.subr.mxu0 0.0
    %4559 = vmatpush1.msra.mxu0 0.0
    %4560 = vmatprep.subr.mxu0 0.0
    %4561 = vmatpush1.msra.mxu0 0.0
    %4562 = vmatprep.subr.mxu0 0.0
    %4563 = vmatpush1.msra.mxu0 0.0
    %4564 = vmatprep.mubr.f32.mxu0 0.0
    %4565 = vmatmul.mubr.f32.gmra.mrb[0].mxu0 %v4498
    %v4566 = vpop.f32.mrb[0].mxu0
    %v4567 = vadd.f32 0.0, %v4566
    %v4568 = vpop.f32.mrb[0].mxu0
    %4569 = vdwg.mxu0
    %v4570 = vadd.f32 %v4458, %v4567
    %v4571 = vadd.f32 %v4570, %v74
    %vm4572 = vcmp.eq.s32.totalorder %v4147, 0
    %v4573 = vsel %vm4572, 1, 0
    %vm4574 = vcmp.eq.s32.totalorder %v4573, 1
    %4576 = vset.pattern.permute.xlu0 0
    %4577 = vperm.xlu0 %4576, %v4571
    %v4578 = vpop.permute.xlu0 %4577
    %v4580 = vsel %vm4574, %v4578, 0.0
    %4581 = vmatprep.subr.mxu0 %v52
    %4582 = vmatpush1.msra.mxu0 %v51
    %4583 = vmatprep.subr.mxu0 %v54
    %4584 = vmatpush1.msra.mxu0 %v53
    %4585 = vmatprep.subr.mxu0 %v56
    %4586 = vmatpush1.msra.mxu0 %v55
    %4587 = vmatprep.subr.mxu0 %v58
    %4588 = vmatpush1.msra.mxu0 %v57
    %4589 = vmatprep.subr.mxu0 0.0
    %4590 = vmatpush1.msra.mxu0 0.0
    %4591 = vmatprep.subr.mxu0 0.0
    %4592 = vmatpush1.msra.mxu0 0.0
    %4593 = vmatprep.subr.mxu0 0.0
    %4594 = vmatpush1.msra.mxu0 0.0
    %4595 = vmatprep.subr.mxu0 0.0
    %4596 = vmatpush1.msra.mxu0 0.0
    %4597 = vmatprep.subr.mxu0 0.0
    %4598 = vmatpush1.msra.mxu0 0.0
    %4599 = vmatprep.subr.mxu0 0.0
    %4600 = vmatpush1.msra.mxu0 0.0
    %4601 = vmatprep.subr.mxu0 0.0
    %4602 = vmatpush1.msra.mxu0 0.0
    %4603 = vmatprep.subr.mxu0 0.0
    %4604 = vmatpush1.msra.mxu0 0.0
    %4605 = vmatprep.subr.mxu0 0.0
    %4606 = vmatpush1.msra.mxu0 0.0
    %4607 = vmatprep.subr.mxu0 0.0
    %4608 = vmatpush1.msra.mxu0 0.0
    %4609 = vmatprep.subr.mxu0 0.0
    %4610 = vmatpush1.msra.mxu0 0.0
    %4611 = vmatprep.subr.mxu0 0.0
    %4612 = vmatpush1.msra.mxu0 0.0
    %4613 = vmatprep.subr.mxu0 0.0
    %4614 = vmatpush1.msra.mxu0 0.0
    %4615 = vmatprep.subr.mxu0 0.0
    %4616 = vmatpush1.msra.mxu0 0.0
    %4617 = vmatprep.subr.mxu0 0.0
    %4618 = vmatpush1.msra.mxu0 0.0
    %4619 = vmatprep.subr.mxu0 0.0
    %4620 = vmatpush1.msra.mxu0 0.0
    %4621 = vmatprep.subr.mxu0 0.0
    %4622 = vmatpush1.msra.mxu0 0.0
    %4623 = vmatprep.subr.mxu0 0.0
    %4624 = vmatpush1.msra.mxu0 0.0
    %4625 = vmatprep.subr.mxu0 0.0
    %4626 = vmatpush1.msra.mxu0 0.0
    %4627 = vmatprep.subr.mxu0 0.0
    %4628 = vmatpush1.msra.mxu0 0.0
    %4629 = vmatprep.subr.mxu0 0.0
    %4630 = vmatpush1.msra.mxu0 0.0
    %4631 = vmatprep.subr.mxu0 0.0
    %4632 = vmatpush1.msra.mxu0 0.0
    %4633 = vmatprep.subr.mxu0 0.0
    %4634 = vmatpush1.msra.mxu0 0.0
    %4635 = vmatprep.subr.mxu0 0.0
    %4636 = vmatpush1.msra.mxu0 0.0
    %4637 = vmatprep.subr.mxu0 0.0
    %4638 = vmatpush1.msra.mxu0 0.0
    %4639 = vmatprep.subr.mxu0 0.0
    %4640 = vmatpush1.msra.mxu0 0.0
    %4641 = vmatprep.subr.mxu0 0.0
    %4642 = vmatpush1.msra.mxu0 0.0
    %4643 = vmatprep.subr.mxu0 0.0
    %4644 = vmatpush1.msra.mxu0 0.0
    %4645 = vmatprep.mubr.f32.mxu0 0.0
    %4646 = vmatmul.mubr.f32.gmra.mrb[0].mxu0 %v4498
    %v4647 = vpop.f32.mrb[0].mxu0
    %v4648 = vadd.f32 0.0, %v4647
    %v4649 = vpop.f32.mrb[0].mxu0
    %v4650 = vadd.f32 0.0, %v4649
    %4651 = vdwg.mxu0
    %v4652 = vadd.f32 %v4144, %v4648
    %4654 = vrot.lane.b32.xlu0 %v4488, 96
    %v4655 = vpop.permute.xlu0 %4654
    %v4656 = vsel %vm76, %v4655, 0
    %4658 = vmatprep.subr.mxu0 0.0
    %4659 = vmatpush1.msra.mxu0 %v59
    %4660 = vmatprep.subr.mxu0 0.0
    %4661 = vmatpush1.msra.mxu0 %v60
    %4662 = vmatprep.subr.mxu0 0.0
    %4663 = vmatpush1.msra.mxu0 %v61
    %4664 = vmatprep.subr.mxu0 0.0
    %4665 = vmatpush1.msra.mxu0 %v62
    %4666 = vmatprep.subr.mxu0 0.0
    %4667 = vmatpush1.msra.mxu0 0.0
    %4668 = vmatprep.subr.mxu0 0.0
    %4669 = vmatpush1.msra.mxu0 0.0
    %4670 = vmatprep.subr.mxu0 0.0
    %4671 = vmatpush1.msra.mxu0 0.0
    %4672 = vmatprep.subr.mxu0 0.0
    %4673 = vmatpush1.msra.mxu0 0.0
    %4674 = vmatprep.subr.mxu0 0.0
    %4675 = vmatpush1.msra.mxu0 0.0
    %4676 = vmatprep.subr.mxu0 0.0
    %4677 = vmatpush1.msra.mxu0 0.0
    %4678 = vmatprep.subr.mxu0 0.0
    %4679 = vmatpush1.msra.mxu0 0.0
    %4680 = vmatprep.subr.mxu0 0.0
    %4681 = vmatpush1.msra.mxu0 0.0
    %4682 = vmatprep.subr.mxu0 0.0
    %4683 = vmatpush1.msra.mxu0 0.0
    %4684 = vmatprep.subr.mxu0 0.0
    %4685 = vmatpush1.msra.mxu0 0.0
    %4686 = vmatprep.subr.mxu0 0.0
    %4687 = vmatpush1.msra.mxu0 0.0
    %4688 = vmatprep.subr.mxu0 0.0
    %4689 = vmatpush1.msra.mxu0 0.0
    %4690 = vmatprep.subr.mxu0 0.0
    %4691 = vmatpush1.msra.mxu0 0.0
    %4692 = vmatprep.subr.mxu0 0.0
    %4693 = vmatpush1.msra.mxu0 0.0
    %4694 = vmatprep.subr.mxu0 0.0
    %4695 = vmatpush1.msra.mxu0 0.0
    %4696 = vmatprep.subr.mxu0 0.0
    %4697 = vmatpush1.msra.mxu0 0.0
    %4698 = vmatprep.subr.mxu0 0.0
    %4699 = vmatpush1.msra.mxu0 0.0
    %4700 = vmatprep.subr.mxu0 0.0
    %4701 = vmatpush1.msra.mxu0 0.0
    %4702 = vmatprep.subr.mxu0 0.0
    %4703 = vmatpush1.msra.mxu0 0.0
    %4704 = vmatprep.subr.mxu0 0.0
    %4705 = vmatpush1.msra.mxu0 0.0
    %4706 = vmatprep.subr.mxu0 0.0
    %4707 = vmatpush1.msra.mxu0 0.0
    %4708 = vmatprep.subr.mxu0 0.0
    %4709 = vmatpush1.msra.mxu0 0.0
    %4710 = vmatprep.subr.mxu0 0.0
    %4711 = vmatpush1.msra.mxu0 0.0
    %4712 = vmatprep.subr.mxu0 0.0
    %4713 = vmatpush1.msra.mxu0 0.0
    %4714 = vmatprep.subr.mxu0 0.0
    %4715 = vmatpush1.msra.mxu0 0.0
    %4716 = vmatprep.subr.mxu0 0.0
    %4717 = vmatpush1.msra.mxu0 0.0
    %4718 = vmatprep.subr.mxu0 0.0
    %4719 = vmatpush1.msra.mxu0 0.0
    %4720 = vmatprep.subr.mxu0 0.0
    %4721 = vmatpush1.msra.mxu0 0.0
    %4722 = vmatprep.mubr.f32.mxu0 0.0
    %4723 = vmatmul.mubr.f32.gmra.mrb[0].mxu0 %v4656
    %v4724 = vpop.f32.mrb[0].mxu0
    %v4725 = vadd.f32 0.0, %v4724
    %v4726 = vpop.f32.mrb[0].mxu0
    %4727 = vdwg.mxu0
    %v4728 = vadd.f32 %v4652, %v4725
    %v4729 = vmax.f32 %v4728, 0.0
    %v4731 = vsel %vm4292, %v4729, 0
    %4733 = vmatprep.subr.mxu0 0.0
    %4734 = vmatpush1.msra.mxu0 %v63
    %4735 = vmatprep.subr.mxu0 0.0
    %4736 = vmatpush1.msra.mxu0 0.0
    %4737 = vmatprep.subr.mxu0 0.0
    %4738 = vmatpush1.msra.mxu0 0.0
    %4739 = vmatprep.subr.mxu0 0.0
    %4740 = vmatpush1.msra.mxu0 0.0
    %4741 = vmatprep.subr.mxu0 0.0
    %4742 = vmatpush1.msra.mxu0 0.0
    %4743 = vmatprep.subr.mxu0 0.0
    %4744 = vmatpush1.msra.mxu0 0.0
    %4745 = vmatprep.subr.mxu0 0.0
    %4746 = vmatpush1.msra.mxu0 0.0
    %4747 = vmatprep.subr.mxu0 0.0
    %4748 = vmatpush1.msra.mxu0 0.0
    %4749 = vmatprep.subr.mxu0 0.0
    %4750 = vmatpush1.msra.mxu0 0.0
    %4751 = vmatprep.subr.mxu0 0.0
    %4752 = vmatpush1.msra.mxu0 0.0
    %4753 = vmatprep.subr.mxu0 0.0
    %4754 = vmatpush1.msra.mxu0 0.0
    %4755 = vmatprep.subr.mxu0 0.0
    %4756 = vmatpush1.msra.mxu0 0.0
    %4757 = vmatprep.subr.mxu0 0.0
    %4758 = vmatpush1.msra.mxu0 0.0
    %4759 = vmatprep.subr.mxu0 0.0
    %4760 = vmatpush1.msra.mxu0 0.0
    %4761 = vmatprep.subr.mxu0 0.0
    %4762 = vmatpush1.msra.mxu0 0.0
    %4763 = vmatprep.subr.mxu0 0.0
    %4764 = vmatpush1.msra.mxu0 0.0
    %4765 = vmatprep.subr.mxu0 0.0
    %4766 = vmatpush1.msra.mxu0 0.0
    %4767 = vmatprep.subr.mxu0 0.0
    %4768 = vmatpush1.msra.mxu0 0.0
    %4769 = vmatprep.subr.mxu0 0.0
    %4770 = vmatpush1.msra.mxu0 0.0
    %4771 = vmatprep.subr.mxu0 0.0
    %4772 = vmatpush1.msra.mxu0 0.0
    %4773 = vmatprep.subr.mxu0 0.0
    %4774 = vmatpush1.msra.mxu0 0.0
    %4775 = vmatprep.subr.mxu0 0.0
    %4776 = vmatpush1.msra.mxu0 0.0
    %4777 = vmatprep.subr.mxu0 0.0
    %4778 = vmatpush1.msra.mxu0 0.0
    %4779 = vmatprep.subr.mxu0 0.0
    %4780 = vmatpush1.msra.mxu0 0.0
    %4781 = vmatprep.subr.mxu0 0.0
    %4782 = vmatpush1.msra.mxu0 0.0
    %4783 = vmatprep.subr.mxu0 0.0
    %4784 = vmatpush1.msra.mxu0 0.0
    %4785 = vmatprep.subr.mxu0 0.0
    %4786 = vmatpush1.msra.mxu0 0.0
    %4787 = vmatprep.subr.mxu0 0.0
    %4788 = vmatpush1.msra.mxu0 0.0
    %4789 = vmatprep.subr.mxu0 0.0
    %4790 = vmatpush1.msra.mxu0 0.0
    %4791 = vmatprep.subr.mxu0 0.0
    %4792 = vmatpush1.msra.mxu0 0.0
    %4793 = vmatprep.subr.mxu0 0.0
    %4794 = vmatpush1.msra.mxu0 0.0
    %4795 = vmatprep.subr.mxu0 0.0
    %4796 = vmatpush1.msra.mxu0 0.0
    %4797 = vmatprep.mubr.f32.mxu0 0.0
    %4798 = vmatmul.mubr.f32.gmra.mrb[0].mxu0 %v4731
    %v4799 = vpop.f32.mrb[0].mxu0
    %v4800 = vadd.f32 %v64, %v4799
    %v4801 = vpop.f32.mrb[0].mxu0
    %4802 = vdwg.mxu0
    %4803 = vmax.xlane.f32.xlu0 %v4800
    %v4804 = vpop.xlane.xlu0 %4803
    %v4805 = vsub.f32 %v4800, %v4804
    %v4806 = vmul.f32 %v4805, 1.442695
    %v4807 = vpow.pop %v4806
    %v4808 = vmul.f32 %v4807, 16.0
    %4809 = vadd.xlane.f32.xlu0 %v4807
    %v4810 = vpop.xlane.xlu0 %4809
    %v4811 = vrcp.pop %v4810
    %v4812 = vmul.f32 %v4808, %v4811
    %v4813 = vmul.f32 %v4145, %v4812
    %4814 = vrot.lane.b32.xlu0 %v4813, 16
    %v4815 = vpop.permute.xlu0 %4814
    %v4816 = vadd.f32 %v4813, %v4815
    %4817 = vrot.lane.b32.xlu0 %v4816, 32
    %v4818 = vpop.permute.xlu0 %4817
    %v4819 = vadd.f32 %v4816, %v4818
    %4820 = vrot.lane.b32.xlu0 %v4819, 64
    %v4821 = vpop.permute.xlu0 %4820
    %v4822 = vadd.f32 %v4819, %v4821
    %v4824 = vsel %vm576, %v4822, 0
    %4826 = vmatprep.subr.mxu0 %v66
    %4827 = vmatpush1.msra.mxu0 %v65
    %4828 = vmatprep.subr.mxu0 %v68
    %4829 = vmatpush1.msra.mxu0 %v67
    %4830 = vmatprep.subr.mxu0 0.0
    %4831 = vmatpush1.msra.mxu0 0.0
    %4832 = vmatprep.subr.mxu0 0.0
    %4833 = vmatpush1.msra.mxu0 0.0
    %4834 = vmatprep.subr.mxu0 0.0
    %4835 = vmatpush1.msra.mxu0 0.0
    %4836 = vmatprep.subr.mxu0 0.0
    %4837 = vmatpush1.msra.mxu0 0.0
    %4838 = vmatprep.subr.mxu0 0.0
    %4839 = vmatpush1.msra.mxu0 0.0
    %4840 = vmatprep.subr.mxu0 0.0
    %4841 = vmatpush1.msra.mxu0 0.0
    %4842 = vmatprep.subr.mxu0 0.0
    %4843 = vmatpush1.msra.mxu0 0.0
    %4844 = vmatprep.subr.mxu0 0.0
    %4845 = vmatpush1.msra.mxu0 0.0
    %4846 = vmatprep.subr.mxu0 0.0
    %4847 = vmatpush1.msra.mxu0 0.0
    %4848 = vmatprep.subr.mxu0 0.0
    %4849 = vmatpush1.msra.mxu0 0.0
    %4850 = vmatprep.subr.mxu0 0.0
    %4851 = vmatpush1.msra.mxu0 0.0
    %4852 = vmatprep.subr.mxu0 0.0
    %4853 = vmatpush1.msra.mxu0 0.0
    %4854 = vmatprep.subr.mxu0 0.0
    %4855 = vmatpush1.msra.mxu0 0.0
    %4856 = vmatprep.subr.mxu0 0.0
    %4857 = vmatpush1.msra.mxu0 0.0
    %4858 = vmatprep.subr.mxu0 0.0
    %4859 = vmatpush1.msra.mxu0 0.0
    %4860 = vmatprep.subr.mxu0 0.0
    %4861 = vmatpush1.msra.mxu0 0.0
    %4862 = vmatprep.subr.mxu0 0.0
    %4863 = vmatpush1.msra.mxu0 0.0
    %4864 = vmatprep.subr.mxu0 0.0
    %4865 = vmatpush1.msra.mxu0 0.0
    %4866 = vmatprep.subr.mxu0 0.0
    %4867 = vmatpush1.msra.mxu0 0.0
    %4868 = vmatprep.subr.mxu0 0.0
    %4869 = vmatpush1.msra.mxu0 0.0
    %4870 = vmatprep.subr.mxu0 0.0
    %4871 = vmatpush1.msra.mxu0 0.0
    %4872 = vmatprep.subr.mxu0 0.0
    %4873 = vmatpush1.msra.mxu0 0.0
    %4874 = vmatprep.subr.mxu0 0.0
    %4875 = vmatpush1.msra.mxu0 0.0
    %4876 = vmatprep.subr.mxu0 0.0
    %4877 = vmatpush1.msra.mxu0 0.0
    %4878 = vmatprep.subr.mxu0 0.0
    %4879 = vmatpush1.msra.mxu0 0.0
    %4880 = vmatprep.subr.mxu0 0.0
    %4881 = vmatpush1.msra.mxu0 0.0
    %4882 = vmatprep.subr.mxu0 0.0
    %4883 = vmatpush1.msra.mxu0 0.0
    %4884 = vmatprep.subr.mxu0 0.0
    %4885 = vmatpush1.msra.mxu0 0.0
    %4886 = vmatprep.subr.mxu0 0.0
    %4887 = vmatpush1.msra.mxu0 0.0
    %4888 = vmatprep.subr.mxu0 0.0
    %4889 = vmatpush1.msra.mxu0 0.0
    %4890 = vmatprep.mubr.f32.mxu0 0.0
    %4891 = vmatmul.mubr.f32.gmra.mrb[0].mxu0 %v4824
    %v4892 = vpop.f32.mrb[0].mxu0
    %v4893 = vadd.f32 0.0, %v4892
    %v4894 = vpop.f32.mrb[0].mxu0
    %v4895 = vadd.f32 0.0, %v4894
    %4896 = vdwg.mxu0
    %4899 = vrot.lane.b32.xlu0 %v4648, 120
    %v4900 = vpop.permute.xlu0 %4899
    %4901 = vrot.lane.b32.xlu0 %v4650, 120
    %v4902 = vpop.permute.xlu0 %4901
    %v4903 = vsel %vm4466, %v4900, %v4902
    %v4905 = vadd.f32 %v4893, %v4903
    %v4906 = vadd.f32 %v4905, %v69
    %v4907 = vxor.u32 %v4906, 2147483648
    %v4908 = vmul.f32 %v4907, 1.442695
    %v4909 = vpow.pop %v4908
    %v4910 = vadd.f32 %v4909, 1.0
    %v4911 = vrcp.pop %v4910
    %v4912 = vmul.f32 1.0, %v4911
    %v4913 = vtanh.pop %v4906
    %v4914 = vmul.f32 %v4912, %v4488
    %4916 = vrot.lane.b32.xlu0 %v4913, 64
    %v4917 = vpop.permute.xlu0 %4916
    %v4919 = vmul.f32 %v4912, %v4917
    %4921 = vrot.lane.b32.xlu0 %v4919, 32
    %v4922 = vpop.permute.xlu0 %4921
    %v4924 = vadd.f32 %v4914, %v4922
    %v4925 = vtanh.pop %v4924
    %4927 = vrot.lane.b32.xlu0 %v4925, 64
    %v4928 = vpop.permute.xlu0 %4927
    %v4930 = vmul.f32 %v4912, %v4928
    %4932 = vrot.lane.b32.xlu0 %v4930, 32
    %v4933 = vpop.permute.xlu0 %4932
    %v4934 = vsel %vm76, %v4933, 0
    %4936 = vmatprep.subr.mxu0 0.0
    %4937 = vmatpush1.msra.mxu0 %v70
    %4938 = vmatprep.subr.mxu0 0.0
    %4939 = vmatpush1.msra.mxu0 %v71
    %4940 = vmatprep.subr.mxu0 0.0
    %4941 = vmatpush1.msra.mxu0 %v72
    %4942 = vmatprep.subr.mxu0 0.0
    %4943 = vmatpush1.msra.mxu0 %v73
    %4944 = vmatprep.subr.mxu0 0.0
    %4945 = vmatpush1.msra.mxu0 0.0
    %4946 = vmatprep.subr.mxu0 0.0
    %4947 = vmatpush1.msra.mxu0 0.0
    %4948 = vmatprep.subr.mxu0 0.0
    %4949 = vmatpush1.msra.mxu0 0.0
    %4950 = vmatprep.subr.mxu0 0.0
    %4951 = vmatpush1.msra.mxu0 0.0
    %4952 = vmatprep.subr.mxu0 0.0
    %4953 = vmatpush1.msra.mxu0 0.0
    %4954 = vmatprep.subr.mxu0 0.0
    %4955 = vmatpush1.msra.mxu0 0.0
    %4956 = vmatprep.subr.mxu0 0.0
    %4957 = vmatpush1.msra.mxu0 0.0
    %4958 = vmatprep.subr.mxu0 0.0
    %4959 = vmatpush1.msra.mxu0 0.0
    %4960 = vmatprep.subr.mxu0 0.0
    %4961 = vmatpush1.msra.mxu0 0.0
    %4962 = vmatprep.subr.mxu0 0.0
    %4963 = vmatpush1.msra.mxu0 0.0
    %4964 = vmatprep.subr.mxu0 0.0
    %4965 = vmatpush1.msra.mxu0 0.0
    %4966 = vmatprep.subr.mxu0 0.0
    %4967 = vmatpush1.msra.mxu0 0.0
    %4968 = vmatprep.subr.mxu0 0.0
    %4969 = vmatpush1.msra.mxu0 0.0
    %4970 = vmatprep.subr.mxu0 0.0
    %4971 = vmatpush1.msra.mxu0 0.0
    %4972 = vmatprep.subr.mxu0 0.0
    %4973 = vmatpush1.msra.mxu0 0.0
    %4974 = vmatprep.subr.mxu0 0.0
    %4975 = vmatpush1.msra.mxu0 0.0
    %4976 = vmatprep.subr.mxu0 0.0
    %4977 = vmatpush1.msra.mxu0 0.0
    %4978 = vmatprep.subr.mxu0 0.0
    %4979 = vmatpush1.msra.mxu0 0.0
    %4980 = vmatprep.subr.mxu0 0.0
    %4981 = vmatpush1.msra.mxu0 0.0
    %4982 = vmatprep.subr.mxu0 0.0
    %4983 = vmatpush1.msra.mxu0 0.0
    %4984 = vmatprep.subr.mxu0 0.0
    %4985 = vmatpush1.msra.mxu0 0.0
    %4986 = vmatprep.subr.mxu0 0.0
    %4987 = vmatpush1.msra.mxu0 0.0
    %4988 = vmatprep.subr.mxu0 0.0
    %4989 = vmatpush1.msra.mxu0 0.0
    %4990 = vmatprep.subr.mxu0 0.0
    %4991 = vmatpush1.msra.mxu0 0.0
    %4992 = vmatprep.subr.mxu0 0.0
    %4993 = vmatpush1.msra.mxu0 0.0
    %4994 = vmatprep.subr.mxu0 0.0
    %4995 = vmatpush1.msra.mxu0 0.0
    %4996 = vmatprep.subr.mxu0 0.0
    %4997 = vmatpush1.msra.mxu0 0.0
    %4998 = vmatprep.subr.mxu0 0.0
    %4999 = vmatpush1.msra.mxu0 0.0
    %5000 = vmatprep.mubr.f32.mxu0 0.0
    %5001 = vmatmul.mubr.f32.gmra.mrb[0].mxu0 %v4934
    %v5002 = vpop.f32.mrb[0].mxu0
    %v5003 = vadd.f32 0.0, %v5002
    %v5004 = vpop.f32.mrb[0].mxu0
    %5005 = vdwg.mxu0
    %v5006 = vadd.f32 %v4895, %v5003
    %v5007 = vadd.f32 %v5006, %v74
    %vm5008 = vcmp.eq.s32.totalorder %v4147, 1
    %v5009 = vsel %vm5008, 1, 0
    %vm5010 = vcmp.eq.s32.totalorder %v5009, 1
    %5012 = vset.pattern.permute.xlu0 0
    %5013 = vperm.xlu0 %5012, %v5007
    %v5014 = vpop.permute.xlu0 %5013
    %v5016 = vsel %vm5010, %v5014, %v4580
    %5017 = vmatprep.subr.mxu0 %v52
    %5018 = vmatpush1.msra.mxu0 %v51
    %5019 = vmatprep.subr.mxu0 %v54
    %5020 = vmatpush1.msra.mxu0 %v53
    %5021 = vmatprep.subr.mxu0 %v56
    %5022 = vmatpush1.msra.mxu0 %v55
    %5023 = vmatprep.subr.mxu0 %v58
    %5024 = vmatpush1.msra.mxu0 %v57
    %5025 = vmatprep.subr.mxu0 0.0
    %5026 = vmatpush1.msra.mxu0 0.0
    %5027 = vmatprep.subr.mxu0 0.0
    %5028 = vmatpush1.msra.mxu0 0.0
    %5029 = vmatprep.subr.mxu0 0.0
    %5030 = vmatpush1.msra.mxu0 0.0
    %5031 = vmatprep.subr.mxu0 0.0
    %5032 = vmatpush1.msra.mxu0 0.0
    %5033 = vmatprep.subr.mxu0 0.0
    %5034 = vmatpush1.msra.mxu0 0.0
    %5035 = vmatprep.subr.mxu0 0.0
    %5036 = vmatpush1.msra.mxu0 0.0
    %5037 = vmatprep.subr.mxu0 0.0
    %5038 = vmatpush1.msra.mxu0 0.0
    %5039 = vmatprep.subr.mxu0 0.0
    %5040 = vmatpush1.msra.mxu0 0.0
    %5041 = vmatprep.subr.mxu0 0.0
    %5042 = vmatpush1.msra.mxu0 0.0
    %5043 = vmatprep.subr.mxu0 0.0
    %5044 = vmatpush1.msra.mxu0 0.0
    %5045 = vmatprep.subr.mxu0 0.0
    %5046 = vmatpush1.msra.mxu0 0.0
    %5047 = vmatprep.subr.mxu0 0.0
    %5048 = vmatpush1.msra.mxu0 0.0
    %5049 = vmatprep.subr.mxu0 0.0
    %5050 = vmatpush1.msra.mxu0 0.0
    %5051 = vmatprep.subr.mxu0 0.0
    %5052 = vmatpush1.msra.mxu0 0.0
    %5053 = vmatprep.subr.mxu0 0.0
    %5054 = vmatpush1.msra.mxu0 0.0
    %5055 = vmatprep.subr.mxu0 0.0
    %5056 = vmatpush1.msra.mxu0 0.0
    %5057 = vmatprep.subr.mxu0 0.0
    %5058 = vmatpush1.msra.mxu0 0.0
    %5059 = vmatprep.subr.mxu0 0.0
    %5060 = vmatpush1.msra.mxu0 0.0
    %5061 = vmatprep.subr.mxu0 0.0
    %5062 = vmatpush1.msra.mxu0 0.0
    %5063 = vmatprep.subr.mxu0 0.0
    %5064 = vmatpush1.msra.mxu0 0.0
    %5065 = vmatprep.subr.mxu0 0.0
    %5066 = vmatpush1.msra.mxu0 0.0
    %5067 = vmatprep.subr.mxu0 0.0
    %5068 = vmatpush1.msra.mxu0 0.0
    %5069 = vmatprep.subr.mxu0 0.0
    %5070 = vmatpush1.msra.mxu0 0.0
    %5071 = vmatprep.subr.mxu0 0.0
    %5072 = vmatpush1.msra.mxu0 0.0
    %5073 = vmatprep.subr.mxu0 0.0
    %5074 = vmatpush1.msra.mxu0 0.0
    %5075 = vmatprep.subr.mxu0 0.0
    %5076 = vmatpush1.msra.mxu0 0.0
    %5077 = vmatprep.subr.mxu0 0.0
    %5078 = vmatpush1.msra.mxu0 0.0
    %5079 = vmatprep.subr.mxu0 0.0
    %5080 = vmatpush1.msra.mxu0 0.0
    %5081 = vmatprep.mubr.f32.mxu0 0.0
    %5082 = vmatmul.mubr.f32.gmra.mrb[0].mxu0 %v4934
    %v5083 = vpop.f32.mrb[0].mxu0
    %v5084 = vadd.f32 0.0, %v5083
    %v5085 = vpop.f32.mrb[0].mxu0
    %v5086 = vadd.f32 0.0, %v5085
    %5087 = vdwg.mxu0
    %v5088 = vadd.f32 %v4144, %v5084
    %5090 = vrot.lane.b32.xlu0 %v4924, 96
    %v5091 = vpop.permute.xlu0 %5090
    %v5092 = vsel %vm76, %v5091, 0
    %5094 = vmatprep.subr.mxu0 0.0
    %5095 = vmatpush1.msra.mxu0 %v59
    %5096 = vmatprep.subr.mxu0 0.0
    %5097 = vmatpush1.msra.mxu0 %v60
    %5098 = vmatprep.subr.mxu0 0.0
    %5099 = vmatpush1.msra.mxu0 %v61
    %5100 = vmatprep.subr.mxu0 0.0
    %5101 = vmatpush1.msra.mxu0 %v62
    %5102 = vmatprep.subr.mxu0 0.0
    %5103 = vmatpush1.msra.mxu0 0.0
    %5104 = vmatprep.subr.mxu0 0.0
    %5105 = vmatpush1.msra.mxu0 0.0
    %5106 = vmatprep.subr.mxu0 0.0
    %5107 = vmatpush1.msra.mxu0 0.0
    %5108 = vmatprep.subr.mxu0 0.0
    %5109 = vmatpush1.msra.mxu0 0.0
    %5110 = vmatprep.subr.mxu0 0.0
    %5111 = vmatpush1.msra.mxu0 0.0
    %5112 = vmatprep.subr.mxu0 0.0
    %5113 = vmatpush1.msra.mxu0 0.0
    %5114 = vmatprep.subr.mxu0 0.0
    %5115 = vmatpush1.msra.mxu0 0.0
    %5116 = vmatprep.subr.mxu0 0.0
    %5117 = vmatpush1.msra.mxu0 0.0
    %5118 = vmatprep.subr.mxu0 0.0
    %5119 = vmatpush1.msra.mxu0 0.0
    %5120 = vmatprep.subr.mxu0 0.0
    %5121 = vmatpush1.msra.mxu0 0.0
    %5122 = vmatprep.subr.mxu0 0.0
    %5123 = vmatpush1.msra.mxu0 0.0
    %5124 = vmatprep.subr.mxu0 0.0
    %5125 = vmatpush1.msra.mxu0 0.0
    %5126 = vmatprep.subr.mxu0 0.0
    %5127 = vmatpush1.msra.mxu0 0.0
    %5128 = vmatprep.subr.mxu0 0.0
    %5129 = vmatpush1.msra.mxu0 0.0
    %5130 = vmatprep.subr.mxu0 0.0
    %5131 = vmatpush1.msra.mxu0 0.0
    %5132 = vmatprep.subr.mxu0 0.0
    %5133 = vmatpush1.msra.mxu0 0.0
    %5134 = vmatprep.subr.mxu0 0.0
    %5135 = vmatpush1.msra.mxu0 0.0
    %5136 = vmatprep.subr.mxu0 0.0
    %5137 = vmatpush1.msra.mxu0 0.0
    %5138 = vmatprep.subr.mxu0 0.0
    %5139 = vmatpush1.msra.mxu0 0.0
    %5140 = vmatprep.subr.mxu0 0.0
    %5141 = vmatpush1.msra.mxu0 0.0
    %5142 = vmatprep.subr.mxu0 0.0
    %5143 = vmatpush1.msra.mxu0 0.0
    %5144 = vmatprep.subr.mxu0 0.0
    %5145 = vmatpush1.msra.mxu0 0.0
    %5146 = vmatprep.subr.mxu0 0.0
    %5147 = vmatpush1.msra.mxu0 0.0
    %5148 = vmatprep.subr.mxu0 0.0
    %5149 = vmatpush1.msra.mxu0 0.0
    %5150 = vmatprep.subr.mxu0 0.0
    %5151 = vmatpush1.msra.mxu0 0.0
    %5152 = vmatprep.subr.mxu0 0.0
    %5153 = vmatpush1.msra.mxu0 0.0
    %5154 = vmatprep.subr.mxu0 0.0
    %5155 = vmatpush1.msra.mxu0 0.0
    %5156 = vmatprep.subr.mxu0 0.0
    %5157 = vmatpush1.msra.mxu0 0.0
    %5158 = vmatprep.mubr.f32.mxu0 0.0
    %5159 = vmatmul.mubr.f32.gmra.mrb[0].mxu0 %v5092
    %v5160 = vpop.f32.mrb[0].mxu0
    %v5161 = vadd.f32 0.0, %v5160
    %v5162 = vpop.f32.mrb[0].mxu0
    %5163 = vdwg.mxu0
    %v5164 = vadd.f32 %v5088, %v5161
    %v5165 = vmax.f32 %v5164, 0.0
    %v5167 = vsel %vm4292, %v5165, 0
    %5169 = vmatprep.subr.mxu0 0.0
    %5170 = vmatpush1.msra.mxu0 %v63
    %5171 = vmatprep.subr.mxu0 0.0
    %5172 = vmatpush1.msra.mxu0 0.0
    %5173 = vmatprep.subr.mxu0 0.0
    %5174 = vmatpush1.msra.mxu0 0.0
    %5175 = vmatprep.subr.mxu0 0.0
    %5176 = vmatpush1.msra.mxu0 0.0
    %5177 = vmatprep.subr.mxu0 0.0
    %5178 = vmatpush1.msra.mxu0 0.0
    %5179 = vmatprep.subr.mxu0 0.0
    %5180 = vmatpush1.msra.mxu0 0.0
    %5181 = vmatprep.subr.mxu0 0.0
    %5182 = vmatpush1.msra.mxu0 0.0
    %5183 = vmatprep.subr.mxu0 0.0
    %5184 = vmatpush1.msra.mxu0 0.0
    %5185 = vmatprep.subr.mxu0 0.0
    %5186 = vmatpush1.msra.mxu0 0.0
    %5187 = vmatprep.subr.mxu0 0.0
    %5188 = vmatpush1.msra.mxu0 0.0
    %5189 = vmatprep.subr.mxu0 0.0
    %5190 = vmatpush1.msra.mxu0 0.0
    %5191 = vmatprep.subr.mxu0 0.0
    %5192 = vmatpush1.msra.mxu0 0.0
    %5193 = vmatprep.subr.mxu0 0.0
    %5194 = vmatpush1.msra.mxu0 0.0
    %5195 = vmatprep.subr.mxu0 0.0
    %5196 = vmatpush1.msra.mxu0 0.0
    %5197 = vmatprep.subr.mxu0 0.0
    %5198 = vmatpush1.msra.mxu0 0.0
    %5199 = vmatprep.subr.mxu0 0.0
    %5200 = vmatpush1.msra.mxu0 0.0
    %5201 = vmatprep.subr.mxu0 0.0
    %5202 = vmatpush1.msra.mxu0 0.0
    %5203 = vmatprep.subr.mxu0 0.0
    %5204 = vmatpush1.msra.mxu0 0.0
    %5205 = vmatprep.subr.mxu0 0.0
    %5206 = vmatpush1.msra.mxu0 0.0
    %5207 = vmatprep.subr.mxu0 0.0
    %5208 = vmatpush1.msra.mxu0 0.0
    %5209 = vmatprep.subr.mxu0 0.0
    %5210 = vmatpush1.msra.mxu0 0.0
    %5211 = vmatprep.subr.mxu0 0.0
    %5212 = vmatpush1.msra.mxu0 0.0
    %5213 = vmatprep.subr.mxu0 0.0
    %5214 = vmatpush1.msra.mxu0 0.0
    %5215 = vmatprep.subr.mxu0 0.0
    %5216 = vmatpush1.msra.mxu0 0.0
    %5217 = vmatprep.subr.mxu0 0.0
    %5218 = vmatpush1.msra.mxu0 0.0
    %5219 = vmatprep.subr.mxu0 0.0
    %5220 = vmatpush1.msra.mxu0 0.0
    %5221 = vmatprep.subr.mxu0 0.0
    %5222 = vmatpush1.msra.mxu0 0.0
    %5223 = vmatprep.subr.mxu0 0.0
    %5224 = vmatpush1.msra.mxu0 0.0
    %5225 = vmatprep.subr.mxu0 0.0
    %5226 = vmatpush1.msra.mxu0 0.0
    %5227 = vmatprep.subr.mxu0 0.0
    %5228 = vmatpush1.msra.mxu0 0.0
    %5229 = vmatprep.subr.mxu0 0.0
    %5230 = vmatpush1.msra.mxu0 0.0
    %5231 = vmatprep.subr.mxu0 0.0
    %5232 = vmatpush1.msra.mxu0 0.0
    %5233 = vmatprep.mubr.f32.mxu0 0.0
    %5234 = vmatmul.mubr.f32.gmra.mrb[0].mxu0 %v5167
    %v5235 = vpop.f32.mrb[0].mxu0
    %v5236 = vadd.f32 %v64, %v5235
    %v5237 = vpop.f32.mrb[0].mxu0
    %5238 = vdwg.mxu0
    %5239 = vmax.xlane.f32.xlu0 %v5236
    %v5240 = vpop.xlane.xlu0 %5239
    %v5241 = vsub.f32 %v5236, %v5240
    %v5242 = vmul.f32 %v5241, 1.442695
    %v5243 = vpow.pop %v5242
    %v5244 = vmul.f32 %v5243, 16.0
    %5245 = vadd.xlane.f32.xlu0 %v5243
    %v5246 = vpop.xlane.xlu0 %5245
    %v5247 = vrcp.pop %v5246
    %v5248 = vmul.f32 %v5244, %v5247
    %v5249 = vmul.f32 %v4145, %v5248
    %5250 = vrot.lane.b32.xlu0 %v5249, 16
    %v5251 = vpop.permute.xlu0 %5250
    %v5252 = vadd.f32 %v5249, %v5251
    %5253 = vrot.lane.b32.xlu0 %v5252, 32
    %v5254 = vpop.permute.xlu0 %5253
    %v5255 = vadd.f32 %v5252, %v5254
    %5256 = vrot.lane.b32.xlu0 %v5255, 64
    %v5257 = vpop.permute.xlu0 %5256
    %v5258 = vadd.f32 %v5255, %v5257
    %v5260 = vsel %vm576, %v5258, 0
    %5262 = vmatprep.subr.mxu0 %v66
    %5263 = vmatpush1.msra.mxu0 %v65
    %5264 = vmatprep.subr.mxu0 %v68
    %5265 = vmatpush1.msra.mxu0 %v67
    %5266 = vmatprep.subr.mxu0 0.0
    %5267 = vmatpush1.msra.mxu0 0.0
    %5268 = vmatprep.subr.mxu0 0.0
    %5269 = vmatpush1.msra.mxu0 0.0
    %5270 = vmatprep.subr.mxu0 0.0
    %5271 = vmatpush1.msra.mxu0 0.0
    %5272 = vmatprep.subr.mxu0 0.0
    %5273 = vmatpush1.msra.mxu0 0.0
    %5274 = vmatprep.subr.mxu0 0.0
    %5275 = vmatpush1.msra.mxu0 0.0
    %5276 = vmatprep.subr.mxu0 0.0
    %5277 = vmatpush1.msra.mxu0 0.0
    %5278 = vmatprep.subr.mxu0 0.0
    %5279 = vmatpush1.msra.mxu0 0.0
    %5280 = vmatprep.subr.mxu0 0.0
    %5281 = vmatpush1.msra.mxu0 0.0
    %5282 = vmatprep.subr.mxu0 0.0
    %5283 = vmatpush1.msra.mxu0 0.0
    %5284 = vmatprep.subr.mxu0 0.0
    %5285 = vmatpush1.msra.mxu0 0.0
    %5286 = vmatprep.subr.mxu0 0.0
    %5287 = vmatpush1.msra.mxu0 0.0
    %5288 = vmatprep.subr.mxu0 0.0
    %5289 = vmatpush1.msra.mxu0 0.0
    %5290 = vmatprep.subr.mxu0 0.0
    %5291 = vmatpush1.msra.mxu0 0.0
    %5292 = vmatprep.subr.mxu0 0.0
    %5293 = vmatpush1.msra.mxu0 0.0
    %5294 = vmatprep.subr.mxu0 0.0
    %5295 = vmatpush1.msra.mxu0 0.0
    %5296 = vmatprep.subr.mxu0 0.0
    %5297 = vmatpush1.msra.mxu0 0.0
    %5298 = vmatprep.subr.mxu0 0.0
    %5299 = vmatpush1.msra.mxu0 0.0
    %5300 = vmatprep.subr.mxu0 0.0
    %5301 = vmatpush1.msra.mxu0 0.0
    %5302 = vmatprep.subr.mxu0 0.0
    %5303 = vmatpush1.msra.mxu0 0.0
    %5304 = vmatprep.subr.mxu0 0.0
    %5305 = vmatpush1.msra.mxu0 0.0
    %5306 = vmatprep.subr.mxu0 0.0
    %5307 = vmatpush1.msra.mxu0 0.0
    %5308 = vmatprep.subr.mxu0 0.0
    %5309 = vmatpush1.msra.mxu0 0.0
    %5310 = vmatprep.subr.mxu0 0.0
    %5311 = vmatpush1.msra.mxu0 0.0
    %5312 = vmatprep.subr.mxu0 0.0
    %5313 = vmatpush1.msra.mxu0 0.0
    %5314 = vmatprep.subr.mxu0 0.0
    %5315 = vmatpush1.msra.mxu0 0.0
    %5316 = vmatprep.subr.mxu0 0.0
    %5317 = vmatpush1.msra.mxu0 0.0
    %5318 = vmatprep.subr.mxu0 0.0
    %5319 = vmatpush1.msra.mxu0 0.0
    %5320 = vmatprep.subr.mxu0 0.0
    %5321 = vmatpush1.msra.mxu0 0.0
    %5322 = vmatprep.subr.mxu0 0.0
    %5323 = vmatpush1.msra.mxu0 0.0
    %5324 = vmatprep.subr.mxu0 0.0
    %5325 = vmatpush1.msra.mxu0 0.0
    %5326 = vmatprep.mubr.f32.mxu0 0.0
    %5327 = vmatmul.mubr.f32.gmra.mrb[0].mxu0 %v5260
    %v5328 = vpop.f32.mrb[0].mxu0
    %v5329 = vadd.f32 0.0, %v5328
    %v5330 = vpop.f32.mrb[0].mxu0
    %v5331 = vadd.f32 0.0, %v5330
    %5332 = vdwg.mxu0
    %5335 = vrot.lane.b32.xlu0 %v5084, 120
    %v5336 = vpop.permute.xlu0 %5335
    %5337 = vrot.lane.b32.xlu0 %v5086, 120
    %v5338 = vpop.permute.xlu0 %5337
    %v5339 = vsel %vm4466, %v5336, %v5338
    %v5341 = vadd.f32 %v5329, %v5339
    %v5342 = vadd.f32 %v5341, %v69
    %v5343 = vxor.u32 %v5342, 2147483648
    %v5344 = vmul.f32 %v5343, 1.442695
    %v5345 = vpow.pop %v5344
    %v5346 = vadd.f32 %v5345, 1.0
    %v5347 = vrcp.pop %v5346
    %v5348 = vmul.f32 1.0, %v5347
    %v5349 = vtanh.pop %v5342
    %v5350 = vmul.f32 %v5348, %v4924
    %5352 = vrot.lane.b32.xlu0 %v5349, 64
    %v5353 = vpop.permute.xlu0 %5352
    %v5355 = vmul.f32 %v5348, %v5353
    %5357 = vrot.lane.b32.xlu0 %v5355, 32
    %v5358 = vpop.permute.xlu0 %5357
    %v5360 = vadd.f32 %v5350, %v5358
    %v5361 = vtanh.pop %v5360
    %5363 = vrot.lane.b32.xlu0 %v5361, 64
    %v5364 = vpop.permute.xlu0 %5363
    %v5366 = vmul.f32 %v5348, %v5364
    %5368 = vrot.lane.b32.xlu0 %v5366, 32
    %v5369 = vpop.permute.xlu0 %5368
    %v5370 = vsel %vm76, %v5369, 0
    %5372 = vmatprep.subr.mxu0 0.0
    %5373 = vmatpush1.msra.mxu0 %v70
    %5374 = vmatprep.subr.mxu0 0.0
    %5375 = vmatpush1.msra.mxu0 %v71
    %5376 = vmatprep.subr.mxu0 0.0
    %5377 = vmatpush1.msra.mxu0 %v72
    %5378 = vmatprep.subr.mxu0 0.0
    %5379 = vmatpush1.msra.mxu0 %v73
    %5380 = vmatprep.subr.mxu0 0.0
    %5381 = vmatpush1.msra.mxu0 0.0
    %5382 = vmatprep.subr.mxu0 0.0
    %5383 = vmatpush1.msra.mxu0 0.0
    %5384 = vmatprep.subr.mxu0 0.0
    %5385 = vmatpush1.msra.mxu0 0.0
    %5386 = vmatprep.subr.mxu0 0.0
    %5387 = vmatpush1.msra.mxu0 0.0
    %5388 = vmatprep.subr.mxu0 0.0
    %5389 = vmatpush1.msra.mxu0 0.0
    %5390 = vmatprep.subr.mxu0 0.0
    %5391 = vmatpush1.msra.mxu0 0.0
    %5392 = vmatprep.subr.mxu0 0.0
    %5393 = vmatpush1.msra.mxu0 0.0
    %5394 = vmatprep.subr.mxu0 0.0
    %5395 = vmatpush1.msra.mxu0 0.0
    %5396 = vmatprep.subr.mxu0 0.0
    %5397 = vmatpush1.msra.mxu0 0.0
    %5398 = vmatprep.subr.mxu0 0.0
    %5399 = vmatpush1.msra.mxu0 0.0
    %5400 = vmatprep.subr.mxu0 0.0
    %5401 = vmatpush1.msra.mxu0 0.0
    %5402 = vmatprep.subr.mxu0 0.0
    %5403 = vmatpush1.msra.mxu0 0.0
    %5404 = vmatprep.subr.mxu0 0.0
    %5405 = vmatpush1.msra.mxu0 0.0
    %5406 = vmatprep.subr.mxu0 0.0
    %5407 = vmatpush1.msra.mxu0 0.0
    %5408 = vmatprep.subr.mxu0 0.0
    %5409 = vmatpush1.msra.mxu0 0.0
    %5410 = vmatprep.subr.mxu0 0.0
    %5411 = vmatpush1.msra.mxu0 0.0
    %5412 = vmatprep.subr.mxu0 0.0
    %5413 = vmatpush1.msra.mxu0 0.0
    %5414 = vmatprep.subr.mxu0 0.0
    %5415 = vmatpush1.msra.mxu0 0.0
    %5416 = vmatprep.subr.mxu0 0.0
    %5417 = vmatpush1.msra.mxu0 0.0
    %5418 = vmatprep.subr.mxu0 0.0
    %5419 = vmatpush1.msra.mxu0 0.0
    %5420 = vmatprep.subr.mxu0 0.0
    %5421 = vmatpush1.msra.mxu0 0.0
    %5422 = vmatprep.subr.mxu0 0.0
    %5423 = vmatpush1.msra.mxu0 0.0
    %5424 = vmatprep.subr.mxu0 0.0
    %5425 = vmatpush1.msra.mxu0 0.0
    %5426 = vmatprep.subr.mxu0 0.0
    %5427 = vmatpush1.msra.mxu0 0.0
    %5428 = vmatprep.subr.mxu0 0.0
    %5429 = vmatpush1.msra.mxu0 0.0
    %5430 = vmatprep.subr.mxu0 0.0
    %5431 = vmatpush1.msra.mxu0 0.0
    %5432 = vmatprep.subr.mxu0 0.0
    %5433 = vmatpush1.msra.mxu0 0.0
    %5434 = vmatprep.subr.mxu0 0.0
    %5435 = vmatpush1.msra.mxu0 0.0
    %5436 = vmatprep.mubr.f32.mxu0 0.0
    %5437 = vmatmul.mubr.f32.gmra.mrb[0].mxu0 %v5370
    %v5438 = vpop.f32.mrb[0].mxu0
    %v5439 = vadd.f32 0.0, %v5438
    %v5440 = vpop.f32.mrb[0].mxu0
    %5441 = vdwg.mxu0
    %v5442 = vadd.f32 %v5331, %v5439
    %v5443 = vadd.f32 %v5442, %v74
    %vm5444 = vcmp.eq.s32.totalorder %v4147, 2
    %v5445 = vsel %vm5444, 1, 0
    %vm5446 = vcmp.eq.s32.totalorder %v5445, 1
    %5448 = vset.pattern.permute.xlu0 0
    %5449 = vperm.xlu0 %5448, %v5443
    %v5450 = vpop.permute.xlu0 %5449
    %v5452 = vsel %vm5446, %v5450, %v5016
    %5453 = vmatprep.subr.mxu0 %v52
    %5454 = vmatpush1.msra.mxu0 %v51
    %5455 = vmatprep.subr.mxu0 %v54
    %5456 = vmatpush1.msra.mxu0 %v53
    %5457 = vmatprep.subr.mxu0 %v56
    %5458 = vmatpush1.msra.mxu0 %v55
    %5459 = vmatprep.subr.mxu0 %v58
    %5460 = vmatpush1.msra.mxu0 %v57
    %5461 = vmatprep.subr.mxu0 0.0
    %5462 = vmatpush1.msra.mxu0 0.0
    %5463 = vmatprep.subr.mxu0 0.0
    %5464 = vmatpush1.msra.mxu0 0.0
    %5465 = vmatprep.subr.mxu0 0.0
    %5466 = vmatpush1.msra.mxu0 0.0
    %5467 = vmatprep.subr.mxu0 0.0
    %5468 = vmatpush1.msra.mxu0 0.0
    %5469 = vmatprep.subr.mxu0 0.0
    %5470 = vmatpush1.msra.mxu0 0.0
    %5471 = vmatprep.subr.mxu0 0.0
    %5472 = vmatpush1.msra.mxu0 0.0
    %5473 = vmatprep.subr.mxu0 0.0
    %5474 = vmatpush1.msra.mxu0 0.0
    %5475 = vmatprep.subr.mxu0 0.0
    %5476 = vmatpush1.msra.mxu0 0.0
    %5477 = vmatprep.subr.mxu0 0.0
    %5478 = vmatpush1.msra.mxu0 0.0
    %5479 = vmatprep.subr.mxu0 0.0
    %5480 = vmatpush1.msra.mxu0 0.0
    %5481 = vmatprep.subr.mxu0 0.0
    %5482 = vmatpush1.msra.mxu0 0.0
    %5483 = vmatprep.subr.mxu0 0.0
    %5484 = vmatpush1.msra.mxu0 0.0
    %5485 = vmatprep.subr.mxu0 0.0
    %5486 = vmatpush1.msra.mxu0 0.0
    %5487 = vmatprep.subr.mxu0 0.0
    %5488 = vmatpush1.msra.mxu0 0.0
    %5489 = vmatprep.subr.mxu0 0.0
    %5490 = vmatpush1.msra.mxu0 0.0
    %5491 = vmatprep.subr.mxu0 0.0
    %5492 = vmatpush1.msra.mxu0 0.0
    %5493 = vmatprep.subr.mxu0 0.0
    %5494 = vmatpush1.msra.mxu0 0.0
    %5495 = vmatprep.subr.mxu0 0.0
    %5496 = vmatpush1.msra.mxu0 0.0
    %5497 = vmatprep.subr.mxu0 0.0
    %5498 = vmatpush1.msra.mxu0 0.0
    %5499 = vmatprep.subr.mxu0 0.0
    %5500 = vmatpush1.msra.mxu0 0.0
    %5501 = vmatprep.subr.mxu0 0.0
    %5502 = vmatpush1.msra.mxu0 0.0
    %5503 = vmatprep.subr.mxu0 0.0
    %5504 = vmatpush1.msra.mxu0 0.0
    %5505 = vmatprep.subr.mxu0 0.0
    %5506 = vmatpush1.msra.mxu0 0.0
    %5507 = vmatprep.subr.mxu0 0.0
    %5508 = vmatpush1.msra.mxu0 0.0
    %5509 = vmatprep.subr.mxu0 0.0
    %5510 = vmatpush1.msra.mxu0 0.0
    %5511 = vmatprep.subr.mxu0 0.0
    %5512 = vmatpush1.msra.mxu0 0.0
    %5513 = vmatprep.subr.mxu0 0.0
    %5514 = vmatpush1.msra.mxu0 0.0
    %5515 = vmatprep.subr.mxu0 0.0
    %5516 = vmatpush1.msra.mxu0 0.0
    %5517 = vmatprep.mubr.f32.mxu0 0.0
    %5518 = vmatmul.mubr.f32.gmra.mrb[0].mxu0 %v5370
    %v5519 = vpop.f32.mrb[0].mxu0
    %v5520 = vadd.f32 0.0, %v5519
    %v5521 = vpop.f32.mrb[0].mxu0
    %v5522 = vadd.f32 0.0, %v5521
    %5523 = vdwg.mxu0
    %v5524 = vadd.f32 %v4144, %v5520
    %5526 = vrot.lane.b32.xlu0 %v5360, 96
    %v5527 = vpop.permute.xlu0 %5526
    %v5528 = vsel %vm76, %v5527, 0
    %5530 = vmatprep.subr.mxu0 0.0
    %5531 = vmatpush1.msra.mxu0 %v59
    %5532 = vmatprep.subr.mxu0 0.0
    %5533 = vmatpush1.msra.mxu0 %v60
    %5534 = vmatprep.subr.mxu0 0.0
    %5535 = vmatpush1.msra.mxu0 %v61
    %5536 = vmatprep.subr.mxu0 0.0
    %5537 = vmatpush1.msra.mxu0 %v62
    %5538 = vmatprep.subr.mxu0 0.0
    %5539 = vmatpush1.msra.mxu0 0.0
    %5540 = vmatprep.subr.mxu0 0.0
    %5541 = vmatpush1.msra.mxu0 0.0
    %5542 = vmatprep.subr.mxu0 0.0
    %5543 = vmatpush1.msra.mxu0 0.0
    %5544 = vmatprep.subr.mxu0 0.0
    %5545 = vmatpush1.msra.mxu0 0.0
    %5546 = vmatprep.subr.mxu0 0.0
    %5547 = vmatpush1.msra.mxu0 0.0
    %5548 = vmatprep.subr.mxu0 0.0
    %5549 = vmatpush1.msra.mxu0 0.0
    %5550 = vmatprep.subr.mxu0 0.0
    %5551 = vmatpush1.msra.mxu0 0.0
    %5552 = vmatprep.subr.mxu0 0.0
    %5553 = vmatpush1.msra.mxu0 0.0
    %5554 = vmatprep.subr.mxu0 0.0
    %5555 = vmatpush1.msra.mxu0 0.0
    %5556 = vmatprep.subr.mxu0 0.0
    %5557 = vmatpush1.msra.mxu0 0.0
    %5558 = vmatprep.subr.mxu0 0.0
    %5559 = vmatpush1.msra.mxu0 0.0
    %5560 = vmatprep.subr.mxu0 0.0
    %5561 = vmatpush1.msra.mxu0 0.0
    %5562 = vmatprep.subr.mxu0 0.0
    %5563 = vmatpush1.msra.mxu0 0.0
    %5564 = vmatprep.subr.mxu0 0.0
    %5565 = vmatpush1.msra.mxu0 0.0
    %5566 = vmatprep.subr.mxu0 0.0
    %5567 = vmatpush1.msra.mxu0 0.0
    %5568 = vmatprep.subr.mxu0 0.0
    %5569 = vmatpush1.msra.mxu0 0.0
    %5570 = vmatprep.subr.mxu0 0.0
    %5571 = vmatpush1.msra.mxu0 0.0
    %5572 = vmatprep.subr.mxu0 0.0
    %5573 = vmatpush1.msra.mxu0 0.0
    %5574 = vmatprep.subr.mxu0 0.0
    %5575 = vmatpush1.msra.mxu0 0.0
    %5576 = vmatprep.subr.mxu0 0.0
    %5577 = vmatpush1.msra.mxu0 0.0
    %5578 = vmatprep.subr.mxu0 0.0
    %5579 = vmatpush1.msra.mxu0 0.0
    %5580 = vmatprep.subr.mxu0 0.0
    %5581 = vmatpush1.msra.mxu0 0.0
    %5582 = vmatprep.subr.mxu0 0.0
    %5583 = vmatpush1.msra.mxu0 0.0
    %5584 = vmatprep.subr.mxu0 0.0
    %5585 = vmatpush1.msra.mxu0 0.0
    %5586 = vmatprep.subr.mxu0 0.0
    %5587 = vmatpush1.msra.mxu0 0.0
    %5588 = vmatprep.subr.mxu0 0.0
    %5589 = vmatpush1.msra.mxu0 0.0
    %5590 = vmatprep.subr.mxu0 0.0
    %5591 = vmatpush1.msra.mxu0 0.0
    %5592 = vmatprep.subr.mxu0 0.0
    %5593 = vmatpush1.msra.mxu0 0.0
    %5594 = vmatprep.mubr.f32.mxu0 0.0
    %5595 = vmatmul.mubr.f32.gmra.mrb[0].mxu0 %v5528
    %v5596 = vpop.f32.mrb[0].mxu0
    %v5597 = vadd.f32 0.0, %v5596
    %v5598 = vpop.f32.mrb[0].mxu0
    %5599 = vdwg.mxu0
    %v5600 = vadd.f32 %v5524, %v5597
    %v5601 = vmax.f32 %v5600, 0.0
    %v5603 = vsel %vm4292, %v5601, 0
    %5605 = vmatprep.subr.mxu0 0.0
    %5606 = vmatpush1.msra.mxu0 %v63
    %5607 = vmatprep.subr.mxu0 0.0
    %5608 = vmatpush1.msra.mxu0 0.0
    %5609 = vmatprep.subr.mxu0 0.0
    %5610 = vmatpush1.msra.mxu0 0.0
    %5611 = vmatprep.subr.mxu0 0.0
    %5612 = vmatpush1.msra.mxu0 0.0
    %5613 = vmatprep.subr.mxu0 0.0
    %5614 = vmatpush1.msra.mxu0 0.0
    %5615 = vmatprep.subr.mxu0 0.0
    %5616 = vmatpush1.msra.mxu0 0.0
    %5617 = vmatprep.subr.mxu0 0.0
    %5618 = vmatpush1.msra.mxu0 0.0
    %5619 = vmatprep.subr.mxu0 0.0
    %5620 = vmatpush1.msra.mxu0 0.0
    %5621 = vmatprep.subr.mxu0 0.0
    %5622 = vmatpush1.msra.mxu0 0.0
    %5623 = vmatprep.subr.mxu0 0.0
    %5624 = vmatpush1.msra.mxu0 0.0
    %5625 = vmatprep.subr.mxu0 0.0
    %5626 = vmatpush1.msra.mxu0 0.0
    %5627 = vmatprep.subr.mxu0 0.0
    %5628 = vmatpush1.msra.mxu0 0.0
    %5629 = vmatprep.subr.mxu0 0.0
    %5630 = vmatpush1.msra.mxu0 0.0
    %5631 = vmatprep.subr.mxu0 0.0
    %5632 = vmatpush1.msra.mxu0 0.0
    %5633 = vmatprep.subr.mxu0 0.0
    %5634 = vmatpush1.msra.mxu0 0.0
    %5635 = vmatprep.subr.mxu0 0.0
    %5636 = vmatpush1.msra.mxu0 0.0
    %5637 = vmatprep.subr.mxu0 0.0
    %5638 = vmatpush1.msra.mxu0 0.0
    %5639 = vmatprep.subr.mxu0 0.0
    %5640 = vmatpush1.msra.mxu0 0.0
    %5641 = vmatprep.subr.mxu0 0.0
    %5642 = vmatpush1.msra.mxu0 0.0
    %5643 = vmatprep.subr.mxu0 0.0
    %5644 = vmatpush1.msra.mxu0 0.0
    %5645 = vmatprep.subr.mxu0 0.0
    %5646 = vmatpush1.msra.mxu0 0.0
    %5647 = vmatprep.subr.mxu0 0.0
    %5648 = vmatpush1.msra.mxu0 0.0
    %5649 = vmatprep.subr.mxu0 0.0
    %5650 = vmatpush1.msra.mxu0 0.0
    %5651 = vmatprep.subr.mxu0 0.0
    %5652 = vmatpush1.msra.mxu0 0.0
    %5653 = vmatprep.subr.mxu0 0.0
    %5654 = vmatpush1.msra.mxu0 0.0
    %5655 = vmatprep.subr.mxu0 0.0
    %5656 = vmatpush1.msra.mxu0 0.0
    %5657 = vmatprep.subr.mxu0 0.0
    %5658 = vmatpush1.msra.mxu0 0.0
    %5659 = vmatprep.subr.mxu0 0.0
    %5660 = vmatpush1.msra.mxu0 0.0
    %5661 = vmatprep.subr.mxu0 0.0
    %5662 = vmatpush1.msra.mxu0 0.0
    %5663 = vmatprep.subr.mxu0 0.0
    %5664 = vmatpush1.msra.mxu0 0.0
    %5665 = vmatprep.subr.mxu0 0.0
    %5666 = vmatpush1.msra.mxu0 0.0
    %5667 = vmatprep.subr.mxu0 0.0
    %5668 = vmatpush1.msra.mxu0 0.0
    %5669 = vmatprep.mubr.f32.mxu0 0.0
    %5670 = vmatmul.mubr.f32.gmra.mrb[0].mxu0 %v5603
    %v5671 = vpop.f32.mrb[0].mxu0
    %v5672 = vadd.f32 %v64, %v5671
    %v5673 = vpop.f32.mrb[0].mxu0
    %5674 = vdwg.mxu0
    %5675 = vmax.xlane.f32.xlu0 %v5672
    %v5676 = vpop.xlane.xlu0 %5675
    %v5677 = vsub.f32 %v5672, %v5676
    %v5678 = vmul.f32 %v5677, 1.442695
    %v5679 = vpow.pop %v5678
    %v5680 = vmul.f32 %v5679, 16.0
    %5681 = vadd.xlane.f32.xlu0 %v5679
    %v5682 = vpop.xlane.xlu0 %5681
    %v5683 = vrcp.pop %v5682
    %v5684 = vmul.f32 %v5680, %v5683
    %v5685 = vmul.f32 %v4145, %v5684
    %5686 = vrot.lane.b32.xlu0 %v5685, 16
    %v5687 = vpop.permute.xlu0 %5686
    %v5688 = vadd.f32 %v5685, %v5687
    %5689 = vrot.lane.b32.xlu0 %v5688, 32
    %v5690 = vpop.permute.xlu0 %5689
    %v5691 = vadd.f32 %v5688, %v5690
    %5692 = vrot.lane.b32.xlu0 %v5691, 64
    %v5693 = vpop.permute.xlu0 %5692
    %v5694 = vadd.f32 %v5691, %v5693
    %v5696 = vsel %vm576, %v5694, 0
    %5698 = vmatprep.subr.mxu0 %v66
    %5699 = vmatpush1.msra.mxu0 %v65
    %5700 = vmatprep.subr.mxu0 %v68
    %5701 = vmatpush1.msra.mxu0 %v67
    %5702 = vmatprep.subr.mxu0 0.0
    %5703 = vmatpush1.msra.mxu0 0.0
    %5704 = vmatprep.subr.mxu0 0.0
    %5705 = vmatpush1.msra.mxu0 0.0
    %5706 = vmatprep.subr.mxu0 0.0
    %5707 = vmatpush1.msra.mxu0 0.0
    %5708 = vmatprep.subr.mxu0 0.0
    %5709 = vmatpush1.msra.mxu0 0.0
    %5710 = vmatprep.subr.mxu0 0.0
    %5711 = vmatpush1.msra.mxu0 0.0
    %5712 = vmatprep.subr.mxu0 0.0
    %5713 = vmatpush1.msra.mxu0 0.0
    %5714 = vmatprep.subr.mxu0 0.0
    %5715 = vmatpush1.msra.mxu0 0.0
    %5716 = vmatprep.subr.mxu0 0.0
    %5717 = vmatpush1.msra.mxu0 0.0
    %5718 = vmatprep.subr.mxu0 0.0
    %5719 = vmatpush1.msra.mxu0 0.0
    %5720 = vmatprep.subr.mxu0 0.0
    %5721 = vmatpush1.msra.mxu0 0.0
    %5722 = vmatprep.subr.mxu0 0.0
    %5723 = vmatpush1.msra.mxu0 0.0
    %5724 = vmatprep.subr.mxu0 0.0
    %5725 = vmatpush1.msra.mxu0 0.0
    %5726 = vmatprep.subr.mxu0 0.0
    %5727 = vmatpush1.msra.mxu0 0.0
    %5728 = vmatprep.subr.mxu0 0.0
    %5729 = vmatpush1.msra.mxu0 0.0
    %5730 = vmatprep.subr.mxu0 0.0
    %5731 = vmatpush1.msra.mxu0 0.0
    %5732 = vmatprep.subr.mxu0 0.0
    %5733 = vmatpush1.msra.mxu0 0.0
    %5734 = vmatprep.subr.mxu0 0.0
    %5735 = vmatpush1.msra.mxu0 0.0
    %5736 = vmatprep.subr.mxu0 0.0
    %5737 = vmatpush1.msra.mxu0 0.0
    %5738 = vmatprep.subr.mxu0 0.0
    %5739 = vmatpush1.msra.mxu0 0.0
    %5740 = vmatprep.subr.mxu0 0.0
    %5741 = vmatpush1.msra.mxu0 0.0
    %5742 = vmatprep.subr.mxu0 0.0
    %5743 = vmatpush1.msra.mxu0 0.0
    %5744 = vmatprep.subr.mxu0 0.0
    %5745 = vmatpush1.msra.mxu0 0.0
    %5746 = vmatprep.subr.mxu0 0.0
    %5747 = vmatpush1.msra.mxu0 0.0
    %5748 = vmatprep.subr.mxu0 0.0
    %5749 = vmatpush1.msra.mxu0 0.0
    %5750 = vmatprep.subr.mxu0 0.0
    %5751 = vmatpush1.msra.mxu0 0.0
    %5752 = vmatprep.subr.mxu0 0.0
    %5753 = vmatpush1.msra.mxu0 0.0
    %5754 = vmatprep.subr.mxu0 0.0
    %5755 = vmatpush1.msra.mxu0 0.0
    %5756 = vmatprep.subr.mxu0 0.0
    %5757 = vmatpush1.msra.mxu0 0.0
    %5758 = vmatprep.subr.mxu0 0.0
    %5759 = vmatpush1.msra.mxu0 0.0
    %5760 = vmatprep.subr.mxu0 0.0
    %5761 = vmatpush1.msra.mxu0 0.0
    %5762 = vmatprep.mubr.f32.mxu0 0.0
    %5763 = vmatmul.mubr.f32.gmra.mrb[0].mxu0 %v5696
    %v5764 = vpop.f32.mrb[0].mxu0
    %v5765 = vadd.f32 0.0, %v5764
    %v5766 = vpop.f32.mrb[0].mxu0
    %v5767 = vadd.f32 0.0, %v5766
    %5768 = vdwg.mxu0
    %5771 = vrot.lane.b32.xlu0 %v5520, 120
    %v5772 = vpop.permute.xlu0 %5771
    %5773 = vrot.lane.b32.xlu0 %v5522, 120
    %v5774 = vpop.permute.xlu0 %5773
    %v5775 = vsel %vm4466, %v5772, %v5774
    %v5777 = vadd.f32 %v5765, %v5775
    %v5778 = vadd.f32 %v5777, %v69
    %v5779 = vxor.u32 %v5778, 2147483648
    %v5780 = vmul.f32 %v5779, 1.442695
    %v5781 = vpow.pop %v5780
    %v5782 = vadd.f32 %v5781, 1.0
    %v5783 = vrcp.pop %v5782
    %v5784 = vmul.f32 1.0, %v5783
    %v5785 = vtanh.pop %v5778
    %v5786 = vmul.f32 %v5784, %v5360
    %5788 = vrot.lane.b32.xlu0 %v5785, 64
    %v5789 = vpop.permute.xlu0 %5788
    %v5791 = vmul.f32 %v5784, %v5789
    %5793 = vrot.lane.b32.xlu0 %v5791, 32
    %v5794 = vpop.permute.xlu0 %5793
    %v5796 = vadd.f32 %v5786, %v5794
    %v5797 = vtanh.pop %v5796
    %5799 = vrot.lane.b32.xlu0 %v5797, 64
    %v5800 = vpop.permute.xlu0 %5799
    %v5802 = vmul.f32 %v5784, %v5800
    %5804 = vrot.lane.b32.xlu0 %v5802, 32
    %v5805 = vpop.permute.xlu0 %5804
    %v5806 = vsel %vm76, %v5805, 0
    %5808 = vmatprep.subr.mxu0 0.0
    %5809 = vmatpush1.msra.mxu0 %v70
    %5810 = vmatprep.subr.mxu0 0.0
    %5811 = vmatpush1.msra.mxu0 %v71
    %5812 = vmatprep.subr.mxu0 0.0
    %5813 = vmatpush1.msra.mxu0 %v72
    %5814 = vmatprep.subr.mxu0 0.0
    %5815 = vmatpush1.msra.mxu0 %v73
    %5816 = vmatprep.subr.mxu0 0.0
    %5817 = vmatpush1.msra.mxu0 0.0
    %5818 = vmatprep.subr.mxu0 0.0
    %5819 = vmatpush1.msra.mxu0 0.0
    %5820 = vmatprep.subr.mxu0 0.0
    %5821 = vmatpush1.msra.mxu0 0.0
    %5822 = vmatprep.subr.mxu0 0.0
    %5823 = vmatpush1.msra.mxu0 0.0
    %5824 = vmatprep.subr.mxu0 0.0
    %5825 = vmatpush1.msra.mxu0 0.0
    %5826 = vmatprep.subr.mxu0 0.0
    %5827 = vmatpush1.msra.mxu0 0.0
    %5828 = vmatprep.subr.mxu0 0.0
    %5829 = vmatpush1.msra.mxu0 0.0
    %5830 = vmatprep.subr.mxu0 0.0
    %5831 = vmatpush1.msra.mxu0 0.0
    %5832 = vmatprep.subr.mxu0 0.0
    %5833 = vmatpush1.msra.mxu0 0.0
    %5834 = vmatprep.subr.mxu0 0.0
    %5835 = vmatpush1.msra.mxu0 0.0
    %5836 = vmatprep.subr.mxu0 0.0
    %5837 = vmatpush1.msra.mxu0 0.0
    %5838 = vmatprep.subr.mxu0 0.0
    %5839 = vmatpush1.msra.mxu0 0.0
    %5840 = vmatprep.subr.mxu0 0.0
    %5841 = vmatpush1.msra.mxu0 0.0
    %5842 = vmatprep.subr.mxu0 0.0
    %5843 = vmatpush1.msra.mxu0 0.0
    %5844 = vmatprep.subr.mxu0 0.0
    %5845 = vmatpush1.msra.mxu0 0.0
    %5846 = vmatprep.subr.mxu0 0.0
    %5847 = vmatpush1.msra.mxu0 0.0
    %5848 = vmatprep.subr.mxu0 0.0
    %5849 = vmatpush1.msra.mxu0 0.0
    %5850 = vmatprep.subr.mxu0 0.0
    %5851 = vmatpush1.msra.mxu0 0.0
    %5852 = vmatprep.subr.mxu0 0.0
    %5853 = vmatpush1.msra.mxu0 0.0
    %5854 = vmatprep.subr.mxu0 0.0
    %5855 = vmatpush1.msra.mxu0 0.0
    %5856 = vmatprep.subr.mxu0 0.0
    %5857 = vmatpush1.msra.mxu0 0.0
    %5858 = vmatprep.subr.mxu0 0.0
    %5859 = vmatpush1.msra.mxu0 0.0
    %5860 = vmatprep.subr.mxu0 0.0
    %5861 = vmatpush1.msra.mxu0 0.0
    %5862 = vmatprep.subr.mxu0 0.0
    %5863 = vmatpush1.msra.mxu0 0.0
    %5864 = vmatprep.subr.mxu0 0.0
    %5865 = vmatpush1.msra.mxu0 0.0
    %5866 = vmatprep.subr.mxu0 0.0
    %5867 = vmatpush1.msra.mxu0 0.0
    %5868 = vmatprep.subr.mxu0 0.0
    %5869 = vmatpush1.msra.mxu0 0.0
    %5870 = vmatprep.subr.mxu0 0.0
    %5871 = vmatpush1.msra.mxu0 0.0
    %5872 = vmatprep.mubr.f32.mxu0 0.0
    %5873 = vmatmul.mubr.f32.gmra.mrb[0].mxu0 %v5806
    %v5874 = vpop.f32.mrb[0].mxu0
    %v5875 = vadd.f32 0.0, %v5874
    %v5876 = vpop.f32.mrb[0].mxu0
    %5877 = vdwg.mxu0
    %v5878 = vadd.f32 %v5767, %v5875
    %v5879 = vadd.f32 %v5878, %v74
    %vm5880 = vcmp.eq.s32.totalorder %v4147, 3
    %v5881 = vsel %vm5880, 1, 0
    %vm5882 = vcmp.eq.s32.totalorder %v5881, 1
    %5884 = vset.pattern.permute.xlu0 0
    %5885 = vperm.xlu0 %5884, %v5879
    %v5886 = vpop.permute.xlu0 %5885
    %v5888 = vsel %vm5882, %v5886, %v5452
    %5889 = vmatprep.subr.mxu0 %v52
    %5890 = vmatpush1.msra.mxu0 %v51
    %5891 = vmatprep.subr.mxu0 %v54
    %5892 = vmatpush1.msra.mxu0 %v53
    %5893 = vmatprep.subr.mxu0 %v56
    %5894 = vmatpush1.msra.mxu0 %v55
    %5895 = vmatprep.subr.mxu0 %v58
    %5896 = vmatpush1.msra.mxu0 %v57
    %5897 = vmatprep.subr.mxu0 0.0
    %5898 = vmatpush1.msra.mxu0 0.0
    %5899 = vmatprep.subr.mxu0 0.0
    %5900 = vmatpush1.msra.mxu0 0.0
    %5901 = vmatprep.subr.mxu0 0.0
    %5902 = vmatpush1.msra.mxu0 0.0
    %5903 = vmatprep.subr.mxu0 0.0
    %5904 = vmatpush1.msra.mxu0 0.0
    %5905 = vmatprep.subr.mxu0 0.0
    %5906 = vmatpush1.msra.mxu0 0.0
    %5907 = vmatprep.subr.mxu0 0.0
    %5908 = vmatpush1.msra.mxu0 0.0
    %5909 = vmatprep.subr.mxu0 0.0
    %5910 = vmatpush1.msra.mxu0 0.0
    %5911 = vmatprep.subr.mxu0 0.0
    %5912 = vmatpush1.msra.mxu0 0.0
    %5913 = vmatprep.subr.mxu0 0.0
    %5914 = vmatpush1.msra.mxu0 0.0
    %5915 = vmatprep.subr.mxu0 0.0
    %5916 = vmatpush1.msra.mxu0 0.0
    %5917 = vmatprep.subr.mxu0 0.0
    %5918 = vmatpush1.msra.mxu0 0.0
    %5919 = vmatprep.subr.mxu0 0.0
    %5920 = vmatpush1.msra.mxu0 0.0
    %5921 = vmatprep.subr.mxu0 0.0
    %5922 = vmatpush1.msra.mxu0 0.0
    %5923 = vmatprep.subr.mxu0 0.0
    %5924 = vmatpush1.msra.mxu0 0.0
    %5925 = vmatprep.subr.mxu0 0.0
    %5926 = vmatpush1.msra.mxu0 0.0
    %5927 = vmatprep.subr.mxu0 0.0
    %5928 = vmatpush1.msra.mxu0 0.0
    %5929 = vmatprep.subr.mxu0 0.0
    %5930 = vmatpush1.msra.mxu0 0.0
    %5931 = vmatprep.subr.mxu0 0.0
    %5932 = vmatpush1.msra.mxu0 0.0
    %5933 = vmatprep.subr.mxu0 0.0
    %5934 = vmatpush1.msra.mxu0 0.0
    %5935 = vmatprep.subr.mxu0 0.0
    %5936 = vmatpush1.msra.mxu0 0.0
    %5937 = vmatprep.subr.mxu0 0.0
    %5938 = vmatpush1.msra.mxu0 0.0
    %5939 = vmatprep.subr.mxu0 0.0
    %5940 = vmatpush1.msra.mxu0 0.0
    %5941 = vmatprep.subr.mxu0 0.0
    %5942 = vmatpush1.msra.mxu0 0.0
    %5943 = vmatprep.subr.mxu0 0.0
    %5944 = vmatpush1.msra.mxu0 0.0
    %5945 = vmatprep.subr.mxu0 0.0
    %5946 = vmatpush1.msra.mxu0 0.0
    %5947 = vmatprep.subr.mxu0 0.0
    %5948 = vmatpush1.msra.mxu0 0.0
    %5949 = vmatprep.subr.mxu0 0.0
    %5950 = vmatpush1.msra.mxu0 0.0
    %5951 = vmatprep.subr.mxu0 0.0
    %5952 = vmatpush1.msra.mxu0 0.0
    %5953 = vmatprep.mubr.f32.mxu0 0.0
    %5954 = vmatmul.mubr.f32.gmra.mrb[0].mxu0 %v5806
    %v5955 = vpop.f32.mrb[0].mxu0
    %v5956 = vadd.f32 0.0, %v5955
    %v5957 = vpop.f32.mrb[0].mxu0
    %v5958 = vadd.f32 0.0, %v5957
    %5959 = vdwg.mxu0
    %v5960 = vadd.f32 %v4144, %v5956
    %5962 = vrot.lane.b32.xlu0 %v5796, 96
    %v5963 = vpop.permute.xlu0 %5962
    %v5964 = vsel %vm76, %v5963, 0
    %5966 = vmatprep.subr.mxu0 0.0
    %5967 = vmatpush1.msra.mxu0 %v59
    %5968 = vmatprep.subr.mxu0 0.0
    %5969 = vmatpush1.msra.mxu0 %v60
    %5970 = vmatprep.subr.mxu0 0.0
    %5971 = vmatpush1.msra.mxu0 %v61
    %5972 = vmatprep.subr.mxu0 0.0
    %5973 = vmatpush1.msra.mxu0 %v62
    %5974 = vmatprep.subr.mxu0 0.0
    %5975 = vmatpush1.msra.mxu0 0.0
    %5976 = vmatprep.subr.mxu0 0.0
    %5977 = vmatpush1.msra.mxu0 0.0
    %5978 = vmatprep.subr.mxu0 0.0
    %5979 = vmatpush1.msra.mxu0 0.0
    %5980 = vmatprep.subr.mxu0 0.0
    %5981 = vmatpush1.msra.mxu0 0.0
    %5982 = vmatprep.subr.mxu0 0.0
    %5983 = vmatpush1.msra.mxu0 0.0
    %5984 = vmatprep.subr.mxu0 0.0
    %5985 = vmatpush1.msra.mxu0 0.0
    %5986 = vmatprep.subr.mxu0 0.0
    %5987 = vmatpush1.msra.mxu0 0.0
    %5988 = vmatprep.subr.mxu0 0.0
    %5989 = vmatpush1.msra.mxu0 0.0
    %5990 = vmatprep.subr.mxu0 0.0
    %5991 = vmatpush1.msra.mxu0 0.0
    %5992 = vmatprep.subr.mxu0 0.0
    %5993 = vmatpush1.msra.mxu0 0.0
    %5994 = vmatprep.subr.mxu0 0.0
    %5995 = vmatpush1.msra.mxu0 0.0
    %5996 = vmatprep.subr.mxu0 0.0
    %5997 = vmatpush1.msra.mxu0 0.0
    %5998 = vmatprep.subr.mxu0 0.0
    %5999 = vmatpush1.msra.mxu0 0.0
    %6000 = vmatprep.subr.mxu0 0.0
    %6001 = vmatpush1.msra.mxu0 0.0
    %6002 = vmatprep.subr.mxu0 0.0
    %6003 = vmatpush1.msra.mxu0 0.0
    %6004 = vmatprep.subr.mxu0 0.0
    %6005 = vmatpush1.msra.mxu0 0.0
    %6006 = vmatprep.subr.mxu0 0.0
    %6007 = vmatpush1.msra.mxu0 0.0
    %6008 = vmatprep.subr.mxu0 0.0
    %6009 = vmatpush1.msra.mxu0 0.0
    %6010 = vmatprep.subr.mxu0 0.0
    %6011 = vmatpush1.msra.mxu0 0.0
    %6012 = vmatprep.subr.mxu0 0.0
    %6013 = vmatpush1.msra.mxu0 0.0
    %6014 = vmatprep.subr.mxu0 0.0
    %6015 = vmatpush1.msra.mxu0 0.0
    %6016 = vmatprep.subr.mxu0 0.0
    %6017 = vmatpush1.msra.mxu0 0.0
    %6018 = vmatprep.subr.mxu0 0.0
    %6019 = vmatpush1.msra.mxu0 0.0
    %6020 = vmatprep.subr.mxu0 0.0
    %6021 = vmatpush1.msra.mxu0 0.0
    %6022 = vmatprep.subr.mxu0 0.0
    %6023 = vmatpush1.msra.mxu0 0.0
    %6024 = vmatprep.subr.mxu0 0.0
    %6025 = vmatpush1.msra.mxu0 0.0
    %6026 = vmatprep.subr.mxu0 0.0
    %6027 = vmatpush1.msra.mxu0 0.0
    %6028 = vmatprep.subr.mxu0 0.0
    %6029 = vmatpush1.msra.mxu0 0.0
    %6030 = vmatprep.mubr.f32.mxu0 0.0
    %6031 = vmatmul.mubr.f32.gmra.mrb[0].mxu0 %v5964
    %v6032 = vpop.f32.mrb[0].mxu0
    %v6033 = vadd.f32 0.0, %v6032
    %v6034 = vpop.f32.mrb[0].mxu0
    %6035 = vdwg.mxu0
    %v6036 = vadd.f32 %v5960, %v6033
    %v6037 = vmax.f32 %v6036, 0.0
    %v6039 = vsel %vm4292, %v6037, 0
    %6041 = vmatprep.subr.mxu0 0.0
    %6042 = vmatpush1.msra.mxu0 %v63
    %6043 = vmatprep.subr.mxu0 0.0
    %6044 = vmatpush1.msra.mxu0 0.0
    %6045 = vmatprep.subr.mxu0 0.0
    %6046 = vmatpush1.msra.mxu0 0.0
    %6047 = vmatprep.subr.mxu0 0.0
    %6048 = vmatpush1.msra.mxu0 0.0
    %6049 = vmatprep.subr.mxu0 0.0
    %6050 = vmatpush1.msra.mxu0 0.0
    %6051 = vmatprep.subr.mxu0 0.0
    %6052 = vmatpush1.msra.mxu0 0.0
    %6053 = vmatprep.subr.mxu0 0.0
    %6054 = vmatpush1.msra.mxu0 0.0
    %6055 = vmatprep.subr.mxu0 0.0
    %6056 = vmatpush1.msra.mxu0 0.0
    %6057 = vmatprep.subr.mxu0 0.0
    %6058 = vmatpush1.msra.mxu0 0.0
    %6059 = vmatprep.subr.mxu0 0.0
    %6060 = vmatpush1.msra.mxu0 0.0
    %6061 = vmatprep.subr.mxu0 0.0
    %6062 = vmatpush1.msra.mxu0 0.0
    %6063 = vmatprep.subr.mxu0 0.0
    %6064 = vmatpush1.msra.mxu0 0.0
    %6065 = vmatprep.subr.mxu0 0.0
    %6066 = vmatpush1.msra.mxu0 0.0
    %6067 = vmatprep.subr.mxu0 0.0
    %6068 = vmatpush1.msra.mxu0 0.0
    %6069 = vmatprep.subr.mxu0 0.0
    %6070 = vmatpush1.msra.mxu0 0.0
    %6071 = vmatprep.subr.mxu0 0.0
    %6072 = vmatpush1.msra.mxu0 0.0
    %6073 = vmatprep.subr.mxu0 0.0
    %6074 = vmatpush1.msra.mxu0 0.0
    %6075 = vmatprep.subr.mxu0 0.0
    %6076 = vmatpush1.msra.mxu0 0.0
    %6077 = vmatprep.subr.mxu0 0.0
    %6078 = vmatpush1.msra.mxu0 0.0
    %6079 = vmatprep.subr.mxu0 0.0
    %6080 = vmatpush1.msra.mxu0 0.0
    %6081 = vmatprep.subr.mxu0 0.0
    %6082 = vmatpush1.msra.mxu0 0.0
    %6083 = vmatprep.subr.mxu0 0.0
    %6084 = vmatpush1.msra.mxu0 0.0
    %6085 = vmatprep.subr.mxu0 0.0
    %6086 = vmatpush1.msra.mxu0 0.0
    %6087 = vmatprep.subr.mxu0 0.0
    %6088 = vmatpush1.msra.mxu0 0.0
    %6089 = vmatprep.subr.mxu0 0.0
    %6090 = vmatpush1.msra.mxu0 0.0
    %6091 = vmatprep.subr.mxu0 0.0
    %6092 = vmatpush1.msra.mxu0 0.0
    %6093 = vmatprep.subr.mxu0 0.0
    %6094 = vmatpush1.msra.mxu0 0.0
    %6095 = vmatprep.subr.mxu0 0.0
    %6096 = vmatpush1.msra.mxu0 0.0
    %6097 = vmatprep.subr.mxu0 0.0
    %6098 = vmatpush1.msra.mxu0 0.0
    %6099 = vmatprep.subr.mxu0 0.0
    %6100 = vmatpush1.msra.mxu0 0.0
    %6101 = vmatprep.subr.mxu0 0.0
    %6102 = vmatpush1.msra.mxu0 0.0
    %6103 = vmatprep.subr.mxu0 0.0
    %6104 = vmatpush1.msra.mxu0 0.0
    %6105 = vmatprep.mubr.f32.mxu0 0.0
    %6106 = vmatmul.mubr.f32.gmra.mrb[0].mxu0 %v6039
    %v6107 = vpop.f32.mrb[0].mxu0
    %v6108 = vadd.f32 %v64, %v6107
    %v6109 = vpop.f32.mrb[0].mxu0
    %6110 = vdwg.mxu0
    %6111 = vmax.xlane.f32.xlu0 %v6108
    %v6112 = vpop.xlane.xlu0 %6111
    %v6113 = vsub.f32 %v6108, %v6112
    %v6114 = vmul.f32 %v6113, 1.442695
    %v6115 = vpow.pop %v6114
    %v6116 = vmul.f32 %v6115, 16.0
    %6117 = vadd.xlane.f32.xlu0 %v6115
    %v6118 = vpop.xlane.xlu0 %6117
    %v6119 = vrcp.pop %v6118
    %v6120 = vmul.f32 %v6116, %v6119
    %v6121 = vmul.f32 %v4145, %v6120
    %6122 = vrot.lane.b32.xlu0 %v6121, 16
    %v6123 = vpop.permute.xlu0 %6122
    %v6124 = vadd.f32 %v6121, %v6123
    %6125 = vrot.lane.b32.xlu0 %v6124, 32
    %v6126 = vpop.permute.xlu0 %6125
    %v6127 = vadd.f32 %v6124, %v6126
    %6128 = vrot.lane.b32.xlu0 %v6127, 64
    %v6129 = vpop.permute.xlu0 %6128
    %v6130 = vadd.f32 %v6127, %v6129
    %v6132 = vsel %vm576, %v6130, 0
    %6134 = vmatprep.subr.mxu0 %v66
    %6135 = vmatpush1.msra.mxu0 %v65
    %6136 = vmatprep.subr.mxu0 %v68
    %6137 = vmatpush1.msra.mxu0 %v67
    %6138 = vmatprep.subr.mxu0 0.0
    %6139 = vmatpush1.msra.mxu0 0.0
    %6140 = vmatprep.subr.mxu0 0.0
    %6141 = vmatpush1.msra.mxu0 0.0
    %6142 = vmatprep.subr.mxu0 0.0
    %6143 = vmatpush1.msra.mxu0 0.0
    %6144 = vmatprep.subr.mxu0 0.0
    %6145 = vmatpush1.msra.mxu0 0.0
    %6146 = vmatprep.subr.mxu0 0.0
    %6147 = vmatpush1.msra.mxu0 0.0
    %6148 = vmatprep.subr.mxu0 0.0
    %6149 = vmatpush1.msra.mxu0 0.0
    %6150 = vmatprep.subr.mxu0 0.0
    %6151 = vmatpush1.msra.mxu0 0.0
    %6152 = vmatprep.subr.mxu0 0.0
    %6153 = vmatpush1.msra.mxu0 0.0
    %6154 = vmatprep.subr.mxu0 0.0
    %6155 = vmatpush1.msra.mxu0 0.0
    %6156 = vmatprep.subr.mxu0 0.0
    %6157 = vmatpush1.msra.mxu0 0.0
    %6158 = vmatprep.subr.mxu0 0.0
    %6159 = vmatpush1.msra.mxu0 0.0
    %6160 = vmatprep.subr.mxu0 0.0
    %6161 = vmatpush1.msra.mxu0 0.0
    %6162 = vmatprep.subr.mxu0 0.0
    %6163 = vmatpush1.msra.mxu0 0.0
    %6164 = vmatprep.subr.mxu0 0.0
    %6165 = vmatpush1.msra.mxu0 0.0
    %6166 = vmatprep.subr.mxu0 0.0
    %6167 = vmatpush1.msra.mxu0 0.0
    %6168 = vmatprep.subr.mxu0 0.0
    %6169 = vmatpush1.msra.mxu0 0.0
    %6170 = vmatprep.subr.mxu0 0.0
    %6171 = vmatpush1.msra.mxu0 0.0
    %6172 = vmatprep.subr.mxu0 0.0
    %6173 = vmatpush1.msra.mxu0 0.0
    %6174 = vmatprep.subr.mxu0 0.0
    %6175 = vmatpush1.msra.mxu0 0.0
    %6176 = vmatprep.subr.mxu0 0.0
    %6177 = vmatpush1.msra.mxu0 0.0
    %6178 = vmatprep.subr.mxu0 0.0
    %6179 = vmatpush1.msra.mxu0 0.0
    %6180 = vmatprep.subr.mxu0 0.0
    %6181 = vmatpush1.msra.mxu0 0.0
    %6182 = vmatprep.subr.mxu0 0.0
    %6183 = vmatpush1.msra.mxu0 0.0
    %6184 = vmatprep.subr.mxu0 0.0
    %6185 = vmatpush1.msra.mxu0 0.0
    %6186 = vmatprep.subr.mxu0 0.0
    %6187 = vmatpush1.msra.mxu0 0.0
    %6188 = vmatprep.subr.mxu0 0.0
    %6189 = vmatpush1.msra.mxu0 0.0
    %6190 = vmatprep.subr.mxu0 0.0
    %6191 = vmatpush1.msra.mxu0 0.0
    %6192 = vmatprep.subr.mxu0 0.0
    %6193 = vmatpush1.msra.mxu0 0.0
    %6194 = vmatprep.subr.mxu0 0.0
    %6195 = vmatpush1.msra.mxu0 0.0
    %6196 = vmatprep.subr.mxu0 0.0
    %6197 = vmatpush1.msra.mxu0 0.0
    %6198 = vmatprep.mubr.f32.mxu0 0.0
    %6199 = vmatmul.mubr.f32.gmra.mrb[0].mxu0 %v6132
    %v6200 = vpop.f32.mrb[0].mxu0
    %v6201 = vadd.f32 0.0, %v6200
    %v6202 = vpop.f32.mrb[0].mxu0
    %v6203 = vadd.f32 0.0, %v6202
    %6204 = vdwg.mxu0
    %6207 = vrot.lane.b32.xlu0 %v5956, 120
    %v6208 = vpop.permute.xlu0 %6207
    %6209 = vrot.lane.b32.xlu0 %v5958, 120
    %v6210 = vpop.permute.xlu0 %6209
    %v6211 = vsel %vm4466, %v6208, %v6210
    %v6213 = vadd.f32 %v6201, %v6211
    %v6214 = vadd.f32 %v6213, %v69
    %v6215 = vxor.u32 %v6214, 2147483648
    %v6216 = vmul.f32 %v6215, 1.442695
    %v6217 = vpow.pop %v6216
    %v6218 = vadd.f32 %v6217, 1.0
    %v6219 = vrcp.pop %v6218
    %v6220 = vmul.f32 1.0, %v6219
    %v6221 = vtanh.pop %v6214
    %v6222 = vmul.f32 %v6220, %v5796
    %6224 = vrot.lane.b32.xlu0 %v6221, 64
    %v6225 = vpop.permute.xlu0 %6224
    %v6227 = vmul.f32 %v6220, %v6225
    %6229 = vrot.lane.b32.xlu0 %v6227, 32
    %v6230 = vpop.permute.xlu0 %6229
    %v6232 = vadd.f32 %v6222, %v6230
    %v6233 = vtanh.pop %v6232
    %6235 = vrot.lane.b32.xlu0 %v6233, 64
    %v6236 = vpop.permute.xlu0 %6235
    %v6238 = vmul.f32 %v6220, %v6236
    %6240 = vrot.lane.b32.xlu0 %v6238, 32
    %v6241 = vpop.permute.xlu0 %6240
    %v6242 = vsel %vm76, %v6241, 0
    %6244 = vmatprep.subr.mxu0 0.0
    %6245 = vmatpush1.msra.mxu0 %v70
    %6246 = vmatprep.subr.mxu0 0.0
    %6247 = vmatpush1.msra.mxu0 %v71
    %6248 = vmatprep.subr.mxu0 0.0
    %6249 = vmatpush1.msra.mxu0 %v72
    %6250 = vmatprep.subr.mxu0 0.0
    %6251 = vmatpush1.msra.mxu0 %v73
    %6252 = vmatprep.subr.mxu0 0.0
    %6253 = vmatpush1.msra.mxu0 0.0
    %6254 = vmatprep.subr.mxu0 0.0
    %6255 = vmatpush1.msra.mxu0 0.0
    %6256 = vmatprep.subr.mxu0 0.0
    %6257 = vmatpush1.msra.mxu0 0.0
    %6258 = vmatprep.subr.mxu0 0.0
    %6259 = vmatpush1.msra.mxu0 0.0
    %6260 = vmatprep.subr.mxu0 0.0
    %6261 = vmatpush1.msra.mxu0 0.0
    %6262 = vmatprep.subr.mxu0 0.0
    %6263 = vmatpush1.msra.mxu0 0.0
    %6264 = vmatprep.subr.mxu0 0.0
    %6265 = vmatpush1.msra.mxu0 0.0
    %6266 = vmatprep.subr.mxu0 0.0
    %6267 = vmatpush1.msra.mxu0 0.0
    %6268 = vmatprep.subr.mxu0 0.0
    %6269 = vmatpush1.msra.mxu0 0.0
    %6270 = vmatprep.subr.mxu0 0.0
    %6271 = vmatpush1.msra.mxu0 0.0
    %6272 = vmatprep.subr.mxu0 0.0
    %6273 = vmatpush1.msra.mxu0 0.0
    %6274 = vmatprep.subr.mxu0 0.0
    %6275 = vmatpush1.msra.mxu0 0.0
    %6276 = vmatprep.subr.mxu0 0.0
    %6277 = vmatpush1.msra.mxu0 0.0
    %6278 = vmatprep.subr.mxu0 0.0
    %6279 = vmatpush1.msra.mxu0 0.0
    %6280 = vmatprep.subr.mxu0 0.0
    %6281 = vmatpush1.msra.mxu0 0.0
    %6282 = vmatprep.subr.mxu0 0.0
    %6283 = vmatpush1.msra.mxu0 0.0
    %6284 = vmatprep.subr.mxu0 0.0
    %6285 = vmatpush1.msra.mxu0 0.0
    %6286 = vmatprep.subr.mxu0 0.0
    %6287 = vmatpush1.msra.mxu0 0.0
    %6288 = vmatprep.subr.mxu0 0.0
    %6289 = vmatpush1.msra.mxu0 0.0
    %6290 = vmatprep.subr.mxu0 0.0
    %6291 = vmatpush1.msra.mxu0 0.0
    %6292 = vmatprep.subr.mxu0 0.0
    %6293 = vmatpush1.msra.mxu0 0.0
    %6294 = vmatprep.subr.mxu0 0.0
    %6295 = vmatpush1.msra.mxu0 0.0
    %6296 = vmatprep.subr.mxu0 0.0
    %6297 = vmatpush1.msra.mxu0 0.0
    %6298 = vmatprep.subr.mxu0 0.0
    %6299 = vmatpush1.msra.mxu0 0.0
    %6300 = vmatprep.subr.mxu0 0.0
    %6301 = vmatpush1.msra.mxu0 0.0
    %6302 = vmatprep.subr.mxu0 0.0
    %6303 = vmatpush1.msra.mxu0 0.0
    %6304 = vmatprep.subr.mxu0 0.0
    %6305 = vmatpush1.msra.mxu0 0.0
    %6306 = vmatprep.subr.mxu0 0.0
    %6307 = vmatpush1.msra.mxu0 0.0
    %6308 = vmatprep.mubr.f32.mxu0 0.0
    %6309 = vmatmul.mubr.f32.gmra.mrb[0].mxu0 %v6242
    %v6310 = vpop.f32.mrb[0].mxu0
    %v6311 = vadd.f32 0.0, %v6310
    %v6312 = vpop.f32.mrb[0].mxu0
    %6313 = vdwg.mxu0
    %v6314 = vadd.f32 %v6203, %v6311
    %v6315 = vadd.f32 %v6314, %v74
    %vm6316 = vcmp.eq.s32.totalorder %v4147, 4
    %v6317 = vsel %vm6316, 1, 0
    %vm6318 = vcmp.eq.s32.totalorder %v6317, 1
    %6320 = vset.pattern.permute.xlu0 0
    %6321 = vperm.xlu0 %6320, %v6315
    %v6322 = vpop.permute.xlu0 %6321
    %v6324 = vsel %vm6318, %v6322, %v5888
    %6325 = vmatprep.subr.mxu0 %v52
    %6326 = vmatpush1.msra.mxu0 %v51
    %6327 = vmatprep.subr.mxu0 %v54
    %6328 = vmatpush1.msra.mxu0 %v53
    %6329 = vmatprep.subr.mxu0 %v56
    %6330 = vmatpush1.msra.mxu0 %v55
    %6331 = vmatprep.subr.mxu0 %v58
    %6332 = vmatpush1.msra.mxu0 %v57
    %6333 = vmatprep.subr.mxu0 0.0
    %6334 = vmatpush1.msra.mxu0 0.0
    %6335 = vmatprep.subr.mxu0 0.0
    %6336 = vmatpush1.msra.mxu0 0.0
    %6337 = vmatprep.subr.mxu0 0.0
    %6338 = vmatpush1.msra.mxu0 0.0
    %6339 = vmatprep.subr.mxu0 0.0
    %6340 = vmatpush1.msra.mxu0 0.0
    %6341 = vmatprep.subr.mxu0 0.0
    %6342 = vmatpush1.msra.mxu0 0.0
    %6343 = vmatprep.subr.mxu0 0.0
    %6344 = vmatpush1.msra.mxu0 0.0
    %6345 = vmatprep.subr.mxu0 0.0
    %6346 = vmatpush1.msra.mxu0 0.0
    %6347 = vmatprep.subr.mxu0 0.0
    %6348 = vmatpush1.msra.mxu0 0.0
    %6349 = vmatprep.subr.mxu0 0.0
    %6350 = vmatpush1.msra.mxu0 0.0
    %6351 = vmatprep.subr.mxu0 0.0
    %6352 = vmatpush1.msra.mxu0 0.0
    %6353 = vmatprep.subr.mxu0 0.0
    %6354 = vmatpush1.msra.mxu0 0.0
    %6355 = vmatprep.subr.mxu0 0.0
    %6356 = vmatpush1.msra.mxu0 0.0
    %6357 = vmatprep.subr.mxu0 0.0
    %6358 = vmatpush1.msra.mxu0 0.0
    %6359 = vmatprep.subr.mxu0 0.0
    %6360 = vmatpush1.msra.mxu0 0.0
    %6361 = vmatprep.subr.mxu0 0.0
    %6362 = vmatpush1.msra.mxu0 0.0
    %6363 = vmatprep.subr.mxu0 0.0
    %6364 = vmatpush1.msra.mxu0 0.0
    %6365 = vmatprep.subr.mxu0 0.0
    %6366 = vmatpush1.msra.mxu0 0.0
    %6367 = vmatprep.subr.mxu0 0.0
    %6368 = vmatpush1.msra.mxu0 0.0
    %6369 = vmatprep.subr.mxu0 0.0
    %6370 = vmatpush1.msra.mxu0 0.0
    %6371 = vmatprep.subr.mxu0 0.0
    %6372 = vmatpush1.msra.mxu0 0.0
    %6373 = vmatprep.subr.mxu0 0.0
    %6374 = vmatpush1.msra.mxu0 0.0
    %6375 = vmatprep.subr.mxu0 0.0
    %6376 = vmatpush1.msra.mxu0 0.0
    %6377 = vmatprep.subr.mxu0 0.0
    %6378 = vmatpush1.msra.mxu0 0.0
    %6379 = vmatprep.subr.mxu0 0.0
    %6380 = vmatpush1.msra.mxu0 0.0
    %6381 = vmatprep.subr.mxu0 0.0
    %6382 = vmatpush1.msra.mxu0 0.0
    %6383 = vmatprep.subr.mxu0 0.0
    %6384 = vmatpush1.msra.mxu0 0.0
    %6385 = vmatprep.subr.mxu0 0.0
    %6386 = vmatpush1.msra.mxu0 0.0
    %6387 = vmatprep.subr.mxu0 0.0
    %6388 = vmatpush1.msra.mxu0 0.0
    %6389 = vmatprep.mubr.f32.mxu0 0.0
    %6390 = vmatmul.mubr.f32.gmra.mrb[0].mxu0 %v6242
    %v6391 = vpop.f32.mrb[0].mxu0
    %v6392 = vadd.f32 0.0, %v6391
    %v6393 = vpop.f32.mrb[0].mxu0
    %v6394 = vadd.f32 0.0, %v6393
    %6395 = vdwg.mxu0
    %v6396 = vadd.f32 %v4144, %v6392
    %6398 = vrot.lane.b32.xlu0 %v6232, 96
    %v6399 = vpop.permute.xlu0 %6398
    %v6400 = vsel %vm76, %v6399, 0
    %6402 = vmatprep.subr.mxu0 0.0
    %6403 = vmatpush1.msra.mxu0 %v59
    %6404 = vmatprep.subr.mxu0 0.0
    %6405 = vmatpush1.msra.mxu0 %v60
    %6406 = vmatprep.subr.mxu0 0.0
    %6407 = vmatpush1.msra.mxu0 %v61
    %6408 = vmatprep.subr.mxu0 0.0
    %6409 = vmatpush1.msra.mxu0 %v62
    %6410 = vmatprep.subr.mxu0 0.0
    %6411 = vmatpush1.msra.mxu0 0.0
    %6412 = vmatprep.subr.mxu0 0.0
    %6413 = vmatpush1.msra.mxu0 0.0
    %6414 = vmatprep.subr.mxu0 0.0
    %6415 = vmatpush1.msra.mxu0 0.0
    %6416 = vmatprep.subr.mxu0 0.0
    %6417 = vmatpush1.msra.mxu0 0.0
    %6418 = vmatprep.subr.mxu0 0.0
    %6419 = vmatpush1.msra.mxu0 0.0
    %6420 = vmatprep.subr.mxu0 0.0
    %6421 = vmatpush1.msra.mxu0 0.0
    %6422 = vmatprep.subr.mxu0 0.0
    %6423 = vmatpush1.msra.mxu0 0.0
    %6424 = vmatprep.subr.mxu0 0.0
    %6425 = vmatpush1.msra.mxu0 0.0
    %6426 = vmatprep.subr.mxu0 0.0
    %6427 = vmatpush1.msra.mxu0 0.0
    %6428 = vmatprep.subr.mxu0 0.0
    %6429 = vmatpush1.msra.mxu0 0.0
    %6430 = vmatprep.subr.mxu0 0.0
    %6431 = vmatpush1.msra.mxu0 0.0
    %6432 = vmatprep.subr.mxu0 0.0
    %6433 = vmatpush1.msra.mxu0 0.0
    %6434 = vmatprep.subr.mxu0 0.0
    %6435 = vmatpush1.msra.mxu0 0.0
    %6436 = vmatprep.subr.mxu0 0.0
    %6437 = vmatpush1.msra.mxu0 0.0
    %6438 = vmatprep.subr.mxu0 0.0
    %6439 = vmatpush1.msra.mxu0 0.0
    %6440 = vmatprep.subr.mxu0 0.0
    %6441 = vmatpush1.msra.mxu0 0.0
    %6442 = vmatprep.subr.mxu0 0.0
    %6443 = vmatpush1.msra.mxu0 0.0
    %6444 = vmatprep.subr.mxu0 0.0
    %6445 = vmatpush1.msra.mxu0 0.0
    %6446 = vmatprep.subr.mxu0 0.0
    %6447 = vmatpush1.msra.mxu0 0.0
    %6448 = vmatprep.subr.mxu0 0.0
    %6449 = vmatpush1.msra.mxu0 0.0
    %6450 = vmatprep.subr.mxu0 0.0
    %6451 = vmatpush1.msra.mxu0 0.0
    %6452 = vmatprep.subr.mxu0 0.0
    %6453 = vmatpush1.msra.mxu0 0.0
    %6454 = vmatprep.subr.mxu0 0.0
    %6455 = vmatpush1.msra.mxu0 0.0
    %6456 = vmatprep.subr.mxu0 0.0
    %6457 = vmatpush1.msra.mxu0 0.0
    %6458 = vmatprep.subr.mxu0 0.0
    %6459 = vmatpush1.msra.mxu0 0.0
    %6460 = vmatprep.subr.mxu0 0.0
    %6461 = vmatpush1.msra.mxu0 0.0
    %6462 = vmatprep.subr.mxu0 0.0
    %6463 = vmatpush1.msra.mxu0 0.0
    %6464 = vmatprep.subr.mxu0 0.0
    %6465 = vmatpush1.msra.mxu0 0.0
    %6466 = vmatprep.mubr.f32.mxu0 0.0
    %6467 = vmatmul.mubr.f32.gmra.mrb[0].mxu0 %v6400
    %v6468 = vpop.f32.mrb[0].mxu0
    %v6469 = vadd.f32 0.0, %v6468
    %v6470 = vpop.f32.mrb[0].mxu0
    %6471 = vdwg.mxu0
    %v6472 = vadd.f32 %v6396, %v6469
    %v6473 = vmax.f32 %v6472, 0.0
    %v6475 = vsel %vm4292, %v6473, 0
    %6477 = vmatprep.subr.mxu0 0.0
    %6478 = vmatpush1.msra.mxu0 %v63
    %6479 = vmatprep.subr.mxu0 0.0
    %6480 = vmatpush1.msra.mxu0 0.0
    %6481 = vmatprep.subr.mxu0 0.0
    %6482 = vmatpush1.msra.mxu0 0.0
    %6483 = vmatprep.subr.mxu0 0.0
    %6484 = vmatpush1.msra.mxu0 0.0
    %6485 = vmatprep.subr.mxu0 0.0
    %6486 = vmatpush1.msra.mxu0 0.0
    %6487 = vmatprep.subr.mxu0 0.0
    %6488 = vmatpush1.msra.mxu0 0.0
    %6489 = vmatprep.subr.mxu0 0.0
    %6490 = vmatpush1.msra.mxu0 0.0
    %6491 = vmatprep.subr.mxu0 0.0
    %6492 = vmatpush1.msra.mxu0 0.0
    %6493 = vmatprep.subr.mxu0 0.0
    %6494 = vmatpush1.msra.mxu0 0.0
    %6495 = vmatprep.subr.mxu0 0.0
    %6496 = vmatpush1.msra.mxu0 0.0
    %6497 = vmatprep.subr.mxu0 0.0
    %6498 = vmatpush1.msra.mxu0 0.0
    %6499 = vmatprep.subr.mxu0 0.0
    %6500 = vmatpush1.msra.mxu0 0.0
    %6501 = vmatprep.subr.mxu0 0.0
    %6502 = vmatpush1.msra.mxu0 0.0
    %6503 = vmatprep.subr.mxu0 0.0
    %6504 = vmatpush1.msra.mxu0 0.0
    %6505 = vmatprep.subr.mxu0 0.0
    %6506 = vmatpush1.msra.mxu0 0.0
    %6507 = vmatprep.subr.mxu0 0.0
    %6508 = vmatpush1.msra.mxu0 0.0
    %6509 = vmatprep.subr.mxu0 0.0
    %6510 = vmatpush1.msra.mxu0 0.0
    %6511 = vmatprep.subr.mxu0 0.0
    %6512 = vmatpush1.msra.mxu0 0.0
    %6513 = vmatprep.subr.mxu0 0.0
    %6514 = vmatpush1.msra.mxu0 0.0
    %6515 = vmatprep.subr.mxu0 0.0
    %6516 = vmatpush1.msra.mxu0 0.0
    %6517 = vmatprep.subr.mxu0 0.0
    %6518 = vmatpush1.msra.mxu0 0.0
    %6519 = vmatprep.subr.mxu0 0.0
    %6520 = vmatpush1.msra.mxu0 0.0
    %6521 = vmatprep.subr.mxu0 0.0
    %6522 = vmatpush1.msra.mxu0 0.0
    %6523 = vmatprep.subr.mxu0 0.0
    %6524 = vmatpush1.msra.mxu0 0.0
    %6525 = vmatprep.subr.mxu0 0.0
    %6526 = vmatpush1.msra.mxu0 0.0
    %6527 = vmatprep.subr.mxu0 0.0
    %6528 = vmatpush1.msra.mxu0 0.0
    %6529 = vmatprep.subr.mxu0 0.0
    %6530 = vmatpush1.msra.mxu0 0.0
    %6531 = vmatprep.subr.mxu0 0.0
    %6532 = vmatpush1.msra.mxu0 0.0
    %6533 = vmatprep.subr.mxu0 0.0
    %6534 = vmatpush1.msra.mxu0 0.0
    %6535 = vmatprep.subr.mxu0 0.0
    %6536 = vmatpush1.msra.mxu0 0.0
    %6537 = vmatprep.subr.mxu0 0.0
    %6538 = vmatpush1.msra.mxu0 0.0
    %6539 = vmatprep.subr.mxu0 0.0
    %6540 = vmatpush1.msra.mxu0 0.0
    %6541 = vmatprep.mubr.f32.mxu0 0.0
    %6542 = vmatmul.mubr.f32.gmra.mrb[0].mxu0 %v6475
    %v6543 = vpop.f32.mrb[0].mxu0
    %v6544 = vadd.f32 %v64, %v6543
    %v6545 = vpop.f32.mrb[0].mxu0
    %6546 = vdwg.mxu0
    %6547 = vmax.xlane.f32.xlu0 %v6544
    %v6548 = vpop.xlane.xlu0 %6547
    %v6549 = vsub.f32 %v6544, %v6548
    %v6550 = vmul.f32 %v6549, 1.442695
    %v6551 = vpow.pop %v6550
    %v6552 = vmul.f32 %v6551, 16.0
    %6553 = vadd.xlane.f32.xlu0 %v6551
    %v6554 = vpop.xlane.xlu0 %6553
    %v6555 = vrcp.pop %v6554
    %v6556 = vmul.f32 %v6552, %v6555
    %v6557 = vmul.f32 %v4145, %v6556
    %6558 = vrot.lane.b32.xlu0 %v6557, 16
    %v6559 = vpop.permute.xlu0 %6558
    %v6560 = vadd.f32 %v6557, %v6559
    %6561 = vrot.lane.b32.xlu0 %v6560, 32
    %v6562 = vpop.permute.xlu0 %6561
    %v6563 = vadd.f32 %v6560, %v6562
    %6564 = vrot.lane.b32.xlu0 %v6563, 64
    %v6565 = vpop.permute.xlu0 %6564
    %v6566 = vadd.f32 %v6563, %v6565
    %v6568 = vsel %vm576, %v6566, 0
    %6570 = vmatprep.subr.mxu0 %v66
    %6571 = vmatpush1.msra.mxu0 %v65
    %6572 = vmatprep.subr.mxu0 %v68
    %6573 = vmatpush1.msra.mxu0 %v67
    %6574 = vmatprep.subr.mxu0 0.0
    %6575 = vmatpush1.msra.mxu0 0.0
    %6576 = vmatprep.subr.mxu0 0.0
    %6577 = vmatpush1.msra.mxu0 0.0
    %6578 = vmatprep.subr.mxu0 0.0
    %6579 = vmatpush1.msra.mxu0 0.0
    %6580 = vmatprep.subr.mxu0 0.0
    %6581 = vmatpush1.msra.mxu0 0.0
    %6582 = vmatprep.subr.mxu0 0.0
    %6583 = vmatpush1.msra.mxu0 0.0
    %6584 = vmatprep.subr.mxu0 0.0
    %6585 = vmatpush1.msra.mxu0 0.0
    %6586 = vmatprep.subr.mxu0 0.0
    %6587 = vmatpush1.msra.mxu0 0.0
    %6588 = vmatprep.subr.mxu0 0.0
    %6589 = vmatpush1.msra.mxu0 0.0
    %6590 = vmatprep.subr.mxu0 0.0
    %6591 = vmatpush1.msra.mxu0 0.0
    %6592 = vmatprep.subr.mxu0 0.0
    %6593 = vmatpush1.msra.mxu0 0.0
    %6594 = vmatprep.subr.mxu0 0.0
    %6595 = vmatpush1.msra.mxu0 0.0
    %6596 = vmatprep.subr.mxu0 0.0
    %6597 = vmatpush1.msra.mxu0 0.0
    %6598 = vmatprep.subr.mxu0 0.0
    %6599 = vmatpush1.msra.mxu0 0.0
    %6600 = vmatprep.subr.mxu0 0.0
    %6601 = vmatpush1.msra.mxu0 0.0
    %6602 = vmatprep.subr.mxu0 0.0
    %6603 = vmatpush1.msra.mxu0 0.0
    %6604 = vmatprep.subr.mxu0 0.0
    %6605 = vmatpush1.msra.mxu0 0.0
    %6606 = vmatprep.subr.mxu0 0.0
    %6607 = vmatpush1.msra.mxu0 0.0
    %6608 = vmatprep.subr.mxu0 0.0
    %6609 = vmatpush1.msra.mxu0 0.0
    %6610 = vmatprep.subr.mxu0 0.0
    %6611 = vmatpush1.msra.mxu0 0.0
    %6612 = vmatprep.subr.mxu0 0.0
    %6613 = vmatpush1.msra.mxu0 0.0
    %6614 = vmatprep.subr.mxu0 0.0
    %6615 = vmatpush1.msra.mxu0 0.0
    %6616 = vmatprep.subr.mxu0 0.0
    %6617 = vmatpush1.msra.mxu0 0.0
    %6618 = vmatprep.subr.mxu0 0.0
    %6619 = vmatpush1.msra.mxu0 0.0
    %6620 = vmatprep.subr.mxu0 0.0
    %6621 = vmatpush1.msra.mxu0 0.0
    %6622 = vmatprep.subr.mxu0 0.0
    %6623 = vmatpush1.msra.mxu0 0.0
    %6624 = vmatprep.subr.mxu0 0.0
    %6625 = vmatpush1.msra.mxu0 0.0
    %6626 = vmatprep.subr.mxu0 0.0
    %6627 = vmatpush1.msra.mxu0 0.0
    %6628 = vmatprep.subr.mxu0 0.0
    %6629 = vmatpush1.msra.mxu0 0.0
    %6630 = vmatprep.subr.mxu0 0.0
    %6631 = vmatpush1.msra.mxu0 0.0
    %6632 = vmatprep.subr.mxu0 0.0
    %6633 = vmatpush1.msra.mxu0 0.0
    %6634 = vmatprep.mubr.f32.mxu0 0.0
    %6635 = vmatmul.mubr.f32.gmra.mrb[0].mxu0 %v6568
    %v6636 = vpop.f32.mrb[0].mxu0
    %v6637 = vadd.f32 0.0, %v6636
    %v6638 = vpop.f32.mrb[0].mxu0
    %v6639 = vadd.f32 0.0, %v6638
    %6640 = vdwg.mxu0
    %6643 = vrot.lane.b32.xlu0 %v6392, 120
    %v6644 = vpop.permute.xlu0 %6643
    %6645 = vrot.lane.b32.xlu0 %v6394, 120
    %v6646 = vpop.permute.xlu0 %6645
    %v6647 = vsel %vm4466, %v6644, %v6646
    %v6649 = vadd.f32 %v6637, %v6647
    %v6650 = vadd.f32 %v6649, %v69
    %v6651 = vxor.u32 %v6650, 2147483648
    %v6652 = vmul.f32 %v6651, 1.442695
    %v6653 = vpow.pop %v6652
    %v6654 = vadd.f32 %v6653, 1.0
    %v6655 = vrcp.pop %v6654
    %v6656 = vmul.f32 1.0, %v6655
    %v6657 = vtanh.pop %v6650
    %v6658 = vmul.f32 %v6656, %v6232
    %6660 = vrot.lane.b32.xlu0 %v6657, 64
    %v6661 = vpop.permute.xlu0 %6660
    %v6663 = vmul.f32 %v6656, %v6661
    %6665 = vrot.lane.b32.xlu0 %v6663, 32
    %v6666 = vpop.permute.xlu0 %6665
    %v6668 = vadd.f32 %v6658, %v6666
    %v6669 = vtanh.pop %v6668
    %6671 = vrot.lane.b32.xlu0 %v6669, 64
    %v6672 = vpop.permute.xlu0 %6671
    %v6674 = vmul.f32 %v6656, %v6672
    %6676 = vrot.lane.b32.xlu0 %v6674, 32
    %v6677 = vpop.permute.xlu0 %6676
    %v6678 = vsel %vm76, %v6677, 0
    %6680 = vmatprep.subr.mxu0 0.0
    %6681 = vmatpush1.msra.mxu0 %v70
    %6682 = vmatprep.subr.mxu0 0.0
    %6683 = vmatpush1.msra.mxu0 %v71
    %6684 = vmatprep.subr.mxu0 0.0
    %6685 = vmatpush1.msra.mxu0 %v72
    %6686 = vmatprep.subr.mxu0 0.0
    %6687 = vmatpush1.msra.mxu0 %v73
    %6688 = vmatprep.subr.mxu0 0.0
    %6689 = vmatpush1.msra.mxu0 0.0
    %6690 = vmatprep.subr.mxu0 0.0
    %6691 = vmatpush1.msra.mxu0 0.0
    %6692 = vmatprep.subr.mxu0 0.0
    %6693 = vmatpush1.msra.mxu0 0.0
    %6694 = vmatprep.subr.mxu0 0.0
    %6695 = vmatpush1.msra.mxu0 0.0
    %6696 = vmatprep.subr.mxu0 0.0
    %6697 = vmatpush1.msra.mxu0 0.0
    %6698 = vmatprep.subr.mxu0 0.0
    %6699 = vmatpush1.msra.mxu0 0.0
    %6700 = vmatprep.subr.mxu0 0.0
    %6701 = vmatpush1.msra.mxu0 0.0
    %6702 = vmatprep.subr.mxu0 0.0
    %6703 = vmatpush1.msra.mxu0 0.0
    %6704 = vmatprep.subr.mxu0 0.0
    %6705 = vmatpush1.msra.mxu0 0.0
    %6706 = vmatprep.subr.mxu0 0.0
    %6707 = vmatpush1.msra.mxu0 0.0
    %6708 = vmatprep.subr.mxu0 0.0
    %6709 = vmatpush1.msra.mxu0 0.0
    %6710 = vmatprep.subr.mxu0 0.0
    %6711 = vmatpush1.msra.mxu0 0.0
    %6712 = vmatprep.subr.mxu0 0.0
    %6713 = vmatpush1.msra.mxu0 0.0
    %6714 = vmatprep.subr.mxu0 0.0
    %6715 = vmatpush1.msra.mxu0 0.0
    %6716 = vmatprep.subr.mxu0 0.0
    %6717 = vmatpush1.msra.mxu0 0.0
    %6718 = vmatprep.subr.mxu0 0.0
    %6719 = vmatpush1.msra.mxu0 0.0
    %6720 = vmatprep.subr.mxu0 0.0
    %6721 = vmatpush1.msra.mxu0 0.0
    %6722 = vmatprep.subr.mxu0 0.0
    %6723 = vmatpush1.msra.mxu0 0.0
    %6724 = vmatprep.subr.mxu0 0.0
    %6725 = vmatpush1.msra.mxu0 0.0
    %6726 = vmatprep.subr.mxu0 0.0
    %6727 = vmatpush1.msra.mxu0 0.0
    %6728 = vmatprep.subr.mxu0 0.0
    %6729 = vmatpush1.msra.mxu0 0.0
    %6730 = vmatprep.subr.mxu0 0.0
    %6731 = vmatpush1.msra.mxu0 0.0
    %6732 = vmatprep.subr.mxu0 0.0
    %6733 = vmatpush1.msra.mxu0 0.0
    %6734 = vmatprep.subr.mxu0 0.0
    %6735 = vmatpush1.msra.mxu0 0.0
    %6736 = vmatprep.subr.mxu0 0.0
    %6737 = vmatpush1.msra.mxu0 0.0
    %6738 = vmatprep.subr.mxu0 0.0
    %6739 = vmatpush1.msra.mxu0 0.0
    %6740 = vmatprep.subr.mxu0 0.0
    %6741 = vmatpush1.msra.mxu0 0.0
    %6742 = vmatprep.subr.mxu0 0.0
    %6743 = vmatpush1.msra.mxu0 0.0
    %6744 = vmatprep.mubr.f32.mxu0 0.0
    %6745 = vmatmul.mubr.f32.gmra.mrb[0].mxu0 %v6678
    %v6746 = vpop.f32.mrb[0].mxu0
    %v6747 = vadd.f32 0.0, %v6746
    %v6748 = vpop.f32.mrb[0].mxu0
    %6749 = vdwg.mxu0
    %v6750 = vadd.f32 %v6639, %v6747
    %v6751 = vadd.f32 %v6750, %v74
    %vm6752 = vcmp.eq.s32.totalorder %v4147, 5
    %v6753 = vsel %vm6752, 1, 0
    %vm6754 = vcmp.eq.s32.totalorder %v6753, 1
    %6756 = vset.pattern.permute.xlu0 0
    %6757 = vperm.xlu0 %6756, %v6751
    %v6758 = vpop.permute.xlu0 %6757
    %v6760 = vsel %vm6754, %v6758, %v6324
    %6761 = vmatprep.subr.mxu0 %v52
    %6762 = vmatpush1.msra.mxu0 %v51
    %6763 = vmatprep.subr.mxu0 %v54
    %6764 = vmatpush1.msra.mxu0 %v53
    %6765 = vmatprep.subr.mxu0 %v56
    %6766 = vmatpush1.msra.mxu0 %v55
    %6767 = vmatprep.subr.mxu0 %v58
    %6768 = vmatpush1.msra.mxu0 %v57
    %6769 = vmatprep.subr.mxu0 0.0
    %6770 = vmatpush1.msra.mxu0 0.0
    %6771 = vmatprep.subr.mxu0 0.0
    %6772 = vmatpush1.msra.mxu0 0.0
    %6773 = vmatprep.subr.mxu0 0.0
    %6774 = vmatpush1.msra.mxu0 0.0
    %6775 = vmatprep.subr.mxu0 0.0
    %6776 = vmatpush1.msra.mxu0 0.0
    %6777 = vmatprep.subr.mxu0 0.0
    %6778 = vmatpush1.msra.mxu0 0.0
    %6779 = vmatprep.subr.mxu0 0.0
    %6780 = vmatpush1.msra.mxu0 0.0
    %6781 = vmatprep.subr.mxu0 0.0
    %6782 = vmatpush1.msra.mxu0 0.0
    %6783 = vmatprep.subr.mxu0 0.0
    %6784 = vmatpush1.msra.mxu0 0.0
    %6785 = vmatprep.subr.mxu0 0.0
    %6786 = vmatpush1.msra.mxu0 0.0
    %6787 = vmatprep.subr.mxu0 0.0
    %6788 = vmatpush1.msra.mxu0 0.0
    %6789 = vmatprep.subr.mxu0 0.0
    %6790 = vmatpush1.msra.mxu0 0.0
    %6791 = vmatprep.subr.mxu0 0.0
    %6792 = vmatpush1.msra.mxu0 0.0
    %6793 = vmatprep.subr.mxu0 0.0
    %6794 = vmatpush1.msra.mxu0 0.0
    %6795 = vmatprep.subr.mxu0 0.0
    %6796 = vmatpush1.msra.mxu0 0.0
    %6797 = vmatprep.subr.mxu0 0.0
    %6798 = vmatpush1.msra.mxu0 0.0
    %6799 = vmatprep.subr.mxu0 0.0
    %6800 = vmatpush1.msra.mxu0 0.0
    %6801 = vmatprep.subr.mxu0 0.0
    %6802 = vmatpush1.msra.mxu0 0.0
    %6803 = vmatprep.subr.mxu0 0.0
    %6804 = vmatpush1.msra.mxu0 0.0
    %6805 = vmatprep.subr.mxu0 0.0
    %6806 = vmatpush1.msra.mxu0 0.0
    %6807 = vmatprep.subr.mxu0 0.0
    %6808 = vmatpush1.msra.mxu0 0.0
    %6809 = vmatprep.subr.mxu0 0.0
    %6810 = vmatpush1.msra.mxu0 0.0
    %6811 = vmatprep.subr.mxu0 0.0
    %6812 = vmatpush1.msra.mxu0 0.0
    %6813 = vmatprep.subr.mxu0 0.0
    %6814 = vmatpush1.msra.mxu0 0.0
    %6815 = vmatprep.subr.mxu0 0.0
    %6816 = vmatpush1.msra.mxu0 0.0
    %6817 = vmatprep.subr.mxu0 0.0
    %6818 = vmatpush1.msra.mxu0 0.0
    %6819 = vmatprep.subr.mxu0 0.0
    %6820 = vmatpush1.msra.mxu0 0.0
    %6821 = vmatprep.subr.mxu0 0.0
    %6822 = vmatpush1.msra.mxu0 0.0
    %6823 = vmatprep.subr.mxu0 0.0
    %6824 = vmatpush1.msra.mxu0 0.0
    %6825 = vmatprep.mubr.f32.mxu0 0.0
    %6826 = vmatmul.mubr.f32.gmra.mrb[0].mxu0 %v6678
    %v6827 = vpop.f32.mrb[0].mxu0
    %v6828 = vadd.f32 0.0, %v6827
    %v6829 = vpop.f32.mrb[0].mxu0
    %v6830 = vadd.f32 0.0, %v6829
    %6831 = vdwg.mxu0
    %v6832 = vadd.f32 %v4144, %v6828
    %6834 = vrot.lane.b32.xlu0 %v6668, 96
    %v6835 = vpop.permute.xlu0 %6834
    %v6836 = vsel %vm76, %v6835, 0
    %6838 = vmatprep.subr.mxu0 0.0
    %6839 = vmatpush1.msra.mxu0 %v59
    %6840 = vmatprep.subr.mxu0 0.0
    %6841 = vmatpush1.msra.mxu0 %v60
    %6842 = vmatprep.subr.mxu0 0.0
    %6843 = vmatpush1.msra.mxu0 %v61
    %6844 = vmatprep.subr.mxu0 0.0
    %6845 = vmatpush1.msra.mxu0 %v62
    %6846 = vmatprep.subr.mxu0 0.0
    %6847 = vmatpush1.msra.mxu0 0.0
    %6848 = vmatprep.subr.mxu0 0.0
    %6849 = vmatpush1.msra.mxu0 0.0
    %6850 = vmatprep.subr.mxu0 0.0
    %6851 = vmatpush1.msra.mxu0 0.0
    %6852 = vmatprep.subr.mxu0 0.0
    %6853 = vmatpush1.msra.mxu0 0.0
    %6854 = vmatprep.subr.mxu0 0.0
    %6855 = vmatpush1.msra.mxu0 0.0
    %6856 = vmatprep.subr.mxu0 0.0
    %6857 = vmatpush1.msra.mxu0 0.0
    %6858 = vmatprep.subr.mxu0 0.0
    %6859 = vmatpush1.msra.mxu0 0.0
    %6860 = vmatprep.subr.mxu0 0.0
    %6861 = vmatpush1.msra.mxu0 0.0
    %6862 = vmatprep.subr.mxu0 0.0
    %6863 = vmatpush1.msra.mxu0 0.0
    %6864 = vmatprep.subr.mxu0 0.0
    %6865 = vmatpush1.msra.mxu0 0.0
    %6866 = vmatprep.subr.mxu0 0.0
    %6867 = vmatpush1.msra.mxu0 0.0
    %6868 = vmatprep.subr.mxu0 0.0
    %6869 = vmatpush1.msra.mxu0 0.0
    %6870 = vmatprep.subr.mxu0 0.0
    %6871 = vmatpush1.msra.mxu0 0.0
    %6872 = vmatprep.subr.mxu0 0.0
    %6873 = vmatpush1.msra.mxu0 0.0
    %6874 = vmatprep.subr.mxu0 0.0
    %6875 = vmatpush1.msra.mxu0 0.0
    %6876 = vmatprep.subr.mxu0 0.0
    %6877 = vmatpush1.msra.mxu0 0.0
    %6878 = vmatprep.subr.mxu0 0.0
    %6879 = vmatpush1.msra.mxu0 0.0
    %6880 = vmatprep.subr.mxu0 0.0
    %6881 = vmatpush1.msra.mxu0 0.0
    %6882 = vmatprep.subr.mxu0 0.0
    %6883 = vmatpush1.msra.mxu0 0.0
    %6884 = vmatprep.subr.mxu0 0.0
    %6885 = vmatpush1.msra.mxu0 0.0
    %6886 = vmatprep.subr.mxu0 0.0
    %6887 = vmatpush1.msra.mxu0 0.0
    %6888 = vmatprep.subr.mxu0 0.0
    %6889 = vmatpush1.msra.mxu0 0.0
    %6890 = vmatprep.subr.mxu0 0.0
    %6891 = vmatpush1.msra.mxu0 0.0
    %6892 = vmatprep.subr.mxu0 0.0
    %6893 = vmatpush1.msra.mxu0 0.0
    %6894 = vmatprep.subr.mxu0 0.0
    %6895 = vmatpush1.msra.mxu0 0.0
    %6896 = vmatprep.subr.mxu0 0.0
    %6897 = vmatpush1.msra.mxu0 0.0
    %6898 = vmatprep.subr.mxu0 0.0
    %6899 = vmatpush1.msra.mxu0 0.0
    %6900 = vmatprep.subr.mxu0 0.0
    %6901 = vmatpush1.msra.mxu0 0.0
    %6902 = vmatprep.mubr.f32.mxu0 0.0
    %6903 = vmatmul.mubr.f32.gmra.mrb[0].mxu0 %v6836
    %v6904 = vpop.f32.mrb[0].mxu0
    %v6905 = vadd.f32 0.0, %v6904
    %v6906 = vpop.f32.mrb[0].mxu0
    %6907 = vdwg.mxu0
    %v6908 = vadd.f32 %v6832, %v6905
    %v6909 = vmax.f32 %v6908, 0.0
    %v6911 = vsel %vm4292, %v6909, 0
    %6913 = vmatprep.subr.mxu0 0.0
    %6914 = vmatpush1.msra.mxu0 %v63
    %6915 = vmatprep.subr.mxu0 0.0
    %6916 = vmatpush1.msra.mxu0 0.0
    %6917 = vmatprep.subr.mxu0 0.0
    %6918 = vmatpush1.msra.mxu0 0.0
    %6919 = vmatprep.subr.mxu0 0.0
    %6920 = vmatpush1.msra.mxu0 0.0
    %6921 = vmatprep.subr.mxu0 0.0
    %6922 = vmatpush1.msra.mxu0 0.0
    %6923 = vmatprep.subr.mxu0 0.0
    %6924 = vmatpush1.msra.mxu0 0.0
    %6925 = vmatprep.subr.mxu0 0.0
    %6926 = vmatpush1.msra.mxu0 0.0
    %6927 = vmatprep.subr.mxu0 0.0
    %6928 = vmatpush1.msra.mxu0 0.0
    %6929 = vmatprep.subr.mxu0 0.0
    %6930 = vmatpush1.msra.mxu0 0.0
    %6931 = vmatprep.subr.mxu0 0.0
    %6932 = vmatpush1.msra.mxu0 0.0
    %6933 = vmatprep.subr.mxu0 0.0
    %6934 = vmatpush1.msra.mxu0 0.0
    %6935 = vmatprep.subr.mxu0 0.0
    %6936 = vmatpush1.msra.mxu0 0.0
    %6937 = vmatprep.subr.mxu0 0.0
    %6938 = vmatpush1.msra.mxu0 0.0
    %6939 = vmatprep.subr.mxu0 0.0
    %6940 = vmatpush1.msra.mxu0 0.0
    %6941 = vmatprep.subr.mxu0 0.0
    %6942 = vmatpush1.msra.mxu0 0.0
    %6943 = vmatprep.subr.mxu0 0.0
    %6944 = vmatpush1.msra.mxu0 0.0
    %6945 = vmatprep.subr.mxu0 0.0
    %6946 = vmatpush1.msra.mxu0 0.0
    %6947 = vmatprep.subr.mxu0 0.0
    %6948 = vmatpush1.msra.mxu0 0.0
    %6949 = vmatprep.subr.mxu0 0.0
    %6950 = vmatpush1.msra.mxu0 0.0
    %6951 = vmatprep.subr.mxu0 0.0
    %6952 = vmatpush1.msra.mxu0 0.0
    %6953 = vmatprep.subr.mxu0 0.0
    %6954 = vmatpush1.msra.mxu0 0.0
    %6955 = vmatprep.subr.mxu0 0.0
    %6956 = vmatpush1.msra.mxu0 0.0
    %6957 = vmatprep.subr.mxu0 0.0
    %6958 = vmatpush1.msra.mxu0 0.0
    %6959 = vmatprep.subr.mxu0 0.0
    %6960 = vmatpush1.msra.mxu0 0.0
    %6961 = vmatprep.subr.mxu0 0.0
    %6962 = vmatpush1.msra.mxu0 0.0
    %6963 = vmatprep.subr.mxu0 0.0
    %6964 = vmatpush1.msra.mxu0 0.0
    %6965 = vmatprep.subr.mxu0 0.0
    %6966 = vmatpush1.msra.mxu0 0.0
    %6967 = vmatprep.subr.mxu0 0.0
    %6968 = vmatpush1.msra.mxu0 0.0
    %6969 = vmatprep.subr.mxu0 0.0
    %6970 = vmatpush1.msra.mxu0 0.0
    %6971 = vmatprep.subr.mxu0 0.0
    %6972 = vmatpush1.msra.mxu0 0.0
    %6973 = vmatprep.subr.mxu0 0.0
    %6974 = vmatpush1.msra.mxu0 0.0
    %6975 = vmatprep.subr.mxu0 0.0
    %6976 = vmatpush1.msra.mxu0 0.0
    %6977 = vmatprep.mubr.f32.mxu0 0.0
    %6978 = vmatmul.mubr.f32.gmra.mrb[0].mxu0 %v6911
    %v6979 = vpop.f32.mrb[0].mxu0
    %v6980 = vadd.f32 %v64, %v6979
    %v6981 = vpop.f32.mrb[0].mxu0
    %6982 = vdwg.mxu0
    %6983 = vmax.xlane.f32.xlu0 %v6980
    %v6984 = vpop.xlane.xlu0 %6983
    %v6985 = vsub.f32 %v6980, %v6984
    %v6986 = vmul.f32 %v6985, 1.442695
    %v6987 = vpow.pop %v6986
    %v6988 = vmul.f32 %v6987, 16.0
    %6989 = vadd.xlane.f32.xlu0 %v6987
    %v6990 = vpop.xlane.xlu0 %6989
    %v6991 = vrcp.pop %v6990
    %v6992 = vmul.f32 %v6988, %v6991
    %v6993 = vmul.f32 %v4145, %v6992
    %6994 = vrot.lane.b32.xlu0 %v6993, 16
    %v6995 = vpop.permute.xlu0 %6994
    %v6996 = vadd.f32 %v6993, %v6995
    %6997 = vrot.lane.b32.xlu0 %v6996, 32
    %v6998 = vpop.permute.xlu0 %6997
    %v6999 = vadd.f32 %v6996, %v6998
    %7000 = vrot.lane.b32.xlu0 %v6999, 64
    %v7001 = vpop.permute.xlu0 %7000
    %v7002 = vadd.f32 %v6999, %v7001
    %v7004 = vsel %vm576, %v7002, 0
    %7006 = vmatprep.subr.mxu0 %v66
    %7007 = vmatpush1.msra.mxu0 %v65
    %7008 = vmatprep.subr.mxu0 %v68
    %7009 = vmatpush1.msra.mxu0 %v67
    %7010 = vmatprep.subr.mxu0 0.0
    %7011 = vmatpush1.msra.mxu0 0.0
    %7012 = vmatprep.subr.mxu0 0.0
    %7013 = vmatpush1.msra.mxu0 0.0
    %7014 = vmatprep.subr.mxu0 0.0
    %7015 = vmatpush1.msra.mxu0 0.0
    %7016 = vmatprep.subr.mxu0 0.0
    %7017 = vmatpush1.msra.mxu0 0.0
    %7018 = vmatprep.subr.mxu0 0.0
    %7019 = vmatpush1.msra.mxu0 0.0
    %7020 = vmatprep.subr.mxu0 0.0
    %7021 = vmatpush1.msra.mxu0 0.0
    %7022 = vmatprep.subr.mxu0 0.0
    %7023 = vmatpush1.msra.mxu0 0.0
    %7024 = vmatprep.subr.mxu0 0.0
    %7025 = vmatpush1.msra.mxu0 0.0
    %7026 = vmatprep.subr.mxu0 0.0
    %7027 = vmatpush1.msra.mxu0 0.0
    %7028 = vmatprep.subr.mxu0 0.0
    %7029 = vmatpush1.msra.mxu0 0.0
    %7030 = vmatprep.subr.mxu0 0.0
    %7031 = vmatpush1.msra.mxu0 0.0
    %7032 = vmatprep.subr.mxu0 0.0
    %7033 = vmatpush1.msra.mxu0 0.0
    %7034 = vmatprep.subr.mxu0 0.0
    %7035 = vmatpush1.msra.mxu0 0.0
    %7036 = vmatprep.subr.mxu0 0.0
    %7037 = vmatpush1.msra.mxu0 0.0
    %7038 = vmatprep.subr.mxu0 0.0
    %7039 = vmatpush1.msra.mxu0 0.0
    %7040 = vmatprep.subr.mxu0 0.0
    %7041 = vmatpush1.msra.mxu0 0.0
    %7042 = vmatprep.subr.mxu0 0.0
    %7043 = vmatpush1.msra.mxu0 0.0
    %7044 = vmatprep.subr.mxu0 0.0
    %7045 = vmatpush1.msra.mxu0 0.0
    %7046 = vmatprep.subr.mxu0 0.0
    %7047 = vmatpush1.msra.mxu0 0.0
    %7048 = vmatprep.subr.mxu0 0.0
    %7049 = vmatpush1.msra.mxu0 0.0
    %7050 = vmatprep.subr.mxu0 0.0
    %7051 = vmatpush1.msra.mxu0 0.0
    %7052 = vmatprep.subr.mxu0 0.0
    %7053 = vmatpush1.msra.mxu0 0.0
    %7054 = vmatprep.subr.mxu0 0.0
    %7055 = vmatpush1.msra.mxu0 0.0
    %7056 = vmatprep.subr.mxu0 0.0
    %7057 = vmatpush1.msra.mxu0 0.0
    %7058 = vmatprep.subr.mxu0 0.0
    %7059 = vmatpush1.msra.mxu0 0.0
    %7060 = vmatprep.subr.mxu0 0.0
    %7061 = vmatpush1.msra.mxu0 0.0
    %7062 = vmatprep.subr.mxu0 0.0
    %7063 = vmatpush1.msra.mxu0 0.0
    %7064 = vmatprep.subr.mxu0 0.0
    %7065 = vmatpush1.msra.mxu0 0.0
    %7066 = vmatprep.subr.mxu0 0.0
    %7067 = vmatpush1.msra.mxu0 0.0
    %7068 = vmatprep.subr.mxu0 0.0
    %7069 = vmatpush1.msra.mxu0 0.0
    %7070 = vmatprep.mubr.f32.mxu0 0.0
    %7071 = vmatmul.mubr.f32.gmra.mrb[0].mxu0 %v7004
    %v7072 = vpop.f32.mrb[0].mxu0
    %v7073 = vadd.f32 0.0, %v7072
    %v7074 = vpop.f32.mrb[0].mxu0
    %v7075 = vadd.f32 0.0, %v7074
    %7076 = vdwg.mxu0
    %7079 = vrot.lane.b32.xlu0 %v6828, 120
    %v7080 = vpop.permute.xlu0 %7079
    %7081 = vrot.lane.b32.xlu0 %v6830, 120
    %v7082 = vpop.permute.xlu0 %7081
    %v7083 = vsel %vm4466, %v7080, %v7082
    %v7085 = vadd.f32 %v7073, %v7083
    %v7086 = vadd.f32 %v7085, %v69
    %v7087 = vxor.u32 %v7086, 2147483648
    %v7088 = vmul.f32 %v7087, 1.442695
    %v7089 = vpow.pop %v7088
    %v7090 = vadd.f32 %v7089, 1.0
    %v7091 = vrcp.pop %v7090
    %v7092 = vmul.f32 1.0, %v7091
    %v7093 = vtanh.pop %v7086
    %v7094 = vmul.f32 %v7092, %v6668
    %7096 = vrot.lane.b32.xlu0 %v7093, 64
    %v7097 = vpop.permute.xlu0 %7096
    %v7099 = vmul.f32 %v7092, %v7097
    %7101 = vrot.lane.b32.xlu0 %v7099, 32
    %v7102 = vpop.permute.xlu0 %7101
    %v7104 = vadd.f32 %v7094, %v7102
    %v7105 = vtanh.pop %v7104
    %7107 = vrot.lane.b32.xlu0 %v7105, 64
    %v7108 = vpop.permute.xlu0 %7107
    %v7110 = vmul.f32 %v7092, %v7108
    %7112 = vrot.lane.b32.xlu0 %v7110, 32
    %v7113 = vpop.permute.xlu0 %7112
    %v7114 = vsel %vm76, %v7113, 0
    %7116 = vmatprep.subr.mxu0 0.0
    %7117 = vmatpush1.msra.mxu0 %v70
    %7118 = vmatprep.subr.mxu0 0.0
    %7119 = vmatpush1.msra.mxu0 %v71
    %7120 = vmatprep.subr.mxu0 0.0
    %7121 = vmatpush1.msra.mxu0 %v72
    %7122 = vmatprep.subr.mxu0 0.0
    %7123 = vmatpush1.msra.mxu0 %v73
    %7124 = vmatprep.subr.mxu0 0.0
    %7125 = vmatpush1.msra.mxu0 0.0
    %7126 = vmatprep.subr.mxu0 0.0
    %7127 = vmatpush1.msra.mxu0 0.0
    %7128 = vmatprep.subr.mxu0 0.0
    %7129 = vmatpush1.msra.mxu0 0.0
    %7130 = vmatprep.subr.mxu0 0.0
    %7131 = vmatpush1.msra.mxu0 0.0
    %7132 = vmatprep.subr.mxu0 0.0
    %7133 = vmatpush1.msra.mxu0 0.0
    %7134 = vmatprep.subr.mxu0 0.0
    %7135 = vmatpush1.msra.mxu0 0.0
    %7136 = vmatprep.subr.mxu0 0.0
    %7137 = vmatpush1.msra.mxu0 0.0
    %7138 = vmatprep.subr.mxu0 0.0
    %7139 = vmatpush1.msra.mxu0 0.0
    %7140 = vmatprep.subr.mxu0 0.0
    %7141 = vmatpush1.msra.mxu0 0.0
    %7142 = vmatprep.subr.mxu0 0.0
    %7143 = vmatpush1.msra.mxu0 0.0
    %7144 = vmatprep.subr.mxu0 0.0
    %7145 = vmatpush1.msra.mxu0 0.0
    %7146 = vmatprep.subr.mxu0 0.0
    %7147 = vmatpush1.msra.mxu0 0.0
    %7148 = vmatprep.subr.mxu0 0.0
    %7149 = vmatpush1.msra.mxu0 0.0
    %7150 = vmatprep.subr.mxu0 0.0
    %7151 = vmatpush1.msra.mxu0 0.0
    %7152 = vmatprep.subr.mxu0 0.0
    %7153 = vmatpush1.msra.mxu0 0.0
    %7154 = vmatprep.subr.mxu0 0.0
    %7155 = vmatpush1.msra.mxu0 0.0
    %7156 = vmatprep.subr.mxu0 0.0
    %7157 = vmatpush1.msra.mxu0 0.0
    %7158 = vmatprep.subr.mxu0 0.0
    %7159 = vmatpush1.msra.mxu0 0.0
    %7160 = vmatprep.subr.mxu0 0.0
    %7161 = vmatpush1.msra.mxu0 0.0
    %7162 = vmatprep.subr.mxu0 0.0
    %7163 = vmatpush1.msra.mxu0 0.0
    %7164 = vmatprep.subr.mxu0 0.0
    %7165 = vmatpush1.msra.mxu0 0.0
    %7166 = vmatprep.subr.mxu0 0.0
    %7167 = vmatpush1.msra.mxu0 0.0
    %7168 = vmatprep.subr.mxu0 0.0
    %7169 = vmatpush1.msra.mxu0 0.0
    %7170 = vmatprep.subr.mxu0 0.0
    %7171 = vmatpush1.msra.mxu0 0.0
    %7172 = vmatprep.subr.mxu0 0.0
    %7173 = vmatpush1.msra.mxu0 0.0
    %7174 = vmatprep.subr.mxu0 0.0
    %7175 = vmatpush1.msra.mxu0 0.0
    %7176 = vmatprep.subr.mxu0 0.0
    %7177 = vmatpush1.msra.mxu0 0.0
    %7178 = vmatprep.subr.mxu0 0.0
    %7179 = vmatpush1.msra.mxu0 0.0
    %7180 = vmatprep.mubr.f32.mxu0 0.0
    %7181 = vmatmul.mubr.f32.gmra.mrb[0].mxu0 %v7114
    %v7182 = vpop.f32.mrb[0].mxu0
    %v7183 = vadd.f32 0.0, %v7182
    %v7184 = vpop.f32.mrb[0].mxu0
    %7185 = vdwg.mxu0
    %v7186 = vadd.f32 %v7075, %v7183
    %v7187 = vadd.f32 %v7186, %v74
    %vm7188 = vcmp.eq.s32.totalorder %v4147, 6
    %v7189 = vsel %vm7188, 1, 0
    %vm7190 = vcmp.eq.s32.totalorder %v7189, 1
    %7192 = vset.pattern.permute.xlu0 0
    %7193 = vperm.xlu0 %7192, %v7187
    %v7194 = vpop.permute.xlu0 %7193
    %v7196 = vsel %vm7190, %v7194, %v6760
    %7197 = vmatprep.subr.mxu0 %v52
    %7198 = vmatpush1.msra.mxu0 %v51
    %7199 = vmatprep.subr.mxu0 %v54
    %7200 = vmatpush1.msra.mxu0 %v53
    %7201 = vmatprep.subr.mxu0 %v56
    %7202 = vmatpush1.msra.mxu0 %v55
    %7203 = vmatprep.subr.mxu0 %v58
    %7204 = vmatpush1.msra.mxu0 %v57
    %7205 = vmatprep.subr.mxu0 0.0
    %7206 = vmatpush1.msra.mxu0 0.0
    %7207 = vmatprep.subr.mxu0 0.0
    %7208 = vmatpush1.msra.mxu0 0.0
    %7209 = vmatprep.subr.mxu0 0.0
    %7210 = vmatpush1.msra.mxu0 0.0
    %7211 = vmatprep.subr.mxu0 0.0
    %7212 = vmatpush1.msra.mxu0 0.0
    %7213 = vmatprep.subr.mxu0 0.0
    %7214 = vmatpush1.msra.mxu0 0.0
    %7215 = vmatprep.subr.mxu0 0.0
    %7216 = vmatpush1.msra.mxu0 0.0
    %7217 = vmatprep.subr.mxu0 0.0
    %7218 = vmatpush1.msra.mxu0 0.0
    %7219 = vmatprep.subr.mxu0 0.0
    %7220 = vmatpush1.msra.mxu0 0.0
    %7221 = vmatprep.subr.mxu0 0.0
    %7222 = vmatpush1.msra.mxu0 0.0
    %7223 = vmatprep.subr.mxu0 0.0
    %7224 = vmatpush1.msra.mxu0 0.0
    %7225 = vmatprep.subr.mxu0 0.0
    %7226 = vmatpush1.msra.mxu0 0.0
    %7227 = vmatprep.subr.mxu0 0.0
    %7228 = vmatpush1.msra.mxu0 0.0
    %7229 = vmatprep.subr.mxu0 0.0
    %7230 = vmatpush1.msra.mxu0 0.0
    %7231 = vmatprep.subr.mxu0 0.0
    %7232 = vmatpush1.msra.mxu0 0.0
    %7233 = vmatprep.subr.mxu0 0.0
    %7234 = vmatpush1.msra.mxu0 0.0
    %7235 = vmatprep.subr.mxu0 0.0
    %7236 = vmatpush1.msra.mxu0 0.0
    %7237 = vmatprep.subr.mxu0 0.0
    %7238 = vmatpush1.msra.mxu0 0.0
    %7239 = vmatprep.subr.mxu0 0.0
    %7240 = vmatpush1.msra.mxu0 0.0
    %7241 = vmatprep.subr.mxu0 0.0
    %7242 = vmatpush1.msra.mxu0 0.0
    %7243 = vmatprep.subr.mxu0 0.0
    %7244 = vmatpush1.msra.mxu0 0.0
    %7245 = vmatprep.subr.mxu0 0.0
    %7246 = vmatpush1.msra.mxu0 0.0
    %7247 = vmatprep.subr.mxu0 0.0
    %7248 = vmatpush1.msra.mxu0 0.0
    %7249 = vmatprep.subr.mxu0 0.0
    %7250 = vmatpush1.msra.mxu0 0.0
    %7251 = vmatprep.subr.mxu0 0.0
    %7252 = vmatpush1.msra.mxu0 0.0
    %7253 = vmatprep.subr.mxu0 0.0
    %7254 = vmatpush1.msra.mxu0 0.0
    %7255 = vmatprep.subr.mxu0 0.0
    %7256 = vmatpush1.msra.mxu0 0.0
    %7257 = vmatprep.subr.mxu0 0.0
    %7258 = vmatpush1.msra.mxu0 0.0
    %7259 = vmatprep.subr.mxu0 0.0
    %7260 = vmatpush1.msra.mxu0 0.0
    %7261 = vmatprep.mubr.f32.mxu0 0.0
    %7262 = vmatmul.mubr.f32.gmra.mrb[0].mxu0 %v7114
    %v7263 = vpop.f32.mrb[0].mxu0
    %v7264 = vadd.f32 0.0, %v7263
    %v7265 = vpop.f32.mrb[0].mxu0
    %v7266 = vadd.f32 0.0, %v7265
    %7267 = vdwg.mxu0
    %v7268 = vadd.f32 %v4144, %v7264
    %7270 = vrot.lane.b32.xlu0 %v7104, 96
    %v7271 = vpop.permute.xlu0 %7270
    %v7272 = vsel %vm76, %v7271, 0
    %7274 = vmatprep.subr.mxu0 0.0
    %7275 = vmatpush1.msra.mxu0 %v59
    %7276 = vmatprep.subr.mxu0 0.0
    %7277 = vmatpush1.msra.mxu0 %v60
    %7278 = vmatprep.subr.mxu0 0.0
    %7279 = vmatpush1.msra.mxu0 %v61
    %7280 = vmatprep.subr.mxu0 0.0
    %7281 = vmatpush1.msra.mxu0 %v62
    %7282 = vmatprep.subr.mxu0 0.0
    %7283 = vmatpush1.msra.mxu0 0.0
    %7284 = vmatprep.subr.mxu0 0.0
    %7285 = vmatpush1.msra.mxu0 0.0
    %7286 = vmatprep.subr.mxu0 0.0
    %7287 = vmatpush1.msra.mxu0 0.0
    %7288 = vmatprep.subr.mxu0 0.0
    %7289 = vmatpush1.msra.mxu0 0.0
    %7290 = vmatprep.subr.mxu0 0.0
    %7291 = vmatpush1.msra.mxu0 0.0
    %7292 = vmatprep.subr.mxu0 0.0
    %7293 = vmatpush1.msra.mxu0 0.0
    %7294 = vmatprep.subr.mxu0 0.0
    %7295 = vmatpush1.msra.mxu0 0.0
    %7296 = vmatprep.subr.mxu0 0.0
    %7297 = vmatpush1.msra.mxu0 0.0
    %7298 = vmatprep.subr.mxu0 0.0
    %7299 = vmatpush1.msra.mxu0 0.0
    %7300 = vmatprep.subr.mxu0 0.0
    %7301 = vmatpush1.msra.mxu0 0.0
    %7302 = vmatprep.subr.mxu0 0.0
    %7303 = vmatpush1.msra.mxu0 0.0
    %7304 = vmatprep.subr.mxu0 0.0
    %7305 = vmatpush1.msra.mxu0 0.0
    %7306 = vmatprep.subr.mxu0 0.0
    %7307 = vmatpush1.msra.mxu0 0.0
    %7308 = vmatprep.subr.mxu0 0.0
    %7309 = vmatpush1.msra.mxu0 0.0
    %7310 = vmatprep.subr.mxu0 0.0
    %7311 = vmatpush1.msra.mxu0 0.0
    %7312 = vmatprep.subr.mxu0 0.0
    %7313 = vmatpush1.msra.mxu0 0.0
    %7314 = vmatprep.subr.mxu0 0.0
    %7315 = vmatpush1.msra.mxu0 0.0
    %7316 = vmatprep.subr.mxu0 0.0
    %7317 = vmatpush1.msra.mxu0 0.0
    %7318 = vmatprep.subr.mxu0 0.0
    %7319 = vmatpush1.msra.mxu0 0.0
    %7320 = vmatprep.subr.mxu0 0.0
    %7321 = vmatpush1.msra.mxu0 0.0
    %7322 = vmatprep.subr.mxu0 0.0
    %7323 = vmatpush1.msra.mxu0 0.0
    %7324 = vmatprep.subr.mxu0 0.0
    %7325 = vmatpush1.msra.mxu0 0.0
    %7326 = vmatprep.subr.mxu0 0.0
    %7327 = vmatpush1.msra.mxu0 0.0
    %7328 = vmatprep.subr.mxu0 0.0
    %7329 = vmatpush1.msra.mxu0 0.0
    %7330 = vmatprep.subr.mxu0 0.0
    %7331 = vmatpush1.msra.mxu0 0.0
    %7332 = vmatprep.subr.mxu0 0.0
    %7333 = vmatpush1.msra.mxu0 0.0
    %7334 = vmatprep.subr.mxu0 0.0
    %7335 = vmatpush1.msra.mxu0 0.0
    %7336 = vmatprep.subr.mxu0 0.0
    %7337 = vmatpush1.msra.mxu0 0.0
    %7338 = vmatprep.mubr.f32.mxu0 0.0
    %7339 = vmatmul.mubr.f32.gmra.mrb[0].mxu0 %v7272
    %v7340 = vpop.f32.mrb[0].mxu0
    %v7341 = vadd.f32 0.0, %v7340
    %v7342 = vpop.f32.mrb[0].mxu0
    %7343 = vdwg.mxu0
    %v7344 = vadd.f32 %v7268, %v7341
    %v7345 = vmax.f32 %v7344, 0.0
    %v7347 = vsel %vm4292, %v7345, 0
    %7349 = vmatprep.subr.mxu0 0.0
    %7350 = vmatpush1.msra.mxu0 %v63
    %7351 = vmatprep.subr.mxu0 0.0
    %7352 = vmatpush1.msra.mxu0 0.0
    %7353 = vmatprep.subr.mxu0 0.0
    %7354 = vmatpush1.msra.mxu0 0.0
    %7355 = vmatprep.subr.mxu0 0.0
    %7356 = vmatpush1.msra.mxu0 0.0
    %7357 = vmatprep.subr.mxu0 0.0
    %7358 = vmatpush1.msra.mxu0 0.0
    %7359 = vmatprep.subr.mxu0 0.0
    %7360 = vmatpush1.msra.mxu0 0.0
    %7361 = vmatprep.subr.mxu0 0.0
    %7362 = vmatpush1.msra.mxu0 0.0
    %7363 = vmatprep.subr.mxu0 0.0
    %7364 = vmatpush1.msra.mxu0 0.0
    %7365 = vmatprep.subr.mxu0 0.0
    %7366 = vmatpush1.msra.mxu0 0.0
    %7367 = vmatprep.subr.mxu0 0.0
    %7368 = vmatpush1.msra.mxu0 0.0
    %7369 = vmatprep.subr.mxu0 0.0
    %7370 = vmatpush1.msra.mxu0 0.0
    %7371 = vmatprep.subr.mxu0 0.0
    %7372 = vmatpush1.msra.mxu0 0.0
    %7373 = vmatprep.subr.mxu0 0.0
    %7374 = vmatpush1.msra.mxu0 0.0
    %7375 = vmatprep.subr.mxu0 0.0
    %7376 = vmatpush1.msra.mxu0 0.0
    %7377 = vmatprep.subr.mxu0 0.0
    %7378 = vmatpush1.msra.mxu0 0.0
    %7379 = vmatprep.subr.mxu0 0.0
    %7380 = vmatpush1.msra.mxu0 0.0
    %7381 = vmatprep.subr.mxu0 0.0
    %7382 = vmatpush1.msra.mxu0 0.0
    %7383 = vmatprep.subr.mxu0 0.0
    %7384 = vmatpush1.msra.mxu0 0.0
    %7385 = vmatprep.subr.mxu0 0.0
    %7386 = vmatpush1.msra.mxu0 0.0
    %7387 = vmatprep.subr.mxu0 0.0
    %7388 = vmatpush1.msra.mxu0 0.0
    %7389 = vmatprep.subr.mxu0 0.0
    %7390 = vmatpush1.msra.mxu0 0.0
    %7391 = vmatprep.subr.mxu0 0.0
    %7392 = vmatpush1.msra.mxu0 0.0
    %7393 = vmatprep.subr.mxu0 0.0
    %7394 = vmatpush1.msra.mxu0 0.0
    %7395 = vmatprep.subr.mxu0 0.0
    %7396 = vmatpush1.msra.mxu0 0.0
    %7397 = vmatprep.subr.mxu0 0.0
    %7398 = vmatpush1.msra.mxu0 0.0
    %7399 = vmatprep.subr.mxu0 0.0
    %7400 = vmatpush1.msra.mxu0 0.0
    %7401 = vmatprep.subr.mxu0 0.0
    %7402 = vmatpush1.msra.mxu0 0.0
    %7403 = vmatprep.subr.mxu0 0.0
    %7404 = vmatpush1.msra.mxu0 0.0
    %7405 = vmatprep.subr.mxu0 0.0
    %7406 = vmatpush1.msra.mxu0 0.0
    %7407 = vmatprep.subr.mxu0 0.0
    %7408 = vmatpush1.msra.mxu0 0.0
    %7409 = vmatprep.subr.mxu0 0.0
    %7410 = vmatpush1.msra.mxu0 0.0
    %7411 = vmatprep.subr.mxu0 0.0
    %7412 = vmatpush1.msra.mxu0 0.0
    %7413 = vmatprep.mubr.f32.mxu0 0.0
    %7414 = vmatmul.mubr.f32.gmra.mrb[0].mxu0 %v7347
    %v7415 = vpop.f32.mrb[0].mxu0
    %v7416 = vadd.f32 %v64, %v7415
    %v7417 = vpop.f32.mrb[0].mxu0
    %7418 = vdwg.mxu0
    %7419 = vmax.xlane.f32.xlu0 %v7416
    %v7420 = vpop.xlane.xlu0 %7419
    %v7421 = vsub.f32 %v7416, %v7420
    %v7422 = vmul.f32 %v7421, 1.442695
    %v7423 = vpow.pop %v7422
    %v7424 = vmul.f32 %v7423, 16.0
    %7425 = vadd.xlane.f32.xlu0 %v7423
    %v7426 = vpop.xlane.xlu0 %7425
    %v7427 = vrcp.pop %v7426
    %v7428 = vmul.f32 %v7424, %v7427
    %v7429 = vmul.f32 %v4145, %v7428
    %7430 = vrot.lane.b32.xlu0 %v7429, 16
    %v7431 = vpop.permute.xlu0 %7430
    %v7432 = vadd.f32 %v7429, %v7431
    %7433 = vrot.lane.b32.xlu0 %v7432, 32
    %v7434 = vpop.permute.xlu0 %7433
    %v7435 = vadd.f32 %v7432, %v7434
    %7436 = vrot.lane.b32.xlu0 %v7435, 64
    %v7437 = vpop.permute.xlu0 %7436
    %v7438 = vadd.f32 %v7435, %v7437
    %v7440 = vsel %vm576, %v7438, 0
    %7442 = vmatprep.subr.mxu0 %v66
    %7443 = vmatpush1.msra.mxu0 %v65
    %7444 = vmatprep.subr.mxu0 %v68
    %7445 = vmatpush1.msra.mxu0 %v67
    %7446 = vmatprep.subr.mxu0 0.0
    %7447 = vmatpush1.msra.mxu0 0.0
    %7448 = vmatprep.subr.mxu0 0.0
    %7449 = vmatpush1.msra.mxu0 0.0
    %7450 = vmatprep.subr.mxu0 0.0
    %7451 = vmatpush1.msra.mxu0 0.0
    %7452 = vmatprep.subr.mxu0 0.0
    %7453 = vmatpush1.msra.mxu0 0.0
    %7454 = vmatprep.subr.mxu0 0.0
    %7455 = vmatpush1.msra.mxu0 0.0
    %7456 = vmatprep.subr.mxu0 0.0
    %7457 = vmatpush1.msra.mxu0 0.0
    %7458 = vmatprep.subr.mxu0 0.0
    %7459 = vmatpush1.msra.mxu0 0.0
    %7460 = vmatprep.subr.mxu0 0.0
    %7461 = vmatpush1.msra.mxu0 0.0
    %7462 = vmatprep.subr.mxu0 0.0
    %7463 = vmatpush1.msra.mxu0 0.0
    %7464 = vmatprep.subr.mxu0 0.0
    %7465 = vmatpush1.msra.mxu0 0.0
    %7466 = vmatprep.subr.mxu0 0.0
    %7467 = vmatpush1.msra.mxu0 0.0
    %7468 = vmatprep.subr.mxu0 0.0
    %7469 = vmatpush1.msra.mxu0 0.0
    %7470 = vmatprep.subr.mxu0 0.0
    %7471 = vmatpush1.msra.mxu0 0.0
    %7472 = vmatprep.subr.mxu0 0.0
    %7473 = vmatpush1.msra.mxu0 0.0
    %7474 = vmatprep.subr.mxu0 0.0
    %7475 = vmatpush1.msra.mxu0 0.0
    %7476 = vmatprep.subr.mxu0 0.0
    %7477 = vmatpush1.msra.mxu0 0.0
    %7478 = vmatprep.subr.mxu0 0.0
    %7479 = vmatpush1.msra.mxu0 0.0
    %7480 = vmatprep.subr.mxu0 0.0
    %7481 = vmatpush1.msra.mxu0 0.0
    %7482 = vmatprep.subr.mxu0 0.0
    %7483 = vmatpush1.msra.mxu0 0.0
    %7484 = vmatprep.subr.mxu0 0.0
    %7485 = vmatpush1.msra.mxu0 0.0
    %7486 = vmatprep.subr.mxu0 0.0
    %7487 = vmatpush1.msra.mxu0 0.0
    %7488 = vmatprep.subr.mxu0 0.0
    %7489 = vmatpush1.msra.mxu0 0.0
    %7490 = vmatprep.subr.mxu0 0.0
    %7491 = vmatpush1.msra.mxu0 0.0
    %7492 = vmatprep.subr.mxu0 0.0
    %7493 = vmatpush1.msra.mxu0 0.0
    %7494 = vmatprep.subr.mxu0 0.0
    %7495 = vmatpush1.msra.mxu0 0.0
    %7496 = vmatprep.subr.mxu0 0.0
    %7497 = vmatpush1.msra.mxu0 0.0
    %7498 = vmatprep.subr.mxu0 0.0
    %7499 = vmatpush1.msra.mxu0 0.0
    %7500 = vmatprep.subr.mxu0 0.0
    %7501 = vmatpush1.msra.mxu0 0.0
    %7502 = vmatprep.subr.mxu0 0.0
    %7503 = vmatpush1.msra.mxu0 0.0
    %7504 = vmatprep.subr.mxu0 0.0
    %7505 = vmatpush1.msra.mxu0 0.0
    %7506 = vmatprep.mubr.f32.mxu0 0.0
    %7507 = vmatmul.mubr.f32.gmra.mrb[0].mxu0 %v7440
    %v7508 = vpop.f32.mrb[0].mxu0
    %v7509 = vadd.f32 0.0, %v7508
    %v7510 = vpop.f32.mrb[0].mxu0
    %v7511 = vadd.f32 0.0, %v7510
    %7512 = vdwg.mxu0
    %7515 = vrot.lane.b32.xlu0 %v7264, 120
    %v7516 = vpop.permute.xlu0 %7515
    %7517 = vrot.lane.b32.xlu0 %v7266, 120
    %v7518 = vpop.permute.xlu0 %7517
    %v7519 = vsel %vm4466, %v7516, %v7518
    %v7521 = vadd.f32 %v7509, %v7519
    %v7522 = vadd.f32 %v7521, %v69
    %v7523 = vxor.u32 %v7522, 2147483648
    %v7524 = vmul.f32 %v7523, 1.442695
    %v7525 = vpow.pop %v7524
    %v7526 = vadd.f32 %v7525, 1.0
    %v7527 = vrcp.pop %v7526
    %v7528 = vmul.f32 1.0, %v7527
    %v7529 = vtanh.pop %v7522
    %v7530 = vmul.f32 %v7528, %v7104
    %7532 = vrot.lane.b32.xlu0 %v7529, 64
    %v7533 = vpop.permute.xlu0 %7532
    %v7535 = vmul.f32 %v7528, %v7533
    %7537 = vrot.lane.b32.xlu0 %v7535, 32
    %v7538 = vpop.permute.xlu0 %7537
    %v7540 = vadd.f32 %v7530, %v7538
    %v7541 = vtanh.pop %v7540
    %7543 = vrot.lane.b32.xlu0 %v7541, 64
    %v7544 = vpop.permute.xlu0 %7543
    %v7546 = vmul.f32 %v7528, %v7544
    %7548 = vrot.lane.b32.xlu0 %v7546, 32
    %v7549 = vpop.permute.xlu0 %7548
    %v7550 = vsel %vm76, %v7549, 0
    %7552 = vmatprep.subr.mxu0 0.0
    %7553 = vmatpush1.msra.mxu0 %v70
    %7554 = vmatprep.subr.mxu0 0.0
    %7555 = vmatpush1.msra.mxu0 %v71
    %7556 = vmatprep.subr.mxu0 0.0
    %7557 = vmatpush1.msra.mxu0 %v72
    %7558 = vmatprep.subr.mxu0 0.0
    %7559 = vmatpush1.msra.mxu0 %v73
    %7560 = vmatprep.subr.mxu0 0.0
    %7561 = vmatpush1.msra.mxu0 0.0
    %7562 = vmatprep.subr.mxu0 0.0
    %7563 = vmatpush1.msra.mxu0 0.0
    %7564 = vmatprep.subr.mxu0 0.0
    %7565 = vmatpush1.msra.mxu0 0.0
    %7566 = vmatprep.subr.mxu0 0.0
    %7567 = vmatpush1.msra.mxu0 0.0
    %7568 = vmatprep.subr.mxu0 0.0
    %7569 = vmatpush1.msra.mxu0 0.0
    %7570 = vmatprep.subr.mxu0 0.0
    %7571 = vmatpush1.msra.mxu0 0.0
    %7572 = vmatprep.subr.mxu0 0.0
    %7573 = vmatpush1.msra.mxu0 0.0
    %7574 = vmatprep.subr.mxu0 0.0
    %7575 = vmatpush1.msra.mxu0 0.0
    %7576 = vmatprep.subr.mxu0 0.0
    %7577 = vmatpush1.msra.mxu0 0.0
    %7578 = vmatprep.subr.mxu0 0.0
    %7579 = vmatpush1.msra.mxu0 0.0
    %7580 = vmatprep.subr.mxu0 0.0
    %7581 = vmatpush1.msra.mxu0 0.0
    %7582 = vmatprep.subr.mxu0 0.0
    %7583 = vmatpush1.msra.mxu0 0.0
    %7584 = vmatprep.subr.mxu0 0.0
    %7585 = vmatpush1.msra.mxu0 0.0
    %7586 = vmatprep.subr.mxu0 0.0
    %7587 = vmatpush1.msra.mxu0 0.0
    %7588 = vmatprep.subr.mxu0 0.0
    %7589 = vmatpush1.msra.mxu0 0.0
    %7590 = vmatprep.subr.mxu0 0.0
    %7591 = vmatpush1.msra.mxu0 0.0
    %7592 = vmatprep.subr.mxu0 0.0
    %7593 = vmatpush1.msra.mxu0 0.0
    %7594 = vmatprep.subr.mxu0 0.0
    %7595 = vmatpush1.msra.mxu0 0.0
    %7596 = vmatprep.subr.mxu0 0.0
    %7597 = vmatpush1.msra.mxu0 0.0
    %7598 = vmatprep.subr.mxu0 0.0
    %7599 = vmatpush1.msra.mxu0 0.0
    %7600 = vmatprep.subr.mxu0 0.0
    %7601 = vmatpush1.msra.mxu0 0.0
    %7602 = vmatprep.subr.mxu0 0.0
    %7603 = vmatpush1.msra.mxu0 0.0
    %7604 = vmatprep.subr.mxu0 0.0
    %7605 = vmatpush1.msra.mxu0 0.0
    %7606 = vmatprep.subr.mxu0 0.0
    %7607 = vmatpush1.msra.mxu0 0.0
    %7608 = vmatprep.subr.mxu0 0.0
    %7609 = vmatpush1.msra.mxu0 0.0
    %7610 = vmatprep.subr.mxu0 0.0
    %7611 = vmatpush1.msra.mxu0 0.0
    %7612 = vmatprep.subr.mxu0 0.0
    %7613 = vmatpush1.msra.mxu0 0.0
    %7614 = vmatprep.subr.mxu0 0.0
    %7615 = vmatpush1.msra.mxu0 0.0
    %7616 = vmatprep.mubr.f32.mxu0 0.0
    %7617 = vmatmul.mubr.f32.gmra.mrb[0].mxu0 %v7550
    %v7618 = vpop.f32.mrb[0].mxu0
    %v7619 = vadd.f32 0.0, %v7618
    %v7620 = vpop.f32.mrb[0].mxu0
    %7621 = vdwg.mxu0
    %v7622 = vadd.f32 %v7511, %v7619
    %v7623 = vadd.f32 %v7622, %v74
    %vm7624 = vcmp.eq.s32.totalorder %v4147, 7
    %v7625 = vsel %vm7624, 1, 0
    %vm7626 = vcmp.eq.s32.totalorder %v7625, 1
    %7628 = vset.pattern.permute.xlu0 0
    %7629 = vperm.xlu0 %7628, %v7623
    %v7630 = vpop.permute.xlu0 %7629
    %v7632 = vsel %vm7626, %v7630, %v7196
    %7633 = vst.msk [vmem:[#allocation6] sm:$0xff] %vm4292, %v7632
    // Predicated region
    $region14: #{tpu_custom_call.1} parent=1 // pred_check
      _
    $region15: #{tpu_custom_call.1} parent=1 // pred_check_branch
      %7635 = sbr.rel (0) target = $region17
    $region16: #{tpu_custom_call.1} parent=1 // pred_region
      %s7637 = ssub.s32 128, 128
      %7638 = vsyncadd [#allocation5], %s7637
      %s7640 = sshll.u32 [#allocation6], 4
      %s7641 = int_to_ptr.vmem [resolvable:$true] %s7640
      %7643 = dma.vmem_to_hbm [thread:$0]  %s7641, 128, %s2, [#allocation5]
    $region17: #{tpu_custom_call.1} parent=1 // pred_fallthru
      _
    // Predicated region
    $region18: #{tpu_custom_call.1} parent=1 // pred_check
      _
    $region19: #{tpu_custom_call.1} parent=1 // pred_check_branch
      %7645 = sbr.rel (0) target = $region21
    $region20: #{tpu_custom_call.1} parent=1 // pred_region
      %7646 = dma.done [#allocation5], 128
    $region21: #{tpu_custom_call.1} parent=1 // pred_fallthru
      _
    %7647 = vsyncpa [#allocation4], 1
    %7648 = vsyncpa [#allocation5], 1

</llo_original>
